<compile_context>
chip_gen: v7x
topology: tpu7x:2x2x1
jax: 0.10.0
libtpu: 0.0.40
codegen_flags: <defaults>
</compile_context>

<pallas_src>
import math
import jax
import jax.numpy as jnp
from jax.experimental import pallas as pl
from jax.experimental.pallas import tpu as pltpu

# ---- small synthetic RoBERTa-like config (real CodeBERT: 768 hid / 12 heads /
#      12 layers / seq 512).  HEAD_DIM is 128 so head slices are lane aligned.
VOCAB = 64
HID = 256
HEADS = 2
HEAD_DIM = HID // HEADS      # 128
FFN = 4 * HID
LAYERS = 2
SEQ = 8                      # chunk length (real model: 512)
CHUNKS = 2                   # sliding-window chunks per text (real: up to 12)
TEXTS = 2                    # texts per batch (anchor/positive/negative each)
LN_EPS = 1e-5


def _layernorm(x, g, b):
    mu = jnp.mean(x, axis=-1, keepdims=True)
    var = jnp.mean((x - mu) ** 2, axis=-1, keepdims=True)
    return (x - mu) * jax.lax.rsqrt(var + LN_EPS) * g + b


def _num_groups():
    """Use 2 blocks on the 'parallel' group axis only where there are 2
    TensorCores (v7x).  On single-TC chips (v5e/v6e) extra groups just
    serialize, halve the matmul M and double per-layer weight streaming."""
    try:
        kind = jax.devices()[0].device_kind.lower()
    except Exception:
        return 1
    return 2 if "v7" in kind else 1


# --------------------------- fused encoder kernel ----------------------------
# Grid = (NGROUPS, LAYERS).  One grid step = one encoder layer applied to one
# group of sequences.  The hidden state stays resident in VMEM scratch across
# the layer axis; layer 0 DMAs the embedded input from HBM into that scratch,
# the last layer does the CLS-pool + L2-normalize epilogue.

def fused_encoder_kernel(h0_hbm, bias_ref,
                         wqkv_ref, wo_ref, wf1_ref, wf2_ref,
                         bqkv_ref, bf1_ref, vech_ref,
                         out_ref, h_ref, dma_sem):
    grp = pl.program_id(0)
    layer = pl.program_id(1)
    nseq, seq, hid = h_ref.shape
    rows = nseq * seq
    ntext_g = nseq // CHUNKS

    # ---- layer-0 prologue: pull this group's embedded hidden state from HBM
    #      straight into the VMEM state scratch (consumed exactly once; it is
    #      NOT kept resident across the layer axis). ----
    @pl.when(layer == 0)
    def _():
        cp = pltpu.make_async_copy(h0_hbm.at[pl.ds(grp * nseq, nseq)],
                                   h_ref, dma_sem)
        cp.start()
        cp.wait()

    x3 = h_ref[...]                          # (nseq, S, H) f32 state
    x2 = x3.reshape(rows, hid)
    xb = x2.astype(jnp.bfloat16)

    # ---- per-layer packed params (streamed via the leading LAYERS axis) ----
    wqkv = wqkv_ref[0]                       # (H, 3H) bf16
    wo = wo_ref[0]                           # (H, H)  bf16
    wf1 = wf1_ref[0]                         # (H, F)  bf16
    wf2 = wf2_ref[0]                         # (F, H)  bf16
    bqkv = bqkv_ref[0]                       # (1, 3H) f32
    bf1 = bf1_ref[0]                         # (1, F)  f32
    vech = vech_ref[0]                       # (6, H)  f32
    bo, ln1g, ln1b = vech[0:1], vech[1:2], vech[2:3]
    b2, ln2g, ln2b = vech[3:4], vech[4:5], vech[5:6]

    # ---- fused QKV projection (bf16 operands, f32 accumulation) ----
    qkv = jnp.dot(xb, wqkv, preferred_element_type=jnp.float32) + bqkv
    q3 = qkv[:, 0 * hid:1 * hid].reshape(nseq, seq, hid)   # 128-lane aligned
    k3 = qkv[:, 1 * hid:2 * hid].reshape(nseq, seq, hid)
    v3 = qkv[:, 2 * hid:3 * hid].reshape(nseq, seq, hid)

    # ---- multi-head attention, batched over all sequences of the group.
    #      Head slices are 128-lane aligned; each head's context is folded
    #      into the output projection (no lane-dim concatenate). ----
    bias = bias_ref[0][:, None, :]           # (nseq, 1, S) additive key mask
    scale = 1.0 / math.sqrt(HEAD_DIM)
    attn = jnp.zeros((rows, hid), jnp.float32)
    for h in range(HEADS):                   # static unroll (HEADS = 2)
        sl = slice(h * HEAD_DIM, (h + 1) * HEAD_DIM)
        s = jnp.einsum('nqd,nkd->nqk', q3[:, :, sl], k3[:, :, sl],
                       preferred_element_type=jnp.float32) * scale + bias
        s = s - jnp.max(s, axis=-1, keepdims=True)
        p = jnp.exp(s)
        p = p * pl.reciprocal(jnp.sum(p, axis=-1, keepdims=True), approx=True)
        ctx = jnp.einsum('nqk,nkd->nqd', p, v3[:, :, sl],
                         preferred_element_type=jnp.float32)
        attn = attn + jnp.dot(ctx.reshape(rows, HEAD_DIM).astype(jnp.bfloat16),
                              wo[sl, :], preferred_element_type=jnp.float32)

    # ---- attention output bias + residual + LN (f32) ----
    h1 = _layernorm(x2 + attn + bo, ln1g, ln1b)

    # ---- feed-forward (tanh-approx GELU) + residual + LN ----
    ff = jnp.dot(h1.astype(jnp.bfloat16), wf1,
                 preferred_element_type=jnp.float32) + bf1
    ff = jax.nn.gelu(ff, approximate=True)
    ff = jnp.dot(ff.astype(jnp.bfloat16), wf2,
                 preferred_element_type=jnp.float32) + b2
    h2 = _layernorm(h1 + ff, ln2g, ln2b)

    h2_3 = h2.reshape(nseq, seq, hid)
    h_ref[...] = h2_3

    # ---- epilogue: CLS sublane slice -> chunk mean -> L2 normalize ----
    @pl.when(layer == LAYERS - 1)
    def _():
        cls = h2_3[:, 0:1, :].reshape(ntext_g, CHUNKS, hid)   # CLS of each chunk
        pooled = jnp.mean(cls, axis=1)                        # mean over chunks
        norm = jnp.sqrt(jnp.sum(pooled * pooled, axis=-1, keepdims=True))
        out_ref[0] = pooled / jnp.maximum(norm, 1e-12)        # F.normalize(dim=1)


# ------------------------------- model glue -----------------------------------

def encode_all(ids, mask, params, ngroups):
    """ids/mask: (n_texts, CHUNKS, SEQ).  Returns (n_texts, HID), L2-normalized."""
    ntext, c, s = ids.shape
    nseq = ntext * c
    assert ntext % ngroups == 0
    ntext_g = ntext // ngroups
    nseq_g = nseq // ngroups

    # word-embedding gather + embedding add + LayerNorm in JAX glue; the result
    # enters the kernel once via a layer-0 DMA (memory_space=pl.ANY below).
    xw = params["word_emb"][ids.reshape(nseq, s)] + params["pos_type_emb"][None, :, :]
    h0 = _layernorm(xw, params["emb_ln"][0:1, :], params["emb_ln"][1:2, :])

    # additive key-mask bias, computed once for all layers
    bias = (1.0 - mask.reshape(ngroups, nseq_g, s).astype(jnp.float32)) * (-1e9)

    lm_w = lambda i, l: (l, 0, 0)      # per-layer streamed weights

    out = pl.pallas_call(
        fused_encoder_kernel,
        out_shape=jax.ShapeDtypeStruct((ngroups, ntext_g, HID), jnp.float32),
        grid=(ngroups, LAYERS),
        in_specs=[
            pl.BlockSpec(memory_space=pl.ANY),                          # h0 (HBM)
            pl.BlockSpec((1, nseq_g, SEQ), lambda i, l: (i, 0, 0)),     # attn bias
            pl.BlockSpec((1, HID, 3 * HID), lm_w),                      # w_qkv bf16
            pl.BlockSpec((1, HID, HID), lm_w),                          # w_o   bf16
            pl.BlockSpec((1, HID, FFN), lm_w),                          # w_f1  bf16
            pl.BlockSpec((1, FFN, HID), lm_w),                          # w_f2  bf16
            pl.BlockSpec((1, 1, 3 * HID), lm_w),                        # b_qkv
            pl.BlockSpec((1, 1, FFN), lm_w),                            # b_f1
            pl.BlockSpec((1, 6, HID), lm_w),                            # bo/ln1/b2/ln2
        ],
        out_specs=pl.BlockSpec((1, ntext_g, HID), lambda i, l: (i, 0, 0)),
        scratch_shapes=[pltpu.VMEM((nseq_g, SEQ, HID), jnp.float32),    # hidden state
                        pltpu.SemaphoreType.DMA(())],                   # layer-0 DMA
        compiler_params=pltpu.CompilerParams(
            dimension_semantics=("parallel", "arbitrary"),
            # Toy shapes are tiny.  At real CodeBERT scale keep this <= ~56 MiB
            # on v7x (64 MiB/TC): tile the FFN weights and/or carry the hidden
            # state in bf16; on v5e consider pipeline_mode=pl.Buffered(3) for
            # w_f1/w_f2 if weight DMA is exposed.
            vmem_limit_bytes=48 * 1024 * 1024,
        ),
    )(h0, bias, params["w_qkv"], params["w_o"], params["w_f1"], params["w_f2"],
      params["b_qkv"], params["b_f1"], params["vec_h"])

    return out.reshape(ntext, HID)


def codebert_triplet_forward(anchor_ids, anchor_mask, pos_ids, pos_mask,
                             neg_ids, neg_mask, params):
    # Encode anchor / positive / negative in ONE pass (single kernel dispatch).
    ids = jnp.concatenate([anchor_ids, pos_ids, neg_ids], axis=0)
    mask = jnp.concatenate([anchor_mask, pos_mask, neg_mask], axis=0)
    emb = encode_all(ids, mask, params, _num_groups())
    n = anchor_ids.shape[0]
    return emb[:n], emb[n:2 * n], emb[2 * n:]


# ----------------------------- parameter setup --------------------------------

def init_params(key):
    def nrm(k, shape):
        return jax.random.normal(k, shape, jnp.float32) * 0.02

    k = jax.random.split(key, 7)
    ones_h = jnp.ones((LAYERS, HID), jnp.float32)
    zeros_h = jnp.zeros((LAYERS, HID), jnp.float32)
    return {
        "word_emb": nrm(k[0], (VOCAB, HID)),
        # position + token-type(0) embeddings, pre-summed
        "pos_type_emb": nrm(k[1], (SEQ, HID)) + nrm(k[2], (1, HID)),
        "emb_ln": jnp.stack([jnp.ones((HID,), jnp.float32),
                             jnp.zeros((HID,), jnp.float32)]),           # (2, H)
        # large matmul weights in bf16 (f32 accumulation inside the kernel)
        "w_qkv": nrm(k[3], (LAYERS, HID, 3 * HID)).astype(jnp.bfloat16),
        "w_o": nrm(k[4], (LAYERS, HID, HID)).astype(jnp.bfloat16),
        "w_f1": nrm(k[5], (LAYERS, HID, FFN)).astype(jnp.bfloat16),
        "w_f2": nrm(k[6], (LAYERS, FFN, HID)).astype(jnp.bfloat16),
        "b_qkv": jnp.zeros((LAYERS, 1, 3 * HID), jnp.float32),
        "b_f1": jnp.zeros((LAYERS, 1, FFN), jnp.float32),
        # packed per-layer vectors: [bo, ln1_g, ln1_b, b2, ln2_g, ln2_b]
        "vec_h": jnp.stack([zeros_h, ones_h, zeros_h,
                            zeros_h, ones_h, zeros_h], axis=1),           # (L, 6, H)
    }


# ---------------------------------- main ---------------------------------------

if __name__ == "__main__":
    key = jax.random.PRNGKey(0)
    k_param, k_a, k_p, k_n = jax.random.split(key, 4)
    params = init_params(k_param)

    def make_inputs(k):
        ids = jax.random.randint(k, (TEXTS, CHUNKS, SEQ), 0, VOCAB, dtype=jnp.int32)
        mask = jnp.ones((TEXTS, CHUNKS, SEQ), jnp.float32)
        # last chunk of each text has a padded tail (attention key-masked)
        mask = mask.at[:, CHUNKS - 1, SEQ - 2:].set(0.0)
        return ids, mask

    a_ids, a_mask = make_inputs(k_a)
    p_ids, p_mask = make_inputs(k_p)
    n_ids, n_mask = make_inputs(k_n)

    fwd = jax.jit(codebert_triplet_forward)
    a_emb, p_emb, n_emb = fwd(a_ids, a_mask, p_ids, p_mask, n_ids, n_mask, params)
    jax.block_until_ready((a_emb, p_emb, n_emb))

    assert a_emb.shape == (TEXTS, HID)
    assert p_emb.shape == (TEXTS, HID)
    assert n_emb.shape == (TEXTS, HID)
    # embeddings must be finite and L2-normalized (F.normalize semantics)
    for e in (a_emb, p_emb, n_emb):
        assert bool(jnp.all(jnp.isfinite(e)))
        assert bool(jnp.allclose(jnp.linalg.norm(e, axis=1), 1.0, atol=1e-3))
    print("KERNEL_OK")
</pallas_src>

<mosaic_0001>
module attributes {stable_mosaic.version = 11 : i64} {
  func.func @fused_encoder_kernel(%arg0: i32, %arg1: i32, %arg2: memref<12x8x256xf32, #tpu.memory_space<any>>, %arg3: memref<1x12x8xf32, #tpu.memory_space<vmem>>, %arg4: memref<1x256x768xbf16, #tpu.memory_space<vmem>>, %arg5: memref<1x256x256xbf16, #tpu.memory_space<vmem>>, %arg6: memref<1x256x1024xbf16, #tpu.memory_space<vmem>>, %arg7: memref<1x1024x256xbf16, #tpu.memory_space<vmem>>, %arg8: memref<1x1x768xf32, #tpu.memory_space<vmem>>, %arg9: memref<1x1x1024xf32, #tpu.memory_space<vmem>>, %arg10: memref<1x6x256xf32, #tpu.memory_space<vmem>>, %arg11: memref<1x6x256xf32, #tpu.memory_space<vmem>>, %arg12: memref<12x8x256xf32, #tpu.memory_space<vmem>>, %arg13: memref<!tpu.dma_semaphore, #tpu.memory_space<semaphore_mem>>) attributes {dimension_semantics = [#tpu.dimension_semantics<parallel>, #tpu.dimension_semantics<arbitrary>], iteration_bounds = array<i64: 1, 2>, scalar_prefetch = 0 : i64, scratch_operands = 2 : i64, tpu.core_type = #tpu.core_type<tc>, window_params = [{}, {transform_indices = @transform_1, window_bounds = array<i64: 1, 12, 8>}, {transform_indices = @transform_2, window_bounds = array<i64: 1, 256, 768>}, {transform_indices = @transform_3, window_bounds = array<i64: 1, 256, 256>}, {transform_indices = @transform_4, window_bounds = array<i64: 1, 256, 1024>}, {transform_indices = @transform_5, window_bounds = array<i64: 1, 1024, 256>}, {transform_indices = @transform_6, window_bounds = array<i64: 1, 1, 768>}, {transform_indices = @transform_7, window_bounds = array<i64: 1, 1, 1024>}, {transform_indices = @transform_8, window_bounds = array<i64: 1, 6, 256>}, {transform_indices = @transform_9, window_bounds = array<i64: 1, 6, 256>}]} {
    %c0_i32 = arith.constant 0 : i32
    %0 = arith.cmpi eq, %arg1, %c0_i32 : i32
    %1 = arith.extui %0 : i1 to i32
    %c0_i32_0 = arith.constant 0 : i32
    %2 = arith.cmpi ne, %1, %c0_i32_0 : i32
    scf.if %2 {
      %c12_i32 = arith.constant 12 : i32
      %161 = arith.muli %arg0, %c12_i32 : i32
      %c0_i32_60 = arith.constant 0 : i32
      %c0_i32_61 = arith.constant 0 : i32
      %162 = tpu.memref_slice %arg2[%161, %c0_i32_60, %c0_i32_61] : memref<12x8x256xf32, #tpu.memory_space<any>> -> memref<12x8x256xf32, #tpu.memory_space<any>>
      tpu.enqueue_dma source(%162 : memref<12x8x256xf32, #tpu.memory_space<any>>) target(%arg12 : memref<12x8x256xf32, #tpu.memory_space<vmem>>) target_semaphore(%arg13 : memref<!tpu.dma_semaphore, #tpu.memory_space<semaphore_mem>>)
      %c0_i32_62 = arith.constant 0 : i32
      %c0_i32_63 = arith.constant 0 : i32
      %163 = tpu.memref_slice %arg2[%161, %c0_i32_62, %c0_i32_63] : memref<12x8x256xf32, #tpu.memory_space<any>> -> memref<12x8x256xf32, #tpu.memory_space<any>>
      tpu.wait_dma2 semaphore(%arg13 : memref<!tpu.dma_semaphore, #tpu.memory_space<semaphore_mem>>) src(%163 : memref<12x8x256xf32, #tpu.memory_space<any>>) dst(%arg12 : memref<12x8x256xf32, #tpu.memory_space<vmem>>)
    } else {
    }
    %c0 = arith.constant 0 : index
    %c0_1 = arith.constant 0 : index
    %c0_2 = arith.constant 0 : index
    %3 = vector.load %arg12[%c0, %c0_1, %c0_2] : memref<12x8x256xf32, #tpu.memory_space<vmem>>, vector<12x8x256xf32>
    %4 = vector.shape_cast %3 : vector<12x8x256xf32> to vector<96x256xf32>
    %5 = arith.truncf %4 : vector<96x256xf32> to vector<96x256xbf16>
    %c0_3 = arith.constant 0 : index
    %c0_4 = arith.constant 0 : index
    %c0_5 = arith.constant 0 : index
    %6 = vector.load %arg4[%c0_3, %c0_4, %c0_5] : memref<1x256x768xbf16, #tpu.memory_space<vmem>>, vector<1x256x768xbf16>
    %7 = vector.shape_cast %6 : vector<1x256x768xbf16> to vector<256x768xbf16>
    %c0_6 = arith.constant 0 : index
    %c0_7 = arith.constant 0 : index
    %c0_8 = arith.constant 0 : index
    %8 = vector.load %arg5[%c0_6, %c0_7, %c0_8] : memref<1x256x256xbf16, #tpu.memory_space<vmem>>, vector<1x256x256xbf16>
    %9 = vector.shape_cast %8 : vector<1x256x256xbf16> to vector<256x256xbf16>
    %c0_9 = arith.constant 0 : index
    %c0_10 = arith.constant 0 : index
    %c0_11 = arith.constant 0 : index
    %10 = vector.load %arg6[%c0_9, %c0_10, %c0_11] : memref<1x256x1024xbf16, #tpu.memory_space<vmem>>, vector<1x256x1024xbf16>
    %11 = vector.shape_cast %10 : vector<1x256x1024xbf16> to vector<256x1024xbf16>
    %c0_12 = arith.constant 0 : index
    %c0_13 = arith.constant 0 : index
    %c0_14 = arith.constant 0 : index
    %12 = vector.load %arg7[%c0_12, %c0_13, %c0_14] : memref<1x1024x256xbf16, #tpu.memory_space<vmem>>, vector<1x1024x256xbf16>
    %13 = vector.shape_cast %12 : vector<1x1024x256xbf16> to vector<1024x256xbf16>
    %c0_15 = arith.constant 0 : index
    %c0_16 = arith.constant 0 : index
    %c0_17 = arith.constant 0 : index
    %14 = vector.load %arg8[%c0_15, %c0_16, %c0_17] : memref<1x1x768xf32, #tpu.memory_space<vmem>>, vector<1x1x768xf32>
    %15 = vector.shape_cast %14 : vector<1x1x768xf32> to vector<1x768xf32>
    %c0_18 = arith.constant 0 : index
    %c0_19 = arith.constant 0 : index
    %c0_20 = arith.constant 0 : index
    %16 = vector.load %arg9[%c0_18, %c0_19, %c0_20] : memref<1x1x1024xf32, #tpu.memory_space<vmem>>, vector<1x1x1024xf32>
    %17 = vector.shape_cast %16 : vector<1x1x1024xf32> to vector<1x1024xf32>
    %c0_21 = arith.constant 0 : index
    %c0_22 = arith.constant 0 : index
    %c0_23 = arith.constant 0 : index
    %18 = vector.load %arg10[%c0_21, %c0_22, %c0_23] : memref<1x6x256xf32, #tpu.memory_space<vmem>>, vector<1x6x256xf32>
    %19 = vector.shape_cast %18 : vector<1x6x256xf32> to vector<6x256xf32>
    %20 = vector.extract_strided_slice %19 {offsets = [0, 0], sizes = [1, 256], strides = [1, 1]} : vector<6x256xf32> to vector<1x256xf32>
    %21 = vector.extract_strided_slice %19 {offsets = [1, 0], sizes = [1, 256], strides = [1, 1]} : vector<6x256xf32> to vector<1x256xf32>
    %22 = vector.extract_strided_slice %19 {offsets = [2, 0], sizes = [1, 256], strides = [1, 1]} : vector<6x256xf32> to vector<1x256xf32>
    %23 = vector.extract_strided_slice %19 {offsets = [3, 0], sizes = [1, 256], strides = [1, 1]} : vector<6x256xf32> to vector<1x256xf32>
    %24 = vector.extract_strided_slice %19 {offsets = [4, 0], sizes = [1, 256], strides = [1, 1]} : vector<6x256xf32> to vector<1x256xf32>
    %25 = vector.extract_strided_slice %19 {offsets = [5, 0], sizes = [1, 256], strides = [1, 1]} : vector<6x256xf32> to vector<1x256xf32>
    %cst = arith.constant dense<0.000000e+00> : vector<96x768xf32>
    %26 = tpu.matmul %5, %7, %cst {dimension_numbers = #tpu.dot_dimension_numbers<[1], [0], [0], [1], [0, 0, 1, 1], [], []>} : vector<96x256xbf16>, vector<256x768xbf16>, vector<96x768xf32> -> vector<96x768xf32>
    %27 = vector.broadcast %15 : vector<1x768xf32> to vector<96x768xf32>
    %28 = arith.addf %26, %27 : vector<96x768xf32>
    %29 = vector.extract_strided_slice %28 {offsets = [0, 0], sizes = [96, 256], strides = [1, 1]} : vector<96x768xf32> to vector<96x256xf32>
    %30 = vector.shape_cast %29 : vector<96x256xf32> to vector<12x8x256xf32>
    %31 = vector.extract_strided_slice %28 {offsets = [0, 256], sizes = [96, 256], strides = [1, 1]} : vector<96x768xf32> to vector<96x256xf32>
    %32 = vector.shape_cast %31 : vector<96x256xf32> to vector<12x8x256xf32>
    %33 = vector.extract_strided_slice %28 {offsets = [0, 512], sizes = [96, 256], strides = [1, 1]} : vector<96x768xf32> to vector<96x256xf32>
    %34 = vector.shape_cast %33 : vector<96x256xf32> to vector<12x8x256xf32>
    %c0_24 = arith.constant 0 : index
    %c0_25 = arith.constant 0 : index
    %c0_26 = arith.constant 0 : index
    %35 = vector.load %arg3[%c0_24, %c0_25, %c0_26] : memref<1x12x8xf32, #tpu.memory_space<vmem>>, vector<1x12x8xf32>
    %36 = vector.shape_cast %35 : vector<1x12x8xf32> to vector<12x8xf32>
    %37 = vector.shape_cast %36 : vector<12x8xf32> to vector<12x1x8xf32>
    %cst_27 = arith.constant 0.000000e+00 : f32
    %38 = vector.broadcast %cst_27 : f32 to vector<96x256xf32>
    %39 = vector.extract_strided_slice %30 {offsets = [0, 0, 0], sizes = [12, 8, 128], strides = [1, 1, 1]} : vector<12x8x256xf32> to vector<12x8x128xf32>
    %40 = vector.extract_strided_slice %32 {offsets = [0, 0, 0], sizes = [12, 8, 128], strides = [1, 1, 1]} : vector<12x8x256xf32> to vector<12x8x128xf32>
    "tpu.trace_start"() <{level = 10 : i32, message = "nqd,nkd->nqk"}> : () -> ()
    %cst_28 = arith.constant dense<0.000000e+00> : vector<12x8x8xf32>
    %41 = tpu.matmul %39, %40, %cst_28 {dimension_numbers = #tpu.dot_dimension_numbers<[2], [2], [1], [1], [0, 0, 0, 1, 1, 1], [0], [0]>} : vector<12x8x128xf32>, vector<12x8x128xf32>, vector<12x8x8xf32> -> vector<12x8x8xf32>
    "tpu.trace_stop"() : () -> ()
    %cst_29 = arith.constant 0.0883883461 : f32
    %42 = vector.broadcast %cst_29 : f32 to vector<12x8x8xf32>
    %43 = arith.mulf %41, %42 : vector<12x8x8xf32>
    %44 = vector.broadcast %37 : vector<12x1x8xf32> to vector<12x8x8xf32>
    %45 = arith.addf %43, %44 : vector<12x8x8xf32>
    %cst_30 = arith.constant dense<0xFF800000> : vector<12x8xf32>
    %46 = vector.multi_reduction <maximumf>, %45, %cst_30 [2] : vector<12x8x8xf32> to vector<12x8xf32>
    %47 = vector.shape_cast %46 : vector<12x8xf32> to vector<12x8x1xf32>
    %48 = vector.broadcast %47 : vector<12x8x1xf32> to vector<12x8x8xf32>
    %49 = arith.subf %45, %48 : vector<12x8x8xf32>
    %50 = math.exp %49 : vector<12x8x8xf32>
    %cst_31 = arith.constant dense<0.000000e+00> : vector<12x8xf32>
    %51 = vector.multi_reduction <add>, %50, %cst_31 [2] : vector<12x8x8xf32> to vector<12x8xf32>
    %52 = vector.shape_cast %51 : vector<12x8xf32> to vector<12x8x1xf32>
    %53 = tpu.reciprocal %52 {approx = true} : vector<12x8x1xf32> -> vector<12x8x1xf32>
    %54 = vector.broadcast %53 : vector<12x8x1xf32> to vector<12x8x8xf32>
    %55 = arith.mulf %50, %54 : vector<12x8x8xf32>
    %56 = vector.extract_strided_slice %34 {offsets = [0, 0, 0], sizes = [12, 8, 128], strides = [1, 1, 1]} : vector<12x8x256xf32> to vector<12x8x128xf32>
    "tpu.trace_start"() <{level = 10 : i32, message = "nqk,nkd->nqd"}> : () -> ()
    %cst_32 = arith.constant dense<0.000000e+00> : vector<12x8x128xf32>
    %57 = tpu.matmul %55, %56, %cst_32 {dimension_numbers = #tpu.dot_dimension_numbers<[2], [1], [1], [2], [0, 0, 0, 1, 1, 2], [0], [0]>} : vector<12x8x8xf32>, vector<12x8x128xf32>, vector<12x8x128xf32> -> vector<12x8x128xf32>
    "tpu.trace_stop"() : () -> ()
    %58 = vector.shape_cast %57 : vector<12x8x128xf32> to vector<96x128xf32>
    %59 = arith.truncf %58 : vector<96x128xf32> to vector<96x128xbf16>
    %60 = vector.extract_strided_slice %9 {offsets = [0, 0], sizes = [128, 256], strides = [1, 1]} : vector<256x256xbf16> to vector<128x256xbf16>
    %cst_33 = arith.constant dense<0.000000e+00> : vector<96x256xf32>
    %61 = tpu.matmul %59, %60, %cst_33 {dimension_numbers = #tpu.dot_dimension_numbers<[1], [0], [0], [1], [0, 0, 1, 1], [], []>} : vector<96x128xbf16>, vector<128x256xbf16>, vector<96x256xf32> -> vector<96x256xf32>
    %62 = arith.addf %38, %61 : vector<96x256xf32>
    %63 = vector.extract_strided_slice %30 {offsets = [0, 0, 128], sizes = [12, 8, 128], strides = [1, 1, 1]} : vector<12x8x256xf32> to vector<12x8x128xf32>
    %64 = vector.extract_strided_slice %32 {offsets = [0, 0, 128], sizes = [12, 8, 128], strides = [1, 1, 1]} : vector<12x8x256xf32> to vector<12x8x128xf32>
    "tpu.trace_start"() <{level = 10 : i32, message = "nqd,nkd->nqk"}> : () -> ()
    %cst_34 = arith.constant dense<0.000000e+00> : vector<12x8x8xf32>
    %65 = tpu.matmul %63, %64, %cst_34 {dimension_numbers = #tpu.dot_dimension_numbers<[2], [2], [1], [1], [0, 0, 0, 1, 1, 1], [0], [0]>} : vector<12x8x128xf32>, vector<12x8x128xf32>, vector<12x8x8xf32> -> vector<12x8x8xf32>
    "tpu.trace_stop"() : () -> ()
    %cst_35 = arith.constant 0.0883883461 : f32
    %66 = vector.broadcast %cst_35 : f32 to vector<12x8x8xf32>
    %67 = arith.mulf %65, %66 : vector<12x8x8xf32>
    %68 = vector.broadcast %37 : vector<12x1x8xf32> to vector<12x8x8xf32>
    %69 = arith.addf %67, %68 : vector<12x8x8xf32>
    %cst_36 = arith.constant dense<0xFF800000> : vector<12x8xf32>
    %70 = vector.multi_reduction <maximumf>, %69, %cst_36 [2] : vector<12x8x8xf32> to vector<12x8xf32>
    %71 = vector.shape_cast %70 : vector<12x8xf32> to vector<12x8x1xf32>
    %72 = vector.broadcast %71 : vector<12x8x1xf32> to vector<12x8x8xf32>
    %73 = arith.subf %69, %72 : vector<12x8x8xf32>
    %74 = math.exp %73 : vector<12x8x8xf32>
    %cst_37 = arith.constant dense<0.000000e+00> : vector<12x8xf32>
    %75 = vector.multi_reduction <add>, %74, %cst_37 [2] : vector<12x8x8xf32> to vector<12x8xf32>
    %76 = vector.shape_cast %75 : vector<12x8xf32> to vector<12x8x1xf32>
    %77 = tpu.reciprocal %76 {approx = true} : vector<12x8x1xf32> -> vector<12x8x1xf32>
    %78 = vector.broadcast %77 : vector<12x8x1xf32> to vector<12x8x8xf32>
    %79 = arith.mulf %74, %78 : vector<12x8x8xf32>
    %80 = vector.extract_strided_slice %34 {offsets = [0, 0, 128], sizes = [12, 8, 128], strides = [1, 1, 1]} : vector<12x8x256xf32> to vector<12x8x128xf32>
    "tpu.trace_start"() <{level = 10 : i32, message = "nqk,nkd->nqd"}> : () -> ()
    %cst_38 = arith.constant dense<0.000000e+00> : vector<12x8x128xf32>
    %81 = tpu.matmul %79, %80, %cst_38 {dimension_numbers = #tpu.dot_dimension_numbers<[2], [1], [1], [2], [0, 0, 0, 1, 1, 2], [0], [0]>} : vector<12x8x8xf32>, vector<12x8x128xf32>, vector<12x8x128xf32> -> vector<12x8x128xf32>
    "tpu.trace_stop"() : () -> ()
    %82 = vector.shape_cast %81 : vector<12x8x128xf32> to vector<96x128xf32>
    %83 = arith.truncf %82 : vector<96x128xf32> to vector<96x128xbf16>
    %84 = vector.extract_strided_slice %9 {offsets = [128, 0], sizes = [128, 256], strides = [1, 1]} : vector<256x256xbf16> to vector<128x256xbf16>
    %cst_39 = arith.constant dense<0.000000e+00> : vector<96x256xf32>
    %85 = tpu.matmul %83, %84, %cst_39 {dimension_numbers = #tpu.dot_dimension_numbers<[1], [0], [0], [1], [0, 0, 1, 1], [], []>} : vector<96x128xbf16>, vector<128x256xbf16>, vector<96x256xf32> -> vector<96x256xf32>
    %86 = arith.addf %62, %85 : vector<96x256xf32>
    %87 = arith.addf %4, %86 : vector<96x256xf32>
    %88 = vector.broadcast %20 : vector<1x256xf32> to vector<96x256xf32>
    %89 = arith.addf %87, %88 : vector<96x256xf32>
    %cst_40 = arith.constant dense<0.000000e+00> : vector<96xf32>
    %90 = vector.multi_reduction <add>, %89, %cst_40 [1] : vector<96x256xf32> to vector<96xf32>
    %91 = vector.shape_cast %90 : vector<96xf32> to vector<96x1xf32>
    %cst_41 = arith.constant 2.560000e+02 : f32
    %92 = vector.broadcast %cst_41 : f32 to vector<96x1xf32>
    %93 = arith.divf %91, %92 : vector<96x1xf32>
    %94 = vector.broadcast %93 : vector<96x1xf32> to vector<96x256xf32>
    %95 = arith.subf %89, %94 : vector<96x256xf32>
    %96 = arith.mulf %95, %95 : vector<96x256xf32>
    %cst_42 = arith.constant dense<0.000000e+00> : vector<96xf32>
    %97 = vector.multi_reduction <add>, %96, %cst_42 [1] : vector<96x256xf32> to vector<96xf32>
    %98 = vector.shape_cast %97 : vector<96xf32> to vector<96x1xf32>
    %cst_43 = arith.constant 2.560000e+02 : f32
    %99 = vector.broadcast %cst_43 : f32 to vector<96x1xf32>
    %100 = arith.divf %98, %99 : vector<96x1xf32>
    %101 = vector.broadcast %93 : vector<96x1xf32> to vector<96x256xf32>
    %102 = arith.subf %89, %101 : vector<96x256xf32>
    %cst_44 = arith.constant 9.99999974E-6 : f32
    %103 = vector.broadcast %cst_44 : f32 to vector<96x1xf32>
    %104 = arith.addf %100, %103 : vector<96x1xf32>
    %105 = math.rsqrt %104 : vector<96x1xf32>
    %106 = vector.broadcast %105 : vector<96x1xf32> to vector<96x256xf32>
    %107 = arith.mulf %102, %106 : vector<96x256xf32>
    %108 = vector.broadcast %21 : vector<1x256xf32> to vector<96x256xf32>
    %109 = arith.mulf %107, %108 : vector<96x256xf32>
    %110 = vector.broadcast %22 : vector<1x256xf32> to vector<96x256xf32>
    %111 = arith.addf %109, %110 : vector<96x256xf32>
    %112 = arith.truncf %111 : vector<96x256xf32> to vector<96x256xbf16>
    %cst_45 = arith.constant dense<0.000000e+00> : vector<96x1024xf32>
    %113 = tpu.matmul %112, %11, %cst_45 {dimension_numbers = #tpu.dot_dimension_numbers<[1], [0], [0], [1], [0, 0, 1, 1], [], []>} : vector<96x256xbf16>, vector<256x1024xbf16>, vector<96x1024xf32> -> vector<96x1024xf32>
    %114 = vector.broadcast %17 : vector<1x1024xf32> to vector<96x1024xf32>
    %115 = arith.addf %113, %114 : vector<96x1024xf32>
    %116 = arith.mulf %115, %115 : vector<96x1024xf32>
    %117 = arith.mulf %115, %116 : vector<96x1024xf32>
    %cst_46 = arith.constant 4.471500e-02 : f32
    %118 = vector.broadcast %cst_46 : f32 to vector<96x1024xf32>
    %119 = arith.mulf %118, %117 : vector<96x1024xf32>
    %120 = arith.addf %115, %119 : vector<96x1024xf32>
    %cst_47 = arith.constant 0.797884583 : f32
    %121 = vector.broadcast %cst_47 : f32 to vector<96x1024xf32>
    %122 = arith.mulf %121, %120 : vector<96x1024xf32>
    %123 = math.tanh %122 : vector<96x1024xf32>
    %cst_48 = arith.constant 1.000000e+00 : f32
    %124 = vector.broadcast %cst_48 : f32 to vector<96x1024xf32>
    %125 = arith.addf %124, %123 : vector<96x1024xf32>
    %cst_49 = arith.constant 5.000000e-01 : f32
    %126 = vector.broadcast %cst_49 : f32 to vector<96x1024xf32>
    %127 = arith.mulf %126, %125 : vector<96x1024xf32>
    %128 = arith.mulf %115, %127 : vector<96x1024xf32>
    %129 = arith.truncf %128 : vector<96x1024xf32> to vector<96x1024xbf16>
    %cst_50 = arith.constant dense<0.000000e+00> : vector<96x256xf32>
    %130 = tpu.matmul %129, %13, %cst_50 {dimension_numbers = #tpu.dot_dimension_numbers<[1], [0], [0], [1], [0, 0, 1, 1], [], []>} : vector<96x1024xbf16>, vector<1024x256xbf16>, vector<96x256xf32> -> vector<96x256xf32>
    %131 = vector.broadcast %23 : vector<1x256xf32> to vector<96x256xf32>
    %132 = arith.addf %130, %131 : vector<96x256xf32>
    %133 = arith.addf %111, %132 : vector<96x256xf32>
    %cst_51 = arith.constant dense<0.000000e+00> : vector<96xf32>
    %134 = vector.multi_reduction <add>, %133, %cst_51 [1] : vector<96x256xf32> to vector<96xf32>
    %135 = vector.shape_cast %134 : vector<96xf32> to vector<96x1xf32>
    %cst_52 = arith.constant 2.560000e+02 : f32
    %136 = vector.broadcast %cst_52 : f32 to vector<96x1xf32>
    %137 = arith.divf %135, %136 : vector<96x1xf32>
    %138 = vector.broadcast %137 : vector<96x1xf32> to vector<96x256xf32>
    %139 = arith.subf %133, %138 : vector<96x256xf32>
    %140 = arith.mulf %139, %139 : vector<96x256xf32>
    %cst_53 = arith.constant dense<0.000000e+00> : vector<96xf32>
    %141 = vector.multi_reduction <add>, %140, %cst_53 [1] : vector<96x256xf32> to vector<96xf32>
    %142 = vector.shape_cast %141 : vector<96xf32> to vector<96x1xf32>
    %cst_54 = arith.constant 2.560000e+02 : f32
    %143 = vector.broadcast %cst_54 : f32 to vector<96x1xf32>
    %144 = arith.divf %142, %143 : vector<96x1xf32>
    %145 = vector.broadcast %137 : vector<96x1xf32> to vector<96x256xf32>
    %146 = arith.subf %133, %145 : vector<96x256xf32>
    %cst_55 = arith.constant 9.99999974E-6 : f32
    %147 = vector.broadcast %cst_55 : f32 to vector<96x1xf32>
    %148 = arith.addf %144, %147 : vector<96x1xf32>
    %149 = math.rsqrt %148 : vector<96x1xf32>
    %150 = vector.broadcast %149 : vector<96x1xf32> to vector<96x256xf32>
    %151 = arith.mulf %146, %150 : vector<96x256xf32>
    %152 = vector.broadcast %24 : vector<1x256xf32> to vector<96x256xf32>
    %153 = arith.mulf %151, %152 : vector<96x256xf32>
    %154 = vector.broadcast %25 : vector<1x256xf32> to vector<96x256xf32>
    %155 = arith.addf %153, %154 : vector<96x256xf32>
    %156 = vector.shape_cast %155 : vector<96x256xf32> to vector<12x8x256xf32>
    %c0_56 = arith.constant 0 : index
    %c0_57 = arith.constant 0 : index
    %c0_58 = arith.constant 0 : index
    %157 = vector.load %arg12[%c0_56, %c0_57, %c0_58] : memref<12x8x256xf32, #tpu.memory_space<vmem>>, vector<12x8x256xf32>
    tpu.vector_store %arg12[%c0_56, %c0_57, %c0_58], %156 {strides = array<i32>} : memref<12x8x256xf32, #tpu.memory_space<vmem>>, vector<12x8x256xf32>,
    %c1_i32 = arith.constant 1 : i32
    %158 = arith.cmpi eq, %arg1, %c1_i32 : i32
    %159 = arith.extui %158 : i1 to i32
    %c0_i32_59 = arith.constant 0 : i32
    %160 = arith.cmpi ne, %159, %c0_i32_59 : i32
    scf.if %160 {
      %161 = vector.extract_strided_slice %156 {offsets = [0, 0, 0], sizes = [12, 1, 256], strides = [1, 1, 1]} : vector<12x8x256xf32> to vector<12x1x256xf32>
      %162 = vector.shape_cast %161 : vector<12x1x256xf32> to vector<6x2x256xf32>
      %cst_60 = arith.constant dense<0.000000e+00> : vector<6x256xf32>
      %163 = vector.multi_reduction <add>, %162, %cst_60 [1] : vector<6x2x256xf32> to vector<6x256xf32>
      %cst_61 = arith.constant 2.000000e+00 : f32
      %164 = vector.broadcast %cst_61 : f32 to vector<6x256xf32>
      %165 = arith.divf %163, %164 : vector<6x256xf32>
      %166 = arith.mulf %165, %165 : vector<6x256xf32>
      %cst_62 = arith.constant dense<0.000000e+00> : vector<6xf32>
      %167 = vector.multi_reduction <add>, %166, %cst_62 [1] : vector<6x256xf32> to vector<6xf32>
      %168 = vector.shape_cast %167 : vector<6xf32> to vector<6x1xf32>
      %169 = math.sqrt %168 : vector<6x1xf32>
      %cst_63 = arith.constant 9.99999996E-13 : f32
      %170 = vector.broadcast %cst_63 : f32 to vector<6x1xf32>
      %171 = arith.maximumf %169, %170 : vector<6x1xf32>
      %172 = vector.broadcast %171 : vector<6x1xf32> to vector<6x256xf32>
      %173 = arith.divf %165, %172 : vector<6x256xf32>
      %c0_64 = arith.constant 0 : index
      %c0_65 = arith.constant 0 : index
      %c0_66 = arith.constant 0 : index
      %174 = vector.load %arg11[%c0_64, %c0_65, %c0_66] : memref<1x6x256xf32, #tpu.memory_space<vmem>>, vector<1x6x256xf32>
      %175 = vector.shape_cast %174 : vector<1x6x256xf32> to vector<6x256xf32>
      %176 = vector.shape_cast %173 : vector<6x256xf32> to vector<1x6x256xf32>
      tpu.vector_store %arg11[%c0_64, %c0_65, %c0_66], %176 {strides = array<i32>} : memref<1x6x256xf32, #tpu.memory_space<vmem>>, vector<1x6x256xf32>,
    } else {
    }
    return
  }
  func.func @transform_1(%arg0: i32, %arg1: i32) -> (i32, i32, i32) {
    %c0_i32 = arith.constant 0 : i32
    %c0_i32_0 = arith.constant 0 : i32
    %c0_i32_1 = arith.constant 0 : i32
    return %arg0, %c0_i32, %c0_i32_0 : i32, i32, i32
  }
  func.func @transform_2(%arg0: i32, %arg1: i32) -> (i32, i32, i32) {
    %c0_i32 = arith.constant 0 : i32
    %c0_i32_0 = arith.constant 0 : i32
    %c0_i32_1 = arith.constant 0 : i32
    return %arg1, %c0_i32, %c0_i32_0 : i32, i32, i32
  }
  func.func @transform_3(%arg0: i32, %arg1: i32) -> (i32, i32, i32) {
    %c0_i32 = arith.constant 0 : i32
    %c0_i32_0 = arith.constant 0 : i32
    %c0_i32_1 = arith.constant 0 : i32
    return %arg1, %c0_i32, %c0_i32_0 : i32, i32, i32
  }
  func.func @transform_4(%arg0: i32, %arg1: i32) -> (i32, i32, i32) {
    %c0_i32 = arith.constant 0 : i32
    %c0_i32_0 = arith.constant 0 : i32
    %c0_i32_1 = arith.constant 0 : i32
    return %arg1, %c0_i32, %c0_i32_0 : i32, i32, i32
  }
  func.func @transform_5(%arg0: i32, %arg1: i32) -> (i32, i32, i32) {
    %c0_i32 = arith.constant 0 : i32
    %c0_i32_0 = arith.constant 0 : i32
    %c0_i32_1 = arith.constant 0 : i32
    return %arg1, %c0_i32, %c0_i32_0 : i32, i32, i32
  }
  func.func @transform_6(%arg0: i32, %arg1: i32) -> (i32, i32, i32) {
    %c0_i32 = arith.constant 0 : i32
    %c0_i32_0 = arith.constant 0 : i32
    %c0_i32_1 = arith.constant 0 : i32
    return %arg1, %c0_i32, %c0_i32_0 : i32, i32, i32
  }
  func.func @transform_7(%arg0: i32, %arg1: i32) -> (i32, i32, i32) {
    %c0_i32 = arith.constant 0 : i32
    %c0_i32_0 = arith.constant 0 : i32
    %c0_i32_1 = arith.constant 0 : i32
    return %arg1, %c0_i32, %c0_i32_0 : i32, i32, i32
  }
  func.func @transform_8(%arg0: i32, %arg1: i32) -> (i32, i32, i32) {
    %c0_i32 = arith.constant 0 : i32
    %c0_i32_0 = arith.constant 0 : i32
    %c0_i32_1 = arith.constant 0 : i32
    return %arg1, %c0_i32, %c0_i32_0 : i32, i32, i32
  }
  func.func @transform_9(%arg0: i32, %arg1: i32) -> (i32, i32, i32) {
    %c0_i32 = arith.constant 0 : i32
    %c0_i32_0 = arith.constant 0 : i32
    %c0_i32_1 = arith.constant 0 : i32
    return %arg0, %c0_i32, %c0_i32_0 : i32, i32, i32
  }
}

</mosaic_0001>

<llo_original>
// kernel: codebert_triplet_forward.1
$region0: #{codebert_triplet_forward.1}
  #allocation0 [shape = 'u32[]', space=smem, size = 0x4, offset = 0x4, fixed_abs, tag = 'smem constant byte address 0x4 - core index']
  #allocation1 [shape = 'u32[144,128]{1,0:T(1,128)}', space=vmem, size = 0x12000, scoped, tag = 'internal scratch']
  #allocation2 [shape = 'f32[12,8,256]{2,1,0:T(8,128)}', space=vmem, size = 0x18000, scoped, tag = 'scratch operand']
  #allocation3 [shape = 's32[1]{0}', space=sflag, size = 0x4, scoped, tag = 'scratch operand']
  #allocation8 [shape = 's32[]', space=sflag, size = 0x4, offset = 0, fixed_abs, tag = 'sflag constant byte address 0x0 - dummy sync flag']
  %s0 = inlined_call_operand.vmem [shape: f32[12,8,256], index: 0, kind: input, shape index: {}]
  %s1 = inlined_call_operand.vmem [shape: f32[1,12,8], index: 1, kind: input, shape index: {}]
  %s2 = inlined_call_operand.hbm [shape: bf16[2,256,768], index: 2, kind: input, shape index: {}]
  %s3 = inlined_call_operand.vmem [shape: bf16[2,256,256], index: 3, kind: input, shape index: {}]
  %s4 = inlined_call_operand.vmem [shape: bf16[2,256,1024], index: 4, kind: input, shape index: {}]
  %s5 = inlined_call_operand.hbm [shape: bf16[2,1024,256], index: 5, kind: input, shape index: {}]
  %s6 = inlined_call_operand.vmem [shape: f32[2,1,768], index: 6, kind: input, shape index: {}]
  %s7 = inlined_call_operand.vmem [shape: f32[2,1,1024], index: 7, kind: input, shape index: {}]
  %s8 = inlined_call_operand.vmem [shape: f32[2,6,256], index: 8, kind: input, shape index: {}]
  %s9 = inlined_call_operand.vmem [shape: f32[1,6,256], index: 9, kind: output, shape index: {}]
  %s10 = sld [smem:[#allocation0]]
  $region115: #{codebert_triplet_forward.1} parent=0
    _
  %s12 = ssub.s32 1, %s10
  %s13 = scalar_select 0, %s12, %s10
  $region1: #{codebert_triplet_forward.1} parent=0
    #allocation4 [shape = 'u8[786432]{0}', space=vmem, size = 0xc0000, scoped, tag = 'input window, operand 2']
    #allocation5 [shape = 's32[2]{0}', space=sflag, size = 0x8, scoped, tag = 'scoped memory for codebert_triplet_forward.1']
    #allocation6 [shape = 'u8[1048576]{0}', space=vmem, size = 0x100000, scoped, tag = 'input window, operand 5']
    #allocation7 [shape = 's32[2]{0}', space=sflag, size = 0x8, scoped, tag = 'scoped memory for codebert_triplet_forward.1']
    %14 = vsyncpa [#allocation5], 0
    %s15 = scalar_lea.sflag [#allocation5], 1
    %16 = vsyncpa %s15, 0
    %17 = vsyncpa [#allocation7], 0
    %s18 = scalar_lea.sflag [#allocation7], 1
    %19 = vsyncpa %s18, 0
    loop: start=0, step=1, limit=4
    $region2: #{codebert_triplet_forward.1} parent=1 // loop_pre_header
      _
    $region3: #{codebert_triplet_forward.1} parent=1 // loop_header
      %s21 = sphi 0, %s25
      %p22 = scmp.ge.s32.totalorder %s21, 4
      %s28 = sphi 0, %s40
      %s29 = sphi 0, %s36
      %s30 = sphi 0, %s28
      %s31 = sphi 0, %s29
      %s32 = sphi 0, %s30
      %s33 = sphi 0, %s31
      %s43 = sphi 0, %s45
      %s46 = sphi 0, %s43
      %s47 = sphi 0, %s46
      %s63 = sphi 0, %s47
      %s69 = sphi 0, %s71
      %s72 = sphi 0, %s69
      %s73 = sphi 0, %s72
      %s89 = sphi 0, %s73
      %s95 = sphi 0, %s97
      %s98 = sphi 0, %s95
      %s99 = sphi 0, %s98
      %s115 = sphi 0, %s99
      %s121 = sphi 0, %s123
      %s124 = sphi 0, %s121
      %s125 = sphi 0, %s124
      %s141 = sphi 0, %s125
      %s147 = sphi 0, %s149
      %s150 = sphi 0, %s147
      %s151 = sphi 0, %s150
      %s167 = sphi 0, %s151
      %s173 = sphi 0, %s175
      %s176 = sphi 0, %s173
      %s177 = sphi 0, %s176
      %s193 = sphi 0, %s177
      %s199 = sphi 0, %s201
      %s202 = sphi 0, %s199
      %s203 = sphi 0, %s202
      %s219 = sphi 0, %s203
      %s225 = sphi 0, %s227
      %s228 = sphi 0, %s225
      %s229 = sphi 0, %s228
      %s245 = sphi 0, %s229
      %s251 = sphi 0, %s253
      %s254 = sphi 0, %s251
      %s255 = sphi 0, %s254
      %s271 = sphi 0, %s255
    $region4: #{codebert_triplet_forward.1} parent=1 // loop_header_branch
      %24 = sbr.rel (%p22) target = $region8
    $region5: #{codebert_triplet_forward.1} parent=1 // loop_body
      %s26 = ssub.s32 %s21, 1
      %s27 = ssub.s32 %s21, 2
      %s34 = sadd.s32 1, %s29
      %p35 = scmp.ge.s32.totalorder %s34, 2
      %s36 = scalar_select %p35, 0, %s34
      %s37 = sadd.s32 1, %s28
      %s38 = scalar_select %p35, %s37, %s28
      %p39 = scmp.ge.s32.totalorder %s38, 1
      %s40 = scalar_select %p39, 0, %s38
      %s41 = ssub.s32 %s28, %s40
      %p42 = scmp.eq.s32.totalorder %s41, 0
      %s44 = sadd.s32 %s43, 1
      %s45 = scalar_select %p42, %s43, %s44
      %p48 = pneg %p42
      %p49 = scmp.eq.s32.totalorder %s21, 1
      %p50 = por %p48, %p49
      %p51 = scmp.ne.s32.totalorder %s43, %s46
      %p52 = scmp.eq.s32.totalorder %s21, 0
      %p53 = por %p51, %p52
      %p54 = scmp.ne.s32.totalorder %s43, %s46
      %p55 = scmp.eq.s32.totalorder %s26, 1
      %p56 = por %p54, %p55
      %p57 = scmp.ne.s32.totalorder %s46, %s47
      %p58 = scmp.eq.s32.totalorder %s26, 0
      %p59 = por %p57, %p58
      %p60 = scmp.ne.s32.totalorder %s46, %s47
      %p61 = scmp.eq.s32.totalorder %s27, 1
      %p62 = por %p60, %p61
      %p64 = scmp.ne.s32.totalorder %s47, %s63
      %p65 = scmp.eq.s32.totalorder %s27, 0
      %p66 = por %p64, %p65
      %s67 = ssub.s32 %s29, %s36
      %p68 = scmp.eq.s32.totalorder %s67, 0
      %s70 = sadd.s32 %s69, 1
      %s71 = scalar_select %p68, %s69, %s70
      %p74 = pneg %p68
      %p75 = scmp.eq.s32.totalorder %s21, 1
      %p76 = por %p74, %p75
      %p77 = scmp.ne.s32.totalorder %s69, %s72
      %p78 = scmp.eq.s32.totalorder %s21, 0
      %p79 = por %p77, %p78
      %p80 = scmp.ne.s32.totalorder %s69, %s72
      %p81 = scmp.eq.s32.totalorder %s26, 1
      %p82 = por %p80, %p81
      %p83 = scmp.ne.s32.totalorder %s72, %s73
      %p84 = scmp.eq.s32.totalorder %s26, 0
      %p85 = por %p83, %p84
      %p86 = scmp.ne.s32.totalorder %s72, %s73
      %p87 = scmp.eq.s32.totalorder %s27, 1
      %p88 = por %p86, %p87
      %p90 = scmp.ne.s32.totalorder %s73, %s89
      %p91 = scmp.eq.s32.totalorder %s27, 0
      %p92 = por %p90, %p91
      %s93 = ssub.s32 %s29, %s36
      %p94 = scmp.eq.s32.totalorder %s93, 0
      %s96 = sadd.s32 %s95, 1
      %s97 = scalar_select %p94, %s95, %s96
      %p100 = pneg %p94
      %p101 = scmp.eq.s32.totalorder %s21, 1
      %p102 = por %p100, %p101
      %p103 = scmp.ne.s32.totalorder %s95, %s98
      %p104 = scmp.eq.s32.totalorder %s21, 0
      %p105 = por %p103, %p104
      %p106 = scmp.ne.s32.totalorder %s95, %s98
      %p107 = scmp.eq.s32.totalorder %s26, 1
      %p108 = por %p106, %p107
      %p109 = scmp.ne.s32.totalorder %s98, %s99
      %p110 = scmp.eq.s32.totalorder %s26, 0
      %p111 = por %p109, %p110
      %p112 = scmp.ne.s32.totalorder %s98, %s99
      %p113 = scmp.eq.s32.totalorder %s27, 1
      %p114 = por %p112, %p113
      %p116 = scmp.ne.s32.totalorder %s99, %s115
      %p117 = scmp.eq.s32.totalorder %s27, 0
      %p118 = por %p116, %p117
      %s119 = ssub.s32 %s29, %s36
      %p120 = scmp.eq.s32.totalorder %s119, 0
      %s122 = sadd.s32 %s121, 1
      %s123 = scalar_select %p120, %s121, %s122
      %p126 = pneg %p120
      %p127 = scmp.eq.s32.totalorder %s21, 1
      %p128 = por %p126, %p127
      %p129 = scmp.ne.s32.totalorder %s121, %s124
      %p130 = scmp.eq.s32.totalorder %s21, 0
      %p131 = por %p129, %p130
      %p132 = scmp.ne.s32.totalorder %s121, %s124
      %p133 = scmp.eq.s32.totalorder %s26, 1
      %p134 = por %p132, %p133
      %p135 = scmp.ne.s32.totalorder %s124, %s125
      %p136 = scmp.eq.s32.totalorder %s26, 0
      %p137 = por %p135, %p136
      %p138 = scmp.ne.s32.totalorder %s124, %s125
      %p139 = scmp.eq.s32.totalorder %s27, 1
      %p140 = por %p138, %p139
      %p142 = scmp.ne.s32.totalorder %s125, %s141
      %p143 = scmp.eq.s32.totalorder %s27, 0
      %p144 = por %p142, %p143
      %s145 = ssub.s32 %s29, %s36
      %p146 = scmp.eq.s32.totalorder %s145, 0
      %s148 = sadd.s32 %s147, 1
      %s149 = scalar_select %p146, %s147, %s148
      %p152 = pneg %p146
      %p153 = scmp.eq.s32.totalorder %s21, 1
      %p154 = por %p152, %p153
      %p155 = scmp.ne.s32.totalorder %s147, %s150
      %p156 = scmp.eq.s32.totalorder %s21, 0
      %p157 = por %p155, %p156
      %p158 = scmp.ne.s32.totalorder %s147, %s150
      %p159 = scmp.eq.s32.totalorder %s26, 1
      %p160 = por %p158, %p159
      %p161 = scmp.ne.s32.totalorder %s150, %s151
      %p162 = scmp.eq.s32.totalorder %s26, 0
      %p163 = por %p161, %p162
      %p164 = scmp.ne.s32.totalorder %s150, %s151
      %p165 = scmp.eq.s32.totalorder %s27, 1
      %p166 = por %p164, %p165
      %p168 = scmp.ne.s32.totalorder %s151, %s167
      %p169 = scmp.eq.s32.totalorder %s27, 0
      %p170 = por %p168, %p169
      %s171 = ssub.s32 %s29, %s36
      %p172 = scmp.eq.s32.totalorder %s171, 0
      %s174 = sadd.s32 %s173, 1
      %s175 = scalar_select %p172, %s173, %s174
      %p178 = pneg %p172
      %p179 = scmp.eq.s32.totalorder %s21, 1
      %p180 = por %p178, %p179
      %p181 = scmp.ne.s32.totalorder %s173, %s176
      %p182 = scmp.eq.s32.totalorder %s21, 0
      %p183 = por %p181, %p182
      %p184 = scmp.ne.s32.totalorder %s173, %s176
      %p185 = scmp.eq.s32.totalorder %s26, 1
      %p186 = por %p184, %p185
      %p187 = scmp.ne.s32.totalorder %s176, %s177
      %p188 = scmp.eq.s32.totalorder %s26, 0
      %p189 = por %p187, %p188
      %p190 = scmp.ne.s32.totalorder %s176, %s177
      %p191 = scmp.eq.s32.totalorder %s27, 1
      %p192 = por %p190, %p191
      %p194 = scmp.ne.s32.totalorder %s177, %s193
      %p195 = scmp.eq.s32.totalorder %s27, 0
      %p196 = por %p194, %p195
      %s197 = ssub.s32 %s29, %s36
      %p198 = scmp.eq.s32.totalorder %s197, 0
      %s200 = sadd.s32 %s199, 1
      %s201 = scalar_select %p198, %s199, %s200
      %p204 = pneg %p198
      %p205 = scmp.eq.s32.totalorder %s21, 1
      %p206 = por %p204, %p205
      %p207 = scmp.ne.s32.totalorder %s199, %s202
      %p208 = scmp.eq.s32.totalorder %s21, 0
      %p209 = por %p207, %p208
      %p210 = scmp.ne.s32.totalorder %s199, %s202
      %p211 = scmp.eq.s32.totalorder %s26, 1
      %p212 = por %p210, %p211
      %p213 = scmp.ne.s32.totalorder %s202, %s203
      %p214 = scmp.eq.s32.totalorder %s26, 0
      %p215 = por %p213, %p214
      %p216 = scmp.ne.s32.totalorder %s202, %s203
      %p217 = scmp.eq.s32.totalorder %s27, 1
      %p218 = por %p216, %p217
      %p220 = scmp.ne.s32.totalorder %s203, %s219
      %p221 = scmp.eq.s32.totalorder %s27, 0
      %p222 = por %p220, %p221
      %s223 = ssub.s32 %s29, %s36
      %p224 = scmp.eq.s32.totalorder %s223, 0
      %s226 = sadd.s32 %s225, 1
      %s227 = scalar_select %p224, %s225, %s226
      %p230 = pneg %p224
      %p231 = scmp.eq.s32.totalorder %s21, 1
      %p232 = por %p230, %p231
      %p233 = scmp.ne.s32.totalorder %s225, %s228
      %p234 = scmp.eq.s32.totalorder %s21, 0
      %p235 = por %p233, %p234
      %p236 = scmp.ne.s32.totalorder %s225, %s228
      %p237 = scmp.eq.s32.totalorder %s26, 1
      %p238 = por %p236, %p237
      %p239 = scmp.ne.s32.totalorder %s228, %s229
      %p240 = scmp.eq.s32.totalorder %s26, 0
      %p241 = por %p239, %p240
      %p242 = scmp.ne.s32.totalorder %s228, %s229
      %p243 = scmp.eq.s32.totalorder %s27, 1
      %p244 = por %p242, %p243
      %p246 = scmp.ne.s32.totalorder %s229, %s245
      %p247 = scmp.eq.s32.totalorder %s27, 0
      %p248 = por %p246, %p247
      %s249 = ssub.s32 %s28, %s40
      %p250 = scmp.eq.s32.totalorder %s249, 0
      %s252 = sadd.s32 %s251, 1
      %s253 = scalar_select %p250, %s251, %s252
      %p256 = pneg %p250
      %p257 = scmp.eq.s32.totalorder %s21, 1
      %p258 = por %p256, %p257
      %p259 = scmp.ne.s32.totalorder %s251, %s254
      %p260 = scmp.eq.s32.totalorder %s21, 0
      %p261 = por %p259, %p260
      %p262 = scmp.ne.s32.totalorder %s251, %s254
      %p263 = scmp.eq.s32.totalorder %s26, 1
      %p264 = por %p262, %p263
      %p265 = scmp.ne.s32.totalorder %s254, %s255
      %p266 = scmp.eq.s32.totalorder %s26, 0
      %p267 = por %p265, %p266
      %p268 = scmp.ne.s32.totalorder %s254, %s255
      %p269 = scmp.eq.s32.totalorder %s27, 1
      %p270 = por %p268, %p269
      %p272 = scmp.ne.s32.totalorder %s255, %s271
      %p273 = scmp.eq.s32.totalorder %s27, 0
      %p274 = por %p272, %p273
      %p275 = scmp.le.s32.totalorder 1, %s21
      %p276 = scmp.lt.s32.totalorder %s21, 3
      %p277 = pnand %p275, %p276
      %p278 = pneg %p277
      // Predicated region
      $region9: #{codebert_triplet_forward.1} parent=5 // pred_check
        _
      $region10: #{codebert_triplet_forward.1} parent=5 // pred_check_branch
        %280 = sbr.rel (%p277) target = $region12
      $region11: #{codebert_triplet_forward.1} parent=5 // pred_region
        %s281 = ssub.s32 %s21, 1
        // Predicated region
        $region13: #{codebert_triplet_forward.1} parent=11 // pred_check
          %p282 = pneg %p59
        $region14: #{codebert_triplet_forward.1} parent=11 // pred_check_branch
          %284 = sbr.rel (%p282) target = $region16
        $region15: #{codebert_triplet_forward.1} parent=11 // pred_region
          %p285 = scmp.lt.s32.totalorder %s30, 0
          %s286 = scalar_select %p285, %s30, 0
          %s287 = smul.addr %s286, 2
          %s288 = smul.addr %s287, 8
          %s289 = scalar_lea.vmem %s1, %s288
        $region16: #{codebert_triplet_forward.1} parent=11 // pred_fallthru
          _
      $region12: #{codebert_triplet_forward.1} parent=5 // pred_fallthru
        _
      %p290 = scmp.lt.s32.totalorder %s21, 2
      // Predicated region
      $region17: #{codebert_triplet_forward.1} parent=5 // pred_check
        %p291 = pneg %p290
      $region18: #{codebert_triplet_forward.1} parent=5 // pred_check_branch
        %293 = sbr.rel (%p291) target = $region20
      $region19: #{codebert_triplet_forward.1} parent=5 // pred_region
        // Predicated region
        $region21: #{codebert_triplet_forward.1} parent=19 // pred_check
          %p294 = pneg %p79
        $region22: #{codebert_triplet_forward.1} parent=19 // pred_check_branch
          %296 = sbr.rel (%p294) target = $region24
        $region23: #{codebert_triplet_forward.1} parent=19 // pred_region
          %s297 = sand.u32 %s69, 1
          %s298 = scalar_lea.sflag [#allocation5], %s297
          %s299 = sand.u32 %s69, 1
          %s300 = smul.addr %s299, 768
          %s301 = scalar_lea.vmem [#allocation4], %s300
          %s303 = ssub.s32 12288, 12288
          %304 = vsyncadd %s298, %s303
          %s305 = smul.addr %s29, 192
          %s306 = smul.addr %s305, 64
          %s307 = scalar_lea.hbm %s2, %s306
          %s308 = sshll.u32 %s301, 4
          %s309 = int_to_ptr.vmem [resolvable:$true] %s308
          %314 = dma.hbm_to_vmem [thread:$0]  %s307, 12288, %s309, %s298, 384, 384, 24
        $region24: #{codebert_triplet_forward.1} parent=19 // pred_fallthru
          _
        // Predicated region
        $region25: #{codebert_triplet_forward.1} parent=19 // pred_check
          %p315 = pneg %p105
        $region26: #{codebert_triplet_forward.1} parent=19 // pred_check_branch
          %317 = sbr.rel (%p315) target = $region28
        $region27: #{codebert_triplet_forward.1} parent=19 // pred_region
          %p318 = scmp.lt.s32.totalorder %s29, 1
          %s319 = scalar_select %p318, %s29, 1
          %s320 = smul.addr %s319, 64
          %s321 = smul.addr %s320, 4
          %s322 = scalar_lea.vmem %s3, %s321
        $region28: #{codebert_triplet_forward.1} parent=19 // pred_fallthru
          _
        // Predicated region
        $region29: #{codebert_triplet_forward.1} parent=19 // pred_check
          %p323 = pneg %p131
        $region30: #{codebert_triplet_forward.1} parent=19 // pred_check_branch
          %325 = sbr.rel (%p323) target = $region32
        $region31: #{codebert_triplet_forward.1} parent=19 // pred_region
          %p326 = scmp.lt.s32.totalorder %s29, 1
          %s327 = scalar_select %p326, %s29, 1
          %s328 = smul.addr %s327, 256
          %s329 = smul.addr %s328, 4
          %s330 = scalar_lea.vmem %s4, %s329
        $region32: #{codebert_triplet_forward.1} parent=19 // pred_fallthru
          _
        // Predicated region
        $region33: #{codebert_triplet_forward.1} parent=19 // pred_check
          %p331 = pneg %p157
        $region34: #{codebert_triplet_forward.1} parent=19 // pred_check_branch
          %333 = sbr.rel (%p331) target = $region36
        $region35: #{codebert_triplet_forward.1} parent=19 // pred_region
          %s334 = sand.u32 %s147, 1
          %s335 = scalar_lea.sflag [#allocation7], %s334
          %s336 = sand.u32 %s147, 1
          %s337 = smul.addr %s336, 1024
          %s338 = scalar_lea.vmem [#allocation6], %s337
          %s340 = ssub.s32 16384, 16384
          %341 = vsyncadd %s335, %s340
          %s342 = smul.addr %s29, 256
          %s343 = smul.addr %s342, 64
          %s344 = scalar_lea.hbm %s5, %s343
          %s345 = sshll.u32 %s338, 4
          %s346 = int_to_ptr.vmem [resolvable:$true] %s345
          %351 = dma.hbm_to_vmem [thread:$0]  %s344, 16384, %s346, %s335, 128, 128, 8
        $region36: #{codebert_triplet_forward.1} parent=19 // pred_fallthru
          _
        // Predicated region
        $region37: #{codebert_triplet_forward.1} parent=19 // pred_check
          %p352 = pneg %p183
        $region38: #{codebert_triplet_forward.1} parent=19 // pred_check_branch
          %354 = sbr.rel (%p352) target = $region40
        $region39: #{codebert_triplet_forward.1} parent=19 // pred_region
          %p355 = scmp.lt.s32.totalorder %s29, 1
          %s356 = scalar_select %p355, %s29, 1
          %s357 = smul.addr %s356, 6
          %s358 = scalar_lea.vmem %s6, %s357
        $region40: #{codebert_triplet_forward.1} parent=19 // pred_fallthru
          _
        // Predicated region
        $region41: #{codebert_triplet_forward.1} parent=19 // pred_check
          %p359 = pneg %p209
        $region42: #{codebert_triplet_forward.1} parent=19 // pred_check_branch
          %361 = sbr.rel (%p359) target = $region44
        $region43: #{codebert_triplet_forward.1} parent=19 // pred_region
          %p362 = scmp.lt.s32.totalorder %s29, 1
          %s363 = scalar_select %p362, %s29, 1
          %s364 = smul.addr %s363, 8
          %s365 = scalar_lea.vmem %s7, %s364
        $region44: #{codebert_triplet_forward.1} parent=19 // pred_fallthru
          _
        // Predicated region
        $region45: #{codebert_triplet_forward.1} parent=19 // pred_check
          %p366 = pneg %p235
        $region46: #{codebert_triplet_forward.1} parent=19 // pred_check_branch
          %368 = sbr.rel (%p366) target = $region48
        $region47: #{codebert_triplet_forward.1} parent=19 // pred_region
          %p369 = scmp.lt.s32.totalorder %s29, 1
          %s370 = scalar_select %p369, %s29, 1
          %s371 = smul.addr %s370, 2
          %s372 = smul.addr %s371, 8
          %s373 = scalar_lea.vmem %s8, %s372
        $region48: #{codebert_triplet_forward.1} parent=19 // pred_fallthru
          _
      $region20: #{codebert_triplet_forward.1} parent=5 // pred_fallthru
        _
      %p374 = scmp.le.s32.totalorder 1, %s21
      %p375 = scmp.lt.s32.totalorder %s21, 3
      %p376 = pnand %p374, %p375
      %p377 = pneg %p376
      // Predicated region
      $region49: #{codebert_triplet_forward.1} parent=5 // pred_check
        _
      $region50: #{codebert_triplet_forward.1} parent=5 // pred_check_branch
        %379 = sbr.rel (%p376) target = $region52
      $region51: #{codebert_triplet_forward.1} parent=5 // pred_region
        %s380 = ssub.s32 %s21, 1
        %s381 = sand.u32 %s72, 1
        %s382 = scalar_lea.sflag [#allocation5], %s381
        %s383 = sand.u32 %s72, 1
        %s384 = smul.addr %s383, 768
        %s385 = scalar_lea.vmem [#allocation4], %s384
        // Predicated region
        $region53: #{codebert_triplet_forward.1} parent=51 // pred_check
          %p386 = pneg %p85
        $region54: #{codebert_triplet_forward.1} parent=51 // pred_check_branch
          %388 = sbr.rel (%p386) target = $region56
        $region55: #{codebert_triplet_forward.1} parent=51 // pred_region
          %389 = dma.done %s382, 12288
        $region56: #{codebert_triplet_forward.1} parent=51 // pred_fallthru
          _
        %s390 = sand.u32 %s150, 1
        %s391 = scalar_lea.sflag [#allocation7], %s390
        %s392 = sand.u32 %s150, 1
        %s393 = smul.addr %s392, 1024
        %s394 = scalar_lea.vmem [#allocation6], %s393
        // Predicated region
        $region57: #{codebert_triplet_forward.1} parent=51 // pred_check
          %p395 = pneg %p163
        $region58: #{codebert_triplet_forward.1} parent=51 // pred_check_branch
          %397 = sbr.rel (%p395) target = $region60
        $region59: #{codebert_triplet_forward.1} parent=51 // pred_region
          %398 = dma.done %s391, 16384
        $region60: #{codebert_triplet_forward.1} parent=51 // pred_fallthru
          _
        %p399 = scmp.lt.s32.totalorder %s30, 0
        %s400 = scalar_select %p399, %s30, 0
        %s401 = smul.addr %s400, 2
        %s402 = smul.addr %s401, 8
        %s403 = scalar_lea.vmem %s1, %s402
        %p404 = pneg %p59
        %p405 = pneg %p56
        %s406 = sand.u32 %s72, 1
        %s407 = scalar_lea.sflag [#allocation5], %s406
        %s408 = sand.u32 %s72, 1
        %s409 = smul.addr %s408, 768
        %s410 = scalar_lea.vmem [#allocation4], %s409
        %p411 = pneg %p85
        %p412 = pneg %p82
        %p413 = scmp.lt.s32.totalorder %s31, 1
        %s414 = scalar_select %p413, %s31, 1
        %s415 = smul.addr %s414, 64
        %s416 = smul.addr %s415, 4
        %s417 = scalar_lea.vmem %s3, %s416
        %p418 = pneg %p111
        %p419 = pneg %p108
        %p420 = scmp.lt.s32.totalorder %s31, 1
        %s421 = scalar_select %p420, %s31, 1
        %s422 = smul.addr %s421, 256
        %s423 = smul.addr %s422, 4
        %s424 = scalar_lea.vmem %s4, %s423
        %p425 = pneg %p137
        %p426 = pneg %p134
        %s427 = sand.u32 %s150, 1
        %s428 = scalar_lea.sflag [#allocation7], %s427
        %s429 = sand.u32 %s150, 1
        %s430 = smul.addr %s429, 1024
        %s431 = scalar_lea.vmem [#allocation6], %s430
        %p432 = pneg %p163
        %p433 = pneg %p160
        %p434 = scmp.lt.s32.totalorder %s31, 1
        %s435 = scalar_select %p434, %s31, 1
        %s436 = smul.addr %s435, 6
        %s437 = scalar_lea.vmem %s6, %s436
        %p438 = pneg %p189
        %p439 = pneg %p186
        %p440 = scmp.lt.s32.totalorder %s31, 1
        %s441 = scalar_select %p440, %s31, 1
        %s442 = smul.addr %s441, 8
        %s443 = scalar_lea.vmem %s7, %s442
        %p444 = pneg %p215
        %p445 = pneg %p212
        %p446 = scmp.lt.s32.totalorder %s31, 1
        %s447 = scalar_select %p446, %s31, 1
        %s448 = smul.addr %s447, 2
        %s449 = smul.addr %s448, 8
        %s450 = scalar_lea.vmem %s8, %s449
        %p451 = pneg %p241
        %p452 = pneg %p238
        %p453 = pneg %p267
        %p454 = pneg %p264
        %p455 = scmp.lt.s32.totalorder %s30, 0
        %s456 = scalar_select %p455, %s30, 0
        %s457 = smul.addr %s456, 2
        %s458 = smul.addr %s457, 8
        %s459 = scalar_lea.vmem %s9, %s458
        %p460 = scmp.lt.s32.totalorder %s30, 0
        %s461 = scalar_select %p460, %s30, 0
        %s462 = smul.addr %s461, 2
        %s463 = smul.addr %s462, 8
        %s464 = scalar_lea.vmem %s1, %s463
        %p465 = scmp.lt.s32.totalorder %s31, 1
        %s466 = scalar_select %p465, %s31, 1
        %s467 = smul.addr %s466, 64
        %s468 = smul.addr %s467, 4
        %s469 = scalar_lea.vmem %s3, %s468
        %p470 = scmp.lt.s32.totalorder %s31, 1
        %s471 = scalar_select %p470, %s31, 1
        %s472 = smul.addr %s471, 256
        %s473 = smul.addr %s472, 4
        %s474 = scalar_lea.vmem %s4, %s473
        %p475 = scmp.lt.s32.totalorder %s31, 1
        %s476 = scalar_select %p475, %s31, 1
        %s477 = smul.addr %s476, 6
        %s478 = scalar_lea.vmem %s6, %s477
        %p479 = scmp.lt.s32.totalorder %s31, 1
        %s480 = scalar_select %p479, %s31, 1
        %s481 = smul.addr %s480, 8
        %s482 = scalar_lea.vmem %s7, %s481
        %p483 = scmp.lt.s32.totalorder %s31, 1
        %s484 = scalar_select %p483, %s31, 1
        %s485 = smul.addr %s484, 2
        %s486 = smul.addr %s485, 8
        %s487 = scalar_lea.vmem %s8, %s486
        %p488 = scmp.lt.s32.totalorder %s30, 0
        %s489 = scalar_select %p488, %s30, 0
        %s490 = smul.addr %s489, 2
        %s491 = smul.addr %s490, 8
        %s492 = scalar_lea.vmem %s9, %s491
        %p494 = scmp.eq.s32.totalorder %s31, 0
        // Predicated region
        $region61: #{codebert_triplet_forward.1} parent=51 // pred_check
          %p495 = pneg %p494
        $region62: #{codebert_triplet_forward.1} parent=51 // pred_check_branch
          %497 = sbr.rel (%p495) target = $region64
        $region63: #{codebert_triplet_forward.1} parent=51 // pred_region
          %s498 = smul.u32 %s30, 12
          %s499 = smul.u32 %s498, 2
          %s500 = smul.addr %s499, 8
          %s501 = scalar_lea.vmem %s0, %s500
          %p503 = scmp.lt.u32.totalorder 192, 8
          %p504 = pneg %p503
          // Predicated region
          $region65: #{codebert_triplet_forward.1} parent=63 // pred_check
            _
          $region66: #{codebert_triplet_forward.1} parent=63 // pred_check_branch
            %506 = sbr.rel (%p503) target = $region68
          $region67: #{codebert_triplet_forward.1} parent=63 // pred_region
            %s521 = sand.u32 192, 7
            %p522 = scmp.eq.s32.totalorder %s521, 0
            // Predicated region
            $region80: #{codebert_triplet_forward.1} parent=67 // pred_check
              %p523 = pneg %p522
            $region81: #{codebert_triplet_forward.1} parent=67 // pred_check_branch
              %525 = sbr.rel (%p523) target = $region83
            $region82: #{codebert_triplet_forward.1} parent=67 // pred_region
              loop: start=0, step=1, limit=1
              $region84: #{codebert_triplet_forward.1} parent=82 // loop_pre_header
                _
              $region85: #{codebert_triplet_forward.1} parent=82 // loop_header
                %s527 = sphi 0, %s531
                %p528 = scmp.ge.s32.totalorder %s527, 1
                %s532 = sphi %s501, %s501
                %s533 = sphi [#allocation2], [#allocation2]
              $region86: #{codebert_triplet_forward.1} parent=82 // loop_header_branch
                %530 = sbr.rel (%p528) target = $region90
              $region87: #{codebert_triplet_forward.1} parent=82 // loop_body
                %v534 = vld [vmem:[%s532] sm:$0xff]
                %535 = vst [vmem:[%s533] sm:$0xff] %v534
                %v536 = vld [vmem:[%s532 + $0x8] sm:$0xff]
                %537 = vst [vmem:[%s533 + $0x8] sm:$0xff] %v536
                %v538 = vld [vmem:[%s532 + $0x10] sm:$0xff]
                %539 = vst [vmem:[%s533 + $0x10] sm:$0xff] %v538
                %v540 = vld [vmem:[%s532 + $0x18] sm:$0xff]
                %541 = vst [vmem:[%s533 + $0x18] sm:$0xff] %v540
                %v542 = vld [vmem:[%s532 + $0x20] sm:$0xff]
                %543 = vst [vmem:[%s533 + $0x20] sm:$0xff] %v542
                %v544 = vld [vmem:[%s532 + $0x28] sm:$0xff]
                %545 = vst [vmem:[%s533 + $0x28] sm:$0xff] %v544
                %v546 = vld [vmem:[%s532 + $0x30] sm:$0xff]
                %547 = vst [vmem:[%s533 + $0x30] sm:$0xff] %v546
                %v548 = vld [vmem:[%s532 + $0x38] sm:$0xff]
                %549 = vst [vmem:[%s533 + $0x38] sm:$0xff] %v548
                %v550 = vld [vmem:[%s532 + $0x40] sm:$0xff]
                %551 = vst [vmem:[%s533 + $0x40] sm:$0xff] %v550
                %v552 = vld [vmem:[%s532 + $0x48] sm:$0xff]
                %553 = vst [vmem:[%s533 + $0x48] sm:$0xff] %v552
                %v554 = vld [vmem:[%s532 + $0x50] sm:$0xff]
                %555 = vst [vmem:[%s533 + $0x50] sm:$0xff] %v554
                %v556 = vld [vmem:[%s532 + $0x58] sm:$0xff]
                %557 = vst [vmem:[%s533 + $0x58] sm:$0xff] %v556
                %v558 = vld [vmem:[%s532 + $0x60] sm:$0xff]
                %559 = vst [vmem:[%s533 + $0x60] sm:$0xff] %v558
                %v560 = vld [vmem:[%s532 + $0x68] sm:$0xff]
                %561 = vst [vmem:[%s533 + $0x68] sm:$0xff] %v560
                %v562 = vld [vmem:[%s532 + $0x70] sm:$0xff]
                %563 = vst [vmem:[%s533 + $0x70] sm:$0xff] %v562
                %v564 = vld [vmem:[%s532 + $0x78] sm:$0xff]
                %565 = vst [vmem:[%s533 + $0x78] sm:$0xff] %v564
                %v566 = vld [vmem:[%s532 + $0x80] sm:$0xff]
                %567 = vst [vmem:[%s533 + $0x80] sm:$0xff] %v566
                %v568 = vld [vmem:[%s532 + $0x88] sm:$0xff]
                %569 = vst [vmem:[%s533 + $0x88] sm:$0xff] %v568
                %v570 = vld [vmem:[%s532 + $0x90] sm:$0xff]
                %571 = vst [vmem:[%s533 + $0x90] sm:$0xff] %v570
                %v572 = vld [vmem:[%s532 + $0x98] sm:$0xff]
                %573 = vst [vmem:[%s533 + $0x98] sm:$0xff] %v572
                %v574 = vld [vmem:[%s532 + $0xa0] sm:$0xff]
                %575 = vst [vmem:[%s533 + $0xa0] sm:$0xff] %v574
                %v576 = vld [vmem:[%s532 + $0xa8] sm:$0xff]
                %577 = vst [vmem:[%s533 + $0xa8] sm:$0xff] %v576
                %v578 = vld [vmem:[%s532 + $0xb0] sm:$0xff]
                %579 = vst [vmem:[%s533 + $0xb0] sm:$0xff] %v578
                %v580 = vld [vmem:[%s532 + $0xb8] sm:$0xff]
                %581 = vst [vmem:[%s533 + $0xb8] sm:$0xff] %v580
              $region88: #{codebert_triplet_forward.1} parent=82 // loop_footer
                %s531 = sadd.s32 1, %s527
              $region89: #{codebert_triplet_forward.1} parent=82 // loop_footer_branch
                %526 = sbr.rel target = $region85
              $region90: #{codebert_triplet_forward.1} parent=82 // loop_exit
                _
            $region83: #{codebert_triplet_forward.1} parent=67 // pred_fallthru
              _
            %p582 = pneg %p522
            // Predicated region
            $region91: #{codebert_triplet_forward.1} parent=67 // pred_check
              _
            $region92: #{codebert_triplet_forward.1} parent=67 // pred_check_branch
              %584 = sbr.rel (%p522) target = $region94
            $region93: #{codebert_triplet_forward.1} parent=67 // pred_region
              %s585 = sand.u32 192, 7
            $region94: #{codebert_triplet_forward.1} parent=67 // pred_fallthru
              _
          $region68: #{codebert_triplet_forward.1} parent=63 // pred_fallthru
            _
          // Predicated region
          $region69: #{codebert_triplet_forward.1} parent=63 // pred_check
            %p507 = pneg %p503
          $region70: #{codebert_triplet_forward.1} parent=63 // pred_check_branch
            %509 = sbr.rel (%p507) target = $region72
          $region71: #{codebert_triplet_forward.1} parent=63 // pred_region
            %s510 = sshllo.u32 0, 192
            loop: start=0, step=1, limit=1
            $region73: #{codebert_triplet_forward.1} parent=71 // loop_pre_header
              _
            $region74: #{codebert_triplet_forward.1} parent=71 // loop_header
              %s512 = sphi 0, %s516
              %p513 = scmp.ge.s32.totalorder %s512, 1
              %s517 = sphi %s501, %s501
              %s518 = sphi [#allocation2], [#allocation2]
            $region75: #{codebert_triplet_forward.1} parent=71 // loop_header_branch
              %515 = sbr.rel (%p513) target = $region79
            $region76: #{codebert_triplet_forward.1} parent=71 // loop_body
              %v519 = vld [vmem:[%s517] sm:%s510]
              %520 = vst [vmem:[%s518] sm:%s510] %v519
            $region77: #{codebert_triplet_forward.1} parent=71 // loop_footer
              %s516 = sadd.s32 1, %s512
            $region78: #{codebert_triplet_forward.1} parent=71 // loop_footer_branch
              %511 = sbr.rel target = $region74
            $region79: #{codebert_triplet_forward.1} parent=71 // loop_exit
              _
          $region72: #{codebert_triplet_forward.1} parent=63 // pred_fallthru
            _
          // Predicated region
          $region95: #{codebert_triplet_forward.1} parent=63 // pred_check
            _
          $region96: #{codebert_triplet_forward.1} parent=63 // pred_check_branch
            %588 = sbr.rel (0) target = $region98
          $region97: #{codebert_triplet_forward.1} parent=63 // pred_region
            %589 = vsyncadd [#allocation3], 3072
          $region98: #{codebert_triplet_forward.1} parent=63 // pred_fallthru
            _
          %s590 = smul.u32 8, 12
          %s591 = smul.u32 %s590, 1
          %s592 = smul.u32 %s591, 2
          %s593 = sshll.u32 %s592, 4
          %594 = dma.done [#allocation3], %s593
        $region64: #{codebert_triplet_forward.1} parent=51 // pred_fallthru
          _
        %v595 = vld [vmem:[#allocation2] sm:$0xff]
        %v596 = vld [vmem:[#allocation2 + $0x8] sm:$0xff]
        %v597 = vld [vmem:[#allocation2 + $0x10] sm:$0xff]
        %v598 = vld [vmem:[#allocation2 + $0x18] sm:$0xff]
        %v599 = vld [vmem:[#allocation2 + $0x20] sm:$0xff]
        %v600 = vld [vmem:[#allocation2 + $0x28] sm:$0xff]
        %v601 = vld [vmem:[#allocation2 + $0x30] sm:$0xff]
        %v602 = vld [vmem:[#allocation2 + $0x38] sm:$0xff]
        %v603 = vld [vmem:[#allocation2 + $0x40] sm:$0xff]
        %v604 = vld [vmem:[#allocation2 + $0x48] sm:$0xff]
        %v605 = vld [vmem:[#allocation2 + $0x50] sm:$0xff]
        %v606 = vld [vmem:[#allocation2 + $0x58] sm:$0xff]
        %v607 = vld [vmem:[#allocation2 + $0x60] sm:$0xff]
        %v608 = vld [vmem:[#allocation2 + $0x68] sm:$0xff]
        %v609 = vld [vmem:[#allocation2 + $0x70] sm:$0xff]
        %v610 = vld [vmem:[#allocation2 + $0x78] sm:$0xff]
        %v611 = vld [vmem:[#allocation2 + $0x80] sm:$0xff]
        %v612 = vld [vmem:[#allocation2 + $0x88] sm:$0xff]
        %v613 = vld [vmem:[#allocation2 + $0x90] sm:$0xff]
        %v614 = vld [vmem:[#allocation2 + $0x98] sm:$0xff]
        %v615 = vld [vmem:[#allocation2 + $0xa0] sm:$0xff]
        %v616 = vld [vmem:[#allocation2 + $0xa8] sm:$0xff]
        %v617 = vld [vmem:[#allocation2 + $0xb0] sm:$0xff]
        %v618 = vld [vmem:[#allocation2 + $0xb8] sm:$0xff]
        %v619 = vpack.c.bf16 %v597, %v595
        %v620 = vpack.c.bf16 %v598, %v596
        %v621 = vpack.c.bf16 %v601, %v599
        %v622 = vpack.c.bf16 %v602, %v600
        %v623 = vpack.c.bf16 %v605, %v603
        %v624 = vpack.c.bf16 %v606, %v604
        %v625 = vpack.c.bf16 %v609, %v607
        %v626 = vpack.c.bf16 %v610, %v608
        %v627 = vpack.c.bf16 %v613, %v611
        %v628 = vpack.c.bf16 %v614, %v612
        %v629 = vpack.c.bf16 %v617, %v615
        %v630 = vpack.c.bf16 %v618, %v616
        %v631 = vld [vmem:[%s385] sm:$0xff]
        %v632 = vld [vmem:[%s385 + $0x8] sm:$0xff]
        %v633 = vld [vmem:[%s385 + $0x10] sm:$0xff]
        %v634 = vld [vmem:[%s385 + $0x18] sm:$0xff]
        %v635 = vld [vmem:[%s385 + $0x20] sm:$0xff]
        %v636 = vld [vmem:[%s385 + $0x28] sm:$0xff]
        %v637 = vld [vmem:[%s385 + $0x30] sm:$0xff]
        %v638 = vld [vmem:[%s385 + $0x38] sm:$0xff]
        %v639 = vld [vmem:[%s385 + $0x40] sm:$0xff]
        %v640 = vld [vmem:[%s385 + $0x48] sm:$0xff]
        %v641 = vld [vmem:[%s385 + $0x50] sm:$0xff]
        %v642 = vld [vmem:[%s385 + $0x58] sm:$0xff]
        %v643 = vld [vmem:[%s385 + $0x60] sm:$0xff]
        %v644 = vld [vmem:[%s385 + $0x68] sm:$0xff]
        %v645 = vld [vmem:[%s385 + $0x70] sm:$0xff]
        %v646 = vld [vmem:[%s385 + $0x78] sm:$0xff]
        %v647 = vld [vmem:[%s385 + $0x80] sm:$0xff]
        %v648 = vld [vmem:[%s385 + $0x88] sm:$0xff]
        %v649 = vld [vmem:[%s385 + $0x90] sm:$0xff]
        %v650 = vld [vmem:[%s385 + $0x98] sm:$0xff]
        %v651 = vld [vmem:[%s385 + $0xa0] sm:$0xff]
        %v652 = vld [vmem:[%s385 + $0xa8] sm:$0xff]
        %v653 = vld [vmem:[%s385 + $0xb0] sm:$0xff]
        %v654 = vld [vmem:[%s385 + $0xb8] sm:$0xff]
        %v655 = vld [vmem:[%s385 + $0xc0] sm:$0xff]
        %v656 = vld [vmem:[%s385 + $0xc8] sm:$0xff]
        %v657 = vld [vmem:[%s385 + $0xd0] sm:$0xff]
        %v658 = vld [vmem:[%s385 + $0xd8] sm:$0xff]
        %v659 = vld [vmem:[%s385 + $0xe0] sm:$0xff]
        %v660 = vld [vmem:[%s385 + $0xe8] sm:$0xff]
        %v661 = vld [vmem:[%s385 + $0xf0] sm:$0xff]
        %v662 = vld [vmem:[%s385 + $0xf8] sm:$0xff]
        %v663 = vld [vmem:[%s385 + $0x100] sm:$0xff]
        %v664 = vld [vmem:[%s385 + $0x108] sm:$0xff]
        %v665 = vld [vmem:[%s385 + $0x110] sm:$0xff]
        %v666 = vld [vmem:[%s385 + $0x118] sm:$0xff]
        %v667 = vld [vmem:[%s385 + $0x120] sm:$0xff]
        %v668 = vld [vmem:[%s385 + $0x128] sm:$0xff]
        %v669 = vld [vmem:[%s385 + $0x130] sm:$0xff]
        %v670 = vld [vmem:[%s385 + $0x138] sm:$0xff]
        %v671 = vld [vmem:[%s385 + $0x140] sm:$0xff]
        %v672 = vld [vmem:[%s385 + $0x148] sm:$0xff]
        %v673 = vld [vmem:[%s385 + $0x150] sm:$0xff]
        %v674 = vld [vmem:[%s385 + $0x158] sm:$0xff]
        %v675 = vld [vmem:[%s385 + $0x160] sm:$0xff]
        %v676 = vld [vmem:[%s385 + $0x168] sm:$0xff]
        %v677 = vld [vmem:[%s385 + $0x170] sm:$0xff]
        %v678 = vld [vmem:[%s385 + $0x178] sm:$0xff]
        %v679 = vld [vmem:[%s385 + $0x180] sm:$0xff]
        %v680 = vld [vmem:[%s385 + $0x188] sm:$0xff]
        %v681 = vld [vmem:[%s385 + $0x190] sm:$0xff]
        %v682 = vld [vmem:[%s385 + $0x198] sm:$0xff]
        %v683 = vld [vmem:[%s385 + $0x1a0] sm:$0xff]
        %v684 = vld [vmem:[%s385 + $0x1a8] sm:$0xff]
        %v685 = vld [vmem:[%s385 + $0x1b0] sm:$0xff]
        %v686 = vld [vmem:[%s385 + $0x1b8] sm:$0xff]
        %v687 = vld [vmem:[%s385 + $0x1c0] sm:$0xff]
        %v688 = vld [vmem:[%s385 + $0x1c8] sm:$0xff]
        %v689 = vld [vmem:[%s385 + $0x1d0] sm:$0xff]
        %v690 = vld [vmem:[%s385 + $0x1d8] sm:$0xff]
        %v691 = vld [vmem:[%s385 + $0x1e0] sm:$0xff]
        %v692 = vld [vmem:[%s385 + $0x1e8] sm:$0xff]
        %v693 = vld [vmem:[%s385 + $0x1f0] sm:$0xff]
        %v694 = vld [vmem:[%s385 + $0x1f8] sm:$0xff]
        %v695 = vld [vmem:[%s385 + $0x200] sm:$0xff]
        %v696 = vld [vmem:[%s385 + $0x208] sm:$0xff]
        %v697 = vld [vmem:[%s385 + $0x210] sm:$0xff]
        %v698 = vld [vmem:[%s385 + $0x218] sm:$0xff]
        %v699 = vld [vmem:[%s385 + $0x220] sm:$0xff]
        %v700 = vld [vmem:[%s385 + $0x228] sm:$0xff]
        %v701 = vld [vmem:[%s385 + $0x230] sm:$0xff]
        %v702 = vld [vmem:[%s385 + $0x238] sm:$0xff]
        %v703 = vld [vmem:[%s385 + $0x240] sm:$0xff]
        %v704 = vld [vmem:[%s385 + $0x248] sm:$0xff]
        %v705 = vld [vmem:[%s385 + $0x250] sm:$0xff]
        %v706 = vld [vmem:[%s385 + $0x258] sm:$0xff]
        %v707 = vld [vmem:[%s385 + $0x260] sm:$0xff]
        %v708 = vld [vmem:[%s385 + $0x268] sm:$0xff]
        %v709 = vld [vmem:[%s385 + $0x270] sm:$0xff]
        %v710 = vld [vmem:[%s385 + $0x278] sm:$0xff]
        %v711 = vld [vmem:[%s385 + $0x280] sm:$0xff]
        %v712 = vld [vmem:[%s385 + $0x288] sm:$0xff]
        %v713 = vld [vmem:[%s385 + $0x290] sm:$0xff]
        %v714 = vld [vmem:[%s385 + $0x298] sm:$0xff]
        %v715 = vld [vmem:[%s385 + $0x2a0] sm:$0xff]
        %v716 = vld [vmem:[%s385 + $0x2a8] sm:$0xff]
        %v717 = vld [vmem:[%s385 + $0x2b0] sm:$0xff]
        %v718 = vld [vmem:[%s385 + $0x2b8] sm:$0xff]
        %v719 = vld [vmem:[%s385 + $0x2c0] sm:$0xff]
        %v720 = vld [vmem:[%s385 + $0x2c8] sm:$0xff]
        %v721 = vld [vmem:[%s385 + $0x2d0] sm:$0xff]
        %v722 = vld [vmem:[%s385 + $0x2d8] sm:$0xff]
        %v723 = vld [vmem:[%s385 + $0x2e0] sm:$0xff]
        %v724 = vld [vmem:[%s385 + $0x2e8] sm:$0xff]
        %v725 = vld [vmem:[%s385 + $0x2f0] sm:$0xff]
        %v726 = vld [vmem:[%s385 + $0x2f8] sm:$0xff]
        %v727 = vld [vmem:[%s469] sm:$0xff]
        %v728 = vld [vmem:[%s469 + $0x8] sm:$0xff]
        %v729 = vld [vmem:[%s469 + $0x10] sm:$0xff]
        %v730 = vld [vmem:[%s469 + $0x18] sm:$0xff]
        %v731 = vld [vmem:[%s469 + $0x20] sm:$0xff]
        %v732 = vld [vmem:[%s469 + $0x28] sm:$0xff]
        %v733 = vld [vmem:[%s469 + $0x30] sm:$0xff]
        %v734 = vld [vmem:[%s469 + $0x38] sm:$0xff]
        %v735 = vld [vmem:[%s469 + $0x40] sm:$0xff]
        %v736 = vld [vmem:[%s469 + $0x48] sm:$0xff]
        %v737 = vld [vmem:[%s469 + $0x50] sm:$0xff]
        %v738 = vld [vmem:[%s469 + $0x58] sm:$0xff]
        %v739 = vld [vmem:[%s469 + $0x60] sm:$0xff]
        %v740 = vld [vmem:[%s469 + $0x68] sm:$0xff]
        %v741 = vld [vmem:[%s469 + $0x70] sm:$0xff]
        %v742 = vld [vmem:[%s469 + $0x78] sm:$0xff]
        %v743 = vld [vmem:[%s469 + $0x80] sm:$0xff]
        %v744 = vld [vmem:[%s469 + $0x88] sm:$0xff]
        %v745 = vld [vmem:[%s469 + $0x90] sm:$0xff]
        %v746 = vld [vmem:[%s469 + $0x98] sm:$0xff]
        %v747 = vld [vmem:[%s469 + $0xa0] sm:$0xff]
        %v748 = vld [vmem:[%s469 + $0xa8] sm:$0xff]
        %v749 = vld [vmem:[%s469 + $0xb0] sm:$0xff]
        %v750 = vld [vmem:[%s469 + $0xb8] sm:$0xff]
        %v751 = vld [vmem:[%s469 + $0xc0] sm:$0xff]
        %v752 = vld [vmem:[%s469 + $0xc8] sm:$0xff]
        %v753 = vld [vmem:[%s469 + $0xd0] sm:$0xff]
        %v754 = vld [vmem:[%s469 + $0xd8] sm:$0xff]
        %v755 = vld [vmem:[%s469 + $0xe0] sm:$0xff]
        %v756 = vld [vmem:[%s469 + $0xe8] sm:$0xff]
        %v757 = vld [vmem:[%s469 + $0xf0] sm:$0xff]
        %v758 = vld [vmem:[%s469 + $0xf8] sm:$0xff]
        %v759 = vld [vmem:[%s474] sm:$0xff]
        %v760 = vld [vmem:[%s474 + $0x8] sm:$0xff]
        %v761 = vld [vmem:[%s474 + $0x10] sm:$0xff]
        %v762 = vld [vmem:[%s474 + $0x18] sm:$0xff]
        %v763 = vld [vmem:[%s474 + $0x20] sm:$0xff]
        %v764 = vld [vmem:[%s474 + $0x28] sm:$0xff]
        %v765 = vld [vmem:[%s474 + $0x30] sm:$0xff]
        %v766 = vld [vmem:[%s474 + $0x38] sm:$0xff]
        %v767 = vld [vmem:[%s474 + $0x40] sm:$0xff]
        %v768 = vld [vmem:[%s474 + $0x48] sm:$0xff]
        %v769 = vld [vmem:[%s474 + $0x50] sm:$0xff]
        %v770 = vld [vmem:[%s474 + $0x58] sm:$0xff]
        %v771 = vld [vmem:[%s474 + $0x60] sm:$0xff]
        %v772 = vld [vmem:[%s474 + $0x68] sm:$0xff]
        %v773 = vld [vmem:[%s474 + $0x70] sm:$0xff]
        %v774 = vld [vmem:[%s474 + $0x78] sm:$0xff]
        %v775 = vld [vmem:[%s474 + $0x80] sm:$0xff]
        %v776 = vld [vmem:[%s474 + $0x88] sm:$0xff]
        %v777 = vld [vmem:[%s474 + $0x90] sm:$0xff]
        %v778 = vld [vmem:[%s474 + $0x98] sm:$0xff]
        %v779 = vld [vmem:[%s474 + $0xa0] sm:$0xff]
        %v780 = vld [vmem:[%s474 + $0xa8] sm:$0xff]
        %v781 = vld [vmem:[%s474 + $0xb0] sm:$0xff]
        %v782 = vld [vmem:[%s474 + $0xb8] sm:$0xff]
        %v783 = vld [vmem:[%s474 + $0xc0] sm:$0xff]
        %v784 = vld [vmem:[%s474 + $0xc8] sm:$0xff]
        %v785 = vld [vmem:[%s474 + $0xd0] sm:$0xff]
        %v786 = vld [vmem:[%s474 + $0xd8] sm:$0xff]
        %v787 = vld [vmem:[%s474 + $0xe0] sm:$0xff]
        %v788 = vld [vmem:[%s474 + $0xe8] sm:$0xff]
        %v789 = vld [vmem:[%s474 + $0xf0] sm:$0xff]
        %v790 = vld [vmem:[%s474 + $0xf8] sm:$0xff]
        %v791 = vld [vmem:[%s474 + $0x100] sm:$0xff]
        %v792 = vld [vmem:[%s474 + $0x108] sm:$0xff]
        %v793 = vld [vmem:[%s474 + $0x110] sm:$0xff]
        %v794 = vld [vmem:[%s474 + $0x118] sm:$0xff]
        %v795 = vld [vmem:[%s474 + $0x120] sm:$0xff]
        %v796 = vld [vmem:[%s474 + $0x128] sm:$0xff]
        %v797 = vld [vmem:[%s474 + $0x130] sm:$0xff]
        %v798 = vld [vmem:[%s474 + $0x138] sm:$0xff]
        %v799 = vld [vmem:[%s474 + $0x140] sm:$0xff]
        %v800 = vld [vmem:[%s474 + $0x148] sm:$0xff]
        %v801 = vld [vmem:[%s474 + $0x150] sm:$0xff]
        %v802 = vld [vmem:[%s474 + $0x158] sm:$0xff]
        %v803 = vld [vmem:[%s474 + $0x160] sm:$0xff]
        %v804 = vld [vmem:[%s474 + $0x168] sm:$0xff]
        %v805 = vld [vmem:[%s474 + $0x170] sm:$0xff]
        %v806 = vld [vmem:[%s474 + $0x178] sm:$0xff]
        %v807 = vld [vmem:[%s474 + $0x180] sm:$0xff]
        %v808 = vld [vmem:[%s474 + $0x188] sm:$0xff]
        %v809 = vld [vmem:[%s474 + $0x190] sm:$0xff]
        %v810 = vld [vmem:[%s474 + $0x198] sm:$0xff]
        %v811 = vld [vmem:[%s474 + $0x1a0] sm:$0xff]
        %v812 = vld [vmem:[%s474 + $0x1a8] sm:$0xff]
        %v813 = vld [vmem:[%s474 + $0x1b0] sm:$0xff]
        %v814 = vld [vmem:[%s474 + $0x1b8] sm:$0xff]
        %v815 = vld [vmem:[%s474 + $0x1c0] sm:$0xff]
        %v816 = vld [vmem:[%s474 + $0x1c8] sm:$0xff]
        %v817 = vld [vmem:[%s474 + $0x1d0] sm:$0xff]
        %v818 = vld [vmem:[%s474 + $0x1d8] sm:$0xff]
        %v819 = vld [vmem:[%s474 + $0x1e0] sm:$0xff]
        %v820 = vld [vmem:[%s474 + $0x1e8] sm:$0xff]
        %v821 = vld [vmem:[%s474 + $0x1f0] sm:$0xff]
        %v822 = vld [vmem:[%s474 + $0x1f8] sm:$0xff]
        %v823 = vld [vmem:[%s474 + $0x200] sm:$0xff]
        %v824 = vld [vmem:[%s474 + $0x208] sm:$0xff]
        %v825 = vld [vmem:[%s474 + $0x210] sm:$0xff]
        %v826 = vld [vmem:[%s474 + $0x218] sm:$0xff]
        %v827 = vld [vmem:[%s474 + $0x220] sm:$0xff]
        %v828 = vld [vmem:[%s474 + $0x228] sm:$0xff]
        %v829 = vld [vmem:[%s474 + $0x230] sm:$0xff]
        %v830 = vld [vmem:[%s474 + $0x238] sm:$0xff]
        %v831 = vld [vmem:[%s474 + $0x240] sm:$0xff]
        %v832 = vld [vmem:[%s474 + $0x248] sm:$0xff]
        %v833 = vld [vmem:[%s474 + $0x250] sm:$0xff]
        %v834 = vld [vmem:[%s474 + $0x258] sm:$0xff]
        %v835 = vld [vmem:[%s474 + $0x260] sm:$0xff]
        %v836 = vld [vmem:[%s474 + $0x268] sm:$0xff]
        %v837 = vld [vmem:[%s474 + $0x270] sm:$0xff]
        %v838 = vld [vmem:[%s474 + $0x278] sm:$0xff]
        %v839 = vld [vmem:[%s474 + $0x280] sm:$0xff]
        %v840 = vld [vmem:[%s474 + $0x288] sm:$0xff]
        %v841 = vld [vmem:[%s474 + $0x290] sm:$0xff]
        %v842 = vld [vmem:[%s474 + $0x298] sm:$0xff]
        %v843 = vld [vmem:[%s474 + $0x2a0] sm:$0xff]
        %v844 = vld [vmem:[%s474 + $0x2a8] sm:$0xff]
        %v845 = vld [vmem:[%s474 + $0x2b0] sm:$0xff]
        %v846 = vld [vmem:[%s474 + $0x2b8] sm:$0xff]
        %v847 = vld [vmem:[%s474 + $0x2c0] sm:$0xff]
        %v848 = vld [vmem:[%s474 + $0x2c8] sm:$0xff]
        %v849 = vld [vmem:[%s474 + $0x2d0] sm:$0xff]
        %v850 = vld [vmem:[%s474 + $0x2d8] sm:$0xff]
        %v851 = vld [vmem:[%s474 + $0x2e0] sm:$0xff]
        %v852 = vld [vmem:[%s474 + $0x2e8] sm:$0xff]
        %v853 = vld [vmem:[%s474 + $0x2f0] sm:$0xff]
        %v854 = vld [vmem:[%s474 + $0x2f8] sm:$0xff]
        %v855 = vld [vmem:[%s474 + $0x300] sm:$0xff]
        %v856 = vld [vmem:[%s474 + $0x308] sm:$0xff]
        %v857 = vld [vmem:[%s474 + $0x310] sm:$0xff]
        %v858 = vld [vmem:[%s474 + $0x318] sm:$0xff]
        %v859 = vld [vmem:[%s474 + $0x320] sm:$0xff]
        %v860 = vld [vmem:[%s474 + $0x328] sm:$0xff]
        %v861 = vld [vmem:[%s474 + $0x330] sm:$0xff]
        %v862 = vld [vmem:[%s474 + $0x338] sm:$0xff]
        %v863 = vld [vmem:[%s474 + $0x340] sm:$0xff]
        %v864 = vld [vmem:[%s474 + $0x348] sm:$0xff]
        %v865 = vld [vmem:[%s474 + $0x350] sm:$0xff]
        %v866 = vld [vmem:[%s474 + $0x358] sm:$0xff]
        %v867 = vld [vmem:[%s474 + $0x360] sm:$0xff]
        %v868 = vld [vmem:[%s474 + $0x368] sm:$0xff]
        %v869 = vld [vmem:[%s474 + $0x370] sm:$0xff]
        %v870 = vld [vmem:[%s474 + $0x378] sm:$0xff]
        %v871 = vld [vmem:[%s474 + $0x380] sm:$0xff]
        %v872 = vld [vmem:[%s474 + $0x388] sm:$0xff]
        %v873 = vld [vmem:[%s474 + $0x390] sm:$0xff]
        %v874 = vld [vmem:[%s474 + $0x398] sm:$0xff]
        %v875 = vld [vmem:[%s474 + $0x3a0] sm:$0xff]
        %v876 = vld [vmem:[%s474 + $0x3a8] sm:$0xff]
        %v877 = vld [vmem:[%s474 + $0x3b0] sm:$0xff]
        %v878 = vld [vmem:[%s474 + $0x3b8] sm:$0xff]
        %v879 = vld [vmem:[%s474 + $0x3c0] sm:$0xff]
        %v880 = vld [vmem:[%s474 + $0x3c8] sm:$0xff]
        %v881 = vld [vmem:[%s474 + $0x3d0] sm:$0xff]
        %v882 = vld [vmem:[%s474 + $0x3d8] sm:$0xff]
        %v883 = vld [vmem:[%s474 + $0x3e0] sm:$0xff]
        %v884 = vld [vmem:[%s474 + $0x3e8] sm:$0xff]
        %v885 = vld [vmem:[%s474 + $0x3f0] sm:$0xff]
        %v886 = vld [vmem:[%s474 + $0x3f8] sm:$0xff]
        %v887 = vld [vmem:[%s394] sm:$0xff]
        %v888 = vld [vmem:[%s394 + $0x8] sm:$0xff]
        %v889 = vld [vmem:[%s394 + $0x10] sm:$0xff]
        %v890 = vld [vmem:[%s394 + $0x18] sm:$0xff]
        %v891 = vld [vmem:[%s394 + $0x20] sm:$0xff]
        %v892 = vld [vmem:[%s394 + $0x28] sm:$0xff]
        %v893 = vld [vmem:[%s394 + $0x30] sm:$0xff]
        %v894 = vld [vmem:[%s394 + $0x38] sm:$0xff]
        %v895 = vld [vmem:[%s394 + $0x40] sm:$0xff]
        %v896 = vld [vmem:[%s394 + $0x48] sm:$0xff]
        %v897 = vld [vmem:[%s394 + $0x50] sm:$0xff]
        %v898 = vld [vmem:[%s394 + $0x58] sm:$0xff]
        %v899 = vld [vmem:[%s394 + $0x60] sm:$0xff]
        %v900 = vld [vmem:[%s394 + $0x68] sm:$0xff]
        %v901 = vld [vmem:[%s394 + $0x70] sm:$0xff]
        %v902 = vld [vmem:[%s394 + $0x78] sm:$0xff]
        %v903 = vld [vmem:[%s394 + $0x80] sm:$0xff]
        %v904 = vld [vmem:[%s394 + $0x88] sm:$0xff]
        %v905 = vld [vmem:[%s394 + $0x90] sm:$0xff]
        %v906 = vld [vmem:[%s394 + $0x98] sm:$0xff]
        %v907 = vld [vmem:[%s394 + $0xa0] sm:$0xff]
        %v908 = vld [vmem:[%s394 + $0xa8] sm:$0xff]
        %v909 = vld [vmem:[%s394 + $0xb0] sm:$0xff]
        %v910 = vld [vmem:[%s394 + $0xb8] sm:$0xff]
        %v911 = vld [vmem:[%s394 + $0xc0] sm:$0xff]
        %v912 = vld [vmem:[%s394 + $0xc8] sm:$0xff]
        %v913 = vld [vmem:[%s394 + $0xd0] sm:$0xff]
        %v914 = vld [vmem:[%s394 + $0xd8] sm:$0xff]
        %v915 = vld [vmem:[%s394 + $0xe0] sm:$0xff]
        %v916 = vld [vmem:[%s394 + $0xe8] sm:$0xff]
        %v917 = vld [vmem:[%s394 + $0xf0] sm:$0xff]
        %v918 = vld [vmem:[%s394 + $0xf8] sm:$0xff]
        %v919 = vld [vmem:[%s394 + $0x100] sm:$0xff]
        %v920 = vld [vmem:[%s394 + $0x108] sm:$0xff]
        %v921 = vld [vmem:[%s394 + $0x110] sm:$0xff]
        %v922 = vld [vmem:[%s394 + $0x118] sm:$0xff]
        %v923 = vld [vmem:[%s394 + $0x120] sm:$0xff]
        %v924 = vld [vmem:[%s394 + $0x128] sm:$0xff]
        %v925 = vld [vmem:[%s394 + $0x130] sm:$0xff]
        %v926 = vld [vmem:[%s394 + $0x138] sm:$0xff]
        %v927 = vld [vmem:[%s394 + $0x140] sm:$0xff]
        %v928 = vld [vmem:[%s394 + $0x148] sm:$0xff]
        %v929 = vld [vmem:[%s394 + $0x150] sm:$0xff]
        %v930 = vld [vmem:[%s394 + $0x158] sm:$0xff]
        %v931 = vld [vmem:[%s394 + $0x160] sm:$0xff]
        %v932 = vld [vmem:[%s394 + $0x168] sm:$0xff]
        %v933 = vld [vmem:[%s394 + $0x170] sm:$0xff]
        %v934 = vld [vmem:[%s394 + $0x178] sm:$0xff]
        %v935 = vld [vmem:[%s394 + $0x180] sm:$0xff]
        %v936 = vld [vmem:[%s394 + $0x188] sm:$0xff]
        %v937 = vld [vmem:[%s394 + $0x190] sm:$0xff]
        %v938 = vld [vmem:[%s394 + $0x198] sm:$0xff]
        %v939 = vld [vmem:[%s394 + $0x1a0] sm:$0xff]
        %v940 = vld [vmem:[%s394 + $0x1a8] sm:$0xff]
        %v941 = vld [vmem:[%s394 + $0x1b0] sm:$0xff]
        %v942 = vld [vmem:[%s394 + $0x1b8] sm:$0xff]
        %v943 = vld [vmem:[%s394 + $0x1c0] sm:$0xff]
        %v944 = vld [vmem:[%s394 + $0x1c8] sm:$0xff]
        %v945 = vld [vmem:[%s394 + $0x1d0] sm:$0xff]
        %v946 = vld [vmem:[%s394 + $0x1d8] sm:$0xff]
        %v947 = vld [vmem:[%s394 + $0x1e0] sm:$0xff]
        %v948 = vld [vmem:[%s394 + $0x1e8] sm:$0xff]
        %v949 = vld [vmem:[%s394 + $0x1f0] sm:$0xff]
        %v950 = vld [vmem:[%s394 + $0x1f8] sm:$0xff]
        %v951 = vld [vmem:[%s394 + $0x200] sm:$0xff]
        %v952 = vld [vmem:[%s394 + $0x208] sm:$0xff]
        %v953 = vld [vmem:[%s394 + $0x210] sm:$0xff]
        %v954 = vld [vmem:[%s394 + $0x218] sm:$0xff]
        %v955 = vld [vmem:[%s394 + $0x220] sm:$0xff]
        %v956 = vld [vmem:[%s394 + $0x228] sm:$0xff]
        %v957 = vld [vmem:[%s394 + $0x230] sm:$0xff]
        %v958 = vld [vmem:[%s394 + $0x238] sm:$0xff]
        %v959 = vld [vmem:[%s394 + $0x240] sm:$0xff]
        %v960 = vld [vmem:[%s394 + $0x248] sm:$0xff]
        %v961 = vld [vmem:[%s394 + $0x250] sm:$0xff]
        %v962 = vld [vmem:[%s394 + $0x258] sm:$0xff]
        %v963 = vld [vmem:[%s394 + $0x260] sm:$0xff]
        %v964 = vld [vmem:[%s394 + $0x268] sm:$0xff]
        %v965 = vld [vmem:[%s394 + $0x270] sm:$0xff]
        %v966 = vld [vmem:[%s394 + $0x278] sm:$0xff]
        %v967 = vld [vmem:[%s394 + $0x280] sm:$0xff]
        %v968 = vld [vmem:[%s394 + $0x288] sm:$0xff]
        %v969 = vld [vmem:[%s394 + $0x290] sm:$0xff]
        %v970 = vld [vmem:[%s394 + $0x298] sm:$0xff]
        %v971 = vld [vmem:[%s394 + $0x2a0] sm:$0xff]
        %v972 = vld [vmem:[%s394 + $0x2a8] sm:$0xff]
        %v973 = vld [vmem:[%s394 + $0x2b0] sm:$0xff]
        %v974 = vld [vmem:[%s394 + $0x2b8] sm:$0xff]
        %v975 = vld [vmem:[%s394 + $0x2c0] sm:$0xff]
        %v976 = vld [vmem:[%s394 + $0x2c8] sm:$0xff]
        %v977 = vld [vmem:[%s394 + $0x2d0] sm:$0xff]
        %v978 = vld [vmem:[%s394 + $0x2d8] sm:$0xff]
        %v979 = vld [vmem:[%s394 + $0x2e0] sm:$0xff]
        %v980 = vld [vmem:[%s394 + $0x2e8] sm:$0xff]
        %v981 = vld [vmem:[%s394 + $0x2f0] sm:$0xff]
        %v982 = vld [vmem:[%s394 + $0x2f8] sm:$0xff]
        %v983 = vld [vmem:[%s394 + $0x300] sm:$0xff]
        %v984 = vld [vmem:[%s394 + $0x308] sm:$0xff]
        %v985 = vld [vmem:[%s394 + $0x310] sm:$0xff]
        %v986 = vld [vmem:[%s394 + $0x318] sm:$0xff]
        %v987 = vld [vmem:[%s394 + $0x320] sm:$0xff]
        %v988 = vld [vmem:[%s394 + $0x328] sm:$0xff]
        %v989 = vld [vmem:[%s394 + $0x330] sm:$0xff]
        %v990 = vld [vmem:[%s394 + $0x338] sm:$0xff]
        %v991 = vld [vmem:[%s394 + $0x340] sm:$0xff]
        %v992 = vld [vmem:[%s394 + $0x348] sm:$0xff]
        %v993 = vld [vmem:[%s394 + $0x350] sm:$0xff]
        %v994 = vld [vmem:[%s394 + $0x358] sm:$0xff]
        %v995 = vld [vmem:[%s394 + $0x360] sm:$0xff]
        %v996 = vld [vmem:[%s394 + $0x368] sm:$0xff]
        %v997 = vld [vmem:[%s394 + $0x370] sm:$0xff]
        %v998 = vld [vmem:[%s394 + $0x378] sm:$0xff]
        %v999 = vld [vmem:[%s394 + $0x380] sm:$0xff]
        %v1000 = vld [vmem:[%s394 + $0x388] sm:$0xff]
        %v1001 = vld [vmem:[%s394 + $0x390] sm:$0xff]
        %v1002 = vld [vmem:[%s394 + $0x398] sm:$0xff]
        %v1003 = vld [vmem:[%s394 + $0x3a0] sm:$0xff]
        %v1004 = vld [vmem:[%s394 + $0x3a8] sm:$0xff]
        %v1005 = vld [vmem:[%s394 + $0x3b0] sm:$0xff]
        %v1006 = vld [vmem:[%s394 + $0x3b8] sm:$0xff]
        %v1007 = vld [vmem:[%s394 + $0x3c0] sm:$0xff]
        %v1008 = vld [vmem:[%s394 + $0x3c8] sm:$0xff]
        %v1009 = vld [vmem:[%s394 + $0x3d0] sm:$0xff]
        %v1010 = vld [vmem:[%s394 + $0x3d8] sm:$0xff]
        %v1011 = vld [vmem:[%s394 + $0x3e0] sm:$0xff]
        %v1012 = vld [vmem:[%s394 + $0x3e8] sm:$0xff]
        %v1013 = vld [vmem:[%s394 + $0x3f0] sm:$0xff]
        %v1014 = vld [vmem:[%s394 + $0x3f8] sm:$0xff]
        %v1015 = vld [vmem:[%s478] sm:$0x3f]
        %v1016 = vld [vmem:[%s482] sm:$0xff]
        %v1017 = vld [vmem:[%s487] sm:$0x3f]
        %v1018 = vld [vmem:[%s487 + $0x8] sm:$0x3f]
        %v1020 = vlaneseq
        %v1021 = vshrl.u32 %v1020, 7
        %v1022 = vsub.s32 0, %v1021
        %v1023 = vrot.slane %v1015, %v1022
        %v1024 = vlaneseq
        %v1025 = vshrl.u32 %v1024, 7
        %v1026 = vsub.s32 1, %v1025
        %v1027 = vrot.slane %v1015, %v1026
        %v1028 = vlaneseq
        %v1029 = vshrl.u32 %v1028, 7
        %v1030 = vsub.s32 2, %v1029
        %v1031 = vrot.slane %v1015, %v1030
        %v1032 = vlaneseq
        %v1033 = vshrl.u32 %v1032, 7
        %v1034 = vsub.s32 3, %v1033
        %v1035 = vrot.slane %v1015, %v1034
        %v1036 = vlaneseq
        %v1037 = vshrl.u32 %v1036, 7
        %v1038 = vsub.s32 4, %v1037
        %v1039 = vrot.slane %v1015, %v1038
        %v1040 = vlaneseq
        %v1041 = vshrl.u32 %v1040, 7
        %v1042 = vsub.s32 5, %v1041
        %v1043 = vrot.slane %v1015, %v1042
        %v1146 = vunpack.c.l.b16 %v631
        %v1147 = vunpack.c.h.b16 %v631
        %v1148 = vunpack.c.l.b16 %v632
        %v1149 = vunpack.c.h.b16 %v632
        %v1150 = vunpack.c.l.b16 %v633
        %v1151 = vunpack.c.h.b16 %v633
        %v1152 = vunpack.c.l.b16 %v634
        %v1153 = vunpack.c.h.b16 %v634
        %v1154 = vunpack.c.l.b16 %v635
        %v1155 = vunpack.c.h.b16 %v635
        %v1156 = vunpack.c.l.b16 %v636
        %v1157 = vunpack.c.h.b16 %v636
        %v1158 = vunpack.c.l.b16 %v637
        %v1159 = vunpack.c.h.b16 %v637
        %v1160 = vunpack.c.l.b16 %v638
        %v1161 = vunpack.c.h.b16 %v638
        %v1162 = vunpack.c.l.b16 %v639
        %v1163 = vunpack.c.h.b16 %v639
        %v1164 = vunpack.c.l.b16 %v640
        %v1165 = vunpack.c.h.b16 %v640
        %v1166 = vunpack.c.l.b16 %v641
        %v1167 = vunpack.c.h.b16 %v641
        %v1168 = vunpack.c.l.b16 %v642
        %v1169 = vunpack.c.h.b16 %v642
        %v1170 = vunpack.c.l.b16 %v643
        %v1171 = vunpack.c.h.b16 %v643
        %v1172 = vunpack.c.l.b16 %v644
        %v1173 = vunpack.c.h.b16 %v644
        %v1174 = vunpack.c.l.b16 %v645
        %v1175 = vunpack.c.h.b16 %v645
        %v1176 = vunpack.c.l.b16 %v646
        %v1177 = vunpack.c.h.b16 %v646
        %v1178 = vunpack.c.l.b16 %v647
        %v1179 = vunpack.c.h.b16 %v647
        %v1180 = vunpack.c.l.b16 %v648
        %v1181 = vunpack.c.h.b16 %v648
        %v1182 = vunpack.c.l.b16 %v649
        %v1183 = vunpack.c.h.b16 %v649
        %v1184 = vunpack.c.l.b16 %v650
        %v1185 = vunpack.c.h.b16 %v650
        %v1186 = vunpack.c.l.b16 %v651
        %v1187 = vunpack.c.h.b16 %v651
        %v1188 = vunpack.c.l.b16 %v652
        %v1189 = vunpack.c.h.b16 %v652
        %v1190 = vunpack.c.l.b16 %v653
        %v1191 = vunpack.c.h.b16 %v653
        %v1192 = vunpack.c.l.b16 %v654
        %v1193 = vunpack.c.h.b16 %v654
        %v1194 = vunpack.c.l.b16 %v655
        %v1195 = vunpack.c.h.b16 %v655
        %v1196 = vunpack.c.l.b16 %v656
        %v1197 = vunpack.c.h.b16 %v656
        %v1198 = vunpack.c.l.b16 %v657
        %v1199 = vunpack.c.h.b16 %v657
        %v1200 = vunpack.c.l.b16 %v658
        %v1201 = vunpack.c.h.b16 %v658
        %v1202 = vunpack.c.l.b16 %v659
        %v1203 = vunpack.c.h.b16 %v659
        %v1204 = vunpack.c.l.b16 %v660
        %v1205 = vunpack.c.h.b16 %v660
        %v1206 = vunpack.c.l.b16 %v661
        %v1207 = vunpack.c.h.b16 %v661
        %v1208 = vunpack.c.l.b16 %v662
        %v1209 = vunpack.c.h.b16 %v662
        %v1210 = vunpack.c.l.b16 %v663
        %v1211 = vunpack.c.h.b16 %v663
        %v1212 = vunpack.c.l.b16 %v664
        %v1213 = vunpack.c.h.b16 %v664
        %v1214 = vunpack.c.l.b16 %v665
        %v1215 = vunpack.c.h.b16 %v665
        %v1216 = vunpack.c.l.b16 %v666
        %v1217 = vunpack.c.h.b16 %v666
        %v1218 = vunpack.c.l.b16 %v667
        %v1219 = vunpack.c.h.b16 %v667
        %v1220 = vunpack.c.l.b16 %v668
        %v1221 = vunpack.c.h.b16 %v668
        %v1222 = vunpack.c.l.b16 %v669
        %v1223 = vunpack.c.h.b16 %v669
        %v1224 = vunpack.c.l.b16 %v670
        %v1225 = vunpack.c.h.b16 %v670
        %v1226 = vunpack.c.l.b16 %v671
        %v1227 = vunpack.c.h.b16 %v671
        %v1228 = vunpack.c.l.b16 %v672
        %v1229 = vunpack.c.h.b16 %v672
        %v1230 = vunpack.c.l.b16 %v673
        %v1231 = vunpack.c.h.b16 %v673
        %v1232 = vunpack.c.l.b16 %v674
        %v1233 = vunpack.c.h.b16 %v674
        %v1234 = vunpack.c.l.b16 %v675
        %v1235 = vunpack.c.h.b16 %v675
        %v1236 = vunpack.c.l.b16 %v676
        %v1237 = vunpack.c.h.b16 %v676
        %v1238 = vunpack.c.l.b16 %v677
        %v1239 = vunpack.c.h.b16 %v677
        %v1240 = vunpack.c.l.b16 %v678
        %v1241 = vunpack.c.h.b16 %v678
        %v1242 = vunpack.c.l.b16 %v679
        %v1243 = vunpack.c.h.b16 %v679
        %v1244 = vunpack.c.l.b16 %v680
        %v1245 = vunpack.c.h.b16 %v680
        %v1246 = vunpack.c.l.b16 %v681
        %v1247 = vunpack.c.h.b16 %v681
        %v1248 = vunpack.c.l.b16 %v682
        %v1249 = vunpack.c.h.b16 %v682
        %v1250 = vunpack.c.l.b16 %v683
        %v1251 = vunpack.c.h.b16 %v683
        %v1252 = vunpack.c.l.b16 %v684
        %v1253 = vunpack.c.h.b16 %v684
        %v1254 = vunpack.c.l.b16 %v685
        %v1255 = vunpack.c.h.b16 %v685
        %v1256 = vunpack.c.l.b16 %v686
        %v1257 = vunpack.c.h.b16 %v686
        %v1258 = vunpack.c.l.b16 %v687
        %v1259 = vunpack.c.h.b16 %v687
        %v1260 = vunpack.c.l.b16 %v688
        %v1261 = vunpack.c.h.b16 %v688
        %v1262 = vunpack.c.l.b16 %v689
        %v1263 = vunpack.c.h.b16 %v689
        %v1264 = vunpack.c.l.b16 %v690
        %v1265 = vunpack.c.h.b16 %v690
        %v1266 = vunpack.c.l.b16 %v691
        %v1267 = vunpack.c.h.b16 %v691
        %v1268 = vunpack.c.l.b16 %v692
        %v1269 = vunpack.c.h.b16 %v692
        %v1270 = vunpack.c.l.b16 %v693
        %v1271 = vunpack.c.h.b16 %v693
        %v1272 = vunpack.c.l.b16 %v694
        %v1273 = vunpack.c.h.b16 %v694
        %v1274 = vunpack.c.l.b16 %v695
        %v1275 = vunpack.c.h.b16 %v695
        %v1276 = vunpack.c.l.b16 %v696
        %v1277 = vunpack.c.h.b16 %v696
        %v1278 = vunpack.c.l.b16 %v697
        %v1279 = vunpack.c.h.b16 %v697
        %v1280 = vunpack.c.l.b16 %v698
        %v1281 = vunpack.c.h.b16 %v698
        %v1282 = vunpack.c.l.b16 %v699
        %v1283 = vunpack.c.h.b16 %v699
        %v1284 = vunpack.c.l.b16 %v700
        %v1285 = vunpack.c.h.b16 %v700
        %v1286 = vunpack.c.l.b16 %v701
        %v1287 = vunpack.c.h.b16 %v701
        %v1288 = vunpack.c.l.b16 %v702
        %v1289 = vunpack.c.h.b16 %v702
        %v1290 = vunpack.c.l.b16 %v703
        %v1291 = vunpack.c.h.b16 %v703
        %v1292 = vunpack.c.l.b16 %v704
        %v1293 = vunpack.c.h.b16 %v704
        %v1294 = vunpack.c.l.b16 %v705
        %v1295 = vunpack.c.h.b16 %v705
        %v1296 = vunpack.c.l.b16 %v706
        %v1297 = vunpack.c.h.b16 %v706
        %v1298 = vunpack.c.l.b16 %v707
        %v1299 = vunpack.c.h.b16 %v707
        %v1300 = vunpack.c.l.b16 %v708
        %v1301 = vunpack.c.h.b16 %v708
        %v1302 = vunpack.c.l.b16 %v709
        %v1303 = vunpack.c.h.b16 %v709
        %v1304 = vunpack.c.l.b16 %v710
        %v1305 = vunpack.c.h.b16 %v710
        %v1306 = vunpack.c.l.b16 %v711
        %v1307 = vunpack.c.h.b16 %v711
        %v1308 = vunpack.c.l.b16 %v712
        %v1309 = vunpack.c.h.b16 %v712
        %v1310 = vunpack.c.l.b16 %v713
        %v1311 = vunpack.c.h.b16 %v713
        %v1312 = vunpack.c.l.b16 %v714
        %v1313 = vunpack.c.h.b16 %v714
        %v1314 = vunpack.c.l.b16 %v715
        %v1315 = vunpack.c.h.b16 %v715
        %v1316 = vunpack.c.l.b16 %v716
        %v1317 = vunpack.c.h.b16 %v716
        %v1318 = vunpack.c.l.b16 %v717
        %v1319 = vunpack.c.h.b16 %v717
        %v1320 = vunpack.c.l.b16 %v718
        %v1321 = vunpack.c.h.b16 %v718
        %v1322 = vunpack.c.l.b16 %v719
        %v1323 = vunpack.c.h.b16 %v719
        %v1324 = vunpack.c.l.b16 %v720
        %v1325 = vunpack.c.h.b16 %v720
        %v1326 = vunpack.c.l.b16 %v721
        %v1327 = vunpack.c.h.b16 %v721
        %v1328 = vunpack.c.l.b16 %v722
        %v1329 = vunpack.c.h.b16 %v722
        %v1330 = vunpack.c.l.b16 %v723
        %v1331 = vunpack.c.h.b16 %v723
        %v1332 = vunpack.c.l.b16 %v724
        %v1333 = vunpack.c.h.b16 %v724
        %v1334 = vunpack.c.l.b16 %v725
        %v1335 = vunpack.c.h.b16 %v725
        %v1336 = vunpack.c.l.b16 %v726
        %v1337 = vunpack.c.h.b16 %v726
        %v1338 = vpack.c.b16 %v1152, %v1146
        %v1339 = vpack.c.b16 %v1153, %v1147
        %v1340 = vpack.c.b16 %v1154, %v1148
        %v1341 = vpack.c.b16 %v1155, %v1149
        %v1342 = vpack.c.b16 %v1156, %v1150
        %v1343 = vpack.c.b16 %v1157, %v1151
        %v1344 = vpack.c.b16 %v1164, %v1158
        %v1345 = vpack.c.b16 %v1165, %v1159
        %v1346 = vpack.c.b16 %v1166, %v1160
        %v1347 = vpack.c.b16 %v1167, %v1161
        %v1348 = vpack.c.b16 %v1168, %v1162
        %v1349 = vpack.c.b16 %v1169, %v1163
        %v1350 = vpack.c.b16 %v1176, %v1170
        %v1351 = vpack.c.b16 %v1177, %v1171
        %v1352 = vpack.c.b16 %v1178, %v1172
        %v1353 = vpack.c.b16 %v1179, %v1173
        %v1354 = vpack.c.b16 %v1180, %v1174
        %v1355 = vpack.c.b16 %v1181, %v1175
        %v1356 = vpack.c.b16 %v1188, %v1182
        %v1357 = vpack.c.b16 %v1189, %v1183
        %v1358 = vpack.c.b16 %v1190, %v1184
        %v1359 = vpack.c.b16 %v1191, %v1185
        %v1360 = vpack.c.b16 %v1192, %v1186
        %v1361 = vpack.c.b16 %v1193, %v1187
        %v1362 = vpack.c.b16 %v1200, %v1194
        %v1363 = vpack.c.b16 %v1201, %v1195
        %v1364 = vpack.c.b16 %v1202, %v1196
        %v1365 = vpack.c.b16 %v1203, %v1197
        %v1366 = vpack.c.b16 %v1204, %v1198
        %v1367 = vpack.c.b16 %v1205, %v1199
        %v1368 = vpack.c.b16 %v1212, %v1206
        %v1369 = vpack.c.b16 %v1213, %v1207
        %v1370 = vpack.c.b16 %v1214, %v1208
        %v1371 = vpack.c.b16 %v1215, %v1209
        %v1372 = vpack.c.b16 %v1216, %v1210
        %v1373 = vpack.c.b16 %v1217, %v1211
        %v1374 = vpack.c.b16 %v1224, %v1218
        %v1375 = vpack.c.b16 %v1225, %v1219
        %v1376 = vpack.c.b16 %v1226, %v1220
        %v1377 = vpack.c.b16 %v1227, %v1221
        %v1378 = vpack.c.b16 %v1228, %v1222
        %v1379 = vpack.c.b16 %v1229, %v1223
        %v1380 = vpack.c.b16 %v1236, %v1230
        %v1381 = vpack.c.b16 %v1237, %v1231
        %v1382 = vpack.c.b16 %v1238, %v1232
        %v1383 = vpack.c.b16 %v1239, %v1233
        %v1384 = vpack.c.b16 %v1240, %v1234
        %v1385 = vpack.c.b16 %v1241, %v1235
        %v1386 = vpack.c.b16 %v1248, %v1242
        %v1387 = vpack.c.b16 %v1249, %v1243
        %v1388 = vpack.c.b16 %v1250, %v1244
        %v1389 = vpack.c.b16 %v1251, %v1245
        %v1390 = vpack.c.b16 %v1252, %v1246
        %v1391 = vpack.c.b16 %v1253, %v1247
        %v1392 = vpack.c.b16 %v1260, %v1254
        %v1393 = vpack.c.b16 %v1261, %v1255
        %v1394 = vpack.c.b16 %v1262, %v1256
        %v1395 = vpack.c.b16 %v1263, %v1257
        %v1396 = vpack.c.b16 %v1264, %v1258
        %v1397 = vpack.c.b16 %v1265, %v1259
        %v1398 = vpack.c.b16 %v1272, %v1266
        %v1399 = vpack.c.b16 %v1273, %v1267
        %v1400 = vpack.c.b16 %v1274, %v1268
        %v1401 = vpack.c.b16 %v1275, %v1269
        %v1402 = vpack.c.b16 %v1276, %v1270
        %v1403 = vpack.c.b16 %v1277, %v1271
        %v1404 = vpack.c.b16 %v1284, %v1278
        %v1405 = vpack.c.b16 %v1285, %v1279
        %v1406 = vpack.c.b16 %v1286, %v1280
        %v1407 = vpack.c.b16 %v1287, %v1281
        %v1408 = vpack.c.b16 %v1288, %v1282
        %v1409 = vpack.c.b16 %v1289, %v1283
        %v1410 = vpack.c.b16 %v1296, %v1290
        %v1411 = vpack.c.b16 %v1297, %v1291
        %v1412 = vpack.c.b16 %v1298, %v1292
        %v1413 = vpack.c.b16 %v1299, %v1293
        %v1414 = vpack.c.b16 %v1300, %v1294
        %v1415 = vpack.c.b16 %v1301, %v1295
        %v1416 = vpack.c.b16 %v1308, %v1302
        %v1417 = vpack.c.b16 %v1309, %v1303
        %v1418 = vpack.c.b16 %v1310, %v1304
        %v1419 = vpack.c.b16 %v1311, %v1305
        %v1420 = vpack.c.b16 %v1312, %v1306
        %v1421 = vpack.c.b16 %v1313, %v1307
        %v1422 = vpack.c.b16 %v1320, %v1314
        %v1423 = vpack.c.b16 %v1321, %v1315
        %v1424 = vpack.c.b16 %v1322, %v1316
        %v1425 = vpack.c.b16 %v1323, %v1317
        %v1426 = vpack.c.b16 %v1324, %v1318
        %v1427 = vpack.c.b16 %v1325, %v1319
        %v1428 = vpack.c.b16 %v1332, %v1326
        %v1429 = vpack.c.b16 %v1333, %v1327
        %v1430 = vpack.c.b16 %v1334, %v1328
        %v1431 = vpack.c.b16 %v1335, %v1329
        %v1432 = vpack.c.b16 %v1336, %v1330
        %v1433 = vpack.c.b16 %v1337, %v1331
        %1530 = vmatprep.subr.bf16.mxu0 %v1339
        %1531 = vmatpush1.bf16.msra.mxu0 %v1338
        %1532 = vmatprep.subr.bf16.mxu0 %v1345
        %1533 = vmatpush1.bf16.msra.mxu0 %v1344
        %1534 = vmatprep.subr.bf16.mxu0 %v1351
        %1535 = vmatpush1.bf16.msra.mxu0 %v1350
        %1536 = vmatprep.subr.bf16.mxu0 %v1357
        %1537 = vmatpush1.bf16.msra.mxu0 %v1356
        %1538 = vmatprep.subr.bf16.mxu0 %v1363
        %1539 = vmatpush1.bf16.msra.mxu0 %v1362
        %1540 = vmatprep.subr.bf16.mxu0 %v1369
        %1541 = vmatpush1.bf16.msra.mxu0 %v1368
        %1542 = vmatprep.subr.bf16.mxu0 %v1375
        %1543 = vmatpush1.bf16.msra.mxu0 %v1374
        %1544 = vmatprep.subr.bf16.mxu0 %v1381
        %1545 = vmatpush1.bf16.msra.mxu0 %v1380
        %1546 = vmatprep.subr.bf16.mxu0 %v1387
        %1547 = vmatpush1.bf16.msra.mxu0 %v1386
        %1548 = vmatprep.subr.bf16.mxu0 %v1393
        %1549 = vmatpush1.bf16.msra.mxu0 %v1392
        %1550 = vmatprep.subr.bf16.mxu0 %v1399
        %1551 = vmatpush1.bf16.msra.mxu0 %v1398
        %1552 = vmatprep.subr.bf16.mxu0 %v1405
        %1553 = vmatpush1.bf16.msra.mxu0 %v1404
        %1554 = vmatprep.subr.bf16.mxu0 %v1411
        %1555 = vmatpush1.bf16.msra.mxu0 %v1410
        %1556 = vmatprep.subr.bf16.mxu0 %v1417
        %1557 = vmatpush1.bf16.msra.mxu0 %v1416
        %1558 = vmatprep.subr.bf16.mxu0 %v1423
        %1559 = vmatpush1.bf16.msra.mxu0 %v1422
        %1560 = vmatprep.subr.bf16.mxu0 %v1429
        %1561 = vmatpush1.bf16.msra.mxu0 %v1428
        %1562 = vmatprep.mubr.bf16.mxu0 %v620
        %1563 = vmatmul.mubr.bf16.gmra.mrb[0].mxu0 %v619
        %v1564 = vpop.f32.mrb[0].mxu0
        %v1565 = vadd.f32 %v1023, %v1564
        %v1566 = vpop.f32.mrb[0].mxu0
        %v1567 = vadd.f32 %v1027, %v1566
        %v1568 = vpop.f32.mrb[0].mxu0
        %v1569 = vadd.f32 %v1023, %v1568
        %v1570 = vpop.f32.mrb[0].mxu0
        %v1571 = vadd.f32 %v1027, %v1570
        %1572 = vmatprep.mubr.bf16.mxu0 %v622
        %1573 = vmatmul.mubr.bf16.gmra.mrb[0].mxu0 %v621
        %v1574 = vpop.f32.mrb[0].mxu0
        %v1575 = vadd.f32 %v1023, %v1574
        %v1576 = vpop.f32.mrb[0].mxu0
        %v1577 = vadd.f32 %v1027, %v1576
        %v1578 = vpop.f32.mrb[0].mxu0
        %v1579 = vadd.f32 %v1023, %v1578
        %v1580 = vpop.f32.mrb[0].mxu0
        %v1581 = vadd.f32 %v1027, %v1580
        %1582 = vmatprep.mubr.bf16.mxu0 %v624
        %1583 = vmatmul.mubr.bf16.gmra.mrb[0].mxu0 %v623
        %v1584 = vpop.f32.mrb[0].mxu0
        %v1585 = vadd.f32 %v1023, %v1584
        %v1586 = vpop.f32.mrb[0].mxu0
        %v1587 = vadd.f32 %v1027, %v1586
        %v1588 = vpop.f32.mrb[0].mxu0
        %v1589 = vadd.f32 %v1023, %v1588
        %v1590 = vpop.f32.mrb[0].mxu0
        %v1591 = vadd.f32 %v1027, %v1590
        %1592 = vmatprep.mubr.bf16.mxu0 %v626
        %1593 = vmatmul.mubr.bf16.gmra.mrb[0].mxu0 %v625
        %v1594 = vpop.f32.mrb[0].mxu0
        %v1595 = vadd.f32 %v1023, %v1594
        %v1596 = vpop.f32.mrb[0].mxu0
        %v1597 = vadd.f32 %v1027, %v1596
        %v1598 = vpop.f32.mrb[0].mxu0
        %v1599 = vadd.f32 %v1023, %v1598
        %v1600 = vpop.f32.mrb[0].mxu0
        %v1601 = vadd.f32 %v1027, %v1600
        %1602 = vmatprep.mubr.bf16.mxu0 %v628
        %1603 = vmatmul.mubr.bf16.gmra.mrb[0].mxu0 %v627
        %v1604 = vpop.f32.mrb[0].mxu0
        %v1605 = vadd.f32 %v1023, %v1604
        %v1606 = vpop.f32.mrb[0].mxu0
        %v1607 = vadd.f32 %v1027, %v1606
        %v1608 = vpop.f32.mrb[0].mxu0
        %v1609 = vadd.f32 %v1023, %v1608
        %v1610 = vpop.f32.mrb[0].mxu0
        %v1611 = vadd.f32 %v1027, %v1610
        %1612 = vmatprep.mubr.bf16.mxu0 %v630
        %1613 = vmatmul.mubr.bf16.gmra.mrb[0].mxu0 %v629
        %v1614 = vpop.f32.mrb[0].mxu0
        %v1615 = vadd.f32 %v1023, %v1614
        %v1616 = vpop.f32.mrb[0].mxu0
        %v1617 = vadd.f32 %v1027, %v1616
        %v1618 = vpop.f32.mrb[0].mxu0
        %v1619 = vadd.f32 %v1023, %v1618
        %v1620 = vpop.f32.mrb[0].mxu0
        %v1621 = vadd.f32 %v1027, %v1620
        %1622 = vdwg.mxu0
        %1623 = vmatprep.subr.bf16.mxu0 %v1341
        %1624 = vmatpush1.bf16.msra.mxu0 %v1340
        %1625 = vmatprep.subr.bf16.mxu0 %v1347
        %1626 = vmatpush1.bf16.msra.mxu0 %v1346
        %1627 = vmatprep.subr.bf16.mxu0 %v1353
        %1628 = vmatpush1.bf16.msra.mxu0 %v1352
        %1629 = vmatprep.subr.bf16.mxu0 %v1359
        %1630 = vmatpush1.bf16.msra.mxu0 %v1358
        %1631 = vmatprep.subr.bf16.mxu0 %v1365
        %1632 = vmatpush1.bf16.msra.mxu0 %v1364
        %1633 = vmatprep.subr.bf16.mxu0 %v1371
        %1634 = vmatpush1.bf16.msra.mxu0 %v1370
        %1635 = vmatprep.subr.bf16.mxu0 %v1377
        %1636 = vmatpush1.bf16.msra.mxu0 %v1376
        %1637 = vmatprep.subr.bf16.mxu0 %v1383
        %1638 = vmatpush1.bf16.msra.mxu0 %v1382
        %1639 = vmatprep.subr.bf16.mxu0 %v1389
        %1640 = vmatpush1.bf16.msra.mxu0 %v1388
        %1641 = vmatprep.subr.bf16.mxu0 %v1395
        %1642 = vmatpush1.bf16.msra.mxu0 %v1394
        %1643 = vmatprep.subr.bf16.mxu0 %v1401
        %1644 = vmatpush1.bf16.msra.mxu0 %v1400
        %1645 = vmatprep.subr.bf16.mxu0 %v1407
        %1646 = vmatpush1.bf16.msra.mxu0 %v1406
        %1647 = vmatprep.subr.bf16.mxu0 %v1413
        %1648 = vmatpush1.bf16.msra.mxu0 %v1412
        %1649 = vmatprep.subr.bf16.mxu0 %v1419
        %1650 = vmatpush1.bf16.msra.mxu0 %v1418
        %1651 = vmatprep.subr.bf16.mxu0 %v1425
        %1652 = vmatpush1.bf16.msra.mxu0 %v1424
        %1653 = vmatprep.subr.bf16.mxu0 %v1431
        %1654 = vmatpush1.bf16.msra.mxu0 %v1430
        %1655 = vmatprep.mubr.bf16.mxu0 %v620
        %1656 = vmatmul.mubr.bf16.gmra.mrb[0].mxu0 %v619
        %v1657 = vpop.f32.mrb[0].mxu0
        %v1658 = vadd.f32 %v1031, %v1657
        %v1659 = vpop.f32.mrb[0].mxu0
        %v1660 = vadd.f32 %v1035, %v1659
        %v1661 = vpop.f32.mrb[0].mxu0
        %v1662 = vadd.f32 %v1031, %v1661
        %v1663 = vpop.f32.mrb[0].mxu0
        %v1664 = vadd.f32 %v1035, %v1663
        %1665 = vmatprep.mubr.bf16.mxu0 %v622
        %1666 = vmatmul.mubr.bf16.gmra.mrb[0].mxu0 %v621
        %v1667 = vpop.f32.mrb[0].mxu0
        %v1668 = vadd.f32 %v1031, %v1667
        %v1669 = vpop.f32.mrb[0].mxu0
        %v1670 = vadd.f32 %v1035, %v1669
        %v1671 = vpop.f32.mrb[0].mxu0
        %v1672 = vadd.f32 %v1031, %v1671
        %v1673 = vpop.f32.mrb[0].mxu0
        %v1674 = vadd.f32 %v1035, %v1673
        %1675 = vmatprep.mubr.bf16.mxu0 %v624
        %1676 = vmatmul.mubr.bf16.gmra.mrb[0].mxu0 %v623
        %v1677 = vpop.f32.mrb[0].mxu0
        %v1678 = vadd.f32 %v1031, %v1677
        %v1679 = vpop.f32.mrb[0].mxu0
        %v1680 = vadd.f32 %v1035, %v1679
        %v1681 = vpop.f32.mrb[0].mxu0
        %v1682 = vadd.f32 %v1031, %v1681
        %v1683 = vpop.f32.mrb[0].mxu0
        %v1684 = vadd.f32 %v1035, %v1683
        %1685 = vmatprep.mubr.bf16.mxu0 %v626
        %1686 = vmatmul.mubr.bf16.gmra.mrb[0].mxu0 %v625
        %v1687 = vpop.f32.mrb[0].mxu0
        %v1688 = vadd.f32 %v1031, %v1687
        %v1689 = vpop.f32.mrb[0].mxu0
        %v1690 = vadd.f32 %v1035, %v1689
        %v1691 = vpop.f32.mrb[0].mxu0
        %v1692 = vadd.f32 %v1031, %v1691
        %v1693 = vpop.f32.mrb[0].mxu0
        %v1694 = vadd.f32 %v1035, %v1693
        %1695 = vmatprep.mubr.bf16.mxu0 %v628
        %1696 = vmatmul.mubr.bf16.gmra.mrb[0].mxu0 %v627
        %v1697 = vpop.f32.mrb[0].mxu0
        %v1698 = vadd.f32 %v1031, %v1697
        %v1699 = vpop.f32.mrb[0].mxu0
        %v1700 = vadd.f32 %v1035, %v1699
        %v1701 = vpop.f32.mrb[0].mxu0
        %v1702 = vadd.f32 %v1031, %v1701
        %v1703 = vpop.f32.mrb[0].mxu0
        %v1704 = vadd.f32 %v1035, %v1703
        %1705 = vmatprep.mubr.bf16.mxu0 %v630
        %1706 = vmatmul.mubr.bf16.gmra.mrb[0].mxu0 %v629
        %v1707 = vpop.f32.mrb[0].mxu0
        %v1708 = vadd.f32 %v1031, %v1707
        %v1709 = vpop.f32.mrb[0].mxu0
        %v1710 = vadd.f32 %v1035, %v1709
        %v1711 = vpop.f32.mrb[0].mxu0
        %v1712 = vadd.f32 %v1031, %v1711
        %v1713 = vpop.f32.mrb[0].mxu0
        %v1714 = vadd.f32 %v1035, %v1713
        %1715 = vdwg.mxu0
        %1716 = vmatprep.subr.bf16.mxu0 %v1343
        %1717 = vmatpush1.bf16.msra.mxu0 %v1342
        %1718 = vmatprep.subr.bf16.mxu0 %v1349
        %1719 = vmatpush1.bf16.msra.mxu0 %v1348
        %1720 = vmatprep.subr.bf16.mxu0 %v1355
        %1721 = vmatpush1.bf16.msra.mxu0 %v1354
        %1722 = vmatprep.subr.bf16.mxu0 %v1361
        %1723 = vmatpush1.bf16.msra.mxu0 %v1360
        %1724 = vmatprep.subr.bf16.mxu0 %v1367
        %1725 = vmatpush1.bf16.msra.mxu0 %v1366
        %1726 = vmatprep.subr.bf16.mxu0 %v1373
        %1727 = vmatpush1.bf16.msra.mxu0 %v1372
        %1728 = vmatprep.subr.bf16.mxu0 %v1379
        %1729 = vmatpush1.bf16.msra.mxu0 %v1378
        %1730 = vmatprep.subr.bf16.mxu0 %v1385
        %1731 = vmatpush1.bf16.msra.mxu0 %v1384
        %1732 = vmatprep.subr.bf16.mxu0 %v1391
        %1733 = vmatpush1.bf16.msra.mxu0 %v1390
        %1734 = vmatprep.subr.bf16.mxu0 %v1397
        %1735 = vmatpush1.bf16.msra.mxu0 %v1396
        %1736 = vmatprep.subr.bf16.mxu0 %v1403
        %1737 = vmatpush1.bf16.msra.mxu0 %v1402
        %1738 = vmatprep.subr.bf16.mxu0 %v1409
        %1739 = vmatpush1.bf16.msra.mxu0 %v1408
        %1740 = vmatprep.subr.bf16.mxu0 %v1415
        %1741 = vmatpush1.bf16.msra.mxu0 %v1414
        %1742 = vmatprep.subr.bf16.mxu0 %v1421
        %1743 = vmatpush1.bf16.msra.mxu0 %v1420
        %1744 = vmatprep.subr.bf16.mxu0 %v1427
        %1745 = vmatpush1.bf16.msra.mxu0 %v1426
        %1746 = vmatprep.subr.bf16.mxu0 %v1433
        %1747 = vmatpush1.bf16.msra.mxu0 %v1432
        %1748 = vmatprep.mubr.bf16.mxu0 %v620
        %1749 = vmatmul.mubr.bf16.gmra.mrb[0].mxu0 %v619
        %v1750 = vpop.f32.mrb[0].mxu0
        %v1751 = vadd.f32 %v1039, %v1750
        %v1752 = vpop.f32.mrb[0].mxu0
        %v1753 = vadd.f32 %v1043, %v1752
        %v1754 = vpop.f32.mrb[0].mxu0
        %v1755 = vadd.f32 %v1039, %v1754
        %v1756 = vpop.f32.mrb[0].mxu0
        %v1757 = vadd.f32 %v1043, %v1756
        %1758 = vmatprep.mubr.bf16.mxu0 %v622
        %1759 = vmatmul.mubr.bf16.gmra.mrb[0].mxu0 %v621
        %v1760 = vpop.f32.mrb[0].mxu0
        %v1761 = vadd.f32 %v1039, %v1760
        %v1762 = vpop.f32.mrb[0].mxu0
        %v1763 = vadd.f32 %v1043, %v1762
        %v1764 = vpop.f32.mrb[0].mxu0
        %v1765 = vadd.f32 %v1039, %v1764
        %v1766 = vpop.f32.mrb[0].mxu0
        %v1767 = vadd.f32 %v1043, %v1766
        %1768 = vmatprep.mubr.bf16.mxu0 %v624
        %1769 = vmatmul.mubr.bf16.gmra.mrb[0].mxu0 %v623
        %v1770 = vpop.f32.mrb[0].mxu0
        %v1771 = vadd.f32 %v1039, %v1770
        %v1772 = vpop.f32.mrb[0].mxu0
        %v1773 = vadd.f32 %v1043, %v1772
        %v1774 = vpop.f32.mrb[0].mxu0
        %v1775 = vadd.f32 %v1039, %v1774
        %v1776 = vpop.f32.mrb[0].mxu0
        %v1777 = vadd.f32 %v1043, %v1776
        %1778 = vmatprep.mubr.bf16.mxu0 %v626
        %1779 = vmatmul.mubr.bf16.gmra.mrb[0].mxu0 %v625
        %v1780 = vpop.f32.mrb[0].mxu0
        %v1781 = vadd.f32 %v1039, %v1780
        %v1782 = vpop.f32.mrb[0].mxu0
        %v1783 = vadd.f32 %v1043, %v1782
        %v1784 = vpop.f32.mrb[0].mxu0
        %v1785 = vadd.f32 %v1039, %v1784
        %v1786 = vpop.f32.mrb[0].mxu0
        %v1787 = vadd.f32 %v1043, %v1786
        %1788 = vmatprep.mubr.bf16.mxu0 %v628
        %1789 = vmatmul.mubr.bf16.gmra.mrb[0].mxu0 %v627
        %v1790 = vpop.f32.mrb[0].mxu0
        %v1791 = vadd.f32 %v1039, %v1790
        %v1792 = vpop.f32.mrb[0].mxu0
        %v1793 = vadd.f32 %v1043, %v1792
        %v1794 = vpop.f32.mrb[0].mxu0
        %v1795 = vadd.f32 %v1039, %v1794
        %v1796 = vpop.f32.mrb[0].mxu0
        %v1797 = vadd.f32 %v1043, %v1796
        %1798 = vmatprep.mubr.bf16.mxu0 %v630
        %1799 = vmatmul.mubr.bf16.gmra.mrb[0].mxu0 %v629
        %v1800 = vpop.f32.mrb[0].mxu0
        %v1801 = vadd.f32 %v1039, %v1800
        %v1802 = vpop.f32.mrb[0].mxu0
        %v1803 = vadd.f32 %v1043, %v1802
        %v1804 = vpop.f32.mrb[0].mxu0
        %v1805 = vadd.f32 %v1039, %v1804
        %v1806 = vpop.f32.mrb[0].mxu0
        %v1807 = vadd.f32 %v1043, %v1806
        %1808 = vdwg.mxu0
        %v1809 = vld [vmem:[%s464] sm:$0xff]
        %v1810 = vld [vmem:[%s464 + $0x8] sm:$0xf]
        %v1813 = vcombine.high %v1809, %v1809
        %v1815 = vunpack.c.l.s4 1966171168
        %v1816 = vunpack.c.0.s8 %v1815
        %v1817 = vlaneseq
        %v1818 = vshrl.u32 %v1817, 7
        %v1819 = vsub.s32 %v1816, %v1818
        %v1820 = vrot.slane %v1809, %v1819
        %v1822 = vunpack.c.l.s4 1966171168
        %v1823 = vunpack.c.0.s8 %v1822
        %v1824 = vlaneseq
        %v1825 = vshrl.u32 %v1824, 7
        %v1826 = vsub.s32 %v1823, %v1825
        %v1827 = vrot.slane %v1813, %v1826
        %v1828 = vcombine.high %v1820, %v1820
        %v1829 = vcombine.high %v1827, %v1827
        %v1831 = vunpack.c.l.s4 1966171168
        %v1832 = vunpack.c.0.s8 %v1831
        %v1833 = vlaneseq
        %v1834 = vshrl.u32 %v1833, 7
        %v1835 = vsub.s32 %v1832, %v1834
        %v1836 = vrot.slane %v1820, %v1835
        %v1838 = vunpack.c.l.s4 1966171168
        %v1839 = vunpack.c.0.s8 %v1838
        %v1840 = vlaneseq
        %v1841 = vshrl.u32 %v1840, 7
        %v1842 = vsub.s32 %v1839, %v1841
        %v1843 = vrot.slane %v1827, %v1842
        %v1845 = vunpack.c.l.s4 1966171168
        %v1846 = vunpack.c.0.s8 %v1845
        %v1847 = vlaneseq
        %v1848 = vshrl.u32 %v1847, 7
        %v1849 = vsub.s32 %v1846, %v1848
        %v1850 = vrot.slane %v1828, %v1849
        %v1852 = vunpack.c.l.s4 1966171168
        %v1853 = vunpack.c.0.s8 %v1852
        %v1854 = vlaneseq
        %v1855 = vshrl.u32 %v1854, 7
        %v1856 = vsub.s32 %v1853, %v1855
        %v1857 = vrot.slane %v1829, %v1856
        %v1858 = vcombine.high %v1836, %v1836
        %v1859 = vcombine.high %v1843, %v1843
        %v1860 = vcombine.high %v1850, %v1850
        %v1861 = vcombine.high %v1857, %v1857
        %v1863 = vunpack.c.l.s4 1966171168
        %v1864 = vunpack.c.0.s8 %v1863
        %v1865 = vlaneseq
        %v1866 = vshrl.u32 %v1865, 7
        %v1867 = vsub.s32 %v1864, %v1866
        %v1868 = vrot.slane %v1810, %v1867
        %v1869 = vcombine.high %v1868, %v1868
        %v1871 = vunpack.c.l.s4 1966171168
        %v1872 = vunpack.c.0.s8 %v1871
        %v1873 = vlaneseq
        %v1874 = vshrl.u32 %v1873, 7
        %v1875 = vsub.s32 %v1872, %v1874
        %v1876 = vrot.slane %v1868, %v1875
        %v1878 = vunpack.c.l.s4 1966171168
        %v1879 = vunpack.c.0.s8 %v1878
        %v1880 = vlaneseq
        %v1881 = vshrl.u32 %v1880, 7
        %v1882 = vsub.s32 %v1879, %v1881
        %v1883 = vrot.slane %v1869, %v1882
        %v1884 = vcombine.high %v1876, %v1876
        %v1885 = vcombine.high %v1883, %v1883
        %1886 = vmatprep.subr.mxu0 0.0
        %1887 = vmatpush1.xpose.msra.mxu0 %v1658
        %1888 = vmatprep.subr.mxu0 0.0
        %1889 = vmatpush1.xpose.msra.mxu0 0.0
        %1890 = vmatprep.subr.mxu0 0.0
        %1891 = vmatpush1.xpose.msra.mxu0 0.0
        %1892 = vmatprep.subr.mxu0 0.0
        %1893 = vmatpush1.xpose.msra.mxu0 0.0
        %1894 = vmatprep.subr.mxu0 0.0
        %1895 = vmatpush1.xpose.msra.mxu0 0.0
        %1896 = vmatprep.subr.mxu0 0.0
        %1897 = vmatpush1.xpose.msra.mxu0 0.0
        %1898 = vmatprep.subr.mxu0 0.0
        %1899 = vmatpush1.xpose.msra.mxu0 0.0
        %1900 = vmatprep.subr.mxu0 0.0
        %1901 = vmatpush1.xpose.msra.mxu0 0.0
        %1902 = vmatprep.subr.mxu0 0.0
        %1903 = vmatpush1.xpose.msra.mxu0 0.0
        %1904 = vmatprep.subr.mxu0 0.0
        %1905 = vmatpush1.xpose.msra.mxu0 0.0
        %1906 = vmatprep.subr.mxu0 0.0
        %1907 = vmatpush1.xpose.msra.mxu0 0.0
        %1908 = vmatprep.subr.mxu0 0.0
        %1909 = vmatpush1.xpose.msra.mxu0 0.0
        %1910 = vmatprep.subr.mxu0 0.0
        %1911 = vmatpush1.xpose.msra.mxu0 0.0
        %1912 = vmatprep.subr.mxu0 0.0
        %1913 = vmatpush1.xpose.msra.mxu0 0.0
        %1914 = vmatprep.subr.mxu0 0.0
        %1915 = vmatpush1.xpose.msra.mxu0 0.0
        %1916 = vmatprep.subr.mxu0 0.0
        %1917 = vmatpush1.xpose.msra.mxu0 0.0
        %1918 = vmatprep.subr.mxu0 0.0
        %1919 = vmatpush1.xpose.msra.mxu0 0.0
        %1920 = vmatprep.subr.mxu0 0.0
        %1921 = vmatpush1.xpose.msra.mxu0 0.0
        %1922 = vmatprep.subr.mxu0 0.0
        %1923 = vmatpush1.xpose.msra.mxu0 0.0
        %1924 = vmatprep.subr.mxu0 0.0
        %1925 = vmatpush1.xpose.msra.mxu0 0.0
        %1926 = vmatprep.subr.mxu0 0.0
        %1927 = vmatpush1.xpose.msra.mxu0 0.0
        %1928 = vmatprep.subr.mxu0 0.0
        %1929 = vmatpush1.xpose.msra.mxu0 0.0
        %1930 = vmatprep.subr.mxu0 0.0
        %1931 = vmatpush1.xpose.msra.mxu0 0.0
        %1932 = vmatprep.subr.mxu0 0.0
        %1933 = vmatpush1.xpose.msra.mxu0 0.0
        %1934 = vmatprep.subr.mxu0 0.0
        %1935 = vmatpush1.xpose.msra.mxu0 0.0
        %1936 = vmatprep.subr.mxu0 0.0
        %1937 = vmatpush1.xpose.msra.mxu0 0.0
        %1938 = vmatprep.subr.mxu0 0.0
        %1939 = vmatpush1.xpose.msra.mxu0 0.0
        %1940 = vmatprep.subr.mxu0 0.0
        %1941 = vmatpush1.xpose.msra.mxu0 0.0
        %1942 = vmatprep.subr.mxu0 0.0
        %1943 = vmatpush1.xpose.msra.mxu0 0.0
        %1944 = vmatprep.subr.mxu0 0.0
        %1945 = vmatpush1.xpose.msra.mxu0 0.0
        %1946 = vmatprep.subr.mxu0 0.0
        %1947 = vmatpush1.xpose.msra.mxu0 0.0
        %1948 = vmatprep.subr.mxu0 0.0
        %1949 = vmatpush1.xpose.msra.mxu0 0.0
        %1950 = vmatprep.mubr.f32.mxu0 0.0
        %1951 = vmatmul.mubr.f32.gmra.mrb[0].mxu0 %v1565
        %v1952 = vpop.f32.mrb[0].mxu0
        %v1953 = vadd.f32 0.0, %v1952
        %v1954 = vpop.f32.mrb[0].mxu0
        %1955 = vdwg.mxu0
        %1956 = vmatprep.subr.mxu0 0.0
        %1957 = vmatpush1.xpose.msra.mxu0 %v1662
        %1958 = vmatprep.subr.mxu0 0.0
        %1959 = vmatpush1.xpose.msra.mxu0 0.0
        %1960 = vmatprep.subr.mxu0 0.0
        %1961 = vmatpush1.xpose.msra.mxu0 0.0
        %1962 = vmatprep.subr.mxu0 0.0
        %1963 = vmatpush1.xpose.msra.mxu0 0.0
        %1964 = vmatprep.subr.mxu0 0.0
        %1965 = vmatpush1.xpose.msra.mxu0 0.0
        %1966 = vmatprep.subr.mxu0 0.0
        %1967 = vmatpush1.xpose.msra.mxu0 0.0
        %1968 = vmatprep.subr.mxu0 0.0
        %1969 = vmatpush1.xpose.msra.mxu0 0.0
        %1970 = vmatprep.subr.mxu0 0.0
        %1971 = vmatpush1.xpose.msra.mxu0 0.0
        %1972 = vmatprep.subr.mxu0 0.0
        %1973 = vmatpush1.xpose.msra.mxu0 0.0
        %1974 = vmatprep.subr.mxu0 0.0
        %1975 = vmatpush1.xpose.msra.mxu0 0.0
        %1976 = vmatprep.subr.mxu0 0.0
        %1977 = vmatpush1.xpose.msra.mxu0 0.0
        %1978 = vmatprep.subr.mxu0 0.0
        %1979 = vmatpush1.xpose.msra.mxu0 0.0
        %1980 = vmatprep.subr.mxu0 0.0
        %1981 = vmatpush1.xpose.msra.mxu0 0.0
        %1982 = vmatprep.subr.mxu0 0.0
        %1983 = vmatpush1.xpose.msra.mxu0 0.0
        %1984 = vmatprep.subr.mxu0 0.0
        %1985 = vmatpush1.xpose.msra.mxu0 0.0
        %1986 = vmatprep.subr.mxu0 0.0
        %1987 = vmatpush1.xpose.msra.mxu0 0.0
        %1988 = vmatprep.subr.mxu0 0.0
        %1989 = vmatpush1.xpose.msra.mxu0 0.0
        %1990 = vmatprep.subr.mxu0 0.0
        %1991 = vmatpush1.xpose.msra.mxu0 0.0
        %1992 = vmatprep.subr.mxu0 0.0
        %1993 = vmatpush1.xpose.msra.mxu0 0.0
        %1994 = vmatprep.subr.mxu0 0.0
        %1995 = vmatpush1.xpose.msra.mxu0 0.0
        %1996 = vmatprep.subr.mxu0 0.0
        %1997 = vmatpush1.xpose.msra.mxu0 0.0
        %1998 = vmatprep.subr.mxu0 0.0
        %1999 = vmatpush1.xpose.msra.mxu0 0.0
        %2000 = vmatprep.subr.mxu0 0.0
        %2001 = vmatpush1.xpose.msra.mxu0 0.0
        %2002 = vmatprep.subr.mxu0 0.0
        %2003 = vmatpush1.xpose.msra.mxu0 0.0
        %2004 = vmatprep.subr.mxu0 0.0
        %2005 = vmatpush1.xpose.msra.mxu0 0.0
        %2006 = vmatprep.subr.mxu0 0.0
        %2007 = vmatpush1.xpose.msra.mxu0 0.0
        %2008 = vmatprep.subr.mxu0 0.0
        %2009 = vmatpush1.xpose.msra.mxu0 0.0
        %2010 = vmatprep.subr.mxu0 0.0
        %2011 = vmatpush1.xpose.msra.mxu0 0.0
        %2012 = vmatprep.subr.mxu0 0.0
        %2013 = vmatpush1.xpose.msra.mxu0 0.0
        %2014 = vmatprep.subr.mxu0 0.0
        %2015 = vmatpush1.xpose.msra.mxu0 0.0
        %2016 = vmatprep.subr.mxu0 0.0
        %2017 = vmatpush1.xpose.msra.mxu0 0.0
        %2018 = vmatprep.subr.mxu0 0.0
        %2019 = vmatpush1.xpose.msra.mxu0 0.0
        %2020 = vmatprep.mubr.f32.mxu0 0.0
        %2021 = vmatmul.mubr.f32.gmra.mrb[0].mxu0 %v1569
        %v2022 = vpop.f32.mrb[0].mxu0
        %v2023 = vadd.f32 0.0, %v2022
        %v2024 = vpop.f32.mrb[0].mxu0
        %2025 = vdwg.mxu0
        %2026 = vmatprep.subr.mxu0 0.0
        %2027 = vmatpush1.xpose.msra.mxu0 %v1668
        %2028 = vmatprep.subr.mxu0 0.0
        %2029 = vmatpush1.xpose.msra.mxu0 0.0
        %2030 = vmatprep.subr.mxu0 0.0
        %2031 = vmatpush1.xpose.msra.mxu0 0.0
        %2032 = vmatprep.subr.mxu0 0.0
        %2033 = vmatpush1.xpose.msra.mxu0 0.0
        %2034 = vmatprep.subr.mxu0 0.0
        %2035 = vmatpush1.xpose.msra.mxu0 0.0
        %2036 = vmatprep.subr.mxu0 0.0
        %2037 = vmatpush1.xpose.msra.mxu0 0.0
        %2038 = vmatprep.subr.mxu0 0.0
        %2039 = vmatpush1.xpose.msra.mxu0 0.0
        %2040 = vmatprep.subr.mxu0 0.0
        %2041 = vmatpush1.xpose.msra.mxu0 0.0
        %2042 = vmatprep.subr.mxu0 0.0
        %2043 = vmatpush1.xpose.msra.mxu0 0.0
        %2044 = vmatprep.subr.mxu0 0.0
        %2045 = vmatpush1.xpose.msra.mxu0 0.0
        %2046 = vmatprep.subr.mxu0 0.0
        %2047 = vmatpush1.xpose.msra.mxu0 0.0
        %2048 = vmatprep.subr.mxu0 0.0
        %2049 = vmatpush1.xpose.msra.mxu0 0.0
        %2050 = vmatprep.subr.mxu0 0.0
        %2051 = vmatpush1.xpose.msra.mxu0 0.0
        %2052 = vmatprep.subr.mxu0 0.0
        %2053 = vmatpush1.xpose.msra.mxu0 0.0
        %2054 = vmatprep.subr.mxu0 0.0
        %2055 = vmatpush1.xpose.msra.mxu0 0.0
        %2056 = vmatprep.subr.mxu0 0.0
        %2057 = vmatpush1.xpose.msra.mxu0 0.0
        %2058 = vmatprep.subr.mxu0 0.0
        %2059 = vmatpush1.xpose.msra.mxu0 0.0
        %2060 = vmatprep.subr.mxu0 0.0
        %2061 = vmatpush1.xpose.msra.mxu0 0.0
        %2062 = vmatprep.subr.mxu0 0.0
        %2063 = vmatpush1.xpose.msra.mxu0 0.0
        %2064 = vmatprep.subr.mxu0 0.0
        %2065 = vmatpush1.xpose.msra.mxu0 0.0
        %2066 = vmatprep.subr.mxu0 0.0
        %2067 = vmatpush1.xpose.msra.mxu0 0.0
        %2068 = vmatprep.subr.mxu0 0.0
        %2069 = vmatpush1.xpose.msra.mxu0 0.0
        %2070 = vmatprep.subr.mxu0 0.0
        %2071 = vmatpush1.xpose.msra.mxu0 0.0
        %2072 = vmatprep.subr.mxu0 0.0
        %2073 = vmatpush1.xpose.msra.mxu0 0.0
        %2074 = vmatprep.subr.mxu0 0.0
        %2075 = vmatpush1.xpose.msra.mxu0 0.0
        %2076 = vmatprep.subr.mxu0 0.0
        %2077 = vmatpush1.xpose.msra.mxu0 0.0
        %2078 = vmatprep.subr.mxu0 0.0
        %2079 = vmatpush1.xpose.msra.mxu0 0.0
        %2080 = vmatprep.subr.mxu0 0.0
        %2081 = vmatpush1.xpose.msra.mxu0 0.0
        %2082 = vmatprep.subr.mxu0 0.0
        %2083 = vmatpush1.xpose.msra.mxu0 0.0
        %2084 = vmatprep.subr.mxu0 0.0
        %2085 = vmatpush1.xpose.msra.mxu0 0.0
        %2086 = vmatprep.subr.mxu0 0.0
        %2087 = vmatpush1.xpose.msra.mxu0 0.0
        %2088 = vmatprep.subr.mxu0 0.0
        %2089 = vmatpush1.xpose.msra.mxu0 0.0
        %2090 = vmatprep.mubr.f32.mxu0 0.0
        %2091 = vmatmul.mubr.f32.gmra.mrb[0].mxu0 %v1575
        %v2092 = vpop.f32.mrb[0].mxu0
        %v2093 = vadd.f32 0.0, %v2092
        %v2094 = vpop.f32.mrb[0].mxu0
        %2095 = vdwg.mxu0
        %2096 = vmatprep.subr.mxu0 0.0
        %2097 = vmatpush1.xpose.msra.mxu0 %v1672
        %2098 = vmatprep.subr.mxu0 0.0
        %2099 = vmatpush1.xpose.msra.mxu0 0.0
        %2100 = vmatprep.subr.mxu0 0.0
        %2101 = vmatpush1.xpose.msra.mxu0 0.0
        %2102 = vmatprep.subr.mxu0 0.0
        %2103 = vmatpush1.xpose.msra.mxu0 0.0
        %2104 = vmatprep.subr.mxu0 0.0
        %2105 = vmatpush1.xpose.msra.mxu0 0.0
        %2106 = vmatprep.subr.mxu0 0.0
        %2107 = vmatpush1.xpose.msra.mxu0 0.0
        %2108 = vmatprep.subr.mxu0 0.0
        %2109 = vmatpush1.xpose.msra.mxu0 0.0
        %2110 = vmatprep.subr.mxu0 0.0
        %2111 = vmatpush1.xpose.msra.mxu0 0.0
        %2112 = vmatprep.subr.mxu0 0.0
        %2113 = vmatpush1.xpose.msra.mxu0 0.0
        %2114 = vmatprep.subr.mxu0 0.0
        %2115 = vmatpush1.xpose.msra.mxu0 0.0
        %2116 = vmatprep.subr.mxu0 0.0
        %2117 = vmatpush1.xpose.msra.mxu0 0.0
        %2118 = vmatprep.subr.mxu0 0.0
        %2119 = vmatpush1.xpose.msra.mxu0 0.0
        %2120 = vmatprep.subr.mxu0 0.0
        %2121 = vmatpush1.xpose.msra.mxu0 0.0
        %2122 = vmatprep.subr.mxu0 0.0
        %2123 = vmatpush1.xpose.msra.mxu0 0.0
        %2124 = vmatprep.subr.mxu0 0.0
        %2125 = vmatpush1.xpose.msra.mxu0 0.0
        %2126 = vmatprep.subr.mxu0 0.0
        %2127 = vmatpush1.xpose.msra.mxu0 0.0
        %2128 = vmatprep.subr.mxu0 0.0
        %2129 = vmatpush1.xpose.msra.mxu0 0.0
        %2130 = vmatprep.subr.mxu0 0.0
        %2131 = vmatpush1.xpose.msra.mxu0 0.0
        %2132 = vmatprep.subr.mxu0 0.0
        %2133 = vmatpush1.xpose.msra.mxu0 0.0
        %2134 = vmatprep.subr.mxu0 0.0
        %2135 = vmatpush1.xpose.msra.mxu0 0.0
        %2136 = vmatprep.subr.mxu0 0.0
        %2137 = vmatpush1.xpose.msra.mxu0 0.0
        %2138 = vmatprep.subr.mxu0 0.0
        %2139 = vmatpush1.xpose.msra.mxu0 0.0
        %2140 = vmatprep.subr.mxu0 0.0
        %2141 = vmatpush1.xpose.msra.mxu0 0.0
        %2142 = vmatprep.subr.mxu0 0.0
        %2143 = vmatpush1.xpose.msra.mxu0 0.0
        %2144 = vmatprep.subr.mxu0 0.0
        %2145 = vmatpush1.xpose.msra.mxu0 0.0
        %2146 = vmatprep.subr.mxu0 0.0
        %2147 = vmatpush1.xpose.msra.mxu0 0.0
        %2148 = vmatprep.subr.mxu0 0.0
        %2149 = vmatpush1.xpose.msra.mxu0 0.0
        %2150 = vmatprep.subr.mxu0 0.0
        %2151 = vmatpush1.xpose.msra.mxu0 0.0
        %2152 = vmatprep.subr.mxu0 0.0
        %2153 = vmatpush1.xpose.msra.mxu0 0.0
        %2154 = vmatprep.subr.mxu0 0.0
        %2155 = vmatpush1.xpose.msra.mxu0 0.0
        %2156 = vmatprep.subr.mxu0 0.0
        %2157 = vmatpush1.xpose.msra.mxu0 0.0
        %2158 = vmatprep.subr.mxu0 0.0
        %2159 = vmatpush1.xpose.msra.mxu0 0.0
        %2160 = vmatprep.mubr.f32.mxu0 0.0
        %2161 = vmatmul.mubr.f32.gmra.mrb[0].mxu0 %v1579
        %v2162 = vpop.f32.mrb[0].mxu0
        %v2163 = vadd.f32 0.0, %v2162
        %v2164 = vpop.f32.mrb[0].mxu0
        %2165 = vdwg.mxu0
        %2166 = vmatprep.subr.mxu0 0.0
        %2167 = vmatpush1.xpose.msra.mxu0 %v1678
        %2168 = vmatprep.subr.mxu0 0.0
        %2169 = vmatpush1.xpose.msra.mxu0 0.0
        %2170 = vmatprep.subr.mxu0 0.0
        %2171 = vmatpush1.xpose.msra.mxu0 0.0
        %2172 = vmatprep.subr.mxu0 0.0
        %2173 = vmatpush1.xpose.msra.mxu0 0.0
        %2174 = vmatprep.subr.mxu0 0.0
        %2175 = vmatpush1.xpose.msra.mxu0 0.0
        %2176 = vmatprep.subr.mxu0 0.0
        %2177 = vmatpush1.xpose.msra.mxu0 0.0
        %2178 = vmatprep.subr.mxu0 0.0
        %2179 = vmatpush1.xpose.msra.mxu0 0.0
        %2180 = vmatprep.subr.mxu0 0.0
        %2181 = vmatpush1.xpose.msra.mxu0 0.0
        %2182 = vmatprep.subr.mxu0 0.0
        %2183 = vmatpush1.xpose.msra.mxu0 0.0
        %2184 = vmatprep.subr.mxu0 0.0
        %2185 = vmatpush1.xpose.msra.mxu0 0.0
        %2186 = vmatprep.subr.mxu0 0.0
        %2187 = vmatpush1.xpose.msra.mxu0 0.0
        %2188 = vmatprep.subr.mxu0 0.0
        %2189 = vmatpush1.xpose.msra.mxu0 0.0
        %2190 = vmatprep.subr.mxu0 0.0
        %2191 = vmatpush1.xpose.msra.mxu0 0.0
        %2192 = vmatprep.subr.mxu0 0.0
        %2193 = vmatpush1.xpose.msra.mxu0 0.0
        %2194 = vmatprep.subr.mxu0 0.0
        %2195 = vmatpush1.xpose.msra.mxu0 0.0
        %2196 = vmatprep.subr.mxu0 0.0
        %2197 = vmatpush1.xpose.msra.mxu0 0.0
        %2198 = vmatprep.subr.mxu0 0.0
        %2199 = vmatpush1.xpose.msra.mxu0 0.0
        %2200 = vmatprep.subr.mxu0 0.0
        %2201 = vmatpush1.xpose.msra.mxu0 0.0
        %2202 = vmatprep.subr.mxu0 0.0
        %2203 = vmatpush1.xpose.msra.mxu0 0.0
        %2204 = vmatprep.subr.mxu0 0.0
        %2205 = vmatpush1.xpose.msra.mxu0 0.0
        %2206 = vmatprep.subr.mxu0 0.0
        %2207 = vmatpush1.xpose.msra.mxu0 0.0
        %2208 = vmatprep.subr.mxu0 0.0
        %2209 = vmatpush1.xpose.msra.mxu0 0.0
        %2210 = vmatprep.subr.mxu0 0.0
        %2211 = vmatpush1.xpose.msra.mxu0 0.0
        %2212 = vmatprep.subr.mxu0 0.0
        %2213 = vmatpush1.xpose.msra.mxu0 0.0
        %2214 = vmatprep.subr.mxu0 0.0
        %2215 = vmatpush1.xpose.msra.mxu0 0.0
        %2216 = vmatprep.subr.mxu0 0.0
        %2217 = vmatpush1.xpose.msra.mxu0 0.0
        %2218 = vmatprep.subr.mxu0 0.0
        %2219 = vmatpush1.xpose.msra.mxu0 0.0
        %2220 = vmatprep.subr.mxu0 0.0
        %2221 = vmatpush1.xpose.msra.mxu0 0.0
        %2222 = vmatprep.subr.mxu0 0.0
        %2223 = vmatpush1.xpose.msra.mxu0 0.0
        %2224 = vmatprep.subr.mxu0 0.0
        %2225 = vmatpush1.xpose.msra.mxu0 0.0
        %2226 = vmatprep.subr.mxu0 0.0
        %2227 = vmatpush1.xpose.msra.mxu0 0.0
        %2228 = vmatprep.subr.mxu0 0.0
        %2229 = vmatpush1.xpose.msra.mxu0 0.0
        %2230 = vmatprep.mubr.f32.mxu0 0.0
        %2231 = vmatmul.mubr.f32.gmra.mrb[0].mxu0 %v1585
        %v2232 = vpop.f32.mrb[0].mxu0
        %v2233 = vadd.f32 0.0, %v2232
        %v2234 = vpop.f32.mrb[0].mxu0
        %2235 = vdwg.mxu0
        %2236 = vmatprep.subr.mxu0 0.0
        %2237 = vmatpush1.xpose.msra.mxu0 %v1682
        %2238 = vmatprep.subr.mxu0 0.0
        %2239 = vmatpush1.xpose.msra.mxu0 0.0
        %2240 = vmatprep.subr.mxu0 0.0
        %2241 = vmatpush1.xpose.msra.mxu0 0.0
        %2242 = vmatprep.subr.mxu0 0.0
        %2243 = vmatpush1.xpose.msra.mxu0 0.0
        %2244 = vmatprep.subr.mxu0 0.0
        %2245 = vmatpush1.xpose.msra.mxu0 0.0
        %2246 = vmatprep.subr.mxu0 0.0
        %2247 = vmatpush1.xpose.msra.mxu0 0.0
        %2248 = vmatprep.subr.mxu0 0.0
        %2249 = vmatpush1.xpose.msra.mxu0 0.0
        %2250 = vmatprep.subr.mxu0 0.0
        %2251 = vmatpush1.xpose.msra.mxu0 0.0
        %2252 = vmatprep.subr.mxu0 0.0
        %2253 = vmatpush1.xpose.msra.mxu0 0.0
        %2254 = vmatprep.subr.mxu0 0.0
        %2255 = vmatpush1.xpose.msra.mxu0 0.0
        %2256 = vmatprep.subr.mxu0 0.0
        %2257 = vmatpush1.xpose.msra.mxu0 0.0
        %2258 = vmatprep.subr.mxu0 0.0
        %2259 = vmatpush1.xpose.msra.mxu0 0.0
        %2260 = vmatprep.subr.mxu0 0.0
        %2261 = vmatpush1.xpose.msra.mxu0 0.0
        %2262 = vmatprep.subr.mxu0 0.0
        %2263 = vmatpush1.xpose.msra.mxu0 0.0
        %2264 = vmatprep.subr.mxu0 0.0
        %2265 = vmatpush1.xpose.msra.mxu0 0.0
        %2266 = vmatprep.subr.mxu0 0.0
        %2267 = vmatpush1.xpose.msra.mxu0 0.0
        %2268 = vmatprep.subr.mxu0 0.0
        %2269 = vmatpush1.xpose.msra.mxu0 0.0
        %2270 = vmatprep.subr.mxu0 0.0
        %2271 = vmatpush1.xpose.msra.mxu0 0.0
        %2272 = vmatprep.subr.mxu0 0.0
        %2273 = vmatpush1.xpose.msra.mxu0 0.0
        %2274 = vmatprep.subr.mxu0 0.0
        %2275 = vmatpush1.xpose.msra.mxu0 0.0
        %2276 = vmatprep.subr.mxu0 0.0
        %2277 = vmatpush1.xpose.msra.mxu0 0.0
        %2278 = vmatprep.subr.mxu0 0.0
        %2279 = vmatpush1.xpose.msra.mxu0 0.0
        %2280 = vmatprep.subr.mxu0 0.0
        %2281 = vmatpush1.xpose.msra.mxu0 0.0
        %2282 = vmatprep.subr.mxu0 0.0
        %2283 = vmatpush1.xpose.msra.mxu0 0.0
        %2284 = vmatprep.subr.mxu0 0.0
        %2285 = vmatpush1.xpose.msra.mxu0 0.0
        %2286 = vmatprep.subr.mxu0 0.0
        %2287 = vmatpush1.xpose.msra.mxu0 0.0
        %2288 = vmatprep.subr.mxu0 0.0
        %2289 = vmatpush1.xpose.msra.mxu0 0.0
        %2290 = vmatprep.subr.mxu0 0.0
        %2291 = vmatpush1.xpose.msra.mxu0 0.0
        %2292 = vmatprep.subr.mxu0 0.0
        %2293 = vmatpush1.xpose.msra.mxu0 0.0
        %2294 = vmatprep.subr.mxu0 0.0
        %2295 = vmatpush1.xpose.msra.mxu0 0.0
        %2296 = vmatprep.subr.mxu0 0.0
        %2297 = vmatpush1.xpose.msra.mxu0 0.0
        %2298 = vmatprep.subr.mxu0 0.0
        %2299 = vmatpush1.xpose.msra.mxu0 0.0
        %2300 = vmatprep.mubr.f32.mxu0 0.0
        %2301 = vmatmul.mubr.f32.gmra.mrb[0].mxu0 %v1589
        %v2302 = vpop.f32.mrb[0].mxu0
        %v2303 = vadd.f32 0.0, %v2302
        %v2304 = vpop.f32.mrb[0].mxu0
        %2305 = vdwg.mxu0
        %2306 = vmatprep.subr.mxu0 0.0
        %2307 = vmatpush1.xpose.msra.mxu0 %v1688
        %2308 = vmatprep.subr.mxu0 0.0
        %2309 = vmatpush1.xpose.msra.mxu0 0.0
        %2310 = vmatprep.subr.mxu0 0.0
        %2311 = vmatpush1.xpose.msra.mxu0 0.0
        %2312 = vmatprep.subr.mxu0 0.0
        %2313 = vmatpush1.xpose.msra.mxu0 0.0
        %2314 = vmatprep.subr.mxu0 0.0
        %2315 = vmatpush1.xpose.msra.mxu0 0.0
        %2316 = vmatprep.subr.mxu0 0.0
        %2317 = vmatpush1.xpose.msra.mxu0 0.0
        %2318 = vmatprep.subr.mxu0 0.0
        %2319 = vmatpush1.xpose.msra.mxu0 0.0
        %2320 = vmatprep.subr.mxu0 0.0
        %2321 = vmatpush1.xpose.msra.mxu0 0.0
        %2322 = vmatprep.subr.mxu0 0.0
        %2323 = vmatpush1.xpose.msra.mxu0 0.0
        %2324 = vmatprep.subr.mxu0 0.0
        %2325 = vmatpush1.xpose.msra.mxu0 0.0
        %2326 = vmatprep.subr.mxu0 0.0
        %2327 = vmatpush1.xpose.msra.mxu0 0.0
        %2328 = vmatprep.subr.mxu0 0.0
        %2329 = vmatpush1.xpose.msra.mxu0 0.0
        %2330 = vmatprep.subr.mxu0 0.0
        %2331 = vmatpush1.xpose.msra.mxu0 0.0
        %2332 = vmatprep.subr.mxu0 0.0
        %2333 = vmatpush1.xpose.msra.mxu0 0.0
        %2334 = vmatprep.subr.mxu0 0.0
        %2335 = vmatpush1.xpose.msra.mxu0 0.0
        %2336 = vmatprep.subr.mxu0 0.0
        %2337 = vmatpush1.xpose.msra.mxu0 0.0
        %2338 = vmatprep.subr.mxu0 0.0
        %2339 = vmatpush1.xpose.msra.mxu0 0.0
        %2340 = vmatprep.subr.mxu0 0.0
        %2341 = vmatpush1.xpose.msra.mxu0 0.0
        %2342 = vmatprep.subr.mxu0 0.0
        %2343 = vmatpush1.xpose.msra.mxu0 0.0
        %2344 = vmatprep.subr.mxu0 0.0
        %2345 = vmatpush1.xpose.msra.mxu0 0.0
        %2346 = vmatprep.subr.mxu0 0.0
        %2347 = vmatpush1.xpose.msra.mxu0 0.0
        %2348 = vmatprep.subr.mxu0 0.0
        %2349 = vmatpush1.xpose.msra.mxu0 0.0
        %2350 = vmatprep.subr.mxu0 0.0
        %2351 = vmatpush1.xpose.msra.mxu0 0.0
        %2352 = vmatprep.subr.mxu0 0.0
        %2353 = vmatpush1.xpose.msra.mxu0 0.0
        %2354 = vmatprep.subr.mxu0 0.0
        %2355 = vmatpush1.xpose.msra.mxu0 0.0
        %2356 = vmatprep.subr.mxu0 0.0
        %2357 = vmatpush1.xpose.msra.mxu0 0.0
        %2358 = vmatprep.subr.mxu0 0.0
        %2359 = vmatpush1.xpose.msra.mxu0 0.0
        %2360 = vmatprep.subr.mxu0 0.0
        %2361 = vmatpush1.xpose.msra.mxu0 0.0
        %2362 = vmatprep.subr.mxu0 0.0
        %2363 = vmatpush1.xpose.msra.mxu0 0.0
        %2364 = vmatprep.subr.mxu0 0.0
        %2365 = vmatpush1.xpose.msra.mxu0 0.0
        %2366 = vmatprep.subr.mxu0 0.0
        %2367 = vmatpush1.xpose.msra.mxu0 0.0
        %2368 = vmatprep.subr.mxu0 0.0
        %2369 = vmatpush1.xpose.msra.mxu0 0.0
        %2370 = vmatprep.mubr.f32.mxu0 0.0
        %2371 = vmatmul.mubr.f32.gmra.mrb[0].mxu0 %v1595
        %v2372 = vpop.f32.mrb[0].mxu0
        %v2373 = vadd.f32 0.0, %v2372
        %v2374 = vpop.f32.mrb[0].mxu0
        %2375 = vdwg.mxu0
        %2376 = vmatprep.subr.mxu0 0.0
        %2377 = vmatpush1.xpose.msra.mxu0 %v1692
        %2378 = vmatprep.subr.mxu0 0.0
        %2379 = vmatpush1.xpose.msra.mxu0 0.0
        %2380 = vmatprep.subr.mxu0 0.0
        %2381 = vmatpush1.xpose.msra.mxu0 0.0
        %2382 = vmatprep.subr.mxu0 0.0
        %2383 = vmatpush1.xpose.msra.mxu0 0.0
        %2384 = vmatprep.subr.mxu0 0.0
        %2385 = vmatpush1.xpose.msra.mxu0 0.0
        %2386 = vmatprep.subr.mxu0 0.0
        %2387 = vmatpush1.xpose.msra.mxu0 0.0
        %2388 = vmatprep.subr.mxu0 0.0
        %2389 = vmatpush1.xpose.msra.mxu0 0.0
        %2390 = vmatprep.subr.mxu0 0.0
        %2391 = vmatpush1.xpose.msra.mxu0 0.0
        %2392 = vmatprep.subr.mxu0 0.0
        %2393 = vmatpush1.xpose.msra.mxu0 0.0
        %2394 = vmatprep.subr.mxu0 0.0
        %2395 = vmatpush1.xpose.msra.mxu0 0.0
        %2396 = vmatprep.subr.mxu0 0.0
        %2397 = vmatpush1.xpose.msra.mxu0 0.0
        %2398 = vmatprep.subr.mxu0 0.0
        %2399 = vmatpush1.xpose.msra.mxu0 0.0
        %2400 = vmatprep.subr.mxu0 0.0
        %2401 = vmatpush1.xpose.msra.mxu0 0.0
        %2402 = vmatprep.subr.mxu0 0.0
        %2403 = vmatpush1.xpose.msra.mxu0 0.0
        %2404 = vmatprep.subr.mxu0 0.0
        %2405 = vmatpush1.xpose.msra.mxu0 0.0
        %2406 = vmatprep.subr.mxu0 0.0
        %2407 = vmatpush1.xpose.msra.mxu0 0.0
        %2408 = vmatprep.subr.mxu0 0.0
        %2409 = vmatpush1.xpose.msra.mxu0 0.0
        %2410 = vmatprep.subr.mxu0 0.0
        %2411 = vmatpush1.xpose.msra.mxu0 0.0
        %2412 = vmatprep.subr.mxu0 0.0
        %2413 = vmatpush1.xpose.msra.mxu0 0.0
        %2414 = vmatprep.subr.mxu0 0.0
        %2415 = vmatpush1.xpose.msra.mxu0 0.0
        %2416 = vmatprep.subr.mxu0 0.0
        %2417 = vmatpush1.xpose.msra.mxu0 0.0
        %2418 = vmatprep.subr.mxu0 0.0
        %2419 = vmatpush1.xpose.msra.mxu0 0.0
        %2420 = vmatprep.subr.mxu0 0.0
        %2421 = vmatpush1.xpose.msra.mxu0 0.0
        %2422 = vmatprep.subr.mxu0 0.0
        %2423 = vmatpush1.xpose.msra.mxu0 0.0
        %2424 = vmatprep.subr.mxu0 0.0
        %2425 = vmatpush1.xpose.msra.mxu0 0.0
        %2426 = vmatprep.subr.mxu0 0.0
        %2427 = vmatpush1.xpose.msra.mxu0 0.0
        %2428 = vmatprep.subr.mxu0 0.0
        %2429 = vmatpush1.xpose.msra.mxu0 0.0
        %2430 = vmatprep.subr.mxu0 0.0
        %2431 = vmatpush1.xpose.msra.mxu0 0.0
        %2432 = vmatprep.subr.mxu0 0.0
        %2433 = vmatpush1.xpose.msra.mxu0 0.0
        %2434 = vmatprep.subr.mxu0 0.0
        %2435 = vmatpush1.xpose.msra.mxu0 0.0
        %2436 = vmatprep.subr.mxu0 0.0
        %2437 = vmatpush1.xpose.msra.mxu0 0.0
        %2438 = vmatprep.subr.mxu0 0.0
        %2439 = vmatpush1.xpose.msra.mxu0 0.0
        %2440 = vmatprep.mubr.f32.mxu0 0.0
        %2441 = vmatmul.mubr.f32.gmra.mrb[0].mxu0 %v1599
        %v2442 = vpop.f32.mrb[0].mxu0
        %v2443 = vadd.f32 0.0, %v2442
        %v2444 = vpop.f32.mrb[0].mxu0
        %2445 = vdwg.mxu0
        %2446 = vmatprep.subr.mxu0 0.0
        %2447 = vmatpush1.xpose.msra.mxu0 %v1698
        %2448 = vmatprep.subr.mxu0 0.0
        %2449 = vmatpush1.xpose.msra.mxu0 0.0
        %2450 = vmatprep.subr.mxu0 0.0
        %2451 = vmatpush1.xpose.msra.mxu0 0.0
        %2452 = vmatprep.subr.mxu0 0.0
        %2453 = vmatpush1.xpose.msra.mxu0 0.0
        %2454 = vmatprep.subr.mxu0 0.0
        %2455 = vmatpush1.xpose.msra.mxu0 0.0
        %2456 = vmatprep.subr.mxu0 0.0
        %2457 = vmatpush1.xpose.msra.mxu0 0.0
        %2458 = vmatprep.subr.mxu0 0.0
        %2459 = vmatpush1.xpose.msra.mxu0 0.0
        %2460 = vmatprep.subr.mxu0 0.0
        %2461 = vmatpush1.xpose.msra.mxu0 0.0
        %2462 = vmatprep.subr.mxu0 0.0
        %2463 = vmatpush1.xpose.msra.mxu0 0.0
        %2464 = vmatprep.subr.mxu0 0.0
        %2465 = vmatpush1.xpose.msra.mxu0 0.0
        %2466 = vmatprep.subr.mxu0 0.0
        %2467 = vmatpush1.xpose.msra.mxu0 0.0
        %2468 = vmatprep.subr.mxu0 0.0
        %2469 = vmatpush1.xpose.msra.mxu0 0.0
        %2470 = vmatprep.subr.mxu0 0.0
        %2471 = vmatpush1.xpose.msra.mxu0 0.0
        %2472 = vmatprep.subr.mxu0 0.0
        %2473 = vmatpush1.xpose.msra.mxu0 0.0
        %2474 = vmatprep.subr.mxu0 0.0
        %2475 = vmatpush1.xpose.msra.mxu0 0.0
        %2476 = vmatprep.subr.mxu0 0.0
        %2477 = vmatpush1.xpose.msra.mxu0 0.0
        %2478 = vmatprep.subr.mxu0 0.0
        %2479 = vmatpush1.xpose.msra.mxu0 0.0
        %2480 = vmatprep.subr.mxu0 0.0
        %2481 = vmatpush1.xpose.msra.mxu0 0.0
        %2482 = vmatprep.subr.mxu0 0.0
        %2483 = vmatpush1.xpose.msra.mxu0 0.0
        %2484 = vmatprep.subr.mxu0 0.0
        %2485 = vmatpush1.xpose.msra.mxu0 0.0
        %2486 = vmatprep.subr.mxu0 0.0
        %2487 = vmatpush1.xpose.msra.mxu0 0.0
        %2488 = vmatprep.subr.mxu0 0.0
        %2489 = vmatpush1.xpose.msra.mxu0 0.0
        %2490 = vmatprep.subr.mxu0 0.0
        %2491 = vmatpush1.xpose.msra.mxu0 0.0
        %2492 = vmatprep.subr.mxu0 0.0
        %2493 = vmatpush1.xpose.msra.mxu0 0.0
        %2494 = vmatprep.subr.mxu0 0.0
        %2495 = vmatpush1.xpose.msra.mxu0 0.0
        %2496 = vmatprep.subr.mxu0 0.0
        %2497 = vmatpush1.xpose.msra.mxu0 0.0
        %2498 = vmatprep.subr.mxu0 0.0
        %2499 = vmatpush1.xpose.msra.mxu0 0.0
        %2500 = vmatprep.subr.mxu0 0.0
        %2501 = vmatpush1.xpose.msra.mxu0 0.0
        %2502 = vmatprep.subr.mxu0 0.0
        %2503 = vmatpush1.xpose.msra.mxu0 0.0
        %2504 = vmatprep.subr.mxu0 0.0
        %2505 = vmatpush1.xpose.msra.mxu0 0.0
        %2506 = vmatprep.subr.mxu0 0.0
        %2507 = vmatpush1.xpose.msra.mxu0 0.0
        %2508 = vmatprep.subr.mxu0 0.0
        %2509 = vmatpush1.xpose.msra.mxu0 0.0
        %2510 = vmatprep.mubr.f32.mxu0 0.0
        %2511 = vmatmul.mubr.f32.gmra.mrb[0].mxu0 %v1605
        %v2512 = vpop.f32.mrb[0].mxu0
        %v2513 = vadd.f32 0.0, %v2512
        %v2514 = vpop.f32.mrb[0].mxu0
        %2515 = vdwg.mxu0
        %2516 = vmatprep.subr.mxu0 0.0
        %2517 = vmatpush1.xpose.msra.mxu0 %v1702
        %2518 = vmatprep.subr.mxu0 0.0
        %2519 = vmatpush1.xpose.msra.mxu0 0.0
        %2520 = vmatprep.subr.mxu0 0.0
        %2521 = vmatpush1.xpose.msra.mxu0 0.0
        %2522 = vmatprep.subr.mxu0 0.0
        %2523 = vmatpush1.xpose.msra.mxu0 0.0
        %2524 = vmatprep.subr.mxu0 0.0
        %2525 = vmatpush1.xpose.msra.mxu0 0.0
        %2526 = vmatprep.subr.mxu0 0.0
        %2527 = vmatpush1.xpose.msra.mxu0 0.0
        %2528 = vmatprep.subr.mxu0 0.0
        %2529 = vmatpush1.xpose.msra.mxu0 0.0
        %2530 = vmatprep.subr.mxu0 0.0
        %2531 = vmatpush1.xpose.msra.mxu0 0.0
        %2532 = vmatprep.subr.mxu0 0.0
        %2533 = vmatpush1.xpose.msra.mxu0 0.0
        %2534 = vmatprep.subr.mxu0 0.0
        %2535 = vmatpush1.xpose.msra.mxu0 0.0
        %2536 = vmatprep.subr.mxu0 0.0
        %2537 = vmatpush1.xpose.msra.mxu0 0.0
        %2538 = vmatprep.subr.mxu0 0.0
        %2539 = vmatpush1.xpose.msra.mxu0 0.0
        %2540 = vmatprep.subr.mxu0 0.0
        %2541 = vmatpush1.xpose.msra.mxu0 0.0
        %2542 = vmatprep.subr.mxu0 0.0
        %2543 = vmatpush1.xpose.msra.mxu0 0.0
        %2544 = vmatprep.subr.mxu0 0.0
        %2545 = vmatpush1.xpose.msra.mxu0 0.0
        %2546 = vmatprep.subr.mxu0 0.0
        %2547 = vmatpush1.xpose.msra.mxu0 0.0
        %2548 = vmatprep.subr.mxu0 0.0
        %2549 = vmatpush1.xpose.msra.mxu0 0.0
        %2550 = vmatprep.subr.mxu0 0.0
        %2551 = vmatpush1.xpose.msra.mxu0 0.0
        %2552 = vmatprep.subr.mxu0 0.0
        %2553 = vmatpush1.xpose.msra.mxu0 0.0
        %2554 = vmatprep.subr.mxu0 0.0
        %2555 = vmatpush1.xpose.msra.mxu0 0.0
        %2556 = vmatprep.subr.mxu0 0.0
        %2557 = vmatpush1.xpose.msra.mxu0 0.0
        %2558 = vmatprep.subr.mxu0 0.0
        %2559 = vmatpush1.xpose.msra.mxu0 0.0
        %2560 = vmatprep.subr.mxu0 0.0
        %2561 = vmatpush1.xpose.msra.mxu0 0.0
        %2562 = vmatprep.subr.mxu0 0.0
        %2563 = vmatpush1.xpose.msra.mxu0 0.0
        %2564 = vmatprep.subr.mxu0 0.0
        %2565 = vmatpush1.xpose.msra.mxu0 0.0
        %2566 = vmatprep.subr.mxu0 0.0
        %2567 = vmatpush1.xpose.msra.mxu0 0.0
        %2568 = vmatprep.subr.mxu0 0.0
        %2569 = vmatpush1.xpose.msra.mxu0 0.0
        %2570 = vmatprep.subr.mxu0 0.0
        %2571 = vmatpush1.xpose.msra.mxu0 0.0
        %2572 = vmatprep.subr.mxu0 0.0
        %2573 = vmatpush1.xpose.msra.mxu0 0.0
        %2574 = vmatprep.subr.mxu0 0.0
        %2575 = vmatpush1.xpose.msra.mxu0 0.0
        %2576 = vmatprep.subr.mxu0 0.0
        %2577 = vmatpush1.xpose.msra.mxu0 0.0
        %2578 = vmatprep.subr.mxu0 0.0
        %2579 = vmatpush1.xpose.msra.mxu0 0.0
        %2580 = vmatprep.mubr.f32.mxu0 0.0
        %2581 = vmatmul.mubr.f32.gmra.mrb[0].mxu0 %v1609
        %v2582 = vpop.f32.mrb[0].mxu0
        %v2583 = vadd.f32 0.0, %v2582
        %v2584 = vpop.f32.mrb[0].mxu0
        %2585 = vdwg.mxu0
        %2586 = vmatprep.subr.mxu0 0.0
        %2587 = vmatpush1.xpose.msra.mxu0 %v1708
        %2588 = vmatprep.subr.mxu0 0.0
        %2589 = vmatpush1.xpose.msra.mxu0 0.0
        %2590 = vmatprep.subr.mxu0 0.0
        %2591 = vmatpush1.xpose.msra.mxu0 0.0
        %2592 = vmatprep.subr.mxu0 0.0
        %2593 = vmatpush1.xpose.msra.mxu0 0.0
        %2594 = vmatprep.subr.mxu0 0.0
        %2595 = vmatpush1.xpose.msra.mxu0 0.0
        %2596 = vmatprep.subr.mxu0 0.0
        %2597 = vmatpush1.xpose.msra.mxu0 0.0
        %2598 = vmatprep.subr.mxu0 0.0
        %2599 = vmatpush1.xpose.msra.mxu0 0.0
        %2600 = vmatprep.subr.mxu0 0.0
        %2601 = vmatpush1.xpose.msra.mxu0 0.0
        %2602 = vmatprep.subr.mxu0 0.0
        %2603 = vmatpush1.xpose.msra.mxu0 0.0
        %2604 = vmatprep.subr.mxu0 0.0
        %2605 = vmatpush1.xpose.msra.mxu0 0.0
        %2606 = vmatprep.subr.mxu0 0.0
        %2607 = vmatpush1.xpose.msra.mxu0 0.0
        %2608 = vmatprep.subr.mxu0 0.0
        %2609 = vmatpush1.xpose.msra.mxu0 0.0
        %2610 = vmatprep.subr.mxu0 0.0
        %2611 = vmatpush1.xpose.msra.mxu0 0.0
        %2612 = vmatprep.subr.mxu0 0.0
        %2613 = vmatpush1.xpose.msra.mxu0 0.0
        %2614 = vmatprep.subr.mxu0 0.0
        %2615 = vmatpush1.xpose.msra.mxu0 0.0
        %2616 = vmatprep.subr.mxu0 0.0
        %2617 = vmatpush1.xpose.msra.mxu0 0.0
        %2618 = vmatprep.subr.mxu0 0.0
        %2619 = vmatpush1.xpose.msra.mxu0 0.0
        %2620 = vmatprep.subr.mxu0 0.0
        %2621 = vmatpush1.xpose.msra.mxu0 0.0
        %2622 = vmatprep.subr.mxu0 0.0
        %2623 = vmatpush1.xpose.msra.mxu0 0.0
        %2624 = vmatprep.subr.mxu0 0.0
        %2625 = vmatpush1.xpose.msra.mxu0 0.0
        %2626 = vmatprep.subr.mxu0 0.0
        %2627 = vmatpush1.xpose.msra.mxu0 0.0
        %2628 = vmatprep.subr.mxu0 0.0
        %2629 = vmatpush1.xpose.msra.mxu0 0.0
        %2630 = vmatprep.subr.mxu0 0.0
        %2631 = vmatpush1.xpose.msra.mxu0 0.0
        %2632 = vmatprep.subr.mxu0 0.0
        %2633 = vmatpush1.xpose.msra.mxu0 0.0
        %2634 = vmatprep.subr.mxu0 0.0
        %2635 = vmatpush1.xpose.msra.mxu0 0.0
        %2636 = vmatprep.subr.mxu0 0.0
        %2637 = vmatpush1.xpose.msra.mxu0 0.0
        %2638 = vmatprep.subr.mxu0 0.0
        %2639 = vmatpush1.xpose.msra.mxu0 0.0
        %2640 = vmatprep.subr.mxu0 0.0
        %2641 = vmatpush1.xpose.msra.mxu0 0.0
        %2642 = vmatprep.subr.mxu0 0.0
        %2643 = vmatpush1.xpose.msra.mxu0 0.0
        %2644 = vmatprep.subr.mxu0 0.0
        %2645 = vmatpush1.xpose.msra.mxu0 0.0
        %2646 = vmatprep.subr.mxu0 0.0
        %2647 = vmatpush1.xpose.msra.mxu0 0.0
        %2648 = vmatprep.subr.mxu0 0.0
        %2649 = vmatpush1.xpose.msra.mxu0 0.0
        %2650 = vmatprep.mubr.f32.mxu0 0.0
        %2651 = vmatmul.mubr.f32.gmra.mrb[0].mxu0 %v1615
        %v2652 = vpop.f32.mrb[0].mxu0
        %v2653 = vadd.f32 0.0, %v2652
        %v2654 = vpop.f32.mrb[0].mxu0
        %2655 = vdwg.mxu0
        %2656 = vmatprep.subr.mxu0 0.0
        %2657 = vmatpush1.xpose.msra.mxu0 %v1712
        %2658 = vmatprep.subr.mxu0 0.0
        %2659 = vmatpush1.xpose.msra.mxu0 0.0
        %2660 = vmatprep.subr.mxu0 0.0
        %2661 = vmatpush1.xpose.msra.mxu0 0.0
        %2662 = vmatprep.subr.mxu0 0.0
        %2663 = vmatpush1.xpose.msra.mxu0 0.0
        %2664 = vmatprep.subr.mxu0 0.0
        %2665 = vmatpush1.xpose.msra.mxu0 0.0
        %2666 = vmatprep.subr.mxu0 0.0
        %2667 = vmatpush1.xpose.msra.mxu0 0.0
        %2668 = vmatprep.subr.mxu0 0.0
        %2669 = vmatpush1.xpose.msra.mxu0 0.0
        %2670 = vmatprep.subr.mxu0 0.0
        %2671 = vmatpush1.xpose.msra.mxu0 0.0
        %2672 = vmatprep.subr.mxu0 0.0
        %2673 = vmatpush1.xpose.msra.mxu0 0.0
        %2674 = vmatprep.subr.mxu0 0.0
        %2675 = vmatpush1.xpose.msra.mxu0 0.0
        %2676 = vmatprep.subr.mxu0 0.0
        %2677 = vmatpush1.xpose.msra.mxu0 0.0
        %2678 = vmatprep.subr.mxu0 0.0
        %2679 = vmatpush1.xpose.msra.mxu0 0.0
        %2680 = vmatprep.subr.mxu0 0.0
        %2681 = vmatpush1.xpose.msra.mxu0 0.0
        %2682 = vmatprep.subr.mxu0 0.0
        %2683 = vmatpush1.xpose.msra.mxu0 0.0
        %2684 = vmatprep.subr.mxu0 0.0
        %2685 = vmatpush1.xpose.msra.mxu0 0.0
        %2686 = vmatprep.subr.mxu0 0.0
        %2687 = vmatpush1.xpose.msra.mxu0 0.0
        %2688 = vmatprep.subr.mxu0 0.0
        %2689 = vmatpush1.xpose.msra.mxu0 0.0
        %2690 = vmatprep.subr.mxu0 0.0
        %2691 = vmatpush1.xpose.msra.mxu0 0.0
        %2692 = vmatprep.subr.mxu0 0.0
        %2693 = vmatpush1.xpose.msra.mxu0 0.0
        %2694 = vmatprep.subr.mxu0 0.0
        %2695 = vmatpush1.xpose.msra.mxu0 0.0
        %2696 = vmatprep.subr.mxu0 0.0
        %2697 = vmatpush1.xpose.msra.mxu0 0.0
        %2698 = vmatprep.subr.mxu0 0.0
        %2699 = vmatpush1.xpose.msra.mxu0 0.0
        %2700 = vmatprep.subr.mxu0 0.0
        %2701 = vmatpush1.xpose.msra.mxu0 0.0
        %2702 = vmatprep.subr.mxu0 0.0
        %2703 = vmatpush1.xpose.msra.mxu0 0.0
        %2704 = vmatprep.subr.mxu0 0.0
        %2705 = vmatpush1.xpose.msra.mxu0 0.0
        %2706 = vmatprep.subr.mxu0 0.0
        %2707 = vmatpush1.xpose.msra.mxu0 0.0
        %2708 = vmatprep.subr.mxu0 0.0
        %2709 = vmatpush1.xpose.msra.mxu0 0.0
        %2710 = vmatprep.subr.mxu0 0.0
        %2711 = vmatpush1.xpose.msra.mxu0 0.0
        %2712 = vmatprep.subr.mxu0 0.0
        %2713 = vmatpush1.xpose.msra.mxu0 0.0
        %2714 = vmatprep.subr.mxu0 0.0
        %2715 = vmatpush1.xpose.msra.mxu0 0.0
        %2716 = vmatprep.subr.mxu0 0.0
        %2717 = vmatpush1.xpose.msra.mxu0 0.0
        %2718 = vmatprep.subr.mxu0 0.0
        %2719 = vmatpush1.xpose.msra.mxu0 0.0
        %2720 = vmatprep.mubr.f32.mxu0 0.0
        %2721 = vmatmul.mubr.f32.gmra.mrb[0].mxu0 %v1619
        %v2722 = vpop.f32.mrb[0].mxu0
        %v2723 = vadd.f32 0.0, %v2722
        %v2724 = vpop.f32.mrb[0].mxu0
        %2725 = vdwg.mxu0
        %v2726 = vmul.f32 %v1953, 0.088388346
        %v2727 = vmul.f32 %v2023, 0.088388346
        %v2728 = vmul.f32 %v2093, 0.088388346
        %v2729 = vmul.f32 %v2163, 0.088388346
        %v2730 = vmul.f32 %v2233, 0.088388346
        %v2731 = vmul.f32 %v2303, 0.088388346
        %v2732 = vmul.f32 %v2373, 0.088388346
        %v2733 = vmul.f32 %v2443, 0.088388346
        %v2734 = vmul.f32 %v2513, 0.088388346
        %v2735 = vmul.f32 %v2583, 0.088388346
        %v2736 = vmul.f32 %v2653, 0.088388346
        %v2737 = vmul.f32 %v2723, 0.088388346
        %v2738 = vlaneseq
        %v2739 = vshrl.u32 %v2738, 7
        %v2740 = vsub.s32 0, %v2739
        %v2741 = vrot.slane %v1836, %v2740
        %v2742 = vlaneseq
        %v2743 = vshrl.u32 %v2742, 7
        %v2744 = vsub.s32 0, %v2743
        %v2745 = vrot.slane %v1850, %v2744
        %v2746 = vlaneseq
        %v2747 = vshrl.u32 %v2746, 7
        %v2748 = vsub.s32 0, %v2747
        %v2749 = vrot.slane %v1858, %v2748
        %v2750 = vlaneseq
        %v2751 = vshrl.u32 %v2750, 7
        %v2752 = vsub.s32 0, %v2751
        %v2753 = vrot.slane %v1860, %v2752
        %v2754 = vlaneseq
        %v2755 = vshrl.u32 %v2754, 7
        %v2756 = vsub.s32 0, %v2755
        %v2757 = vrot.slane %v1843, %v2756
        %v2758 = vlaneseq
        %v2759 = vshrl.u32 %v2758, 7
        %v2760 = vsub.s32 0, %v2759
        %v2761 = vrot.slane %v1857, %v2760
        %v2762 = vlaneseq
        %v2763 = vshrl.u32 %v2762, 7
        %v2764 = vsub.s32 0, %v2763
        %v2765 = vrot.slane %v1859, %v2764
        %v2766 = vlaneseq
        %v2767 = vshrl.u32 %v2766, 7
        %v2768 = vsub.s32 0, %v2767
        %v2769 = vrot.slane %v1861, %v2768
        %v2770 = vlaneseq
        %v2771 = vshrl.u32 %v2770, 7
        %v2772 = vsub.s32 0, %v2771
        %v2773 = vrot.slane %v1876, %v2772
        %v2774 = vlaneseq
        %v2775 = vshrl.u32 %v2774, 7
        %v2776 = vsub.s32 0, %v2775
        %v2777 = vrot.slane %v1883, %v2776
        %v2778 = vlaneseq
        %v2779 = vshrl.u32 %v2778, 7
        %v2780 = vsub.s32 0, %v2779
        %v2781 = vrot.slane %v1884, %v2780
        %v2782 = vlaneseq
        %v2783 = vshrl.u32 %v2782, 7
        %v2784 = vsub.s32 0, %v2783
        %v2785 = vrot.slane %v1885, %v2784
        %v2798 = vadd.f32 %v2726, %v2741
        %v2799 = vadd.f32 %v2727, %v2745
        %v2800 = vadd.f32 %v2728, %v2749
        %v2801 = vadd.f32 %v2729, %v2753
        %v2802 = vadd.f32 %v2730, %v2757
        %v2803 = vadd.f32 %v2731, %v2761
        %v2804 = vadd.f32 %v2732, %v2765
        %v2805 = vadd.f32 %v2733, %v2769
        %v2806 = vadd.f32 %v2734, %v2773
        %v2807 = vadd.f32 %v2735, %v2777
        %v2808 = vadd.f32 %v2736, %v2781
        %v2809 = vadd.f32 %v2737, %v2785
        %vm2810 = vcmask 64512
        %v2811 = vsel %vm2810, %v2798, -inf
        %2812 = vmax.xlane.f32.xlu0 %v2811
        %v2813 = vpop.xlane.xlu0 %2812
        %v2814 = vsel %vm2810, %v2799, -inf
        %2815 = vmax.xlane.f32.xlu0 %v2814
        %v2816 = vpop.xlane.xlu0 %2815
        %v2817 = vsel %vm2810, %v2800, -inf
        %2818 = vmax.xlane.f32.xlu0 %v2817
        %v2819 = vpop.xlane.xlu0 %2818
        %v2820 = vsel %vm2810, %v2801, -inf
        %2821 = vmax.xlane.f32.xlu0 %v2820
        %v2822 = vpop.xlane.xlu0 %2821
        %v2823 = vsel %vm2810, %v2802, -inf
        %2824 = vmax.xlane.f32.xlu0 %v2823
        %v2825 = vpop.xlane.xlu0 %2824
        %v2826 = vsel %vm2810, %v2803, -inf
        %2827 = vmax.xlane.f32.xlu0 %v2826
        %v2828 = vpop.xlane.xlu0 %2827
        %v2829 = vsel %vm2810, %v2804, -inf
        %2830 = vmax.xlane.f32.xlu0 %v2829
        %v2831 = vpop.xlane.xlu0 %2830
        %v2832 = vsel %vm2810, %v2805, -inf
        %2833 = vmax.xlane.f32.xlu0 %v2832
        %v2834 = vpop.xlane.xlu0 %2833
        %v2835 = vsel %vm2810, %v2806, -inf
        %2836 = vmax.xlane.f32.xlu0 %v2835
        %v2837 = vpop.xlane.xlu0 %2836
        %v2838 = vsel %vm2810, %v2807, -inf
        %2839 = vmax.xlane.f32.xlu0 %v2838
        %v2840 = vpop.xlane.xlu0 %2839
        %v2841 = vsel %vm2810, %v2808, -inf
        %2842 = vmax.xlane.f32.xlu0 %v2841
        %v2843 = vpop.xlane.xlu0 %2842
        %v2844 = vsel %vm2810, %v2809, -inf
        %2845 = vmax.xlane.f32.xlu0 %v2844
        %v2846 = vpop.xlane.xlu0 %2845
        %v2847 = vsub.f32 %v2798, %v2813
        %v2848 = vsub.f32 %v2799, %v2816
        %v2849 = vsub.f32 %v2800, %v2819
        %v2850 = vsub.f32 %v2801, %v2822
        %v2851 = vsub.f32 %v2802, %v2825
        %v2852 = vsub.f32 %v2803, %v2828
        %v2853 = vsub.f32 %v2804, %v2831
        %v2854 = vsub.f32 %v2805, %v2834
        %v2855 = vsub.f32 %v2806, %v2837
        %v2856 = vsub.f32 %v2807, %v2840
        %v2857 = vsub.f32 %v2808, %v2843
        %v2858 = vsub.f32 %v2809, %v2846
        %v2859 = vmul.f32 %v2847, 1.442695
        %v2860 = vpow.pop %v2859
        %v2861 = vmul.f32 %v2848, 1.442695
        %v2862 = vpow.pop %v2861
        %v2863 = vmul.f32 %v2849, 1.442695
        %v2864 = vpow.pop %v2863
        %v2865 = vmul.f32 %v2850, 1.442695
        %v2866 = vpow.pop %v2865
        %v2867 = vmul.f32 %v2851, 1.442695
        %v2868 = vpow.pop %v2867
        %v2869 = vmul.f32 %v2852, 1.442695
        %v2870 = vpow.pop %v2869
        %v2871 = vmul.f32 %v2853, 1.442695
        %v2872 = vpow.pop %v2871
        %v2873 = vmul.f32 %v2854, 1.442695
        %v2874 = vpow.pop %v2873
        %v2875 = vmul.f32 %v2855, 1.442695
        %v2876 = vpow.pop %v2875
        %v2877 = vmul.f32 %v2856, 1.442695
        %v2878 = vpow.pop %v2877
        %v2879 = vmul.f32 %v2857, 1.442695
        %v2880 = vpow.pop %v2879
        %v2881 = vmul.f32 %v2858, 1.442695
        %v2882 = vpow.pop %v2881
        %v2883 = vsel %vm2810, %v2860, 0.0
        %2884 = vadd.xlane.f32.xlu0 %v2883
        %v2885 = vpop.xlane.xlu0 %2884
        %v2886 = vsel %vm2810, %v2862, 0.0
        %2887 = vadd.xlane.f32.xlu0 %v2886
        %v2888 = vpop.xlane.xlu0 %2887
        %v2889 = vsel %vm2810, %v2864, 0.0
        %2890 = vadd.xlane.f32.xlu0 %v2889
        %v2891 = vpop.xlane.xlu0 %2890
        %v2892 = vsel %vm2810, %v2866, 0.0
        %2893 = vadd.xlane.f32.xlu0 %v2892
        %v2894 = vpop.xlane.xlu0 %2893
        %v2895 = vsel %vm2810, %v2868, 0.0
        %2896 = vadd.xlane.f32.xlu0 %v2895
        %v2897 = vpop.xlane.xlu0 %2896
        %v2898 = vsel %vm2810, %v2870, 0.0
        %2899 = vadd.xlane.f32.xlu0 %v2898
        %v2900 = vpop.xlane.xlu0 %2899
        %v2901 = vsel %vm2810, %v2872, 0.0
        %2902 = vadd.xlane.f32.xlu0 %v2901
        %v2903 = vpop.xlane.xlu0 %2902
        %v2904 = vsel %vm2810, %v2874, 0.0
        %2905 = vadd.xlane.f32.xlu0 %v2904
        %v2906 = vpop.xlane.xlu0 %2905
        %v2907 = vsel %vm2810, %v2876, 0.0
        %2908 = vadd.xlane.f32.xlu0 %v2907
        %v2909 = vpop.xlane.xlu0 %2908
        %v2910 = vsel %vm2810, %v2878, 0.0
        %2911 = vadd.xlane.f32.xlu0 %v2910
        %v2912 = vpop.xlane.xlu0 %2911
        %v2913 = vsel %vm2810, %v2880, 0.0
        %2914 = vadd.xlane.f32.xlu0 %v2913
        %v2915 = vpop.xlane.xlu0 %2914
        %v2916 = vsel %vm2810, %v2882, 0.0
        %2917 = vadd.xlane.f32.xlu0 %v2916
        %v2918 = vpop.xlane.xlu0 %2917
        %v2919 = vrcp.pop %v2885
        %v2920 = vrcp.pop %v2888
        %v2921 = vrcp.pop %v2891
        %v2922 = vrcp.pop %v2894
        %v2923 = vrcp.pop %v2897
        %v2924 = vrcp.pop %v2900
        %v2925 = vrcp.pop %v2903
        %v2926 = vrcp.pop %v2906
        %v2927 = vrcp.pop %v2909
        %v2928 = vrcp.pop %v2912
        %v2929 = vrcp.pop %v2915
        %v2930 = vrcp.pop %v2918
        %v2931 = vmul.f32 %v2860, %v2919
        %v2932 = vmul.f32 %v2862, %v2920
        %v2933 = vmul.f32 %v2864, %v2921
        %v2934 = vmul.f32 %v2866, %v2922
        %v2935 = vmul.f32 %v2868, %v2923
        %v2936 = vmul.f32 %v2870, %v2924
        %v2937 = vmul.f32 %v2872, %v2925
        %v2938 = vmul.f32 %v2874, %v2926
        %v2939 = vmul.f32 %v2876, %v2927
        %v2940 = vmul.f32 %v2878, %v2928
        %v2941 = vmul.f32 %v2880, %v2929
        %v2942 = vmul.f32 %v2882, %v2930
        %v2944 = vsel %vm2810, %v2931, 0
        %2946 = vmatprep.subr.mxu0 0.0
        %2947 = vmatpush1.msra.mxu0 %v1751
        %2948 = vmatprep.subr.mxu0 0.0
        %2949 = vmatpush1.msra.mxu0 0.0
        %2950 = vmatprep.subr.mxu0 0.0
        %2951 = vmatpush1.msra.mxu0 0.0
        %2952 = vmatprep.subr.mxu0 0.0
        %2953 = vmatpush1.msra.mxu0 0.0
        %2954 = vmatprep.subr.mxu0 0.0
        %2955 = vmatpush1.msra.mxu0 0.0
        %2956 = vmatprep.subr.mxu0 0.0
        %2957 = vmatpush1.msra.mxu0 0.0
        %2958 = vmatprep.subr.mxu0 0.0
        %2959 = vmatpush1.msra.mxu0 0.0
        %2960 = vmatprep.subr.mxu0 0.0
        %2961 = vmatpush1.msra.mxu0 0.0
        %2962 = vmatprep.subr.mxu0 0.0
        %2963 = vmatpush1.msra.mxu0 0.0
        %2964 = vmatprep.subr.mxu0 0.0
        %2965 = vmatpush1.msra.mxu0 0.0
        %2966 = vmatprep.subr.mxu0 0.0
        %2967 = vmatpush1.msra.mxu0 0.0
        %2968 = vmatprep.subr.mxu0 0.0
        %2969 = vmatpush1.msra.mxu0 0.0
        %2970 = vmatprep.subr.mxu0 0.0
        %2971 = vmatpush1.msra.mxu0 0.0
        %2972 = vmatprep.subr.mxu0 0.0
        %2973 = vmatpush1.msra.mxu0 0.0
        %2974 = vmatprep.subr.mxu0 0.0
        %2975 = vmatpush1.msra.mxu0 0.0
        %2976 = vmatprep.subr.mxu0 0.0
        %2977 = vmatpush1.msra.mxu0 0.0
        %2978 = vmatprep.subr.mxu0 0.0
        %2979 = vmatpush1.msra.mxu0 0.0
        %2980 = vmatprep.subr.mxu0 0.0
        %2981 = vmatpush1.msra.mxu0 0.0
        %2982 = vmatprep.subr.mxu0 0.0
        %2983 = vmatpush1.msra.mxu0 0.0
        %2984 = vmatprep.subr.mxu0 0.0
        %2985 = vmatpush1.msra.mxu0 0.0
        %2986 = vmatprep.subr.mxu0 0.0
        %2987 = vmatpush1.msra.mxu0 0.0
        %2988 = vmatprep.subr.mxu0 0.0
        %2989 = vmatpush1.msra.mxu0 0.0
        %2990 = vmatprep.subr.mxu0 0.0
        %2991 = vmatpush1.msra.mxu0 0.0
        %2992 = vmatprep.subr.mxu0 0.0
        %2993 = vmatpush1.msra.mxu0 0.0
        %2994 = vmatprep.subr.mxu0 0.0
        %2995 = vmatpush1.msra.mxu0 0.0
        %2996 = vmatprep.subr.mxu0 0.0
        %2997 = vmatpush1.msra.mxu0 0.0
        %2998 = vmatprep.subr.mxu0 0.0
        %2999 = vmatpush1.msra.mxu0 0.0
        %3000 = vmatprep.subr.mxu0 0.0
        %3001 = vmatpush1.msra.mxu0 0.0
        %3002 = vmatprep.subr.mxu0 0.0
        %3003 = vmatpush1.msra.mxu0 0.0
        %3004 = vmatprep.subr.mxu0 0.0
        %3005 = vmatpush1.msra.mxu0 0.0
        %3006 = vmatprep.subr.mxu0 0.0
        %3007 = vmatpush1.msra.mxu0 0.0
        %3008 = vmatprep.subr.mxu0 0.0
        %3009 = vmatpush1.msra.mxu0 0.0
        %3010 = vmatprep.mubr.f32.mxu0 0.0
        %3011 = vmatmul.mubr.f32.gmra.mrb[0].mxu0 %v2944
        %v3012 = vpop.f32.mrb[0].mxu0
        %v3013 = vadd.f32 0.0, %v3012
        %v3014 = vpop.f32.mrb[0].mxu0
        %3015 = vdwg.mxu0
        %v3017 = vsel %vm2810, %v2932, 0
        %3019 = vmatprep.subr.mxu0 0.0
        %3020 = vmatpush1.msra.mxu0 %v1755
        %3021 = vmatprep.subr.mxu0 0.0
        %3022 = vmatpush1.msra.mxu0 0.0
        %3023 = vmatprep.subr.mxu0 0.0
        %3024 = vmatpush1.msra.mxu0 0.0
        %3025 = vmatprep.subr.mxu0 0.0
        %3026 = vmatpush1.msra.mxu0 0.0
        %3027 = vmatprep.subr.mxu0 0.0
        %3028 = vmatpush1.msra.mxu0 0.0
        %3029 = vmatprep.subr.mxu0 0.0
        %3030 = vmatpush1.msra.mxu0 0.0
        %3031 = vmatprep.subr.mxu0 0.0
        %3032 = vmatpush1.msra.mxu0 0.0
        %3033 = vmatprep.subr.mxu0 0.0
        %3034 = vmatpush1.msra.mxu0 0.0
        %3035 = vmatprep.subr.mxu0 0.0
        %3036 = vmatpush1.msra.mxu0 0.0
        %3037 = vmatprep.subr.mxu0 0.0
        %3038 = vmatpush1.msra.mxu0 0.0
        %3039 = vmatprep.subr.mxu0 0.0
        %3040 = vmatpush1.msra.mxu0 0.0
        %3041 = vmatprep.subr.mxu0 0.0
        %3042 = vmatpush1.msra.mxu0 0.0
        %3043 = vmatprep.subr.mxu0 0.0
        %3044 = vmatpush1.msra.mxu0 0.0
        %3045 = vmatprep.subr.mxu0 0.0
        %3046 = vmatpush1.msra.mxu0 0.0
        %3047 = vmatprep.subr.mxu0 0.0
        %3048 = vmatpush1.msra.mxu0 0.0
        %3049 = vmatprep.subr.mxu0 0.0
        %3050 = vmatpush1.msra.mxu0 0.0
        %3051 = vmatprep.subr.mxu0 0.0
        %3052 = vmatpush1.msra.mxu0 0.0
        %3053 = vmatprep.subr.mxu0 0.0
        %3054 = vmatpush1.msra.mxu0 0.0
        %3055 = vmatprep.subr.mxu0 0.0
        %3056 = vmatpush1.msra.mxu0 0.0
        %3057 = vmatprep.subr.mxu0 0.0
        %3058 = vmatpush1.msra.mxu0 0.0
        %3059 = vmatprep.subr.mxu0 0.0
        %3060 = vmatpush1.msra.mxu0 0.0
        %3061 = vmatprep.subr.mxu0 0.0
        %3062 = vmatpush1.msra.mxu0 0.0
        %3063 = vmatprep.subr.mxu0 0.0
        %3064 = vmatpush1.msra.mxu0 0.0
        %3065 = vmatprep.subr.mxu0 0.0
        %3066 = vmatpush1.msra.mxu0 0.0
        %3067 = vmatprep.subr.mxu0 0.0
        %3068 = vmatpush1.msra.mxu0 0.0
        %3069 = vmatprep.subr.mxu0 0.0
        %3070 = vmatpush1.msra.mxu0 0.0
        %3071 = vmatprep.subr.mxu0 0.0
        %3072 = vmatpush1.msra.mxu0 0.0
        %3073 = vmatprep.subr.mxu0 0.0
        %3074 = vmatpush1.msra.mxu0 0.0
        %3075 = vmatprep.subr.mxu0 0.0
        %3076 = vmatpush1.msra.mxu0 0.0
        %3077 = vmatprep.subr.mxu0 0.0
        %3078 = vmatpush1.msra.mxu0 0.0
        %3079 = vmatprep.subr.mxu0 0.0
        %3080 = vmatpush1.msra.mxu0 0.0
        %3081 = vmatprep.subr.mxu0 0.0
        %3082 = vmatpush1.msra.mxu0 0.0
        %3083 = vmatprep.mubr.f32.mxu0 0.0
        %3084 = vmatmul.mubr.f32.gmra.mrb[0].mxu0 %v3017
        %v3085 = vpop.f32.mrb[0].mxu0
        %v3086 = vadd.f32 0.0, %v3085
        %v3087 = vpop.f32.mrb[0].mxu0
        %3088 = vdwg.mxu0
        %v3090 = vsel %vm2810, %v2933, 0
        %3092 = vmatprep.subr.mxu0 0.0
        %3093 = vmatpush1.msra.mxu0 %v1761
        %3094 = vmatprep.subr.mxu0 0.0
        %3095 = vmatpush1.msra.mxu0 0.0
        %3096 = vmatprep.subr.mxu0 0.0
        %3097 = vmatpush1.msra.mxu0 0.0
        %3098 = vmatprep.subr.mxu0 0.0
        %3099 = vmatpush1.msra.mxu0 0.0
        %3100 = vmatprep.subr.mxu0 0.0
        %3101 = vmatpush1.msra.mxu0 0.0
        %3102 = vmatprep.subr.mxu0 0.0
        %3103 = vmatpush1.msra.mxu0 0.0
        %3104 = vmatprep.subr.mxu0 0.0
        %3105 = vmatpush1.msra.mxu0 0.0
        %3106 = vmatprep.subr.mxu0 0.0
        %3107 = vmatpush1.msra.mxu0 0.0
        %3108 = vmatprep.subr.mxu0 0.0
        %3109 = vmatpush1.msra.mxu0 0.0
        %3110 = vmatprep.subr.mxu0 0.0
        %3111 = vmatpush1.msra.mxu0 0.0
        %3112 = vmatprep.subr.mxu0 0.0
        %3113 = vmatpush1.msra.mxu0 0.0
        %3114 = vmatprep.subr.mxu0 0.0
        %3115 = vmatpush1.msra.mxu0 0.0
        %3116 = vmatprep.subr.mxu0 0.0
        %3117 = vmatpush1.msra.mxu0 0.0
        %3118 = vmatprep.subr.mxu0 0.0
        %3119 = vmatpush1.msra.mxu0 0.0
        %3120 = vmatprep.subr.mxu0 0.0
        %3121 = vmatpush1.msra.mxu0 0.0
        %3122 = vmatprep.subr.mxu0 0.0
        %3123 = vmatpush1.msra.mxu0 0.0
        %3124 = vmatprep.subr.mxu0 0.0
        %3125 = vmatpush1.msra.mxu0 0.0
        %3126 = vmatprep.subr.mxu0 0.0
        %3127 = vmatpush1.msra.mxu0 0.0
        %3128 = vmatprep.subr.mxu0 0.0
        %3129 = vmatpush1.msra.mxu0 0.0
        %3130 = vmatprep.subr.mxu0 0.0
        %3131 = vmatpush1.msra.mxu0 0.0
        %3132 = vmatprep.subr.mxu0 0.0
        %3133 = vmatpush1.msra.mxu0 0.0
        %3134 = vmatprep.subr.mxu0 0.0
        %3135 = vmatpush1.msra.mxu0 0.0
        %3136 = vmatprep.subr.mxu0 0.0
        %3137 = vmatpush1.msra.mxu0 0.0
        %3138 = vmatprep.subr.mxu0 0.0
        %3139 = vmatpush1.msra.mxu0 0.0
        %3140 = vmatprep.subr.mxu0 0.0
        %3141 = vmatpush1.msra.mxu0 0.0
        %3142 = vmatprep.subr.mxu0 0.0
        %3143 = vmatpush1.msra.mxu0 0.0
        %3144 = vmatprep.subr.mxu0 0.0
        %3145 = vmatpush1.msra.mxu0 0.0
        %3146 = vmatprep.subr.mxu0 0.0
        %3147 = vmatpush1.msra.mxu0 0.0
        %3148 = vmatprep.subr.mxu0 0.0
        %3149 = vmatpush1.msra.mxu0 0.0
        %3150 = vmatprep.subr.mxu0 0.0
        %3151 = vmatpush1.msra.mxu0 0.0
        %3152 = vmatprep.subr.mxu0 0.0
        %3153 = vmatpush1.msra.mxu0 0.0
        %3154 = vmatprep.subr.mxu0 0.0
        %3155 = vmatpush1.msra.mxu0 0.0
        %3156 = vmatprep.mubr.f32.mxu0 0.0
        %3157 = vmatmul.mubr.f32.gmra.mrb[0].mxu0 %v3090
        %v3158 = vpop.f32.mrb[0].mxu0
        %v3159 = vadd.f32 0.0, %v3158
        %v3160 = vpop.f32.mrb[0].mxu0
        %3161 = vdwg.mxu0
        %v3163 = vsel %vm2810, %v2934, 0
        %3165 = vmatprep.subr.mxu0 0.0
        %3166 = vmatpush1.msra.mxu0 %v1765
        %3167 = vmatprep.subr.mxu0 0.0
        %3168 = vmatpush1.msra.mxu0 0.0
        %3169 = vmatprep.subr.mxu0 0.0
        %3170 = vmatpush1.msra.mxu0 0.0
        %3171 = vmatprep.subr.mxu0 0.0
        %3172 = vmatpush1.msra.mxu0 0.0
        %3173 = vmatprep.subr.mxu0 0.0
        %3174 = vmatpush1.msra.mxu0 0.0
        %3175 = vmatprep.subr.mxu0 0.0
        %3176 = vmatpush1.msra.mxu0 0.0
        %3177 = vmatprep.subr.mxu0 0.0
        %3178 = vmatpush1.msra.mxu0 0.0
        %3179 = vmatprep.subr.mxu0 0.0
        %3180 = vmatpush1.msra.mxu0 0.0
        %3181 = vmatprep.subr.mxu0 0.0
        %3182 = vmatpush1.msra.mxu0 0.0
        %3183 = vmatprep.subr.mxu0 0.0
        %3184 = vmatpush1.msra.mxu0 0.0
        %3185 = vmatprep.subr.mxu0 0.0
        %3186 = vmatpush1.msra.mxu0 0.0
        %3187 = vmatprep.subr.mxu0 0.0
        %3188 = vmatpush1.msra.mxu0 0.0
        %3189 = vmatprep.subr.mxu0 0.0
        %3190 = vmatpush1.msra.mxu0 0.0
        %3191 = vmatprep.subr.mxu0 0.0
        %3192 = vmatpush1.msra.mxu0 0.0
        %3193 = vmatprep.subr.mxu0 0.0
        %3194 = vmatpush1.msra.mxu0 0.0
        %3195 = vmatprep.subr.mxu0 0.0
        %3196 = vmatpush1.msra.mxu0 0.0
        %3197 = vmatprep.subr.mxu0 0.0
        %3198 = vmatpush1.msra.mxu0 0.0
        %3199 = vmatprep.subr.mxu0 0.0
        %3200 = vmatpush1.msra.mxu0 0.0
        %3201 = vmatprep.subr.mxu0 0.0
        %3202 = vmatpush1.msra.mxu0 0.0
        %3203 = vmatprep.subr.mxu0 0.0
        %3204 = vmatpush1.msra.mxu0 0.0
        %3205 = vmatprep.subr.mxu0 0.0
        %3206 = vmatpush1.msra.mxu0 0.0
        %3207 = vmatprep.subr.mxu0 0.0
        %3208 = vmatpush1.msra.mxu0 0.0
        %3209 = vmatprep.subr.mxu0 0.0
        %3210 = vmatpush1.msra.mxu0 0.0
        %3211 = vmatprep.subr.mxu0 0.0
        %3212 = vmatpush1.msra.mxu0 0.0
        %3213 = vmatprep.subr.mxu0 0.0
        %3214 = vmatpush1.msra.mxu0 0.0
        %3215 = vmatprep.subr.mxu0 0.0
        %3216 = vmatpush1.msra.mxu0 0.0
        %3217 = vmatprep.subr.mxu0 0.0
        %3218 = vmatpush1.msra.mxu0 0.0
        %3219 = vmatprep.subr.mxu0 0.0
        %3220 = vmatpush1.msra.mxu0 0.0
        %3221 = vmatprep.subr.mxu0 0.0
        %3222 = vmatpush1.msra.mxu0 0.0
        %3223 = vmatprep.subr.mxu0 0.0
        %3224 = vmatpush1.msra.mxu0 0.0
        %3225 = vmatprep.subr.mxu0 0.0
        %3226 = vmatpush1.msra.mxu0 0.0
        %3227 = vmatprep.subr.mxu0 0.0
        %3228 = vmatpush1.msra.mxu0 0.0
        %3229 = vmatprep.mubr.f32.mxu0 0.0
        %3230 = vmatmul.mubr.f32.gmra.mrb[0].mxu0 %v3163
        %v3231 = vpop.f32.mrb[0].mxu0
        %v3232 = vadd.f32 0.0, %v3231
        %v3233 = vpop.f32.mrb[0].mxu0
        %3234 = vdwg.mxu0
        %v3236 = vsel %vm2810, %v2935, 0
        %3238 = vmatprep.subr.mxu0 0.0
        %3239 = vmatpush1.msra.mxu0 %v1771
        %3240 = vmatprep.subr.mxu0 0.0
        %3241 = vmatpush1.msra.mxu0 0.0
        %3242 = vmatprep.subr.mxu0 0.0
        %3243 = vmatpush1.msra.mxu0 0.0
        %3244 = vmatprep.subr.mxu0 0.0
        %3245 = vmatpush1.msra.mxu0 0.0
        %3246 = vmatprep.subr.mxu0 0.0
        %3247 = vmatpush1.msra.mxu0 0.0
        %3248 = vmatprep.subr.mxu0 0.0
        %3249 = vmatpush1.msra.mxu0 0.0
        %3250 = vmatprep.subr.mxu0 0.0
        %3251 = vmatpush1.msra.mxu0 0.0
        %3252 = vmatprep.subr.mxu0 0.0
        %3253 = vmatpush1.msra.mxu0 0.0
        %3254 = vmatprep.subr.mxu0 0.0
        %3255 = vmatpush1.msra.mxu0 0.0
        %3256 = vmatprep.subr.mxu0 0.0
        %3257 = vmatpush1.msra.mxu0 0.0
        %3258 = vmatprep.subr.mxu0 0.0
        %3259 = vmatpush1.msra.mxu0 0.0
        %3260 = vmatprep.subr.mxu0 0.0
        %3261 = vmatpush1.msra.mxu0 0.0
        %3262 = vmatprep.subr.mxu0 0.0
        %3263 = vmatpush1.msra.mxu0 0.0
        %3264 = vmatprep.subr.mxu0 0.0
        %3265 = vmatpush1.msra.mxu0 0.0
        %3266 = vmatprep.subr.mxu0 0.0
        %3267 = vmatpush1.msra.mxu0 0.0
        %3268 = vmatprep.subr.mxu0 0.0
        %3269 = vmatpush1.msra.mxu0 0.0
        %3270 = vmatprep.subr.mxu0 0.0
        %3271 = vmatpush1.msra.mxu0 0.0
        %3272 = vmatprep.subr.mxu0 0.0
        %3273 = vmatpush1.msra.mxu0 0.0
        %3274 = vmatprep.subr.mxu0 0.0
        %3275 = vmatpush1.msra.mxu0 0.0
        %3276 = vmatprep.subr.mxu0 0.0
        %3277 = vmatpush1.msra.mxu0 0.0
        %3278 = vmatprep.subr.mxu0 0.0
        %3279 = vmatpush1.msra.mxu0 0.0
        %3280 = vmatprep.subr.mxu0 0.0
        %3281 = vmatpush1.msra.mxu0 0.0
        %3282 = vmatprep.subr.mxu0 0.0
        %3283 = vmatpush1.msra.mxu0 0.0
        %3284 = vmatprep.subr.mxu0 0.0
        %3285 = vmatpush1.msra.mxu0 0.0
        %3286 = vmatprep.subr.mxu0 0.0
        %3287 = vmatpush1.msra.mxu0 0.0
        %3288 = vmatprep.subr.mxu0 0.0
        %3289 = vmatpush1.msra.mxu0 0.0
        %3290 = vmatprep.subr.mxu0 0.0
        %3291 = vmatpush1.msra.mxu0 0.0
        %3292 = vmatprep.subr.mxu0 0.0
        %3293 = vmatpush1.msra.mxu0 0.0
        %3294 = vmatprep.subr.mxu0 0.0
        %3295 = vmatpush1.msra.mxu0 0.0
        %3296 = vmatprep.subr.mxu0 0.0
        %3297 = vmatpush1.msra.mxu0 0.0
        %3298 = vmatprep.subr.mxu0 0.0
        %3299 = vmatpush1.msra.mxu0 0.0
        %3300 = vmatprep.subr.mxu0 0.0
        %3301 = vmatpush1.msra.mxu0 0.0
        %3302 = vmatprep.mubr.f32.mxu0 0.0
        %3303 = vmatmul.mubr.f32.gmra.mrb[0].mxu0 %v3236
        %v3304 = vpop.f32.mrb[0].mxu0
        %v3305 = vadd.f32 0.0, %v3304
        %v3306 = vpop.f32.mrb[0].mxu0
        %3307 = vdwg.mxu0
        %v3309 = vsel %vm2810, %v2936, 0
        %3311 = vmatprep.subr.mxu0 0.0
        %3312 = vmatpush1.msra.mxu0 %v1775
        %3313 = vmatprep.subr.mxu0 0.0
        %3314 = vmatpush1.msra.mxu0 0.0
        %3315 = vmatprep.subr.mxu0 0.0
        %3316 = vmatpush1.msra.mxu0 0.0
        %3317 = vmatprep.subr.mxu0 0.0
        %3318 = vmatpush1.msra.mxu0 0.0
        %3319 = vmatprep.subr.mxu0 0.0
        %3320 = vmatpush1.msra.mxu0 0.0
        %3321 = vmatprep.subr.mxu0 0.0
        %3322 = vmatpush1.msra.mxu0 0.0
        %3323 = vmatprep.subr.mxu0 0.0
        %3324 = vmatpush1.msra.mxu0 0.0
        %3325 = vmatprep.subr.mxu0 0.0
        %3326 = vmatpush1.msra.mxu0 0.0
        %3327 = vmatprep.subr.mxu0 0.0
        %3328 = vmatpush1.msra.mxu0 0.0
        %3329 = vmatprep.subr.mxu0 0.0
        %3330 = vmatpush1.msra.mxu0 0.0
        %3331 = vmatprep.subr.mxu0 0.0
        %3332 = vmatpush1.msra.mxu0 0.0
        %3333 = vmatprep.subr.mxu0 0.0
        %3334 = vmatpush1.msra.mxu0 0.0
        %3335 = vmatprep.subr.mxu0 0.0
        %3336 = vmatpush1.msra.mxu0 0.0
        %3337 = vmatprep.subr.mxu0 0.0
        %3338 = vmatpush1.msra.mxu0 0.0
        %3339 = vmatprep.subr.mxu0 0.0
        %3340 = vmatpush1.msra.mxu0 0.0
        %3341 = vmatprep.subr.mxu0 0.0
        %3342 = vmatpush1.msra.mxu0 0.0
        %3343 = vmatprep.subr.mxu0 0.0
        %3344 = vmatpush1.msra.mxu0 0.0
        %3345 = vmatprep.subr.mxu0 0.0
        %3346 = vmatpush1.msra.mxu0 0.0
        %3347 = vmatprep.subr.mxu0 0.0
        %3348 = vmatpush1.msra.mxu0 0.0
        %3349 = vmatprep.subr.mxu0 0.0
        %3350 = vmatpush1.msra.mxu0 0.0
        %3351 = vmatprep.subr.mxu0 0.0
        %3352 = vmatpush1.msra.mxu0 0.0
        %3353 = vmatprep.subr.mxu0 0.0
        %3354 = vmatpush1.msra.mxu0 0.0
        %3355 = vmatprep.subr.mxu0 0.0
        %3356 = vmatpush1.msra.mxu0 0.0
        %3357 = vmatprep.subr.mxu0 0.0
        %3358 = vmatpush1.msra.mxu0 0.0
        %3359 = vmatprep.subr.mxu0 0.0
        %3360 = vmatpush1.msra.mxu0 0.0
        %3361 = vmatprep.subr.mxu0 0.0
        %3362 = vmatpush1.msra.mxu0 0.0
        %3363 = vmatprep.subr.mxu0 0.0
        %3364 = vmatpush1.msra.mxu0 0.0
        %3365 = vmatprep.subr.mxu0 0.0
        %3366 = vmatpush1.msra.mxu0 0.0
        %3367 = vmatprep.subr.mxu0 0.0
        %3368 = vmatpush1.msra.mxu0 0.0
        %3369 = vmatprep.subr.mxu0 0.0
        %3370 = vmatpush1.msra.mxu0 0.0
        %3371 = vmatprep.subr.mxu0 0.0
        %3372 = vmatpush1.msra.mxu0 0.0
        %3373 = vmatprep.subr.mxu0 0.0
        %3374 = vmatpush1.msra.mxu0 0.0
        %3375 = vmatprep.mubr.f32.mxu0 0.0
        %3376 = vmatmul.mubr.f32.gmra.mrb[0].mxu0 %v3309
        %v3377 = vpop.f32.mrb[0].mxu0
        %v3378 = vadd.f32 0.0, %v3377
        %v3379 = vpop.f32.mrb[0].mxu0
        %3380 = vdwg.mxu0
        %v3382 = vsel %vm2810, %v2937, 0
        %3384 = vmatprep.subr.mxu0 0.0
        %3385 = vmatpush1.msra.mxu0 %v1781
        %3386 = vmatprep.subr.mxu0 0.0
        %3387 = vmatpush1.msra.mxu0 0.0
        %3388 = vmatprep.subr.mxu0 0.0
        %3389 = vmatpush1.msra.mxu0 0.0
        %3390 = vmatprep.subr.mxu0 0.0
        %3391 = vmatpush1.msra.mxu0 0.0
        %3392 = vmatprep.subr.mxu0 0.0
        %3393 = vmatpush1.msra.mxu0 0.0
        %3394 = vmatprep.subr.mxu0 0.0
        %3395 = vmatpush1.msra.mxu0 0.0
        %3396 = vmatprep.subr.mxu0 0.0
        %3397 = vmatpush1.msra.mxu0 0.0
        %3398 = vmatprep.subr.mxu0 0.0
        %3399 = vmatpush1.msra.mxu0 0.0
        %3400 = vmatprep.subr.mxu0 0.0
        %3401 = vmatpush1.msra.mxu0 0.0
        %3402 = vmatprep.subr.mxu0 0.0
        %3403 = vmatpush1.msra.mxu0 0.0
        %3404 = vmatprep.subr.mxu0 0.0
        %3405 = vmatpush1.msra.mxu0 0.0
        %3406 = vmatprep.subr.mxu0 0.0
        %3407 = vmatpush1.msra.mxu0 0.0
        %3408 = vmatprep.subr.mxu0 0.0
        %3409 = vmatpush1.msra.mxu0 0.0
        %3410 = vmatprep.subr.mxu0 0.0
        %3411 = vmatpush1.msra.mxu0 0.0
        %3412 = vmatprep.subr.mxu0 0.0
        %3413 = vmatpush1.msra.mxu0 0.0
        %3414 = vmatprep.subr.mxu0 0.0
        %3415 = vmatpush1.msra.mxu0 0.0
        %3416 = vmatprep.subr.mxu0 0.0
        %3417 = vmatpush1.msra.mxu0 0.0
        %3418 = vmatprep.subr.mxu0 0.0
        %3419 = vmatpush1.msra.mxu0 0.0
        %3420 = vmatprep.subr.mxu0 0.0
        %3421 = vmatpush1.msra.mxu0 0.0
        %3422 = vmatprep.subr.mxu0 0.0
        %3423 = vmatpush1.msra.mxu0 0.0
        %3424 = vmatprep.subr.mxu0 0.0
        %3425 = vmatpush1.msra.mxu0 0.0
        %3426 = vmatprep.subr.mxu0 0.0
        %3427 = vmatpush1.msra.mxu0 0.0
        %3428 = vmatprep.subr.mxu0 0.0
        %3429 = vmatpush1.msra.mxu0 0.0
        %3430 = vmatprep.subr.mxu0 0.0
        %3431 = vmatpush1.msra.mxu0 0.0
        %3432 = vmatprep.subr.mxu0 0.0
        %3433 = vmatpush1.msra.mxu0 0.0
        %3434 = vmatprep.subr.mxu0 0.0
        %3435 = vmatpush1.msra.mxu0 0.0
        %3436 = vmatprep.subr.mxu0 0.0
        %3437 = vmatpush1.msra.mxu0 0.0
        %3438 = vmatprep.subr.mxu0 0.0
        %3439 = vmatpush1.msra.mxu0 0.0
        %3440 = vmatprep.subr.mxu0 0.0
        %3441 = vmatpush1.msra.mxu0 0.0
        %3442 = vmatprep.subr.mxu0 0.0
        %3443 = vmatpush1.msra.mxu0 0.0
        %3444 = vmatprep.subr.mxu0 0.0
        %3445 = vmatpush1.msra.mxu0 0.0
        %3446 = vmatprep.subr.mxu0 0.0
        %3447 = vmatpush1.msra.mxu0 0.0
        %3448 = vmatprep.mubr.f32.mxu0 0.0
        %3449 = vmatmul.mubr.f32.gmra.mrb[0].mxu0 %v3382
        %v3450 = vpop.f32.mrb[0].mxu0
        %v3451 = vadd.f32 0.0, %v3450
        %v3452 = vpop.f32.mrb[0].mxu0
        %3453 = vdwg.mxu0
        %v3455 = vsel %vm2810, %v2938, 0
        %3457 = vmatprep.subr.mxu0 0.0
        %3458 = vmatpush1.msra.mxu0 %v1785
        %3459 = vmatprep.subr.mxu0 0.0
        %3460 = vmatpush1.msra.mxu0 0.0
        %3461 = vmatprep.subr.mxu0 0.0
        %3462 = vmatpush1.msra.mxu0 0.0
        %3463 = vmatprep.subr.mxu0 0.0
        %3464 = vmatpush1.msra.mxu0 0.0
        %3465 = vmatprep.subr.mxu0 0.0
        %3466 = vmatpush1.msra.mxu0 0.0
        %3467 = vmatprep.subr.mxu0 0.0
        %3468 = vmatpush1.msra.mxu0 0.0
        %3469 = vmatprep.subr.mxu0 0.0
        %3470 = vmatpush1.msra.mxu0 0.0
        %3471 = vmatprep.subr.mxu0 0.0
        %3472 = vmatpush1.msra.mxu0 0.0
        %3473 = vmatprep.subr.mxu0 0.0
        %3474 = vmatpush1.msra.mxu0 0.0
        %3475 = vmatprep.subr.mxu0 0.0
        %3476 = vmatpush1.msra.mxu0 0.0
        %3477 = vmatprep.subr.mxu0 0.0
        %3478 = vmatpush1.msra.mxu0 0.0
        %3479 = vmatprep.subr.mxu0 0.0
        %3480 = vmatpush1.msra.mxu0 0.0
        %3481 = vmatprep.subr.mxu0 0.0
        %3482 = vmatpush1.msra.mxu0 0.0
        %3483 = vmatprep.subr.mxu0 0.0
        %3484 = vmatpush1.msra.mxu0 0.0
        %3485 = vmatprep.subr.mxu0 0.0
        %3486 = vmatpush1.msra.mxu0 0.0
        %3487 = vmatprep.subr.mxu0 0.0
        %3488 = vmatpush1.msra.mxu0 0.0
        %3489 = vmatprep.subr.mxu0 0.0
        %3490 = vmatpush1.msra.mxu0 0.0
        %3491 = vmatprep.subr.mxu0 0.0
        %3492 = vmatpush1.msra.mxu0 0.0
        %3493 = vmatprep.subr.mxu0 0.0
        %3494 = vmatpush1.msra.mxu0 0.0
        %3495 = vmatprep.subr.mxu0 0.0
        %3496 = vmatpush1.msra.mxu0 0.0
        %3497 = vmatprep.subr.mxu0 0.0
        %3498 = vmatpush1.msra.mxu0 0.0
        %3499 = vmatprep.subr.mxu0 0.0
        %3500 = vmatpush1.msra.mxu0 0.0
        %3501 = vmatprep.subr.mxu0 0.0
        %3502 = vmatpush1.msra.mxu0 0.0
        %3503 = vmatprep.subr.mxu0 0.0
        %3504 = vmatpush1.msra.mxu0 0.0
        %3505 = vmatprep.subr.mxu0 0.0
        %3506 = vmatpush1.msra.mxu0 0.0
        %3507 = vmatprep.subr.mxu0 0.0
        %3508 = vmatpush1.msra.mxu0 0.0
        %3509 = vmatprep.subr.mxu0 0.0
        %3510 = vmatpush1.msra.mxu0 0.0
        %3511 = vmatprep.subr.mxu0 0.0
        %3512 = vmatpush1.msra.mxu0 0.0
        %3513 = vmatprep.subr.mxu0 0.0
        %3514 = vmatpush1.msra.mxu0 0.0
        %3515 = vmatprep.subr.mxu0 0.0
        %3516 = vmatpush1.msra.mxu0 0.0
        %3517 = vmatprep.subr.mxu0 0.0
        %3518 = vmatpush1.msra.mxu0 0.0
        %3519 = vmatprep.subr.mxu0 0.0
        %3520 = vmatpush1.msra.mxu0 0.0
        %3521 = vmatprep.mubr.f32.mxu0 0.0
        %3522 = vmatmul.mubr.f32.gmra.mrb[0].mxu0 %v3455
        %v3523 = vpop.f32.mrb[0].mxu0
        %v3524 = vadd.f32 0.0, %v3523
        %v3525 = vpop.f32.mrb[0].mxu0
        %3526 = vdwg.mxu0
        %v3528 = vsel %vm2810, %v2939, 0
        %3530 = vmatprep.subr.mxu0 0.0
        %3531 = vmatpush1.msra.mxu0 %v1791
        %3532 = vmatprep.subr.mxu0 0.0
        %3533 = vmatpush1.msra.mxu0 0.0
        %3534 = vmatprep.subr.mxu0 0.0
        %3535 = vmatpush1.msra.mxu0 0.0
        %3536 = vmatprep.subr.mxu0 0.0
        %3537 = vmatpush1.msra.mxu0 0.0
        %3538 = vmatprep.subr.mxu0 0.0
        %3539 = vmatpush1.msra.mxu0 0.0
        %3540 = vmatprep.subr.mxu0 0.0
        %3541 = vmatpush1.msra.mxu0 0.0
        %3542 = vmatprep.subr.mxu0 0.0
        %3543 = vmatpush1.msra.mxu0 0.0
        %3544 = vmatprep.subr.mxu0 0.0
        %3545 = vmatpush1.msra.mxu0 0.0
        %3546 = vmatprep.subr.mxu0 0.0
        %3547 = vmatpush1.msra.mxu0 0.0
        %3548 = vmatprep.subr.mxu0 0.0
        %3549 = vmatpush1.msra.mxu0 0.0
        %3550 = vmatprep.subr.mxu0 0.0
        %3551 = vmatpush1.msra.mxu0 0.0
        %3552 = vmatprep.subr.mxu0 0.0
        %3553 = vmatpush1.msra.mxu0 0.0
        %3554 = vmatprep.subr.mxu0 0.0
        %3555 = vmatpush1.msra.mxu0 0.0
        %3556 = vmatprep.subr.mxu0 0.0
        %3557 = vmatpush1.msra.mxu0 0.0
        %3558 = vmatprep.subr.mxu0 0.0
        %3559 = vmatpush1.msra.mxu0 0.0
        %3560 = vmatprep.subr.mxu0 0.0
        %3561 = vmatpush1.msra.mxu0 0.0
        %3562 = vmatprep.subr.mxu0 0.0
        %3563 = vmatpush1.msra.mxu0 0.0
        %3564 = vmatprep.subr.mxu0 0.0
        %3565 = vmatpush1.msra.mxu0 0.0
        %3566 = vmatprep.subr.mxu0 0.0
        %3567 = vmatpush1.msra.mxu0 0.0
        %3568 = vmatprep.subr.mxu0 0.0
        %3569 = vmatpush1.msra.mxu0 0.0
        %3570 = vmatprep.subr.mxu0 0.0
        %3571 = vmatpush1.msra.mxu0 0.0
        %3572 = vmatprep.subr.mxu0 0.0
        %3573 = vmatpush1.msra.mxu0 0.0
        %3574 = vmatprep.subr.mxu0 0.0
        %3575 = vmatpush1.msra.mxu0 0.0
        %3576 = vmatprep.subr.mxu0 0.0
        %3577 = vmatpush1.msra.mxu0 0.0
        %3578 = vmatprep.subr.mxu0 0.0
        %3579 = vmatpush1.msra.mxu0 0.0
        %3580 = vmatprep.subr.mxu0 0.0
        %3581 = vmatpush1.msra.mxu0 0.0
        %3582 = vmatprep.subr.mxu0 0.0
        %3583 = vmatpush1.msra.mxu0 0.0
        %3584 = vmatprep.subr.mxu0 0.0
        %3585 = vmatpush1.msra.mxu0 0.0
        %3586 = vmatprep.subr.mxu0 0.0
        %3587 = vmatpush1.msra.mxu0 0.0
        %3588 = vmatprep.subr.mxu0 0.0
        %3589 = vmatpush1.msra.mxu0 0.0
        %3590 = vmatprep.subr.mxu0 0.0
        %3591 = vmatpush1.msra.mxu0 0.0
        %3592 = vmatprep.subr.mxu0 0.0
        %3593 = vmatpush1.msra.mxu0 0.0
        %3594 = vmatprep.mubr.f32.mxu0 0.0
        %3595 = vmatmul.mubr.f32.gmra.mrb[0].mxu0 %v3528
        %v3596 = vpop.f32.mrb[0].mxu0
        %v3597 = vadd.f32 0.0, %v3596
        %v3598 = vpop.f32.mrb[0].mxu0
        %3599 = vdwg.mxu0
        %v3601 = vsel %vm2810, %v2940, 0
        %3603 = vmatprep.subr.mxu0 0.0
        %3604 = vmatpush1.msra.mxu0 %v1795
        %3605 = vmatprep.subr.mxu0 0.0
        %3606 = vmatpush1.msra.mxu0 0.0
        %3607 = vmatprep.subr.mxu0 0.0
        %3608 = vmatpush1.msra.mxu0 0.0
        %3609 = vmatprep.subr.mxu0 0.0
        %3610 = vmatpush1.msra.mxu0 0.0
        %3611 = vmatprep.subr.mxu0 0.0
        %3612 = vmatpush1.msra.mxu0 0.0
        %3613 = vmatprep.subr.mxu0 0.0
        %3614 = vmatpush1.msra.mxu0 0.0
        %3615 = vmatprep.subr.mxu0 0.0
        %3616 = vmatpush1.msra.mxu0 0.0
        %3617 = vmatprep.subr.mxu0 0.0
        %3618 = vmatpush1.msra.mxu0 0.0
        %3619 = vmatprep.subr.mxu0 0.0
        %3620 = vmatpush1.msra.mxu0 0.0
        %3621 = vmatprep.subr.mxu0 0.0
        %3622 = vmatpush1.msra.mxu0 0.0
        %3623 = vmatprep.subr.mxu0 0.0
        %3624 = vmatpush1.msra.mxu0 0.0
        %3625 = vmatprep.subr.mxu0 0.0
        %3626 = vmatpush1.msra.mxu0 0.0
        %3627 = vmatprep.subr.mxu0 0.0
        %3628 = vmatpush1.msra.mxu0 0.0
        %3629 = vmatprep.subr.mxu0 0.0
        %3630 = vmatpush1.msra.mxu0 0.0
        %3631 = vmatprep.subr.mxu0 0.0
        %3632 = vmatpush1.msra.mxu0 0.0
        %3633 = vmatprep.subr.mxu0 0.0
        %3634 = vmatpush1.msra.mxu0 0.0
        %3635 = vmatprep.subr.mxu0 0.0
        %3636 = vmatpush1.msra.mxu0 0.0
        %3637 = vmatprep.subr.mxu0 0.0
        %3638 = vmatpush1.msra.mxu0 0.0
        %3639 = vmatprep.subr.mxu0 0.0
        %3640 = vmatpush1.msra.mxu0 0.0
        %3641 = vmatprep.subr.mxu0 0.0
        %3642 = vmatpush1.msra.mxu0 0.0
        %3643 = vmatprep.subr.mxu0 0.0
        %3644 = vmatpush1.msra.mxu0 0.0
        %3645 = vmatprep.subr.mxu0 0.0
        %3646 = vmatpush1.msra.mxu0 0.0
        %3647 = vmatprep.subr.mxu0 0.0
        %3648 = vmatpush1.msra.mxu0 0.0
        %3649 = vmatprep.subr.mxu0 0.0
        %3650 = vmatpush1.msra.mxu0 0.0
        %3651 = vmatprep.subr.mxu0 0.0
        %3652 = vmatpush1.msra.mxu0 0.0
        %3653 = vmatprep.subr.mxu0 0.0
        %3654 = vmatpush1.msra.mxu0 0.0
        %3655 = vmatprep.subr.mxu0 0.0
        %3656 = vmatpush1.msra.mxu0 0.0
        %3657 = vmatprep.subr.mxu0 0.0
        %3658 = vmatpush1.msra.mxu0 0.0
        %3659 = vmatprep.subr.mxu0 0.0
        %3660 = vmatpush1.msra.mxu0 0.0
        %3661 = vmatprep.subr.mxu0 0.0
        %3662 = vmatpush1.msra.mxu0 0.0
        %3663 = vmatprep.subr.mxu0 0.0
        %3664 = vmatpush1.msra.mxu0 0.0
        %3665 = vmatprep.subr.mxu0 0.0
        %3666 = vmatpush1.msra.mxu0 0.0
        %3667 = vmatprep.mubr.f32.mxu0 0.0
        %3668 = vmatmul.mubr.f32.gmra.mrb[0].mxu0 %v3601
        %v3669 = vpop.f32.mrb[0].mxu0
        %v3670 = vadd.f32 0.0, %v3669
        %v3671 = vpop.f32.mrb[0].mxu0
        %3672 = vdwg.mxu0
        %v3674 = vsel %vm2810, %v2941, 0
        %3676 = vmatprep.subr.mxu0 0.0
        %3677 = vmatpush1.msra.mxu0 %v1801
        %3678 = vmatprep.subr.mxu0 0.0
        %3679 = vmatpush1.msra.mxu0 0.0
        %3680 = vmatprep.subr.mxu0 0.0
        %3681 = vmatpush1.msra.mxu0 0.0
        %3682 = vmatprep.subr.mxu0 0.0
        %3683 = vmatpush1.msra.mxu0 0.0
        %3684 = vmatprep.subr.mxu0 0.0
        %3685 = vmatpush1.msra.mxu0 0.0
        %3686 = vmatprep.subr.mxu0 0.0
        %3687 = vmatpush1.msra.mxu0 0.0
        %3688 = vmatprep.subr.mxu0 0.0
        %3689 = vmatpush1.msra.mxu0 0.0
        %3690 = vmatprep.subr.mxu0 0.0
        %3691 = vmatpush1.msra.mxu0 0.0
        %3692 = vmatprep.subr.mxu0 0.0
        %3693 = vmatpush1.msra.mxu0 0.0
        %3694 = vmatprep.subr.mxu0 0.0
        %3695 = vmatpush1.msra.mxu0 0.0
        %3696 = vmatprep.subr.mxu0 0.0
        %3697 = vmatpush1.msra.mxu0 0.0
        %3698 = vmatprep.subr.mxu0 0.0
        %3699 = vmatpush1.msra.mxu0 0.0
        %3700 = vmatprep.subr.mxu0 0.0
        %3701 = vmatpush1.msra.mxu0 0.0
        %3702 = vmatprep.subr.mxu0 0.0
        %3703 = vmatpush1.msra.mxu0 0.0
        %3704 = vmatprep.subr.mxu0 0.0
        %3705 = vmatpush1.msra.mxu0 0.0
        %3706 = vmatprep.subr.mxu0 0.0
        %3707 = vmatpush1.msra.mxu0 0.0
        %3708 = vmatprep.subr.mxu0 0.0
        %3709 = vmatpush1.msra.mxu0 0.0
        %3710 = vmatprep.subr.mxu0 0.0
        %3711 = vmatpush1.msra.mxu0 0.0
        %3712 = vmatprep.subr.mxu0 0.0
        %3713 = vmatpush1.msra.mxu0 0.0
        %3714 = vmatprep.subr.mxu0 0.0
        %3715 = vmatpush1.msra.mxu0 0.0
        %3716 = vmatprep.subr.mxu0 0.0
        %3717 = vmatpush1.msra.mxu0 0.0
        %3718 = vmatprep.subr.mxu0 0.0
        %3719 = vmatpush1.msra.mxu0 0.0
        %3720 = vmatprep.subr.mxu0 0.0
        %3721 = vmatpush1.msra.mxu0 0.0
        %3722 = vmatprep.subr.mxu0 0.0
        %3723 = vmatpush1.msra.mxu0 0.0
        %3724 = vmatprep.subr.mxu0 0.0
        %3725 = vmatpush1.msra.mxu0 0.0
        %3726 = vmatprep.subr.mxu0 0.0
        %3727 = vmatpush1.msra.mxu0 0.0
        %3728 = vmatprep.subr.mxu0 0.0
        %3729 = vmatpush1.msra.mxu0 0.0
        %3730 = vmatprep.subr.mxu0 0.0
        %3731 = vmatpush1.msra.mxu0 0.0
        %3732 = vmatprep.subr.mxu0 0.0
        %3733 = vmatpush1.msra.mxu0 0.0
        %3734 = vmatprep.subr.mxu0 0.0
        %3735 = vmatpush1.msra.mxu0 0.0
        %3736 = vmatprep.subr.mxu0 0.0
        %3737 = vmatpush1.msra.mxu0 0.0
        %3738 = vmatprep.subr.mxu0 0.0
        %3739 = vmatpush1.msra.mxu0 0.0
        %3740 = vmatprep.mubr.f32.mxu0 0.0
        %3741 = vmatmul.mubr.f32.gmra.mrb[0].mxu0 %v3674
        %v3742 = vpop.f32.mrb[0].mxu0
        %v3743 = vadd.f32 0.0, %v3742
        %v3744 = vpop.f32.mrb[0].mxu0
        %3745 = vdwg.mxu0
        %v3747 = vsel %vm2810, %v2942, 0
        %3749 = vmatprep.subr.mxu0 0.0
        %3750 = vmatpush1.msra.mxu0 %v1805
        %3751 = vmatprep.subr.mxu0 0.0
        %3752 = vmatpush1.msra.mxu0 0.0
        %3753 = vmatprep.subr.mxu0 0.0
        %3754 = vmatpush1.msra.mxu0 0.0
        %3755 = vmatprep.subr.mxu0 0.0
        %3756 = vmatpush1.msra.mxu0 0.0
        %3757 = vmatprep.subr.mxu0 0.0
        %3758 = vmatpush1.msra.mxu0 0.0
        %3759 = vmatprep.subr.mxu0 0.0
        %3760 = vmatpush1.msra.mxu0 0.0
        %3761 = vmatprep.subr.mxu0 0.0
        %3762 = vmatpush1.msra.mxu0 0.0
        %3763 = vmatprep.subr.mxu0 0.0
        %3764 = vmatpush1.msra.mxu0 0.0
        %3765 = vmatprep.subr.mxu0 0.0
        %3766 = vmatpush1.msra.mxu0 0.0
        %3767 = vmatprep.subr.mxu0 0.0
        %3768 = vmatpush1.msra.mxu0 0.0
        %3769 = vmatprep.subr.mxu0 0.0
        %3770 = vmatpush1.msra.mxu0 0.0
        %3771 = vmatprep.subr.mxu0 0.0
        %3772 = vmatpush1.msra.mxu0 0.0
        %3773 = vmatprep.subr.mxu0 0.0
        %3774 = vmatpush1.msra.mxu0 0.0
        %3775 = vmatprep.subr.mxu0 0.0
        %3776 = vmatpush1.msra.mxu0 0.0
        %3777 = vmatprep.subr.mxu0 0.0
        %3778 = vmatpush1.msra.mxu0 0.0
        %3779 = vmatprep.subr.mxu0 0.0
        %3780 = vmatpush1.msra.mxu0 0.0
        %3781 = vmatprep.subr.mxu0 0.0
        %3782 = vmatpush1.msra.mxu0 0.0
        %3783 = vmatprep.subr.mxu0 0.0
        %3784 = vmatpush1.msra.mxu0 0.0
        %3785 = vmatprep.subr.mxu0 0.0
        %3786 = vmatpush1.msra.mxu0 0.0
        %3787 = vmatprep.subr.mxu0 0.0
        %3788 = vmatpush1.msra.mxu0 0.0
        %3789 = vmatprep.subr.mxu0 0.0
        %3790 = vmatpush1.msra.mxu0 0.0
        %3791 = vmatprep.subr.mxu0 0.0
        %3792 = vmatpush1.msra.mxu0 0.0
        %3793 = vmatprep.subr.mxu0 0.0
        %3794 = vmatpush1.msra.mxu0 0.0
        %3795 = vmatprep.subr.mxu0 0.0
        %3796 = vmatpush1.msra.mxu0 0.0
        %3797 = vmatprep.subr.mxu0 0.0
        %3798 = vmatpush1.msra.mxu0 0.0
        %3799 = vmatprep.subr.mxu0 0.0
        %3800 = vmatpush1.msra.mxu0 0.0
        %3801 = vmatprep.subr.mxu0 0.0
        %3802 = vmatpush1.msra.mxu0 0.0
        %3803 = vmatprep.subr.mxu0 0.0
        %3804 = vmatpush1.msra.mxu0 0.0
        %3805 = vmatprep.subr.mxu0 0.0
        %3806 = vmatpush1.msra.mxu0 0.0
        %3807 = vmatprep.subr.mxu0 0.0
        %3808 = vmatpush1.msra.mxu0 0.0
        %3809 = vmatprep.subr.mxu0 0.0
        %3810 = vmatpush1.msra.mxu0 0.0
        %3811 = vmatprep.subr.mxu0 0.0
        %3812 = vmatpush1.msra.mxu0 0.0
        %3813 = vmatprep.mubr.f32.mxu0 0.0
        %3814 = vmatmul.mubr.f32.gmra.mrb[0].mxu0 %v3747
        %v3815 = vpop.f32.mrb[0].mxu0
        %v3816 = vadd.f32 0.0, %v3815
        %v3817 = vpop.f32.mrb[0].mxu0
        %3818 = vdwg.mxu0
        %v3819 = vpack.c.bf16 %v3086, %v3013
        %v3820 = vpack.c.bf16 %v3232, %v3159
        %v3821 = vpack.c.bf16 %v3378, %v3305
        %v3822 = vpack.c.bf16 %v3524, %v3451
        %v3823 = vpack.c.bf16 %v3670, %v3597
        %v3824 = vpack.c.bf16 %v3816, %v3743
        %3825 = vmatprep.subr.mxu0 0.0
        %3826 = vmatpush1.xpose.msra.mxu0 %v1660
        %3827 = vmatprep.subr.mxu0 0.0
        %3828 = vmatpush1.xpose.msra.mxu0 0.0
        %3829 = vmatprep.subr.mxu0 0.0
        %3830 = vmatpush1.xpose.msra.mxu0 0.0
        %3831 = vmatprep.subr.mxu0 0.0
        %3832 = vmatpush1.xpose.msra.mxu0 0.0
        %3833 = vmatprep.subr.mxu0 0.0
        %3834 = vmatpush1.xpose.msra.mxu0 0.0
        %3835 = vmatprep.subr.mxu0 0.0
        %3836 = vmatpush1.xpose.msra.mxu0 0.0
        %3837 = vmatprep.subr.mxu0 0.0
        %3838 = vmatpush1.xpose.msra.mxu0 0.0
        %3839 = vmatprep.subr.mxu0 0.0
        %3840 = vmatpush1.xpose.msra.mxu0 0.0
        %3841 = vmatprep.subr.mxu0 0.0
        %3842 = vmatpush1.xpose.msra.mxu0 0.0
        %3843 = vmatprep.subr.mxu0 0.0
        %3844 = vmatpush1.xpose.msra.mxu0 0.0
        %3845 = vmatprep.subr.mxu0 0.0
        %3846 = vmatpush1.xpose.msra.mxu0 0.0
        %3847 = vmatprep.subr.mxu0 0.0
        %3848 = vmatpush1.xpose.msra.mxu0 0.0
        %3849 = vmatprep.subr.mxu0 0.0
        %3850 = vmatpush1.xpose.msra.mxu0 0.0
        %3851 = vmatprep.subr.mxu0 0.0
        %3852 = vmatpush1.xpose.msra.mxu0 0.0
        %3853 = vmatprep.subr.mxu0 0.0
        %3854 = vmatpush1.xpose.msra.mxu0 0.0
        %3855 = vmatprep.subr.mxu0 0.0
        %3856 = vmatpush1.xpose.msra.mxu0 0.0
        %3857 = vmatprep.subr.mxu0 0.0
        %3858 = vmatpush1.xpose.msra.mxu0 0.0
        %3859 = vmatprep.subr.mxu0 0.0
        %3860 = vmatpush1.xpose.msra.mxu0 0.0
        %3861 = vmatprep.subr.mxu0 0.0
        %3862 = vmatpush1.xpose.msra.mxu0 0.0
        %3863 = vmatprep.subr.mxu0 0.0
        %3864 = vmatpush1.xpose.msra.mxu0 0.0
        %3865 = vmatprep.subr.mxu0 0.0
        %3866 = vmatpush1.xpose.msra.mxu0 0.0
        %3867 = vmatprep.subr.mxu0 0.0
        %3868 = vmatpush1.xpose.msra.mxu0 0.0
        %3869 = vmatprep.subr.mxu0 0.0
        %3870 = vmatpush1.xpose.msra.mxu0 0.0
        %3871 = vmatprep.subr.mxu0 0.0
        %3872 = vmatpush1.xpose.msra.mxu0 0.0
        %3873 = vmatprep.subr.mxu0 0.0
        %3874 = vmatpush1.xpose.msra.mxu0 0.0
        %3875 = vmatprep.subr.mxu0 0.0
        %3876 = vmatpush1.xpose.msra.mxu0 0.0
        %3877 = vmatprep.subr.mxu0 0.0
        %3878 = vmatpush1.xpose.msra.mxu0 0.0
        %3879 = vmatprep.subr.mxu0 0.0
        %3880 = vmatpush1.xpose.msra.mxu0 0.0
        %3881 = vmatprep.subr.mxu0 0.0
        %3882 = vmatpush1.xpose.msra.mxu0 0.0
        %3883 = vmatprep.subr.mxu0 0.0
        %3884 = vmatpush1.xpose.msra.mxu0 0.0
        %3885 = vmatprep.subr.mxu0 0.0
        %3886 = vmatpush1.xpose.msra.mxu0 0.0
        %3887 = vmatprep.subr.mxu0 0.0
        %3888 = vmatpush1.xpose.msra.mxu0 0.0
        %3889 = vmatprep.mubr.f32.mxu0 0.0
        %3890 = vmatmul.mubr.f32.gmra.mrb[0].mxu0 %v1567
        %v3891 = vpop.f32.mrb[0].mxu0
        %v3892 = vadd.f32 0.0, %v3891
        %v3893 = vpop.f32.mrb[0].mxu0
        %3894 = vdwg.mxu0
        %3895 = vmatprep.subr.mxu0 0.0
        %3896 = vmatpush1.xpose.msra.mxu0 %v1664
        %3897 = vmatprep.subr.mxu0 0.0
        %3898 = vmatpush1.xpose.msra.mxu0 0.0
        %3899 = vmatprep.subr.mxu0 0.0
        %3900 = vmatpush1.xpose.msra.mxu0 0.0
        %3901 = vmatprep.subr.mxu0 0.0
        %3902 = vmatpush1.xpose.msra.mxu0 0.0
        %3903 = vmatprep.subr.mxu0 0.0
        %3904 = vmatpush1.xpose.msra.mxu0 0.0
        %3905 = vmatprep.subr.mxu0 0.0
        %3906 = vmatpush1.xpose.msra.mxu0 0.0
        %3907 = vmatprep.subr.mxu0 0.0
        %3908 = vmatpush1.xpose.msra.mxu0 0.0
        %3909 = vmatprep.subr.mxu0 0.0
        %3910 = vmatpush1.xpose.msra.mxu0 0.0
        %3911 = vmatprep.subr.mxu0 0.0
        %3912 = vmatpush1.xpose.msra.mxu0 0.0
        %3913 = vmatprep.subr.mxu0 0.0
        %3914 = vmatpush1.xpose.msra.mxu0 0.0
        %3915 = vmatprep.subr.mxu0 0.0
        %3916 = vmatpush1.xpose.msra.mxu0 0.0
        %3917 = vmatprep.subr.mxu0 0.0
        %3918 = vmatpush1.xpose.msra.mxu0 0.0
        %3919 = vmatprep.subr.mxu0 0.0
        %3920 = vmatpush1.xpose.msra.mxu0 0.0
        %3921 = vmatprep.subr.mxu0 0.0
        %3922 = vmatpush1.xpose.msra.mxu0 0.0
        %3923 = vmatprep.subr.mxu0 0.0
        %3924 = vmatpush1.xpose.msra.mxu0 0.0
        %3925 = vmatprep.subr.mxu0 0.0
        %3926 = vmatpush1.xpose.msra.mxu0 0.0
        %3927 = vmatprep.subr.mxu0 0.0
        %3928 = vmatpush1.xpose.msra.mxu0 0.0
        %3929 = vmatprep.subr.mxu0 0.0
        %3930 = vmatpush1.xpose.msra.mxu0 0.0
        %3931 = vmatprep.subr.mxu0 0.0
        %3932 = vmatpush1.xpose.msra.mxu0 0.0
        %3933 = vmatprep.subr.mxu0 0.0
        %3934 = vmatpush1.xpose.msra.mxu0 0.0
        %3935 = vmatprep.subr.mxu0 0.0
        %3936 = vmatpush1.xpose.msra.mxu0 0.0
        %3937 = vmatprep.subr.mxu0 0.0
        %3938 = vmatpush1.xpose.msra.mxu0 0.0
        %3939 = vmatprep.subr.mxu0 0.0
        %3940 = vmatpush1.xpose.msra.mxu0 0.0
        %3941 = vmatprep.subr.mxu0 0.0
        %3942 = vmatpush1.xpose.msra.mxu0 0.0
        %3943 = vmatprep.subr.mxu0 0.0
        %3944 = vmatpush1.xpose.msra.mxu0 0.0
        %3945 = vmatprep.subr.mxu0 0.0
        %3946 = vmatpush1.xpose.msra.mxu0 0.0
        %3947 = vmatprep.subr.mxu0 0.0
        %3948 = vmatpush1.xpose.msra.mxu0 0.0
        %3949 = vmatprep.subr.mxu0 0.0
        %3950 = vmatpush1.xpose.msra.mxu0 0.0
        %3951 = vmatprep.subr.mxu0 0.0
        %3952 = vmatpush1.xpose.msra.mxu0 0.0
        %3953 = vmatprep.subr.mxu0 0.0
        %3954 = vmatpush1.xpose.msra.mxu0 0.0
        %3955 = vmatprep.subr.mxu0 0.0
        %3956 = vmatpush1.xpose.msra.mxu0 0.0
        %3957 = vmatprep.subr.mxu0 0.0
        %3958 = vmatpush1.xpose.msra.mxu0 0.0
        %3959 = vmatprep.mubr.f32.mxu0 0.0
        %3960 = vmatmul.mubr.f32.gmra.mrb[0].mxu0 %v1571
        %v3961 = vpop.f32.mrb[0].mxu0
        %v3962 = vadd.f32 0.0, %v3961
        %v3963 = vpop.f32.mrb[0].mxu0
        %3964 = vdwg.mxu0
        %3965 = vmatprep.subr.mxu0 0.0
        %3966 = vmatpush1.xpose.msra.mxu0 %v1670
        %3967 = vmatprep.subr.mxu0 0.0
        %3968 = vmatpush1.xpose.msra.mxu0 0.0
        %3969 = vmatprep.subr.mxu0 0.0
        %3970 = vmatpush1.xpose.msra.mxu0 0.0
        %3971 = vmatprep.subr.mxu0 0.0
        %3972 = vmatpush1.xpose.msra.mxu0 0.0
        %3973 = vmatprep.subr.mxu0 0.0
        %3974 = vmatpush1.xpose.msra.mxu0 0.0
        %3975 = vmatprep.subr.mxu0 0.0
        %3976 = vmatpush1.xpose.msra.mxu0 0.0
        %3977 = vmatprep.subr.mxu0 0.0
        %3978 = vmatpush1.xpose.msra.mxu0 0.0
        %3979 = vmatprep.subr.mxu0 0.0
        %3980 = vmatpush1.xpose.msra.mxu0 0.0
        %3981 = vmatprep.subr.mxu0 0.0
        %3982 = vmatpush1.xpose.msra.mxu0 0.0
        %3983 = vmatprep.subr.mxu0 0.0
        %3984 = vmatpush1.xpose.msra.mxu0 0.0
        %3985 = vmatprep.subr.mxu0 0.0
        %3986 = vmatpush1.xpose.msra.mxu0 0.0
        %3987 = vmatprep.subr.mxu0 0.0
        %3988 = vmatpush1.xpose.msra.mxu0 0.0
        %3989 = vmatprep.subr.mxu0 0.0
        %3990 = vmatpush1.xpose.msra.mxu0 0.0
        %3991 = vmatprep.subr.mxu0 0.0
        %3992 = vmatpush1.xpose.msra.mxu0 0.0
        %3993 = vmatprep.subr.mxu0 0.0
        %3994 = vmatpush1.xpose.msra.mxu0 0.0
        %3995 = vmatprep.subr.mxu0 0.0
        %3996 = vmatpush1.xpose.msra.mxu0 0.0
        %3997 = vmatprep.subr.mxu0 0.0
        %3998 = vmatpush1.xpose.msra.mxu0 0.0
        %3999 = vmatprep.subr.mxu0 0.0
        %4000 = vmatpush1.xpose.msra.mxu0 0.0
        %4001 = vmatprep.subr.mxu0 0.0
        %4002 = vmatpush1.xpose.msra.mxu0 0.0
        %4003 = vmatprep.subr.mxu0 0.0
        %4004 = vmatpush1.xpose.msra.mxu0 0.0
        %4005 = vmatprep.subr.mxu0 0.0
        %4006 = vmatpush1.xpose.msra.mxu0 0.0
        %4007 = vmatprep.subr.mxu0 0.0
        %4008 = vmatpush1.xpose.msra.mxu0 0.0
        %4009 = vmatprep.subr.mxu0 0.0
        %4010 = vmatpush1.xpose.msra.mxu0 0.0
        %4011 = vmatprep.subr.mxu0 0.0
        %4012 = vmatpush1.xpose.msra.mxu0 0.0
        %4013 = vmatprep.subr.mxu0 0.0
        %4014 = vmatpush1.xpose.msra.mxu0 0.0
        %4015 = vmatprep.subr.mxu0 0.0
        %4016 = vmatpush1.xpose.msra.mxu0 0.0
        %4017 = vmatprep.subr.mxu0 0.0
        %4018 = vmatpush1.xpose.msra.mxu0 0.0
        %4019 = vmatprep.subr.mxu0 0.0
        %4020 = vmatpush1.xpose.msra.mxu0 0.0
        %4021 = vmatprep.subr.mxu0 0.0
        %4022 = vmatpush1.xpose.msra.mxu0 0.0
        %4023 = vmatprep.subr.mxu0 0.0
        %4024 = vmatpush1.xpose.msra.mxu0 0.0
        %4025 = vmatprep.subr.mxu0 0.0
        %4026 = vmatpush1.xpose.msra.mxu0 0.0
        %4027 = vmatprep.subr.mxu0 0.0
        %4028 = vmatpush1.xpose.msra.mxu0 0.0
        %4029 = vmatprep.mubr.f32.mxu0 0.0
        %4030 = vmatmul.mubr.f32.gmra.mrb[0].mxu0 %v1577
        %v4031 = vpop.f32.mrb[0].mxu0
        %v4032 = vadd.f32 0.0, %v4031
        %v4033 = vpop.f32.mrb[0].mxu0
        %4034 = vdwg.mxu0
        %4035 = vmatprep.subr.mxu0 0.0
        %4036 = vmatpush1.xpose.msra.mxu0 %v1674
        %4037 = vmatprep.subr.mxu0 0.0
        %4038 = vmatpush1.xpose.msra.mxu0 0.0
        %4039 = vmatprep.subr.mxu0 0.0
        %4040 = vmatpush1.xpose.msra.mxu0 0.0
        %4041 = vmatprep.subr.mxu0 0.0
        %4042 = vmatpush1.xpose.msra.mxu0 0.0
        %4043 = vmatprep.subr.mxu0 0.0
        %4044 = vmatpush1.xpose.msra.mxu0 0.0
        %4045 = vmatprep.subr.mxu0 0.0
        %4046 = vmatpush1.xpose.msra.mxu0 0.0
        %4047 = vmatprep.subr.mxu0 0.0
        %4048 = vmatpush1.xpose.msra.mxu0 0.0
        %4049 = vmatprep.subr.mxu0 0.0
        %4050 = vmatpush1.xpose.msra.mxu0 0.0
        %4051 = vmatprep.subr.mxu0 0.0
        %4052 = vmatpush1.xpose.msra.mxu0 0.0
        %4053 = vmatprep.subr.mxu0 0.0
        %4054 = vmatpush1.xpose.msra.mxu0 0.0
        %4055 = vmatprep.subr.mxu0 0.0
        %4056 = vmatpush1.xpose.msra.mxu0 0.0
        %4057 = vmatprep.subr.mxu0 0.0
        %4058 = vmatpush1.xpose.msra.mxu0 0.0
        %4059 = vmatprep.subr.mxu0 0.0
        %4060 = vmatpush1.xpose.msra.mxu0 0.0
        %4061 = vmatprep.subr.mxu0 0.0
        %4062 = vmatpush1.xpose.msra.mxu0 0.0
        %4063 = vmatprep.subr.mxu0 0.0
        %4064 = vmatpush1.xpose.msra.mxu0 0.0
        %4065 = vmatprep.subr.mxu0 0.0
        %4066 = vmatpush1.xpose.msra.mxu0 0.0
        %4067 = vmatprep.subr.mxu0 0.0
        %4068 = vmatpush1.xpose.msra.mxu0 0.0
        %4069 = vmatprep.subr.mxu0 0.0
        %4070 = vmatpush1.xpose.msra.mxu0 0.0
        %4071 = vmatprep.subr.mxu0 0.0
        %4072 = vmatpush1.xpose.msra.mxu0 0.0
        %4073 = vmatprep.subr.mxu0 0.0
        %4074 = vmatpush1.xpose.msra.mxu0 0.0
        %4075 = vmatprep.subr.mxu0 0.0
        %4076 = vmatpush1.xpose.msra.mxu0 0.0
        %4077 = vmatprep.subr.mxu0 0.0
        %4078 = vmatpush1.xpose.msra.mxu0 0.0
        %4079 = vmatprep.subr.mxu0 0.0
        %4080 = vmatpush1.xpose.msra.mxu0 0.0
        %4081 = vmatprep.subr.mxu0 0.0
        %4082 = vmatpush1.xpose.msra.mxu0 0.0
        %4083 = vmatprep.subr.mxu0 0.0
        %4084 = vmatpush1.xpose.msra.mxu0 0.0
        %4085 = vmatprep.subr.mxu0 0.0
        %4086 = vmatpush1.xpose.msra.mxu0 0.0
        %4087 = vmatprep.subr.mxu0 0.0
        %4088 = vmatpush1.xpose.msra.mxu0 0.0
        %4089 = vmatprep.subr.mxu0 0.0
        %4090 = vmatpush1.xpose.msra.mxu0 0.0
        %4091 = vmatprep.subr.mxu0 0.0
        %4092 = vmatpush1.xpose.msra.mxu0 0.0
        %4093 = vmatprep.subr.mxu0 0.0
        %4094 = vmatpush1.xpose.msra.mxu0 0.0
        %4095 = vmatprep.subr.mxu0 0.0
        %4096 = vmatpush1.xpose.msra.mxu0 0.0
        %4097 = vmatprep.subr.mxu0 0.0
        %4098 = vmatpush1.xpose.msra.mxu0 0.0
        %4099 = vmatprep.mubr.f32.mxu0 0.0
        %4100 = vmatmul.mubr.f32.gmra.mrb[0].mxu0 %v1581
        %v4101 = vpop.f32.mrb[0].mxu0
        %v4102 = vadd.f32 0.0, %v4101
        %v4103 = vpop.f32.mrb[0].mxu0
        %4104 = vdwg.mxu0
        %4105 = vmatprep.subr.mxu0 0.0
        %4106 = vmatpush1.xpose.msra.mxu0 %v1680
        %4107 = vmatprep.subr.mxu0 0.0
        %4108 = vmatpush1.xpose.msra.mxu0 0.0
        %4109 = vmatprep.subr.mxu0 0.0
        %4110 = vmatpush1.xpose.msra.mxu0 0.0
        %4111 = vmatprep.subr.mxu0 0.0
        %4112 = vmatpush1.xpose.msra.mxu0 0.0
        %4113 = vmatprep.subr.mxu0 0.0
        %4114 = vmatpush1.xpose.msra.mxu0 0.0
        %4115 = vmatprep.subr.mxu0 0.0
        %4116 = vmatpush1.xpose.msra.mxu0 0.0
        %4117 = vmatprep.subr.mxu0 0.0
        %4118 = vmatpush1.xpose.msra.mxu0 0.0
        %4119 = vmatprep.subr.mxu0 0.0
        %4120 = vmatpush1.xpose.msra.mxu0 0.0
        %4121 = vmatprep.subr.mxu0 0.0
        %4122 = vmatpush1.xpose.msra.mxu0 0.0
        %4123 = vmatprep.subr.mxu0 0.0
        %4124 = vmatpush1.xpose.msra.mxu0 0.0
        %4125 = vmatprep.subr.mxu0 0.0
        %4126 = vmatpush1.xpose.msra.mxu0 0.0
        %4127 = vmatprep.subr.mxu0 0.0
        %4128 = vmatpush1.xpose.msra.mxu0 0.0
        %4129 = vmatprep.subr.mxu0 0.0
        %4130 = vmatpush1.xpose.msra.mxu0 0.0
        %4131 = vmatprep.subr.mxu0 0.0
        %4132 = vmatpush1.xpose.msra.mxu0 0.0
        %4133 = vmatprep.subr.mxu0 0.0
        %4134 = vmatpush1.xpose.msra.mxu0 0.0
        %4135 = vmatprep.subr.mxu0 0.0
        %4136 = vmatpush1.xpose.msra.mxu0 0.0
        %4137 = vmatprep.subr.mxu0 0.0
        %4138 = vmatpush1.xpose.msra.mxu0 0.0
        %4139 = vmatprep.subr.mxu0 0.0
        %4140 = vmatpush1.xpose.msra.mxu0 0.0
        %4141 = vmatprep.subr.mxu0 0.0
        %4142 = vmatpush1.xpose.msra.mxu0 0.0
        %4143 = vmatprep.subr.mxu0 0.0
        %4144 = vmatpush1.xpose.msra.mxu0 0.0
        %4145 = vmatprep.subr.mxu0 0.0
        %4146 = vmatpush1.xpose.msra.mxu0 0.0
        %4147 = vmatprep.subr.mxu0 0.0
        %4148 = vmatpush1.xpose.msra.mxu0 0.0
        %4149 = vmatprep.subr.mxu0 0.0
        %4150 = vmatpush1.xpose.msra.mxu0 0.0
        %4151 = vmatprep.subr.mxu0 0.0
        %4152 = vmatpush1.xpose.msra.mxu0 0.0
        %4153 = vmatprep.subr.mxu0 0.0
        %4154 = vmatpush1.xpose.msra.mxu0 0.0
        %4155 = vmatprep.subr.mxu0 0.0
        %4156 = vmatpush1.xpose.msra.mxu0 0.0
        %4157 = vmatprep.subr.mxu0 0.0
        %4158 = vmatpush1.xpose.msra.mxu0 0.0
        %4159 = vmatprep.subr.mxu0 0.0
        %4160 = vmatpush1.xpose.msra.mxu0 0.0
        %4161 = vmatprep.subr.mxu0 0.0
        %4162 = vmatpush1.xpose.msra.mxu0 0.0
        %4163 = vmatprep.subr.mxu0 0.0
        %4164 = vmatpush1.xpose.msra.mxu0 0.0
        %4165 = vmatprep.subr.mxu0 0.0
        %4166 = vmatpush1.xpose.msra.mxu0 0.0
        %4167 = vmatprep.subr.mxu0 0.0
        %4168 = vmatpush1.xpose.msra.mxu0 0.0
        %4169 = vmatprep.mubr.f32.mxu0 0.0
        %4170 = vmatmul.mubr.f32.gmra.mrb[0].mxu0 %v1587
        %v4171 = vpop.f32.mrb[0].mxu0
        %v4172 = vadd.f32 0.0, %v4171
        %v4173 = vpop.f32.mrb[0].mxu0
        %4174 = vdwg.mxu0
        %4175 = vmatprep.subr.mxu0 0.0
        %4176 = vmatpush1.xpose.msra.mxu0 %v1684
        %4177 = vmatprep.subr.mxu0 0.0
        %4178 = vmatpush1.xpose.msra.mxu0 0.0
        %4179 = vmatprep.subr.mxu0 0.0
        %4180 = vmatpush1.xpose.msra.mxu0 0.0
        %4181 = vmatprep.subr.mxu0 0.0
        %4182 = vmatpush1.xpose.msra.mxu0 0.0
        %4183 = vmatprep.subr.mxu0 0.0
        %4184 = vmatpush1.xpose.msra.mxu0 0.0
        %4185 = vmatprep.subr.mxu0 0.0
        %4186 = vmatpush1.xpose.msra.mxu0 0.0
        %4187 = vmatprep.subr.mxu0 0.0
        %4188 = vmatpush1.xpose.msra.mxu0 0.0
        %4189 = vmatprep.subr.mxu0 0.0
        %4190 = vmatpush1.xpose.msra.mxu0 0.0
        %4191 = vmatprep.subr.mxu0 0.0
        %4192 = vmatpush1.xpose.msra.mxu0 0.0
        %4193 = vmatprep.subr.mxu0 0.0
        %4194 = vmatpush1.xpose.msra.mxu0 0.0
        %4195 = vmatprep.subr.mxu0 0.0
        %4196 = vmatpush1.xpose.msra.mxu0 0.0
        %4197 = vmatprep.subr.mxu0 0.0
        %4198 = vmatpush1.xpose.msra.mxu0 0.0
        %4199 = vmatprep.subr.mxu0 0.0
        %4200 = vmatpush1.xpose.msra.mxu0 0.0
        %4201 = vmatprep.subr.mxu0 0.0
        %4202 = vmatpush1.xpose.msra.mxu0 0.0
        %4203 = vmatprep.subr.mxu0 0.0
        %4204 = vmatpush1.xpose.msra.mxu0 0.0
        %4205 = vmatprep.subr.mxu0 0.0
        %4206 = vmatpush1.xpose.msra.mxu0 0.0
        %4207 = vmatprep.subr.mxu0 0.0
        %4208 = vmatpush1.xpose.msra.mxu0 0.0
        %4209 = vmatprep.subr.mxu0 0.0
        %4210 = vmatpush1.xpose.msra.mxu0 0.0
        %4211 = vmatprep.subr.mxu0 0.0
        %4212 = vmatpush1.xpose.msra.mxu0 0.0
        %4213 = vmatprep.subr.mxu0 0.0
        %4214 = vmatpush1.xpose.msra.mxu0 0.0
        %4215 = vmatprep.subr.mxu0 0.0
        %4216 = vmatpush1.xpose.msra.mxu0 0.0
        %4217 = vmatprep.subr.mxu0 0.0
        %4218 = vmatpush1.xpose.msra.mxu0 0.0
        %4219 = vmatprep.subr.mxu0 0.0
        %4220 = vmatpush1.xpose.msra.mxu0 0.0
        %4221 = vmatprep.subr.mxu0 0.0
        %4222 = vmatpush1.xpose.msra.mxu0 0.0
        %4223 = vmatprep.subr.mxu0 0.0
        %4224 = vmatpush1.xpose.msra.mxu0 0.0
        %4225 = vmatprep.subr.mxu0 0.0
        %4226 = vmatpush1.xpose.msra.mxu0 0.0
        %4227 = vmatprep.subr.mxu0 0.0
        %4228 = vmatpush1.xpose.msra.mxu0 0.0
        %4229 = vmatprep.subr.mxu0 0.0
        %4230 = vmatpush1.xpose.msra.mxu0 0.0
        %4231 = vmatprep.subr.mxu0 0.0
        %4232 = vmatpush1.xpose.msra.mxu0 0.0
        %4233 = vmatprep.subr.mxu0 0.0
        %4234 = vmatpush1.xpose.msra.mxu0 0.0
        %4235 = vmatprep.subr.mxu0 0.0
        %4236 = vmatpush1.xpose.msra.mxu0 0.0
        %4237 = vmatprep.subr.mxu0 0.0
        %4238 = vmatpush1.xpose.msra.mxu0 0.0
        %4239 = vmatprep.mubr.f32.mxu0 0.0
        %4240 = vmatmul.mubr.f32.gmra.mrb[0].mxu0 %v1591
        %v4241 = vpop.f32.mrb[0].mxu0
        %v4242 = vadd.f32 0.0, %v4241
        %v4243 = vpop.f32.mrb[0].mxu0
        %4244 = vdwg.mxu0
        %4245 = vmatprep.subr.mxu0 0.0
        %4246 = vmatpush1.xpose.msra.mxu0 %v1690
        %4247 = vmatprep.subr.mxu0 0.0
        %4248 = vmatpush1.xpose.msra.mxu0 0.0
        %4249 = vmatprep.subr.mxu0 0.0
        %4250 = vmatpush1.xpose.msra.mxu0 0.0
        %4251 = vmatprep.subr.mxu0 0.0
        %4252 = vmatpush1.xpose.msra.mxu0 0.0
        %4253 = vmatprep.subr.mxu0 0.0
        %4254 = vmatpush1.xpose.msra.mxu0 0.0
        %4255 = vmatprep.subr.mxu0 0.0
        %4256 = vmatpush1.xpose.msra.mxu0 0.0
        %4257 = vmatprep.subr.mxu0 0.0
        %4258 = vmatpush1.xpose.msra.mxu0 0.0
        %4259 = vmatprep.subr.mxu0 0.0
        %4260 = vmatpush1.xpose.msra.mxu0 0.0
        %4261 = vmatprep.subr.mxu0 0.0
        %4262 = vmatpush1.xpose.msra.mxu0 0.0
        %4263 = vmatprep.subr.mxu0 0.0
        %4264 = vmatpush1.xpose.msra.mxu0 0.0
        %4265 = vmatprep.subr.mxu0 0.0
        %4266 = vmatpush1.xpose.msra.mxu0 0.0
        %4267 = vmatprep.subr.mxu0 0.0
        %4268 = vmatpush1.xpose.msra.mxu0 0.0
        %4269 = vmatprep.subr.mxu0 0.0
        %4270 = vmatpush1.xpose.msra.mxu0 0.0
        %4271 = vmatprep.subr.mxu0 0.0
        %4272 = vmatpush1.xpose.msra.mxu0 0.0
        %4273 = vmatprep.subr.mxu0 0.0
        %4274 = vmatpush1.xpose.msra.mxu0 0.0
        %4275 = vmatprep.subr.mxu0 0.0
        %4276 = vmatpush1.xpose.msra.mxu0 0.0
        %4277 = vmatprep.subr.mxu0 0.0
        %4278 = vmatpush1.xpose.msra.mxu0 0.0
        %4279 = vmatprep.subr.mxu0 0.0
        %4280 = vmatpush1.xpose.msra.mxu0 0.0
        %4281 = vmatprep.subr.mxu0 0.0
        %4282 = vmatpush1.xpose.msra.mxu0 0.0
        %4283 = vmatprep.subr.mxu0 0.0
        %4284 = vmatpush1.xpose.msra.mxu0 0.0
        %4285 = vmatprep.subr.mxu0 0.0
        %4286 = vmatpush1.xpose.msra.mxu0 0.0
        %4287 = vmatprep.subr.mxu0 0.0
        %4288 = vmatpush1.xpose.msra.mxu0 0.0
        %4289 = vmatprep.subr.mxu0 0.0
        %4290 = vmatpush1.xpose.msra.mxu0 0.0
        %4291 = vmatprep.subr.mxu0 0.0
        %4292 = vmatpush1.xpose.msra.mxu0 0.0
        %4293 = vmatprep.subr.mxu0 0.0
        %4294 = vmatpush1.xpose.msra.mxu0 0.0
        %4295 = vmatprep.subr.mxu0 0.0
        %4296 = vmatpush1.xpose.msra.mxu0 0.0
        %4297 = vmatprep.subr.mxu0 0.0
        %4298 = vmatpush1.xpose.msra.mxu0 0.0
        %4299 = vmatprep.subr.mxu0 0.0
        %4300 = vmatpush1.xpose.msra.mxu0 0.0
        %4301 = vmatprep.subr.mxu0 0.0
        %4302 = vmatpush1.xpose.msra.mxu0 0.0
        %4303 = vmatprep.subr.mxu0 0.0
        %4304 = vmatpush1.xpose.msra.mxu0 0.0
        %4305 = vmatprep.subr.mxu0 0.0
        %4306 = vmatpush1.xpose.msra.mxu0 0.0
        %4307 = vmatprep.subr.mxu0 0.0
        %4308 = vmatpush1.xpose.msra.mxu0 0.0
        %4309 = vmatprep.mubr.f32.mxu0 0.0
        %4310 = vmatmul.mubr.f32.gmra.mrb[0].mxu0 %v1597
        %v4311 = vpop.f32.mrb[0].mxu0
        %v4312 = vadd.f32 0.0, %v4311
        %v4313 = vpop.f32.mrb[0].mxu0
        %4314 = vdwg.mxu0
        %4315 = vmatprep.subr.mxu0 0.0
        %4316 = vmatpush1.xpose.msra.mxu0 %v1694
        %4317 = vmatprep.subr.mxu0 0.0
        %4318 = vmatpush1.xpose.msra.mxu0 0.0
        %4319 = vmatprep.subr.mxu0 0.0
        %4320 = vmatpush1.xpose.msra.mxu0 0.0
        %4321 = vmatprep.subr.mxu0 0.0
        %4322 = vmatpush1.xpose.msra.mxu0 0.0
        %4323 = vmatprep.subr.mxu0 0.0
        %4324 = vmatpush1.xpose.msra.mxu0 0.0
        %4325 = vmatprep.subr.mxu0 0.0
        %4326 = vmatpush1.xpose.msra.mxu0 0.0
        %4327 = vmatprep.subr.mxu0 0.0
        %4328 = vmatpush1.xpose.msra.mxu0 0.0
        %4329 = vmatprep.subr.mxu0 0.0
        %4330 = vmatpush1.xpose.msra.mxu0 0.0
        %4331 = vmatprep.subr.mxu0 0.0
        %4332 = vmatpush1.xpose.msra.mxu0 0.0
        %4333 = vmatprep.subr.mxu0 0.0
        %4334 = vmatpush1.xpose.msra.mxu0 0.0
        %4335 = vmatprep.subr.mxu0 0.0
        %4336 = vmatpush1.xpose.msra.mxu0 0.0
        %4337 = vmatprep.subr.mxu0 0.0
        %4338 = vmatpush1.xpose.msra.mxu0 0.0
        %4339 = vmatprep.subr.mxu0 0.0
        %4340 = vmatpush1.xpose.msra.mxu0 0.0
        %4341 = vmatprep.subr.mxu0 0.0
        %4342 = vmatpush1.xpose.msra.mxu0 0.0
        %4343 = vmatprep.subr.mxu0 0.0
        %4344 = vmatpush1.xpose.msra.mxu0 0.0
        %4345 = vmatprep.subr.mxu0 0.0
        %4346 = vmatpush1.xpose.msra.mxu0 0.0
        %4347 = vmatprep.subr.mxu0 0.0
        %4348 = vmatpush1.xpose.msra.mxu0 0.0
        %4349 = vmatprep.subr.mxu0 0.0
        %4350 = vmatpush1.xpose.msra.mxu0 0.0
        %4351 = vmatprep.subr.mxu0 0.0
        %4352 = vmatpush1.xpose.msra.mxu0 0.0
        %4353 = vmatprep.subr.mxu0 0.0
        %4354 = vmatpush1.xpose.msra.mxu0 0.0
        %4355 = vmatprep.subr.mxu0 0.0
        %4356 = vmatpush1.xpose.msra.mxu0 0.0
        %4357 = vmatprep.subr.mxu0 0.0
        %4358 = vmatpush1.xpose.msra.mxu0 0.0
        %4359 = vmatprep.subr.mxu0 0.0
        %4360 = vmatpush1.xpose.msra.mxu0 0.0
        %4361 = vmatprep.subr.mxu0 0.0
        %4362 = vmatpush1.xpose.msra.mxu0 0.0
        %4363 = vmatprep.subr.mxu0 0.0
        %4364 = vmatpush1.xpose.msra.mxu0 0.0
        %4365 = vmatprep.subr.mxu0 0.0
        %4366 = vmatpush1.xpose.msra.mxu0 0.0
        %4367 = vmatprep.subr.mxu0 0.0
        %4368 = vmatpush1.xpose.msra.mxu0 0.0
        %4369 = vmatprep.subr.mxu0 0.0
        %4370 = vmatpush1.xpose.msra.mxu0 0.0
        %4371 = vmatprep.subr.mxu0 0.0
        %4372 = vmatpush1.xpose.msra.mxu0 0.0
        %4373 = vmatprep.subr.mxu0 0.0
        %4374 = vmatpush1.xpose.msra.mxu0 0.0
        %4375 = vmatprep.subr.mxu0 0.0
        %4376 = vmatpush1.xpose.msra.mxu0 0.0
        %4377 = vmatprep.subr.mxu0 0.0
        %4378 = vmatpush1.xpose.msra.mxu0 0.0
        %4379 = vmatprep.mubr.f32.mxu0 0.0
        %4380 = vmatmul.mubr.f32.gmra.mrb[0].mxu0 %v1601
        %v4381 = vpop.f32.mrb[0].mxu0
        %v4382 = vadd.f32 0.0, %v4381
        %v4383 = vpop.f32.mrb[0].mxu0
        %4384 = vdwg.mxu0
        %4385 = vmatprep.subr.mxu0 0.0
        %4386 = vmatpush1.xpose.msra.mxu0 %v1700
        %4387 = vmatprep.subr.mxu0 0.0
        %4388 = vmatpush1.xpose.msra.mxu0 0.0
        %4389 = vmatprep.subr.mxu0 0.0
        %4390 = vmatpush1.xpose.msra.mxu0 0.0
        %4391 = vmatprep.subr.mxu0 0.0
        %4392 = vmatpush1.xpose.msra.mxu0 0.0
        %4393 = vmatprep.subr.mxu0 0.0
        %4394 = vmatpush1.xpose.msra.mxu0 0.0
        %4395 = vmatprep.subr.mxu0 0.0
        %4396 = vmatpush1.xpose.msra.mxu0 0.0
        %4397 = vmatprep.subr.mxu0 0.0
        %4398 = vmatpush1.xpose.msra.mxu0 0.0
        %4399 = vmatprep.subr.mxu0 0.0
        %4400 = vmatpush1.xpose.msra.mxu0 0.0
        %4401 = vmatprep.subr.mxu0 0.0
        %4402 = vmatpush1.xpose.msra.mxu0 0.0
        %4403 = vmatprep.subr.mxu0 0.0
        %4404 = vmatpush1.xpose.msra.mxu0 0.0
        %4405 = vmatprep.subr.mxu0 0.0
        %4406 = vmatpush1.xpose.msra.mxu0 0.0
        %4407 = vmatprep.subr.mxu0 0.0
        %4408 = vmatpush1.xpose.msra.mxu0 0.0
        %4409 = vmatprep.subr.mxu0 0.0
        %4410 = vmatpush1.xpose.msra.mxu0 0.0
        %4411 = vmatprep.subr.mxu0 0.0
        %4412 = vmatpush1.xpose.msra.mxu0 0.0
        %4413 = vmatprep.subr.mxu0 0.0
        %4414 = vmatpush1.xpose.msra.mxu0 0.0
        %4415 = vmatprep.subr.mxu0 0.0
        %4416 = vmatpush1.xpose.msra.mxu0 0.0
        %4417 = vmatprep.subr.mxu0 0.0
        %4418 = vmatpush1.xpose.msra.mxu0 0.0
        %4419 = vmatprep.subr.mxu0 0.0
        %4420 = vmatpush1.xpose.msra.mxu0 0.0
        %4421 = vmatprep.subr.mxu0 0.0
        %4422 = vmatpush1.xpose.msra.mxu0 0.0
        %4423 = vmatprep.subr.mxu0 0.0
        %4424 = vmatpush1.xpose.msra.mxu0 0.0
        %4425 = vmatprep.subr.mxu0 0.0
        %4426 = vmatpush1.xpose.msra.mxu0 0.0
        %4427 = vmatprep.subr.mxu0 0.0
        %4428 = vmatpush1.xpose.msra.mxu0 0.0
        %4429 = vmatprep.subr.mxu0 0.0
        %4430 = vmatpush1.xpose.msra.mxu0 0.0
        %4431 = vmatprep.subr.mxu0 0.0
        %4432 = vmatpush1.xpose.msra.mxu0 0.0
        %4433 = vmatprep.subr.mxu0 0.0
        %4434 = vmatpush1.xpose.msra.mxu0 0.0
        %4435 = vmatprep.subr.mxu0 0.0
        %4436 = vmatpush1.xpose.msra.mxu0 0.0
        %4437 = vmatprep.subr.mxu0 0.0
        %4438 = vmatpush1.xpose.msra.mxu0 0.0
        %4439 = vmatprep.subr.mxu0 0.0
        %4440 = vmatpush1.xpose.msra.mxu0 0.0
        %4441 = vmatprep.subr.mxu0 0.0
        %4442 = vmatpush1.xpose.msra.mxu0 0.0
        %4443 = vmatprep.subr.mxu0 0.0
        %4444 = vmatpush1.xpose.msra.mxu0 0.0
        %4445 = vmatprep.subr.mxu0 0.0
        %4446 = vmatpush1.xpose.msra.mxu0 0.0
        %4447 = vmatprep.subr.mxu0 0.0
        %4448 = vmatpush1.xpose.msra.mxu0 0.0
        %4449 = vmatprep.mubr.f32.mxu0 0.0
        %4450 = vmatmul.mubr.f32.gmra.mrb[0].mxu0 %v1607
        %v4451 = vpop.f32.mrb[0].mxu0
        %v4452 = vadd.f32 0.0, %v4451
        %v4453 = vpop.f32.mrb[0].mxu0
        %4454 = vdwg.mxu0
        %4455 = vmatprep.subr.mxu0 0.0
        %4456 = vmatpush1.xpose.msra.mxu0 %v1704
        %4457 = vmatprep.subr.mxu0 0.0
        %4458 = vmatpush1.xpose.msra.mxu0 0.0
        %4459 = vmatprep.subr.mxu0 0.0
        %4460 = vmatpush1.xpose.msra.mxu0 0.0
        %4461 = vmatprep.subr.mxu0 0.0
        %4462 = vmatpush1.xpose.msra.mxu0 0.0
        %4463 = vmatprep.subr.mxu0 0.0
        %4464 = vmatpush1.xpose.msra.mxu0 0.0
        %4465 = vmatprep.subr.mxu0 0.0
        %4466 = vmatpush1.xpose.msra.mxu0 0.0
        %4467 = vmatprep.subr.mxu0 0.0
        %4468 = vmatpush1.xpose.msra.mxu0 0.0
        %4469 = vmatprep.subr.mxu0 0.0
        %4470 = vmatpush1.xpose.msra.mxu0 0.0
        %4471 = vmatprep.subr.mxu0 0.0
        %4472 = vmatpush1.xpose.msra.mxu0 0.0
        %4473 = vmatprep.subr.mxu0 0.0
        %4474 = vmatpush1.xpose.msra.mxu0 0.0
        %4475 = vmatprep.subr.mxu0 0.0
        %4476 = vmatpush1.xpose.msra.mxu0 0.0
        %4477 = vmatprep.subr.mxu0 0.0
        %4478 = vmatpush1.xpose.msra.mxu0 0.0
        %4479 = vmatprep.subr.mxu0 0.0
        %4480 = vmatpush1.xpose.msra.mxu0 0.0
        %4481 = vmatprep.subr.mxu0 0.0
        %4482 = vmatpush1.xpose.msra.mxu0 0.0
        %4483 = vmatprep.subr.mxu0 0.0
        %4484 = vmatpush1.xpose.msra.mxu0 0.0
        %4485 = vmatprep.subr.mxu0 0.0
        %4486 = vmatpush1.xpose.msra.mxu0 0.0
        %4487 = vmatprep.subr.mxu0 0.0
        %4488 = vmatpush1.xpose.msra.mxu0 0.0
        %4489 = vmatprep.subr.mxu0 0.0
        %4490 = vmatpush1.xpose.msra.mxu0 0.0
        %4491 = vmatprep.subr.mxu0 0.0
        %4492 = vmatpush1.xpose.msra.mxu0 0.0
        %4493 = vmatprep.subr.mxu0 0.0
        %4494 = vmatpush1.xpose.msra.mxu0 0.0
        %4495 = vmatprep.subr.mxu0 0.0
        %4496 = vmatpush1.xpose.msra.mxu0 0.0
        %4497 = vmatprep.subr.mxu0 0.0
        %4498 = vmatpush1.xpose.msra.mxu0 0.0
        %4499 = vmatprep.subr.mxu0 0.0
        %4500 = vmatpush1.xpose.msra.mxu0 0.0
        %4501 = vmatprep.subr.mxu0 0.0
        %4502 = vmatpush1.xpose.msra.mxu0 0.0
        %4503 = vmatprep.subr.mxu0 0.0
        %4504 = vmatpush1.xpose.msra.mxu0 0.0
        %4505 = vmatprep.subr.mxu0 0.0
        %4506 = vmatpush1.xpose.msra.mxu0 0.0
        %4507 = vmatprep.subr.mxu0 0.0
        %4508 = vmatpush1.xpose.msra.mxu0 0.0
        %4509 = vmatprep.subr.mxu0 0.0
        %4510 = vmatpush1.xpose.msra.mxu0 0.0
        %4511 = vmatprep.subr.mxu0 0.0
        %4512 = vmatpush1.xpose.msra.mxu0 0.0
        %4513 = vmatprep.subr.mxu0 0.0
        %4514 = vmatpush1.xpose.msra.mxu0 0.0
        %4515 = vmatprep.subr.mxu0 0.0
        %4516 = vmatpush1.xpose.msra.mxu0 0.0
        %4517 = vmatprep.subr.mxu0 0.0
        %4518 = vmatpush1.xpose.msra.mxu0 0.0
        %4519 = vmatprep.mubr.f32.mxu0 0.0
        %4520 = vmatmul.mubr.f32.gmra.mrb[0].mxu0 %v1611
        %v4521 = vpop.f32.mrb[0].mxu0
        %v4522 = vadd.f32 0.0, %v4521
        %v4523 = vpop.f32.mrb[0].mxu0
        %4524 = vdwg.mxu0
        %4525 = vmatprep.subr.mxu0 0.0
        %4526 = vmatpush1.xpose.msra.mxu0 %v1710
        %4527 = vmatprep.subr.mxu0 0.0
        %4528 = vmatpush1.xpose.msra.mxu0 0.0
        %4529 = vmatprep.subr.mxu0 0.0
        %4530 = vmatpush1.xpose.msra.mxu0 0.0
        %4531 = vmatprep.subr.mxu0 0.0
        %4532 = vmatpush1.xpose.msra.mxu0 0.0
        %4533 = vmatprep.subr.mxu0 0.0
        %4534 = vmatpush1.xpose.msra.mxu0 0.0
        %4535 = vmatprep.subr.mxu0 0.0
        %4536 = vmatpush1.xpose.msra.mxu0 0.0
        %4537 = vmatprep.subr.mxu0 0.0
        %4538 = vmatpush1.xpose.msra.mxu0 0.0
        %4539 = vmatprep.subr.mxu0 0.0
        %4540 = vmatpush1.xpose.msra.mxu0 0.0
        %4541 = vmatprep.subr.mxu0 0.0
        %4542 = vmatpush1.xpose.msra.mxu0 0.0
        %4543 = vmatprep.subr.mxu0 0.0
        %4544 = vmatpush1.xpose.msra.mxu0 0.0
        %4545 = vmatprep.subr.mxu0 0.0
        %4546 = vmatpush1.xpose.msra.mxu0 0.0
        %4547 = vmatprep.subr.mxu0 0.0
        %4548 = vmatpush1.xpose.msra.mxu0 0.0
        %4549 = vmatprep.subr.mxu0 0.0
        %4550 = vmatpush1.xpose.msra.mxu0 0.0
        %4551 = vmatprep.subr.mxu0 0.0
        %4552 = vmatpush1.xpose.msra.mxu0 0.0
        %4553 = vmatprep.subr.mxu0 0.0
        %4554 = vmatpush1.xpose.msra.mxu0 0.0
        %4555 = vmatprep.subr.mxu0 0.0
        %4556 = vmatpush1.xpose.msra.mxu0 0.0
        %4557 = vmatprep.subr.mxu0 0.0
        %4558 = vmatpush1.xpose.msra.mxu0 0.0
        %4559 = vmatprep.subr.mxu0 0.0
        %4560 = vmatpush1.xpose.msra.mxu0 0.0
        %4561 = vmatprep.subr.mxu0 0.0
        %4562 = vmatpush1.xpose.msra.mxu0 0.0
        %4563 = vmatprep.subr.mxu0 0.0
        %4564 = vmatpush1.xpose.msra.mxu0 0.0
        %4565 = vmatprep.subr.mxu0 0.0
        %4566 = vmatpush1.xpose.msra.mxu0 0.0
        %4567 = vmatprep.subr.mxu0 0.0
        %4568 = vmatpush1.xpose.msra.mxu0 0.0
        %4569 = vmatprep.subr.mxu0 0.0
        %4570 = vmatpush1.xpose.msra.mxu0 0.0
        %4571 = vmatprep.subr.mxu0 0.0
        %4572 = vmatpush1.xpose.msra.mxu0 0.0
        %4573 = vmatprep.subr.mxu0 0.0
        %4574 = vmatpush1.xpose.msra.mxu0 0.0
        %4575 = vmatprep.subr.mxu0 0.0
        %4576 = vmatpush1.xpose.msra.mxu0 0.0
        %4577 = vmatprep.subr.mxu0 0.0
        %4578 = vmatpush1.xpose.msra.mxu0 0.0
        %4579 = vmatprep.subr.mxu0 0.0
        %4580 = vmatpush1.xpose.msra.mxu0 0.0
        %4581 = vmatprep.subr.mxu0 0.0
        %4582 = vmatpush1.xpose.msra.mxu0 0.0
        %4583 = vmatprep.subr.mxu0 0.0
        %4584 = vmatpush1.xpose.msra.mxu0 0.0
        %4585 = vmatprep.subr.mxu0 0.0
        %4586 = vmatpush1.xpose.msra.mxu0 0.0
        %4587 = vmatprep.subr.mxu0 0.0
        %4588 = vmatpush1.xpose.msra.mxu0 0.0
        %4589 = vmatprep.mubr.f32.mxu0 0.0
        %4590 = vmatmul.mubr.f32.gmra.mrb[0].mxu0 %v1617
        %v4591 = vpop.f32.mrb[0].mxu0
        %v4592 = vadd.f32 0.0, %v4591
        %v4593 = vpop.f32.mrb[0].mxu0
        %4594 = vdwg.mxu0
        %4595 = vmatprep.subr.mxu0 0.0
        %4596 = vmatpush1.xpose.msra.mxu0 %v1714
        %4597 = vmatprep.subr.mxu0 0.0
        %4598 = vmatpush1.xpose.msra.mxu0 0.0
        %4599 = vmatprep.subr.mxu0 0.0
        %4600 = vmatpush1.xpose.msra.mxu0 0.0
        %4601 = vmatprep.subr.mxu0 0.0
        %4602 = vmatpush1.xpose.msra.mxu0 0.0
        %4603 = vmatprep.subr.mxu0 0.0
        %4604 = vmatpush1.xpose.msra.mxu0 0.0
        %4605 = vmatprep.subr.mxu0 0.0
        %4606 = vmatpush1.xpose.msra.mxu0 0.0
        %4607 = vmatprep.subr.mxu0 0.0
        %4608 = vmatpush1.xpose.msra.mxu0 0.0
        %4609 = vmatprep.subr.mxu0 0.0
        %4610 = vmatpush1.xpose.msra.mxu0 0.0
        %4611 = vmatprep.subr.mxu0 0.0
        %4612 = vmatpush1.xpose.msra.mxu0 0.0
        %4613 = vmatprep.subr.mxu0 0.0
        %4614 = vmatpush1.xpose.msra.mxu0 0.0
        %4615 = vmatprep.subr.mxu0 0.0
        %4616 = vmatpush1.xpose.msra.mxu0 0.0
        %4617 = vmatprep.subr.mxu0 0.0
        %4618 = vmatpush1.xpose.msra.mxu0 0.0
        %4619 = vmatprep.subr.mxu0 0.0
        %4620 = vmatpush1.xpose.msra.mxu0 0.0
        %4621 = vmatprep.subr.mxu0 0.0
        %4622 = vmatpush1.xpose.msra.mxu0 0.0
        %4623 = vmatprep.subr.mxu0 0.0
        %4624 = vmatpush1.xpose.msra.mxu0 0.0
        %4625 = vmatprep.subr.mxu0 0.0
        %4626 = vmatpush1.xpose.msra.mxu0 0.0
        %4627 = vmatprep.subr.mxu0 0.0
        %4628 = vmatpush1.xpose.msra.mxu0 0.0
        %4629 = vmatprep.subr.mxu0 0.0
        %4630 = vmatpush1.xpose.msra.mxu0 0.0
        %4631 = vmatprep.subr.mxu0 0.0
        %4632 = vmatpush1.xpose.msra.mxu0 0.0
        %4633 = vmatprep.subr.mxu0 0.0
        %4634 = vmatpush1.xpose.msra.mxu0 0.0
        %4635 = vmatprep.subr.mxu0 0.0
        %4636 = vmatpush1.xpose.msra.mxu0 0.0
        %4637 = vmatprep.subr.mxu0 0.0
        %4638 = vmatpush1.xpose.msra.mxu0 0.0
        %4639 = vmatprep.subr.mxu0 0.0
        %4640 = vmatpush1.xpose.msra.mxu0 0.0
        %4641 = vmatprep.subr.mxu0 0.0
        %4642 = vmatpush1.xpose.msra.mxu0 0.0
        %4643 = vmatprep.subr.mxu0 0.0
        %4644 = vmatpush1.xpose.msra.mxu0 0.0
        %4645 = vmatprep.subr.mxu0 0.0
        %4646 = vmatpush1.xpose.msra.mxu0 0.0
        %4647 = vmatprep.subr.mxu0 0.0
        %4648 = vmatpush1.xpose.msra.mxu0 0.0
        %4649 = vmatprep.subr.mxu0 0.0
        %4650 = vmatpush1.xpose.msra.mxu0 0.0
        %4651 = vmatprep.subr.mxu0 0.0
        %4652 = vmatpush1.xpose.msra.mxu0 0.0
        %4653 = vmatprep.subr.mxu0 0.0
        %4654 = vmatpush1.xpose.msra.mxu0 0.0
        %4655 = vmatprep.subr.mxu0 0.0
        %4656 = vmatpush1.xpose.msra.mxu0 0.0
        %4657 = vmatprep.subr.mxu0 0.0
        %4658 = vmatpush1.xpose.msra.mxu0 0.0
        %4659 = vmatprep.mubr.f32.mxu0 0.0
        %4660 = vmatmul.mubr.f32.gmra.mrb[0].mxu0 %v1621
        %v4661 = vpop.f32.mrb[0].mxu0
        %v4662 = vadd.f32 0.0, %v4661
        %v4663 = vpop.f32.mrb[0].mxu0
        %4664 = vdwg.mxu0
        %v4665 = vmul.f32 %v3892, 0.088388346
        %v4666 = vmul.f32 %v3962, 0.088388346
        %v4667 = vmul.f32 %v4032, 0.088388346
        %v4668 = vmul.f32 %v4102, 0.088388346
        %v4669 = vmul.f32 %v4172, 0.088388346
        %v4670 = vmul.f32 %v4242, 0.088388346
        %v4671 = vmul.f32 %v4312, 0.088388346
        %v4672 = vmul.f32 %v4382, 0.088388346
        %v4673 = vmul.f32 %v4452, 0.088388346
        %v4674 = vmul.f32 %v4522, 0.088388346
        %v4675 = vmul.f32 %v4592, 0.088388346
        %v4676 = vmul.f32 %v4662, 0.088388346
        %v4677 = vadd.f32 %v4665, %v2741
        %v4678 = vadd.f32 %v4666, %v2745
        %v4679 = vadd.f32 %v4667, %v2749
        %v4680 = vadd.f32 %v4668, %v2753
        %v4681 = vadd.f32 %v4669, %v2757
        %v4682 = vadd.f32 %v4670, %v2761
        %v4683 = vadd.f32 %v4671, %v2765
        %v4684 = vadd.f32 %v4672, %v2769
        %v4685 = vadd.f32 %v4673, %v2773
        %v4686 = vadd.f32 %v4674, %v2777
        %v4687 = vadd.f32 %v4675, %v2781
        %v4688 = vadd.f32 %v4676, %v2785
        %v4689 = vsel %vm2810, %v4677, -inf
        %4690 = vmax.xlane.f32.xlu0 %v4689
        %v4691 = vpop.xlane.xlu0 %4690
        %v4692 = vsel %vm2810, %v4678, -inf
        %4693 = vmax.xlane.f32.xlu0 %v4692
        %v4694 = vpop.xlane.xlu0 %4693
        %v4695 = vsel %vm2810, %v4679, -inf
        %4696 = vmax.xlane.f32.xlu0 %v4695
        %v4697 = vpop.xlane.xlu0 %4696
        %v4698 = vsel %vm2810, %v4680, -inf
        %4699 = vmax.xlane.f32.xlu0 %v4698
        %v4700 = vpop.xlane.xlu0 %4699
        %v4701 = vsel %vm2810, %v4681, -inf
        %4702 = vmax.xlane.f32.xlu0 %v4701
        %v4703 = vpop.xlane.xlu0 %4702
        %v4704 = vsel %vm2810, %v4682, -inf
        %4705 = vmax.xlane.f32.xlu0 %v4704
        %v4706 = vpop.xlane.xlu0 %4705
        %v4707 = vsel %vm2810, %v4683, -inf
        %4708 = vmax.xlane.f32.xlu0 %v4707
        %v4709 = vpop.xlane.xlu0 %4708
        %v4710 = vsel %vm2810, %v4684, -inf
        %4711 = vmax.xlane.f32.xlu0 %v4710
        %v4712 = vpop.xlane.xlu0 %4711
        %v4713 = vsel %vm2810, %v4685, -inf
        %4714 = vmax.xlane.f32.xlu0 %v4713
        %v4715 = vpop.xlane.xlu0 %4714
        %v4716 = vsel %vm2810, %v4686, -inf
        %4717 = vmax.xlane.f32.xlu0 %v4716
        %v4718 = vpop.xlane.xlu0 %4717
        %v4719 = vsel %vm2810, %v4687, -inf
        %4720 = vmax.xlane.f32.xlu0 %v4719
        %v4721 = vpop.xlane.xlu0 %4720
        %v4722 = vsel %vm2810, %v4688, -inf
        %4723 = vmax.xlane.f32.xlu0 %v4722
        %v4724 = vpop.xlane.xlu0 %4723
        %v4725 = vsub.f32 %v4677, %v4691
        %v4726 = vsub.f32 %v4678, %v4694
        %v4727 = vsub.f32 %v4679, %v4697
        %v4728 = vsub.f32 %v4680, %v4700
        %v4729 = vsub.f32 %v4681, %v4703
        %v4730 = vsub.f32 %v4682, %v4706
        %v4731 = vsub.f32 %v4683, %v4709
        %v4732 = vsub.f32 %v4684, %v4712
        %v4733 = vsub.f32 %v4685, %v4715
        %v4734 = vsub.f32 %v4686, %v4718
        %v4735 = vsub.f32 %v4687, %v4721
        %v4736 = vsub.f32 %v4688, %v4724
        %v4737 = vmul.f32 %v4725, 1.442695
        %v4738 = vpow.pop %v4737
        %v4739 = vmul.f32 %v4726, 1.442695
        %v4740 = vpow.pop %v4739
        %v4741 = vmul.f32 %v4727, 1.442695
        %v4742 = vpow.pop %v4741
        %v4743 = vmul.f32 %v4728, 1.442695
        %v4744 = vpow.pop %v4743
        %v4745 = vmul.f32 %v4729, 1.442695
        %v4746 = vpow.pop %v4745
        %v4747 = vmul.f32 %v4730, 1.442695
        %v4748 = vpow.pop %v4747
        %v4749 = vmul.f32 %v4731, 1.442695
        %v4750 = vpow.pop %v4749
        %v4751 = vmul.f32 %v4732, 1.442695
        %v4752 = vpow.pop %v4751
        %v4753 = vmul.f32 %v4733, 1.442695
        %v4754 = vpow.pop %v4753
        %v4755 = vmul.f32 %v4734, 1.442695
        %v4756 = vpow.pop %v4755
        %v4757 = vmul.f32 %v4735, 1.442695
        %v4758 = vpow.pop %v4757
        %v4759 = vmul.f32 %v4736, 1.442695
        %v4760 = vpow.pop %v4759
        %v4761 = vsel %vm2810, %v4738, 0.0
        %4762 = vadd.xlane.f32.xlu0 %v4761
        %v4763 = vpop.xlane.xlu0 %4762
        %v4764 = vsel %vm2810, %v4740, 0.0
        %4765 = vadd.xlane.f32.xlu0 %v4764
        %v4766 = vpop.xlane.xlu0 %4765
        %v4767 = vsel %vm2810, %v4742, 0.0
        %4768 = vadd.xlane.f32.xlu0 %v4767
        %v4769 = vpop.xlane.xlu0 %4768
        %v4770 = vsel %vm2810, %v4744, 0.0
        %4771 = vadd.xlane.f32.xlu0 %v4770
        %v4772 = vpop.xlane.xlu0 %4771
        %v4773 = vsel %vm2810, %v4746, 0.0
        %4774 = vadd.xlane.f32.xlu0 %v4773
        %v4775 = vpop.xlane.xlu0 %4774
        %v4776 = vsel %vm2810, %v4748, 0.0
        %4777 = vadd.xlane.f32.xlu0 %v4776
        %v4778 = vpop.xlane.xlu0 %4777
        %v4779 = vsel %vm2810, %v4750, 0.0
        %4780 = vadd.xlane.f32.xlu0 %v4779
        %v4781 = vpop.xlane.xlu0 %4780
        %v4782 = vsel %vm2810, %v4752, 0.0
        %4783 = vadd.xlane.f32.xlu0 %v4782
        %v4784 = vpop.xlane.xlu0 %4783
        %v4785 = vsel %vm2810, %v4754, 0.0
        %4786 = vadd.xlane.f32.xlu0 %v4785
        %v4787 = vpop.xlane.xlu0 %4786
        %v4788 = vsel %vm2810, %v4756, 0.0
        %4789 = vadd.xlane.f32.xlu0 %v4788
        %v4790 = vpop.xlane.xlu0 %4789
        %v4791 = vsel %vm2810, %v4758, 0.0
        %4792 = vadd.xlane.f32.xlu0 %v4791
        %v4793 = vpop.xlane.xlu0 %4792
        %v4794 = vsel %vm2810, %v4760, 0.0
        %4795 = vadd.xlane.f32.xlu0 %v4794
        %v4796 = vpop.xlane.xlu0 %4795
        %v4797 = vrcp.pop %v4763
        %v4798 = vrcp.pop %v4766
        %v4799 = vrcp.pop %v4769
        %v4800 = vrcp.pop %v4772
        %v4801 = vrcp.pop %v4775
        %v4802 = vrcp.pop %v4778
        %v4803 = vrcp.pop %v4781
        %v4804 = vrcp.pop %v4784
        %v4805 = vrcp.pop %v4787
        %v4806 = vrcp.pop %v4790
        %v4807 = vrcp.pop %v4793
        %v4808 = vrcp.pop %v4796
        %v4809 = vmul.f32 %v4738, %v4797
        %v4810 = vmul.f32 %v4740, %v4798
        %v4811 = vmul.f32 %v4742, %v4799
        %v4812 = vmul.f32 %v4744, %v4800
        %v4813 = vmul.f32 %v4746, %v4801
        %v4814 = vmul.f32 %v4748, %v4802
        %v4815 = vmul.f32 %v4750, %v4803
        %v4816 = vmul.f32 %v4752, %v4804
        %v4817 = vmul.f32 %v4754, %v4805
        %v4818 = vmul.f32 %v4756, %v4806
        %v4819 = vmul.f32 %v4758, %v4807
        %v4820 = vmul.f32 %v4760, %v4808
        %v4822 = vsel %vm2810, %v4809, 0
        %4824 = vmatprep.subr.mxu0 0.0
        %4825 = vmatpush1.msra.mxu0 %v1753
        %4826 = vmatprep.subr.mxu0 0.0
        %4827 = vmatpush1.msra.mxu0 0.0
        %4828 = vmatprep.subr.mxu0 0.0
        %4829 = vmatpush1.msra.mxu0 0.0
        %4830 = vmatprep.subr.mxu0 0.0
        %4831 = vmatpush1.msra.mxu0 0.0
        %4832 = vmatprep.subr.mxu0 0.0
        %4833 = vmatpush1.msra.mxu0 0.0
        %4834 = vmatprep.subr.mxu0 0.0
        %4835 = vmatpush1.msra.mxu0 0.0
        %4836 = vmatprep.subr.mxu0 0.0
        %4837 = vmatpush1.msra.mxu0 0.0
        %4838 = vmatprep.subr.mxu0 0.0
        %4839 = vmatpush1.msra.mxu0 0.0
        %4840 = vmatprep.subr.mxu0 0.0
        %4841 = vmatpush1.msra.mxu0 0.0
        %4842 = vmatprep.subr.mxu0 0.0
        %4843 = vmatpush1.msra.mxu0 0.0
        %4844 = vmatprep.subr.mxu0 0.0
        %4845 = vmatpush1.msra.mxu0 0.0
        %4846 = vmatprep.subr.mxu0 0.0
        %4847 = vmatpush1.msra.mxu0 0.0
        %4848 = vmatprep.subr.mxu0 0.0
        %4849 = vmatpush1.msra.mxu0 0.0
        %4850 = vmatprep.subr.mxu0 0.0
        %4851 = vmatpush1.msra.mxu0 0.0
        %4852 = vmatprep.subr.mxu0 0.0
        %4853 = vmatpush1.msra.mxu0 0.0
        %4854 = vmatprep.subr.mxu0 0.0
        %4855 = vmatpush1.msra.mxu0 0.0
        %4856 = vmatprep.subr.mxu0 0.0
        %4857 = vmatpush1.msra.mxu0 0.0
        %4858 = vmatprep.subr.mxu0 0.0
        %4859 = vmatpush1.msra.mxu0 0.0
        %4860 = vmatprep.subr.mxu0 0.0
        %4861 = vmatpush1.msra.mxu0 0.0
        %4862 = vmatprep.subr.mxu0 0.0
        %4863 = vmatpush1.msra.mxu0 0.0
        %4864 = vmatprep.subr.mxu0 0.0
        %4865 = vmatpush1.msra.mxu0 0.0
        %4866 = vmatprep.subr.mxu0 0.0
        %4867 = vmatpush1.msra.mxu0 0.0
        %4868 = vmatprep.subr.mxu0 0.0
        %4869 = vmatpush1.msra.mxu0 0.0
        %4870 = vmatprep.subr.mxu0 0.0
        %4871 = vmatpush1.msra.mxu0 0.0
        %4872 = vmatprep.subr.mxu0 0.0
        %4873 = vmatpush1.msra.mxu0 0.0
        %4874 = vmatprep.subr.mxu0 0.0
        %4875 = vmatpush1.msra.mxu0 0.0
        %4876 = vmatprep.subr.mxu0 0.0
        %4877 = vmatpush1.msra.mxu0 0.0
        %4878 = vmatprep.subr.mxu0 0.0
        %4879 = vmatpush1.msra.mxu0 0.0
        %4880 = vmatprep.subr.mxu0 0.0
        %4881 = vmatpush1.msra.mxu0 0.0
        %4882 = vmatprep.subr.mxu0 0.0
        %4883 = vmatpush1.msra.mxu0 0.0
        %4884 = vmatprep.subr.mxu0 0.0
        %4885 = vmatpush1.msra.mxu0 0.0
        %4886 = vmatprep.subr.mxu0 0.0
        %4887 = vmatpush1.msra.mxu0 0.0
        %4888 = vmatprep.mubr.f32.mxu0 0.0
        %4889 = vmatmul.mubr.f32.gmra.mrb[0].mxu0 %v4822
        %v4890 = vpop.f32.mrb[0].mxu0
        %v4891 = vadd.f32 0.0, %v4890
        %v4892 = vpop.f32.mrb[0].mxu0
        %4893 = vdwg.mxu0
        %v4895 = vsel %vm2810, %v4810, 0
        %4897 = vmatprep.subr.mxu0 0.0
        %4898 = vmatpush1.msra.mxu0 %v1757
        %4899 = vmatprep.subr.mxu0 0.0
        %4900 = vmatpush1.msra.mxu0 0.0
        %4901 = vmatprep.subr.mxu0 0.0
        %4902 = vmatpush1.msra.mxu0 0.0
        %4903 = vmatprep.subr.mxu0 0.0
        %4904 = vmatpush1.msra.mxu0 0.0
        %4905 = vmatprep.subr.mxu0 0.0
        %4906 = vmatpush1.msra.mxu0 0.0
        %4907 = vmatprep.subr.mxu0 0.0
        %4908 = vmatpush1.msra.mxu0 0.0
        %4909 = vmatprep.subr.mxu0 0.0
        %4910 = vmatpush1.msra.mxu0 0.0
        %4911 = vmatprep.subr.mxu0 0.0
        %4912 = vmatpush1.msra.mxu0 0.0
        %4913 = vmatprep.subr.mxu0 0.0
        %4914 = vmatpush1.msra.mxu0 0.0
        %4915 = vmatprep.subr.mxu0 0.0
        %4916 = vmatpush1.msra.mxu0 0.0
        %4917 = vmatprep.subr.mxu0 0.0
        %4918 = vmatpush1.msra.mxu0 0.0
        %4919 = vmatprep.subr.mxu0 0.0
        %4920 = vmatpush1.msra.mxu0 0.0
        %4921 = vmatprep.subr.mxu0 0.0
        %4922 = vmatpush1.msra.mxu0 0.0
        %4923 = vmatprep.subr.mxu0 0.0
        %4924 = vmatpush1.msra.mxu0 0.0
        %4925 = vmatprep.subr.mxu0 0.0
        %4926 = vmatpush1.msra.mxu0 0.0
        %4927 = vmatprep.subr.mxu0 0.0
        %4928 = vmatpush1.msra.mxu0 0.0
        %4929 = vmatprep.subr.mxu0 0.0
        %4930 = vmatpush1.msra.mxu0 0.0
        %4931 = vmatprep.subr.mxu0 0.0
        %4932 = vmatpush1.msra.mxu0 0.0
        %4933 = vmatprep.subr.mxu0 0.0
        %4934 = vmatpush1.msra.mxu0 0.0
        %4935 = vmatprep.subr.mxu0 0.0
        %4936 = vmatpush1.msra.mxu0 0.0
        %4937 = vmatprep.subr.mxu0 0.0
        %4938 = vmatpush1.msra.mxu0 0.0
        %4939 = vmatprep.subr.mxu0 0.0
        %4940 = vmatpush1.msra.mxu0 0.0
        %4941 = vmatprep.subr.mxu0 0.0
        %4942 = vmatpush1.msra.mxu0 0.0
        %4943 = vmatprep.subr.mxu0 0.0
        %4944 = vmatpush1.msra.mxu0 0.0
        %4945 = vmatprep.subr.mxu0 0.0
        %4946 = vmatpush1.msra.mxu0 0.0
        %4947 = vmatprep.subr.mxu0 0.0
        %4948 = vmatpush1.msra.mxu0 0.0
        %4949 = vmatprep.subr.mxu0 0.0
        %4950 = vmatpush1.msra.mxu0 0.0
        %4951 = vmatprep.subr.mxu0 0.0
        %4952 = vmatpush1.msra.mxu0 0.0
        %4953 = vmatprep.subr.mxu0 0.0
        %4954 = vmatpush1.msra.mxu0 0.0
        %4955 = vmatprep.subr.mxu0 0.0
        %4956 = vmatpush1.msra.mxu0 0.0
        %4957 = vmatprep.subr.mxu0 0.0
        %4958 = vmatpush1.msra.mxu0 0.0
        %4959 = vmatprep.subr.mxu0 0.0
        %4960 = vmatpush1.msra.mxu0 0.0
        %4961 = vmatprep.mubr.f32.mxu0 0.0
        %4962 = vmatmul.mubr.f32.gmra.mrb[0].mxu0 %v4895
        %v4963 = vpop.f32.mrb[0].mxu0
        %v4964 = vadd.f32 0.0, %v4963
        %v4965 = vpop.f32.mrb[0].mxu0
        %4966 = vdwg.mxu0
        %v4968 = vsel %vm2810, %v4811, 0
        %4970 = vmatprep.subr.mxu0 0.0
        %4971 = vmatpush1.msra.mxu0 %v1763
        %4972 = vmatprep.subr.mxu0 0.0
        %4973 = vmatpush1.msra.mxu0 0.0
        %4974 = vmatprep.subr.mxu0 0.0
        %4975 = vmatpush1.msra.mxu0 0.0
        %4976 = vmatprep.subr.mxu0 0.0
        %4977 = vmatpush1.msra.mxu0 0.0
        %4978 = vmatprep.subr.mxu0 0.0
        %4979 = vmatpush1.msra.mxu0 0.0
        %4980 = vmatprep.subr.mxu0 0.0
        %4981 = vmatpush1.msra.mxu0 0.0
        %4982 = vmatprep.subr.mxu0 0.0
        %4983 = vmatpush1.msra.mxu0 0.0
        %4984 = vmatprep.subr.mxu0 0.0
        %4985 = vmatpush1.msra.mxu0 0.0
        %4986 = vmatprep.subr.mxu0 0.0
        %4987 = vmatpush1.msra.mxu0 0.0
        %4988 = vmatprep.subr.mxu0 0.0
        %4989 = vmatpush1.msra.mxu0 0.0
        %4990 = vmatprep.subr.mxu0 0.0
        %4991 = vmatpush1.msra.mxu0 0.0
        %4992 = vmatprep.subr.mxu0 0.0
        %4993 = vmatpush1.msra.mxu0 0.0
        %4994 = vmatprep.subr.mxu0 0.0
        %4995 = vmatpush1.msra.mxu0 0.0
        %4996 = vmatprep.subr.mxu0 0.0
        %4997 = vmatpush1.msra.mxu0 0.0
        %4998 = vmatprep.subr.mxu0 0.0
        %4999 = vmatpush1.msra.mxu0 0.0
        %5000 = vmatprep.subr.mxu0 0.0
        %5001 = vmatpush1.msra.mxu0 0.0
        %5002 = vmatprep.subr.mxu0 0.0
        %5003 = vmatpush1.msra.mxu0 0.0
        %5004 = vmatprep.subr.mxu0 0.0
        %5005 = vmatpush1.msra.mxu0 0.0
        %5006 = vmatprep.subr.mxu0 0.0
        %5007 = vmatpush1.msra.mxu0 0.0
        %5008 = vmatprep.subr.mxu0 0.0
        %5009 = vmatpush1.msra.mxu0 0.0
        %5010 = vmatprep.subr.mxu0 0.0
        %5011 = vmatpush1.msra.mxu0 0.0
        %5012 = vmatprep.subr.mxu0 0.0
        %5013 = vmatpush1.msra.mxu0 0.0
        %5014 = vmatprep.subr.mxu0 0.0
        %5015 = vmatpush1.msra.mxu0 0.0
        %5016 = vmatprep.subr.mxu0 0.0
        %5017 = vmatpush1.msra.mxu0 0.0
        %5018 = vmatprep.subr.mxu0 0.0
        %5019 = vmatpush1.msra.mxu0 0.0
        %5020 = vmatprep.subr.mxu0 0.0
        %5021 = vmatpush1.msra.mxu0 0.0
        %5022 = vmatprep.subr.mxu0 0.0
        %5023 = vmatpush1.msra.mxu0 0.0
        %5024 = vmatprep.subr.mxu0 0.0
        %5025 = vmatpush1.msra.mxu0 0.0
        %5026 = vmatprep.subr.mxu0 0.0
        %5027 = vmatpush1.msra.mxu0 0.0
        %5028 = vmatprep.subr.mxu0 0.0
        %5029 = vmatpush1.msra.mxu0 0.0
        %5030 = vmatprep.subr.mxu0 0.0
        %5031 = vmatpush1.msra.mxu0 0.0
        %5032 = vmatprep.subr.mxu0 0.0
        %5033 = vmatpush1.msra.mxu0 0.0
        %5034 = vmatprep.mubr.f32.mxu0 0.0
        %5035 = vmatmul.mubr.f32.gmra.mrb[0].mxu0 %v4968
        %v5036 = vpop.f32.mrb[0].mxu0
        %v5037 = vadd.f32 0.0, %v5036
        %v5038 = vpop.f32.mrb[0].mxu0
        %5039 = vdwg.mxu0
        %v5041 = vsel %vm2810, %v4812, 0
        %5043 = vmatprep.subr.mxu0 0.0
        %5044 = vmatpush1.msra.mxu0 %v1767
        %5045 = vmatprep.subr.mxu0 0.0
        %5046 = vmatpush1.msra.mxu0 0.0
        %5047 = vmatprep.subr.mxu0 0.0
        %5048 = vmatpush1.msra.mxu0 0.0
        %5049 = vmatprep.subr.mxu0 0.0
        %5050 = vmatpush1.msra.mxu0 0.0
        %5051 = vmatprep.subr.mxu0 0.0
        %5052 = vmatpush1.msra.mxu0 0.0
        %5053 = vmatprep.subr.mxu0 0.0
        %5054 = vmatpush1.msra.mxu0 0.0
        %5055 = vmatprep.subr.mxu0 0.0
        %5056 = vmatpush1.msra.mxu0 0.0
        %5057 = vmatprep.subr.mxu0 0.0
        %5058 = vmatpush1.msra.mxu0 0.0
        %5059 = vmatprep.subr.mxu0 0.0
        %5060 = vmatpush1.msra.mxu0 0.0
        %5061 = vmatprep.subr.mxu0 0.0
        %5062 = vmatpush1.msra.mxu0 0.0
        %5063 = vmatprep.subr.mxu0 0.0
        %5064 = vmatpush1.msra.mxu0 0.0
        %5065 = vmatprep.subr.mxu0 0.0
        %5066 = vmatpush1.msra.mxu0 0.0
        %5067 = vmatprep.subr.mxu0 0.0
        %5068 = vmatpush1.msra.mxu0 0.0
        %5069 = vmatprep.subr.mxu0 0.0
        %5070 = vmatpush1.msra.mxu0 0.0
        %5071 = vmatprep.subr.mxu0 0.0
        %5072 = vmatpush1.msra.mxu0 0.0
        %5073 = vmatprep.subr.mxu0 0.0
        %5074 = vmatpush1.msra.mxu0 0.0
        %5075 = vmatprep.subr.mxu0 0.0
        %5076 = vmatpush1.msra.mxu0 0.0
        %5077 = vmatprep.subr.mxu0 0.0
        %5078 = vmatpush1.msra.mxu0 0.0
        %5079 = vmatprep.subr.mxu0 0.0
        %5080 = vmatpush1.msra.mxu0 0.0
        %5081 = vmatprep.subr.mxu0 0.0
        %5082 = vmatpush1.msra.mxu0 0.0
        %5083 = vmatprep.subr.mxu0 0.0
        %5084 = vmatpush1.msra.mxu0 0.0
        %5085 = vmatprep.subr.mxu0 0.0
        %5086 = vmatpush1.msra.mxu0 0.0
        %5087 = vmatprep.subr.mxu0 0.0
        %5088 = vmatpush1.msra.mxu0 0.0
        %5089 = vmatprep.subr.mxu0 0.0
        %5090 = vmatpush1.msra.mxu0 0.0
        %5091 = vmatprep.subr.mxu0 0.0
        %5092 = vmatpush1.msra.mxu0 0.0
        %5093 = vmatprep.subr.mxu0 0.0
        %5094 = vmatpush1.msra.mxu0 0.0
        %5095 = vmatprep.subr.mxu0 0.0
        %5096 = vmatpush1.msra.mxu0 0.0
        %5097 = vmatprep.subr.mxu0 0.0
        %5098 = vmatpush1.msra.mxu0 0.0
        %5099 = vmatprep.subr.mxu0 0.0
        %5100 = vmatpush1.msra.mxu0 0.0
        %5101 = vmatprep.subr.mxu0 0.0
        %5102 = vmatpush1.msra.mxu0 0.0
        %5103 = vmatprep.subr.mxu0 0.0
        %5104 = vmatpush1.msra.mxu0 0.0
        %5105 = vmatprep.subr.mxu0 0.0
        %5106 = vmatpush1.msra.mxu0 0.0
        %5107 = vmatprep.mubr.f32.mxu0 0.0
        %5108 = vmatmul.mubr.f32.gmra.mrb[0].mxu0 %v5041
        %v5109 = vpop.f32.mrb[0].mxu0
        %v5110 = vadd.f32 0.0, %v5109
        %v5111 = vpop.f32.mrb[0].mxu0
        %5112 = vdwg.mxu0
        %v5114 = vsel %vm2810, %v4813, 0
        %5116 = vmatprep.subr.mxu0 0.0
        %5117 = vmatpush1.msra.mxu0 %v1773
        %5118 = vmatprep.subr.mxu0 0.0
        %5119 = vmatpush1.msra.mxu0 0.0
        %5120 = vmatprep.subr.mxu0 0.0
        %5121 = vmatpush1.msra.mxu0 0.0
        %5122 = vmatprep.subr.mxu0 0.0
        %5123 = vmatpush1.msra.mxu0 0.0
        %5124 = vmatprep.subr.mxu0 0.0
        %5125 = vmatpush1.msra.mxu0 0.0
        %5126 = vmatprep.subr.mxu0 0.0
        %5127 = vmatpush1.msra.mxu0 0.0
        %5128 = vmatprep.subr.mxu0 0.0
        %5129 = vmatpush1.msra.mxu0 0.0
        %5130 = vmatprep.subr.mxu0 0.0
        %5131 = vmatpush1.msra.mxu0 0.0
        %5132 = vmatprep.subr.mxu0 0.0
        %5133 = vmatpush1.msra.mxu0 0.0
        %5134 = vmatprep.subr.mxu0 0.0
        %5135 = vmatpush1.msra.mxu0 0.0
        %5136 = vmatprep.subr.mxu0 0.0
        %5137 = vmatpush1.msra.mxu0 0.0
        %5138 = vmatprep.subr.mxu0 0.0
        %5139 = vmatpush1.msra.mxu0 0.0
        %5140 = vmatprep.subr.mxu0 0.0
        %5141 = vmatpush1.msra.mxu0 0.0
        %5142 = vmatprep.subr.mxu0 0.0
        %5143 = vmatpush1.msra.mxu0 0.0
        %5144 = vmatprep.subr.mxu0 0.0
        %5145 = vmatpush1.msra.mxu0 0.0
        %5146 = vmatprep.subr.mxu0 0.0
        %5147 = vmatpush1.msra.mxu0 0.0
        %5148 = vmatprep.subr.mxu0 0.0
        %5149 = vmatpush1.msra.mxu0 0.0
        %5150 = vmatprep.subr.mxu0 0.0
        %5151 = vmatpush1.msra.mxu0 0.0
        %5152 = vmatprep.subr.mxu0 0.0
        %5153 = vmatpush1.msra.mxu0 0.0
        %5154 = vmatprep.subr.mxu0 0.0
        %5155 = vmatpush1.msra.mxu0 0.0
        %5156 = vmatprep.subr.mxu0 0.0
        %5157 = vmatpush1.msra.mxu0 0.0
        %5158 = vmatprep.subr.mxu0 0.0
        %5159 = vmatpush1.msra.mxu0 0.0
        %5160 = vmatprep.subr.mxu0 0.0
        %5161 = vmatpush1.msra.mxu0 0.0
        %5162 = vmatprep.subr.mxu0 0.0
        %5163 = vmatpush1.msra.mxu0 0.0
        %5164 = vmatprep.subr.mxu0 0.0
        %5165 = vmatpush1.msra.mxu0 0.0
        %5166 = vmatprep.subr.mxu0 0.0
        %5167 = vmatpush1.msra.mxu0 0.0
        %5168 = vmatprep.subr.mxu0 0.0
        %5169 = vmatpush1.msra.mxu0 0.0
        %5170 = vmatprep.subr.mxu0 0.0
        %5171 = vmatpush1.msra.mxu0 0.0
        %5172 = vmatprep.subr.mxu0 0.0
        %5173 = vmatpush1.msra.mxu0 0.0
        %5174 = vmatprep.subr.mxu0 0.0
        %5175 = vmatpush1.msra.mxu0 0.0
        %5176 = vmatprep.subr.mxu0 0.0
        %5177 = vmatpush1.msra.mxu0 0.0
        %5178 = vmatprep.subr.mxu0 0.0
        %5179 = vmatpush1.msra.mxu0 0.0
        %5180 = vmatprep.mubr.f32.mxu0 0.0
        %5181 = vmatmul.mubr.f32.gmra.mrb[0].mxu0 %v5114
        %v5182 = vpop.f32.mrb[0].mxu0
        %v5183 = vadd.f32 0.0, %v5182
        %v5184 = vpop.f32.mrb[0].mxu0
        %5185 = vdwg.mxu0
        %v5187 = vsel %vm2810, %v4814, 0
        %5189 = vmatprep.subr.mxu0 0.0
        %5190 = vmatpush1.msra.mxu0 %v1777
        %5191 = vmatprep.subr.mxu0 0.0
        %5192 = vmatpush1.msra.mxu0 0.0
        %5193 = vmatprep.subr.mxu0 0.0
        %5194 = vmatpush1.msra.mxu0 0.0
        %5195 = vmatprep.subr.mxu0 0.0
        %5196 = vmatpush1.msra.mxu0 0.0
        %5197 = vmatprep.subr.mxu0 0.0
        %5198 = vmatpush1.msra.mxu0 0.0
        %5199 = vmatprep.subr.mxu0 0.0
        %5200 = vmatpush1.msra.mxu0 0.0
        %5201 = vmatprep.subr.mxu0 0.0
        %5202 = vmatpush1.msra.mxu0 0.0
        %5203 = vmatprep.subr.mxu0 0.0
        %5204 = vmatpush1.msra.mxu0 0.0
        %5205 = vmatprep.subr.mxu0 0.0
        %5206 = vmatpush1.msra.mxu0 0.0
        %5207 = vmatprep.subr.mxu0 0.0
        %5208 = vmatpush1.msra.mxu0 0.0
        %5209 = vmatprep.subr.mxu0 0.0
        %5210 = vmatpush1.msra.mxu0 0.0
        %5211 = vmatprep.subr.mxu0 0.0
        %5212 = vmatpush1.msra.mxu0 0.0
        %5213 = vmatprep.subr.mxu0 0.0
        %5214 = vmatpush1.msra.mxu0 0.0
        %5215 = vmatprep.subr.mxu0 0.0
        %5216 = vmatpush1.msra.mxu0 0.0
        %5217 = vmatprep.subr.mxu0 0.0
        %5218 = vmatpush1.msra.mxu0 0.0
        %5219 = vmatprep.subr.mxu0 0.0
        %5220 = vmatpush1.msra.mxu0 0.0
        %5221 = vmatprep.subr.mxu0 0.0
        %5222 = vmatpush1.msra.mxu0 0.0
        %5223 = vmatprep.subr.mxu0 0.0
        %5224 = vmatpush1.msra.mxu0 0.0
        %5225 = vmatprep.subr.mxu0 0.0
        %5226 = vmatpush1.msra.mxu0 0.0
        %5227 = vmatprep.subr.mxu0 0.0
        %5228 = vmatpush1.msra.mxu0 0.0
        %5229 = vmatprep.subr.mxu0 0.0
        %5230 = vmatpush1.msra.mxu0 0.0
        %5231 = vmatprep.subr.mxu0 0.0
        %5232 = vmatpush1.msra.mxu0 0.0
        %5233 = vmatprep.subr.mxu0 0.0
        %5234 = vmatpush1.msra.mxu0 0.0
        %5235 = vmatprep.subr.mxu0 0.0
        %5236 = vmatpush1.msra.mxu0 0.0
        %5237 = vmatprep.subr.mxu0 0.0
        %5238 = vmatpush1.msra.mxu0 0.0
        %5239 = vmatprep.subr.mxu0 0.0
        %5240 = vmatpush1.msra.mxu0 0.0
        %5241 = vmatprep.subr.mxu0 0.0
        %5242 = vmatpush1.msra.mxu0 0.0
        %5243 = vmatprep.subr.mxu0 0.0
        %5244 = vmatpush1.msra.mxu0 0.0
        %5245 = vmatprep.subr.mxu0 0.0
        %5246 = vmatpush1.msra.mxu0 0.0
        %5247 = vmatprep.subr.mxu0 0.0
        %5248 = vmatpush1.msra.mxu0 0.0
        %5249 = vmatprep.subr.mxu0 0.0
        %5250 = vmatpush1.msra.mxu0 0.0
        %5251 = vmatprep.subr.mxu0 0.0
        %5252 = vmatpush1.msra.mxu0 0.0
        %5253 = vmatprep.mubr.f32.mxu0 0.0
        %5254 = vmatmul.mubr.f32.gmra.mrb[0].mxu0 %v5187
        %v5255 = vpop.f32.mrb[0].mxu0
        %v5256 = vadd.f32 0.0, %v5255
        %v5257 = vpop.f32.mrb[0].mxu0
        %5258 = vdwg.mxu0
        %v5260 = vsel %vm2810, %v4815, 0
        %5262 = vmatprep.subr.mxu0 0.0
        %5263 = vmatpush1.msra.mxu0 %v1783
        %5264 = vmatprep.subr.mxu0 0.0
        %5265 = vmatpush1.msra.mxu0 0.0
        %5266 = vmatprep.subr.mxu0 0.0
        %5267 = vmatpush1.msra.mxu0 0.0
        %5268 = vmatprep.subr.mxu0 0.0
        %5269 = vmatpush1.msra.mxu0 0.0
        %5270 = vmatprep.subr.mxu0 0.0
        %5271 = vmatpush1.msra.mxu0 0.0
        %5272 = vmatprep.subr.mxu0 0.0
        %5273 = vmatpush1.msra.mxu0 0.0
        %5274 = vmatprep.subr.mxu0 0.0
        %5275 = vmatpush1.msra.mxu0 0.0
        %5276 = vmatprep.subr.mxu0 0.0
        %5277 = vmatpush1.msra.mxu0 0.0
        %5278 = vmatprep.subr.mxu0 0.0
        %5279 = vmatpush1.msra.mxu0 0.0
        %5280 = vmatprep.subr.mxu0 0.0
        %5281 = vmatpush1.msra.mxu0 0.0
        %5282 = vmatprep.subr.mxu0 0.0
        %5283 = vmatpush1.msra.mxu0 0.0
        %5284 = vmatprep.subr.mxu0 0.0
        %5285 = vmatpush1.msra.mxu0 0.0
        %5286 = vmatprep.subr.mxu0 0.0
        %5287 = vmatpush1.msra.mxu0 0.0
        %5288 = vmatprep.subr.mxu0 0.0
        %5289 = vmatpush1.msra.mxu0 0.0
        %5290 = vmatprep.subr.mxu0 0.0
        %5291 = vmatpush1.msra.mxu0 0.0
        %5292 = vmatprep.subr.mxu0 0.0
        %5293 = vmatpush1.msra.mxu0 0.0
        %5294 = vmatprep.subr.mxu0 0.0
        %5295 = vmatpush1.msra.mxu0 0.0
        %5296 = vmatprep.subr.mxu0 0.0
        %5297 = vmatpush1.msra.mxu0 0.0
        %5298 = vmatprep.subr.mxu0 0.0
        %5299 = vmatpush1.msra.mxu0 0.0
        %5300 = vmatprep.subr.mxu0 0.0
        %5301 = vmatpush1.msra.mxu0 0.0
        %5302 = vmatprep.subr.mxu0 0.0
        %5303 = vmatpush1.msra.mxu0 0.0
        %5304 = vmatprep.subr.mxu0 0.0
        %5305 = vmatpush1.msra.mxu0 0.0
        %5306 = vmatprep.subr.mxu0 0.0
        %5307 = vmatpush1.msra.mxu0 0.0
        %5308 = vmatprep.subr.mxu0 0.0
        %5309 = vmatpush1.msra.mxu0 0.0
        %5310 = vmatprep.subr.mxu0 0.0
        %5311 = vmatpush1.msra.mxu0 0.0
        %5312 = vmatprep.subr.mxu0 0.0
        %5313 = vmatpush1.msra.mxu0 0.0
        %5314 = vmatprep.subr.mxu0 0.0
        %5315 = vmatpush1.msra.mxu0 0.0
        %5316 = vmatprep.subr.mxu0 0.0
        %5317 = vmatpush1.msra.mxu0 0.0
        %5318 = vmatprep.subr.mxu0 0.0
        %5319 = vmatpush1.msra.mxu0 0.0
        %5320 = vmatprep.subr.mxu0 0.0
        %5321 = vmatpush1.msra.mxu0 0.0
        %5322 = vmatprep.subr.mxu0 0.0
        %5323 = vmatpush1.msra.mxu0 0.0
        %5324 = vmatprep.subr.mxu0 0.0
        %5325 = vmatpush1.msra.mxu0 0.0
        %5326 = vmatprep.mubr.f32.mxu0 0.0
        %5327 = vmatmul.mubr.f32.gmra.mrb[0].mxu0 %v5260
        %v5328 = vpop.f32.mrb[0].mxu0
        %v5329 = vadd.f32 0.0, %v5328
        %v5330 = vpop.f32.mrb[0].mxu0
        %5331 = vdwg.mxu0
        %v5333 = vsel %vm2810, %v4816, 0
        %5335 = vmatprep.subr.mxu0 0.0
        %5336 = vmatpush1.msra.mxu0 %v1787
        %5337 = vmatprep.subr.mxu0 0.0
        %5338 = vmatpush1.msra.mxu0 0.0
        %5339 = vmatprep.subr.mxu0 0.0
        %5340 = vmatpush1.msra.mxu0 0.0
        %5341 = vmatprep.subr.mxu0 0.0
        %5342 = vmatpush1.msra.mxu0 0.0
        %5343 = vmatprep.subr.mxu0 0.0
        %5344 = vmatpush1.msra.mxu0 0.0
        %5345 = vmatprep.subr.mxu0 0.0
        %5346 = vmatpush1.msra.mxu0 0.0
        %5347 = vmatprep.subr.mxu0 0.0
        %5348 = vmatpush1.msra.mxu0 0.0
        %5349 = vmatprep.subr.mxu0 0.0
        %5350 = vmatpush1.msra.mxu0 0.0
        %5351 = vmatprep.subr.mxu0 0.0
        %5352 = vmatpush1.msra.mxu0 0.0
        %5353 = vmatprep.subr.mxu0 0.0
        %5354 = vmatpush1.msra.mxu0 0.0
        %5355 = vmatprep.subr.mxu0 0.0
        %5356 = vmatpush1.msra.mxu0 0.0
        %5357 = vmatprep.subr.mxu0 0.0
        %5358 = vmatpush1.msra.mxu0 0.0
        %5359 = vmatprep.subr.mxu0 0.0
        %5360 = vmatpush1.msra.mxu0 0.0
        %5361 = vmatprep.subr.mxu0 0.0
        %5362 = vmatpush1.msra.mxu0 0.0
        %5363 = vmatprep.subr.mxu0 0.0
        %5364 = vmatpush1.msra.mxu0 0.0
        %5365 = vmatprep.subr.mxu0 0.0
        %5366 = vmatpush1.msra.mxu0 0.0
        %5367 = vmatprep.subr.mxu0 0.0
        %5368 = vmatpush1.msra.mxu0 0.0
        %5369 = vmatprep.subr.mxu0 0.0
        %5370 = vmatpush1.msra.mxu0 0.0
        %5371 = vmatprep.subr.mxu0 0.0
        %5372 = vmatpush1.msra.mxu0 0.0
        %5373 = vmatprep.subr.mxu0 0.0
        %5374 = vmatpush1.msra.mxu0 0.0
        %5375 = vmatprep.subr.mxu0 0.0
        %5376 = vmatpush1.msra.mxu0 0.0
        %5377 = vmatprep.subr.mxu0 0.0
        %5378 = vmatpush1.msra.mxu0 0.0
        %5379 = vmatprep.subr.mxu0 0.0
        %5380 = vmatpush1.msra.mxu0 0.0
        %5381 = vmatprep.subr.mxu0 0.0
        %5382 = vmatpush1.msra.mxu0 0.0
        %5383 = vmatprep.subr.mxu0 0.0
        %5384 = vmatpush1.msra.mxu0 0.0
        %5385 = vmatprep.subr.mxu0 0.0
        %5386 = vmatpush1.msra.mxu0 0.0
        %5387 = vmatprep.subr.mxu0 0.0
        %5388 = vmatpush1.msra.mxu0 0.0
        %5389 = vmatprep.subr.mxu0 0.0
        %5390 = vmatpush1.msra.mxu0 0.0
        %5391 = vmatprep.subr.mxu0 0.0
        %5392 = vmatpush1.msra.mxu0 0.0
        %5393 = vmatprep.subr.mxu0 0.0
        %5394 = vmatpush1.msra.mxu0 0.0
        %5395 = vmatprep.subr.mxu0 0.0
        %5396 = vmatpush1.msra.mxu0 0.0
        %5397 = vmatprep.subr.mxu0 0.0
        %5398 = vmatpush1.msra.mxu0 0.0
        %5399 = vmatprep.mubr.f32.mxu0 0.0
        %5400 = vmatmul.mubr.f32.gmra.mrb[0].mxu0 %v5333
        %v5401 = vpop.f32.mrb[0].mxu0
        %v5402 = vadd.f32 0.0, %v5401
        %v5403 = vpop.f32.mrb[0].mxu0
        %5404 = vdwg.mxu0
        %v5406 = vsel %vm2810, %v4817, 0
        %5408 = vmatprep.subr.mxu0 0.0
        %5409 = vmatpush1.msra.mxu0 %v1793
        %5410 = vmatprep.subr.mxu0 0.0
        %5411 = vmatpush1.msra.mxu0 0.0
        %5412 = vmatprep.subr.mxu0 0.0
        %5413 = vmatpush1.msra.mxu0 0.0
        %5414 = vmatprep.subr.mxu0 0.0
        %5415 = vmatpush1.msra.mxu0 0.0
        %5416 = vmatprep.subr.mxu0 0.0
        %5417 = vmatpush1.msra.mxu0 0.0
        %5418 = vmatprep.subr.mxu0 0.0
        %5419 = vmatpush1.msra.mxu0 0.0
        %5420 = vmatprep.subr.mxu0 0.0
        %5421 = vmatpush1.msra.mxu0 0.0
        %5422 = vmatprep.subr.mxu0 0.0
        %5423 = vmatpush1.msra.mxu0 0.0
        %5424 = vmatprep.subr.mxu0 0.0
        %5425 = vmatpush1.msra.mxu0 0.0
        %5426 = vmatprep.subr.mxu0 0.0
        %5427 = vmatpush1.msra.mxu0 0.0
        %5428 = vmatprep.subr.mxu0 0.0
        %5429 = vmatpush1.msra.mxu0 0.0
        %5430 = vmatprep.subr.mxu0 0.0
        %5431 = vmatpush1.msra.mxu0 0.0
        %5432 = vmatprep.subr.mxu0 0.0
        %5433 = vmatpush1.msra.mxu0 0.0
        %5434 = vmatprep.subr.mxu0 0.0
        %5435 = vmatpush1.msra.mxu0 0.0
        %5436 = vmatprep.subr.mxu0 0.0
        %5437 = vmatpush1.msra.mxu0 0.0
        %5438 = vmatprep.subr.mxu0 0.0
        %5439 = vmatpush1.msra.mxu0 0.0
        %5440 = vmatprep.subr.mxu0 0.0
        %5441 = vmatpush1.msra.mxu0 0.0
        %5442 = vmatprep.subr.mxu0 0.0
        %5443 = vmatpush1.msra.mxu0 0.0
        %5444 = vmatprep.subr.mxu0 0.0
        %5445 = vmatpush1.msra.mxu0 0.0
        %5446 = vmatprep.subr.mxu0 0.0
        %5447 = vmatpush1.msra.mxu0 0.0
        %5448 = vmatprep.subr.mxu0 0.0
        %5449 = vmatpush1.msra.mxu0 0.0
        %5450 = vmatprep.subr.mxu0 0.0
        %5451 = vmatpush1.msra.mxu0 0.0
        %5452 = vmatprep.subr.mxu0 0.0
        %5453 = vmatpush1.msra.mxu0 0.0
        %5454 = vmatprep.subr.mxu0 0.0
        %5455 = vmatpush1.msra.mxu0 0.0
        %5456 = vmatprep.subr.mxu0 0.0
        %5457 = vmatpush1.msra.mxu0 0.0
        %5458 = vmatprep.subr.mxu0 0.0
        %5459 = vmatpush1.msra.mxu0 0.0
        %5460 = vmatprep.subr.mxu0 0.0
        %5461 = vmatpush1.msra.mxu0 0.0
        %5462 = vmatprep.subr.mxu0 0.0
        %5463 = vmatpush1.msra.mxu0 0.0
        %5464 = vmatprep.subr.mxu0 0.0
        %5465 = vmatpush1.msra.mxu0 0.0
        %5466 = vmatprep.subr.mxu0 0.0
        %5467 = vmatpush1.msra.mxu0 0.0
        %5468 = vmatprep.subr.mxu0 0.0
        %5469 = vmatpush1.msra.mxu0 0.0
        %5470 = vmatprep.subr.mxu0 0.0
        %5471 = vmatpush1.msra.mxu0 0.0
        %5472 = vmatprep.mubr.f32.mxu0 0.0
        %5473 = vmatmul.mubr.f32.gmra.mrb[0].mxu0 %v5406
        %v5474 = vpop.f32.mrb[0].mxu0
        %v5475 = vadd.f32 0.0, %v5474
        %v5476 = vpop.f32.mrb[0].mxu0
        %5477 = vdwg.mxu0
        %v5479 = vsel %vm2810, %v4818, 0
        %5481 = vmatprep.subr.mxu0 0.0
        %5482 = vmatpush1.msra.mxu0 %v1797
        %5483 = vmatprep.subr.mxu0 0.0
        %5484 = vmatpush1.msra.mxu0 0.0
        %5485 = vmatprep.subr.mxu0 0.0
        %5486 = vmatpush1.msra.mxu0 0.0
        %5487 = vmatprep.subr.mxu0 0.0
        %5488 = vmatpush1.msra.mxu0 0.0
        %5489 = vmatprep.subr.mxu0 0.0
        %5490 = vmatpush1.msra.mxu0 0.0
        %5491 = vmatprep.subr.mxu0 0.0
        %5492 = vmatpush1.msra.mxu0 0.0
        %5493 = vmatprep.subr.mxu0 0.0
        %5494 = vmatpush1.msra.mxu0 0.0
        %5495 = vmatprep.subr.mxu0 0.0
        %5496 = vmatpush1.msra.mxu0 0.0
        %5497 = vmatprep.subr.mxu0 0.0
        %5498 = vmatpush1.msra.mxu0 0.0
        %5499 = vmatprep.subr.mxu0 0.0
        %5500 = vmatpush1.msra.mxu0 0.0
        %5501 = vmatprep.subr.mxu0 0.0
        %5502 = vmatpush1.msra.mxu0 0.0
        %5503 = vmatprep.subr.mxu0 0.0
        %5504 = vmatpush1.msra.mxu0 0.0
        %5505 = vmatprep.subr.mxu0 0.0
        %5506 = vmatpush1.msra.mxu0 0.0
        %5507 = vmatprep.subr.mxu0 0.0
        %5508 = vmatpush1.msra.mxu0 0.0
        %5509 = vmatprep.subr.mxu0 0.0
        %5510 = vmatpush1.msra.mxu0 0.0
        %5511 = vmatprep.subr.mxu0 0.0
        %5512 = vmatpush1.msra.mxu0 0.0
        %5513 = vmatprep.subr.mxu0 0.0
        %5514 = vmatpush1.msra.mxu0 0.0
        %5515 = vmatprep.subr.mxu0 0.0
        %5516 = vmatpush1.msra.mxu0 0.0
        %5517 = vmatprep.subr.mxu0 0.0
        %5518 = vmatpush1.msra.mxu0 0.0
        %5519 = vmatprep.subr.mxu0 0.0
        %5520 = vmatpush1.msra.mxu0 0.0
        %5521 = vmatprep.subr.mxu0 0.0
        %5522 = vmatpush1.msra.mxu0 0.0
        %5523 = vmatprep.subr.mxu0 0.0
        %5524 = vmatpush1.msra.mxu0 0.0
        %5525 = vmatprep.subr.mxu0 0.0
        %5526 = vmatpush1.msra.mxu0 0.0
        %5527 = vmatprep.subr.mxu0 0.0
        %5528 = vmatpush1.msra.mxu0 0.0
        %5529 = vmatprep.subr.mxu0 0.0
        %5530 = vmatpush1.msra.mxu0 0.0
        %5531 = vmatprep.subr.mxu0 0.0
        %5532 = vmatpush1.msra.mxu0 0.0
        %5533 = vmatprep.subr.mxu0 0.0
        %5534 = vmatpush1.msra.mxu0 0.0
        %5535 = vmatprep.subr.mxu0 0.0
        %5536 = vmatpush1.msra.mxu0 0.0
        %5537 = vmatprep.subr.mxu0 0.0
        %5538 = vmatpush1.msra.mxu0 0.0
        %5539 = vmatprep.subr.mxu0 0.0
        %5540 = vmatpush1.msra.mxu0 0.0
        %5541 = vmatprep.subr.mxu0 0.0
        %5542 = vmatpush1.msra.mxu0 0.0
        %5543 = vmatprep.subr.mxu0 0.0
        %5544 = vmatpush1.msra.mxu0 0.0
        %5545 = vmatprep.mubr.f32.mxu0 0.0
        %5546 = vmatmul.mubr.f32.gmra.mrb[0].mxu0 %v5479
        %v5547 = vpop.f32.mrb[0].mxu0
        %v5548 = vadd.f32 0.0, %v5547
        %v5549 = vpop.f32.mrb[0].mxu0
        %5550 = vdwg.mxu0
        %v5552 = vsel %vm2810, %v4819, 0
        %5554 = vmatprep.subr.mxu0 0.0
        %5555 = vmatpush1.msra.mxu0 %v1803
        %5556 = vmatprep.subr.mxu0 0.0
        %5557 = vmatpush1.msra.mxu0 0.0
        %5558 = vmatprep.subr.mxu0 0.0
        %5559 = vmatpush1.msra.mxu0 0.0
        %5560 = vmatprep.subr.mxu0 0.0
        %5561 = vmatpush1.msra.mxu0 0.0
        %5562 = vmatprep.subr.mxu0 0.0
        %5563 = vmatpush1.msra.mxu0 0.0
        %5564 = vmatprep.subr.mxu0 0.0
        %5565 = vmatpush1.msra.mxu0 0.0
        %5566 = vmatprep.subr.mxu0 0.0
        %5567 = vmatpush1.msra.mxu0 0.0
        %5568 = vmatprep.subr.mxu0 0.0
        %5569 = vmatpush1.msra.mxu0 0.0
        %5570 = vmatprep.subr.mxu0 0.0
        %5571 = vmatpush1.msra.mxu0 0.0
        %5572 = vmatprep.subr.mxu0 0.0
        %5573 = vmatpush1.msra.mxu0 0.0
        %5574 = vmatprep.subr.mxu0 0.0
        %5575 = vmatpush1.msra.mxu0 0.0
        %5576 = vmatprep.subr.mxu0 0.0
        %5577 = vmatpush1.msra.mxu0 0.0
        %5578 = vmatprep.subr.mxu0 0.0
        %5579 = vmatpush1.msra.mxu0 0.0
        %5580 = vmatprep.subr.mxu0 0.0
        %5581 = vmatpush1.msra.mxu0 0.0
        %5582 = vmatprep.subr.mxu0 0.0
        %5583 = vmatpush1.msra.mxu0 0.0
        %5584 = vmatprep.subr.mxu0 0.0
        %5585 = vmatpush1.msra.mxu0 0.0
        %5586 = vmatprep.subr.mxu0 0.0
        %5587 = vmatpush1.msra.mxu0 0.0
        %5588 = vmatprep.subr.mxu0 0.0
        %5589 = vmatpush1.msra.mxu0 0.0
        %5590 = vmatprep.subr.mxu0 0.0
        %5591 = vmatpush1.msra.mxu0 0.0
        %5592 = vmatprep.subr.mxu0 0.0
        %5593 = vmatpush1.msra.mxu0 0.0
        %5594 = vmatprep.subr.mxu0 0.0
        %5595 = vmatpush1.msra.mxu0 0.0
        %5596 = vmatprep.subr.mxu0 0.0
        %5597 = vmatpush1.msra.mxu0 0.0
        %5598 = vmatprep.subr.mxu0 0.0
        %5599 = vmatpush1.msra.mxu0 0.0
        %5600 = vmatprep.subr.mxu0 0.0
        %5601 = vmatpush1.msra.mxu0 0.0
        %5602 = vmatprep.subr.mxu0 0.0
        %5603 = vmatpush1.msra.mxu0 0.0
        %5604 = vmatprep.subr.mxu0 0.0
        %5605 = vmatpush1.msra.mxu0 0.0
        %5606 = vmatprep.subr.mxu0 0.0
        %5607 = vmatpush1.msra.mxu0 0.0
        %5608 = vmatprep.subr.mxu0 0.0
        %5609 = vmatpush1.msra.mxu0 0.0
        %5610 = vmatprep.subr.mxu0 0.0
        %5611 = vmatpush1.msra.mxu0 0.0
        %5612 = vmatprep.subr.mxu0 0.0
        %5613 = vmatpush1.msra.mxu0 0.0
        %5614 = vmatprep.subr.mxu0 0.0
        %5615 = vmatpush1.msra.mxu0 0.0
        %5616 = vmatprep.subr.mxu0 0.0
        %5617 = vmatpush1.msra.mxu0 0.0
        %5618 = vmatprep.mubr.f32.mxu0 0.0
        %5619 = vmatmul.mubr.f32.gmra.mrb[0].mxu0 %v5552
        %v5620 = vpop.f32.mrb[0].mxu0
        %v5621 = vadd.f32 0.0, %v5620
        %v5622 = vpop.f32.mrb[0].mxu0
        %5623 = vdwg.mxu0
        %v5625 = vsel %vm2810, %v4820, 0
        %5627 = vmatprep.subr.mxu0 0.0
        %5628 = vmatpush1.msra.mxu0 %v1807
        %5629 = vmatprep.subr.mxu0 0.0
        %5630 = vmatpush1.msra.mxu0 0.0
        %5631 = vmatprep.subr.mxu0 0.0
        %5632 = vmatpush1.msra.mxu0 0.0
        %5633 = vmatprep.subr.mxu0 0.0
        %5634 = vmatpush1.msra.mxu0 0.0
        %5635 = vmatprep.subr.mxu0 0.0
        %5636 = vmatpush1.msra.mxu0 0.0
        %5637 = vmatprep.subr.mxu0 0.0
        %5638 = vmatpush1.msra.mxu0 0.0
        %5639 = vmatprep.subr.mxu0 0.0
        %5640 = vmatpush1.msra.mxu0 0.0
        %5641 = vmatprep.subr.mxu0 0.0
        %5642 = vmatpush1.msra.mxu0 0.0
        %5643 = vmatprep.subr.mxu0 0.0
        %5644 = vmatpush1.msra.mxu0 0.0
        %5645 = vmatprep.subr.mxu0 0.0
        %5646 = vmatpush1.msra.mxu0 0.0
        %5647 = vmatprep.subr.mxu0 0.0
        %5648 = vmatpush1.msra.mxu0 0.0
        %5649 = vmatprep.subr.mxu0 0.0
        %5650 = vmatpush1.msra.mxu0 0.0
        %5651 = vmatprep.subr.mxu0 0.0
        %5652 = vmatpush1.msra.mxu0 0.0
        %5653 = vmatprep.subr.mxu0 0.0
        %5654 = vmatpush1.msra.mxu0 0.0
        %5655 = vmatprep.subr.mxu0 0.0
        %5656 = vmatpush1.msra.mxu0 0.0
        %5657 = vmatprep.subr.mxu0 0.0
        %5658 = vmatpush1.msra.mxu0 0.0
        %5659 = vmatprep.subr.mxu0 0.0
        %5660 = vmatpush1.msra.mxu0 0.0
        %5661 = vmatprep.subr.mxu0 0.0
        %5662 = vmatpush1.msra.mxu0 0.0
        %5663 = vmatprep.subr.mxu0 0.0
        %5664 = vmatpush1.msra.mxu0 0.0
        %5665 = vmatprep.subr.mxu0 0.0
        %5666 = vmatpush1.msra.mxu0 0.0
        %5667 = vmatprep.subr.mxu0 0.0
        %5668 = vmatpush1.msra.mxu0 0.0
        %5669 = vmatprep.subr.mxu0 0.0
        %5670 = vmatpush1.msra.mxu0 0.0
        %5671 = vmatprep.subr.mxu0 0.0
        %5672 = vmatpush1.msra.mxu0 0.0
        %5673 = vmatprep.subr.mxu0 0.0
        %5674 = vmatpush1.msra.mxu0 0.0
        %5675 = vmatprep.subr.mxu0 0.0
        %5676 = vmatpush1.msra.mxu0 0.0
        %5677 = vmatprep.subr.mxu0 0.0
        %5678 = vmatpush1.msra.mxu0 0.0
        %5679 = vmatprep.subr.mxu0 0.0
        %5680 = vmatpush1.msra.mxu0 0.0
        %5681 = vmatprep.subr.mxu0 0.0
        %5682 = vmatpush1.msra.mxu0 0.0
        %5683 = vmatprep.subr.mxu0 0.0
        %5684 = vmatpush1.msra.mxu0 0.0
        %5685 = vmatprep.subr.mxu0 0.0
        %5686 = vmatpush1.msra.mxu0 0.0
        %5687 = vmatprep.subr.mxu0 0.0
        %5688 = vmatpush1.msra.mxu0 0.0
        %5689 = vmatprep.subr.mxu0 0.0
        %5690 = vmatpush1.msra.mxu0 0.0
        %5691 = vmatprep.mubr.f32.mxu0 0.0
        %5692 = vmatmul.mubr.f32.gmra.mrb[0].mxu0 %v5625
        %v5693 = vpop.f32.mrb[0].mxu0
        %v5694 = vadd.f32 0.0, %v5693
        %v5695 = vpop.f32.mrb[0].mxu0
        %5696 = vdwg.mxu0
        %v5697 = vpack.c.bf16 %v4964, %v4891
        %v5698 = vpack.c.bf16 %v5110, %v5037
        %v5699 = vpack.c.bf16 %v5256, %v5183
        %v5700 = vpack.c.bf16 %v5402, %v5329
        %v5701 = vpack.c.bf16 %v5548, %v5475
        %v5702 = vpack.c.bf16 %v5694, %v5621
        %v5719 = vunpack.c.l.b16 %v743
        %v5720 = vunpack.c.h.b16 %v743
        %v5721 = vunpack.c.l.b16 %v744
        %v5722 = vunpack.c.h.b16 %v744
        %v5723 = vunpack.c.l.b16 %v745
        %v5724 = vunpack.c.h.b16 %v745
        %v5725 = vunpack.c.l.b16 %v746
        %v5726 = vunpack.c.h.b16 %v746
        %v5727 = vunpack.c.l.b16 %v747
        %v5728 = vunpack.c.h.b16 %v747
        %v5729 = vunpack.c.l.b16 %v748
        %v5730 = vunpack.c.h.b16 %v748
        %v5731 = vunpack.c.l.b16 %v749
        %v5732 = vunpack.c.h.b16 %v749
        %v5733 = vunpack.c.l.b16 %v750
        %v5734 = vunpack.c.h.b16 %v750
        %v5735 = vunpack.c.l.b16 %v751
        %v5736 = vunpack.c.h.b16 %v751
        %v5737 = vunpack.c.l.b16 %v752
        %v5738 = vunpack.c.h.b16 %v752
        %v5739 = vunpack.c.l.b16 %v753
        %v5740 = vunpack.c.h.b16 %v753
        %v5741 = vunpack.c.l.b16 %v754
        %v5742 = vunpack.c.h.b16 %v754
        %v5743 = vunpack.c.l.b16 %v755
        %v5744 = vunpack.c.h.b16 %v755
        %v5745 = vunpack.c.l.b16 %v756
        %v5746 = vunpack.c.h.b16 %v756
        %v5747 = vunpack.c.l.b16 %v757
        %v5748 = vunpack.c.h.b16 %v757
        %v5749 = vunpack.c.l.b16 %v758
        %v5750 = vunpack.c.h.b16 %v758
        %v5751 = vpack.c.b16 %v5721, %v5719
        %v5752 = vpack.c.b16 %v5722, %v5720
        %v5753 = vpack.c.b16 %v5725, %v5723
        %v5754 = vpack.c.b16 %v5726, %v5724
        %v5755 = vpack.c.b16 %v5729, %v5727
        %v5756 = vpack.c.b16 %v5730, %v5728
        %v5757 = vpack.c.b16 %v5733, %v5731
        %v5758 = vpack.c.b16 %v5734, %v5732
        %v5759 = vpack.c.b16 %v5737, %v5735
        %v5760 = vpack.c.b16 %v5738, %v5736
        %v5761 = vpack.c.b16 %v5741, %v5739
        %v5762 = vpack.c.b16 %v5742, %v5740
        %v5763 = vpack.c.b16 %v5745, %v5743
        %v5764 = vpack.c.b16 %v5746, %v5744
        %v5765 = vpack.c.b16 %v5749, %v5747
        %v5766 = vpack.c.b16 %v5750, %v5748
        %5783 = vmatprep.subr.bf16.mxu0 %v5752
        %5784 = vmatpush1.bf16.msra.mxu0 %v5751
        %5785 = vmatprep.subr.bf16.mxu0 %v5754
        %5786 = vmatpush1.bf16.msra.mxu0 %v5753
        %5787 = vmatprep.subr.bf16.mxu0 %v5756
        %5788 = vmatpush1.bf16.msra.mxu0 %v5755
        %5789 = vmatprep.subr.bf16.mxu0 %v5758
        %5790 = vmatpush1.bf16.msra.mxu0 %v5757
        %5791 = vmatprep.subr.bf16.mxu0 %v5760
        %5792 = vmatpush1.bf16.msra.mxu0 %v5759
        %5793 = vmatprep.subr.bf16.mxu0 %v5762
        %5794 = vmatpush1.bf16.msra.mxu0 %v5761
        %5795 = vmatprep.subr.bf16.mxu0 %v5764
        %5796 = vmatpush1.bf16.msra.mxu0 %v5763
        %5797 = vmatprep.subr.bf16.mxu0 %v5766
        %5798 = vmatpush1.bf16.msra.mxu0 %v5765
        %5799 = vmatprep.subr.bf16.mxu0 0
        %5800 = vmatpush1.bf16.msra.mxu0 0
        %5801 = vmatprep.subr.bf16.mxu0 0
        %5802 = vmatpush1.bf16.msra.mxu0 0
        %5803 = vmatprep.subr.bf16.mxu0 0
        %5804 = vmatpush1.bf16.msra.mxu0 0
        %5805 = vmatprep.subr.bf16.mxu0 0
        %5806 = vmatpush1.bf16.msra.mxu0 0
        %5807 = vmatprep.subr.bf16.mxu0 0
        %5808 = vmatpush1.bf16.msra.mxu0 0
        %5809 = vmatprep.subr.bf16.mxu0 0
        %5810 = vmatpush1.bf16.msra.mxu0 0
        %5811 = vmatprep.subr.bf16.mxu0 0
        %5812 = vmatpush1.bf16.msra.mxu0 0
        %5813 = vmatprep.subr.bf16.mxu0 0
        %5814 = vmatpush1.bf16.msra.mxu0 0
        %5815 = vmatprep.mubr.bf16.mxu0 0
        %5816 = vmatmul.mubr.bf16.gmra.mrb[0].mxu0 %v5697
        %v5817 = vpop.f32.mrb[0].mxu0
        %v5818 = vadd.f32 0.0, %v5817
        %v5819 = vpop.f32.mrb[0].mxu0
        %v5820 = vadd.f32 0.0, %v5819
        %v5821 = vpop.f32.mrb[0].mxu0
        %v5822 = vadd.f32 0.0, %v5821
        %v5823 = vpop.f32.mrb[0].mxu0
        %v5824 = vadd.f32 0.0, %v5823
        %5825 = vmatprep.mubr.bf16.mxu0 0
        %5826 = vmatmul.mubr.bf16.gmra.mrb[0].mxu0 %v5698
        %v5827 = vpop.f32.mrb[0].mxu0
        %v5828 = vadd.f32 0.0, %v5827
        %v5829 = vpop.f32.mrb[0].mxu0
        %v5830 = vadd.f32 0.0, %v5829
        %v5831 = vpop.f32.mrb[0].mxu0
        %v5832 = vadd.f32 0.0, %v5831
        %v5833 = vpop.f32.mrb[0].mxu0
        %v5834 = vadd.f32 0.0, %v5833
        %5835 = vmatprep.mubr.bf16.mxu0 0
        %5836 = vmatmul.mubr.bf16.gmra.mrb[0].mxu0 %v5699
        %v5837 = vpop.f32.mrb[0].mxu0
        %v5838 = vadd.f32 0.0, %v5837
        %v5839 = vpop.f32.mrb[0].mxu0
        %v5840 = vadd.f32 0.0, %v5839
        %v5841 = vpop.f32.mrb[0].mxu0
        %v5842 = vadd.f32 0.0, %v5841
        %v5843 = vpop.f32.mrb[0].mxu0
        %v5844 = vadd.f32 0.0, %v5843
        %5845 = vmatprep.mubr.bf16.mxu0 0
        %5846 = vmatmul.mubr.bf16.gmra.mrb[0].mxu0 %v5700
        %v5847 = vpop.f32.mrb[0].mxu0
        %v5848 = vadd.f32 0.0, %v5847
        %v5849 = vpop.f32.mrb[0].mxu0
        %v5850 = vadd.f32 0.0, %v5849
        %v5851 = vpop.f32.mrb[0].mxu0
        %v5852 = vadd.f32 0.0, %v5851
        %v5853 = vpop.f32.mrb[0].mxu0
        %v5854 = vadd.f32 0.0, %v5853
        %5855 = vmatprep.mubr.bf16.mxu0 0
        %5856 = vmatmul.mubr.bf16.gmra.mrb[0].mxu0 %v5701
        %v5857 = vpop.f32.mrb[0].mxu0
        %v5858 = vadd.f32 0.0, %v5857
        %v5859 = vpop.f32.mrb[0].mxu0
        %v5860 = vadd.f32 0.0, %v5859
        %v5861 = vpop.f32.mrb[0].mxu0
        %v5862 = vadd.f32 0.0, %v5861
        %v5863 = vpop.f32.mrb[0].mxu0
        %v5864 = vadd.f32 0.0, %v5863
        %5865 = vmatprep.mubr.bf16.mxu0 0
        %5866 = vmatmul.mubr.bf16.gmra.mrb[0].mxu0 %v5702
        %v5867 = vpop.f32.mrb[0].mxu0
        %v5868 = vadd.f32 0.0, %v5867
        %v5869 = vpop.f32.mrb[0].mxu0
        %v5870 = vadd.f32 0.0, %v5869
        %v5871 = vpop.f32.mrb[0].mxu0
        %v5872 = vadd.f32 0.0, %v5871
        %v5873 = vpop.f32.mrb[0].mxu0
        %v5874 = vadd.f32 0.0, %v5873
        %5875 = vdwg.mxu0
        %v5892 = vunpack.c.l.b16 %v727
        %v5893 = vunpack.c.h.b16 %v727
        %v5894 = vunpack.c.l.b16 %v728
        %v5895 = vunpack.c.h.b16 %v728
        %v5896 = vunpack.c.l.b16 %v729
        %v5897 = vunpack.c.h.b16 %v729
        %v5898 = vunpack.c.l.b16 %v730
        %v5899 = vunpack.c.h.b16 %v730
        %v5900 = vunpack.c.l.b16 %v731
        %v5901 = vunpack.c.h.b16 %v731
        %v5902 = vunpack.c.l.b16 %v732
        %v5903 = vunpack.c.h.b16 %v732
        %v5904 = vunpack.c.l.b16 %v733
        %v5905 = vunpack.c.h.b16 %v733
        %v5906 = vunpack.c.l.b16 %v734
        %v5907 = vunpack.c.h.b16 %v734
        %v5908 = vunpack.c.l.b16 %v735
        %v5909 = vunpack.c.h.b16 %v735
        %v5910 = vunpack.c.l.b16 %v736
        %v5911 = vunpack.c.h.b16 %v736
        %v5912 = vunpack.c.l.b16 %v737
        %v5913 = vunpack.c.h.b16 %v737
        %v5914 = vunpack.c.l.b16 %v738
        %v5915 = vunpack.c.h.b16 %v738
        %v5916 = vunpack.c.l.b16 %v739
        %v5917 = vunpack.c.h.b16 %v739
        %v5918 = vunpack.c.l.b16 %v740
        %v5919 = vunpack.c.h.b16 %v740
        %v5920 = vunpack.c.l.b16 %v741
        %v5921 = vunpack.c.h.b16 %v741
        %v5922 = vunpack.c.l.b16 %v742
        %v5923 = vunpack.c.h.b16 %v742
        %v5924 = vpack.c.b16 %v5894, %v5892
        %v5925 = vpack.c.b16 %v5895, %v5893
        %v5926 = vpack.c.b16 %v5898, %v5896
        %v5927 = vpack.c.b16 %v5899, %v5897
        %v5928 = vpack.c.b16 %v5902, %v5900
        %v5929 = vpack.c.b16 %v5903, %v5901
        %v5930 = vpack.c.b16 %v5906, %v5904
        %v5931 = vpack.c.b16 %v5907, %v5905
        %v5932 = vpack.c.b16 %v5910, %v5908
        %v5933 = vpack.c.b16 %v5911, %v5909
        %v5934 = vpack.c.b16 %v5914, %v5912
        %v5935 = vpack.c.b16 %v5915, %v5913
        %v5936 = vpack.c.b16 %v5918, %v5916
        %v5937 = vpack.c.b16 %v5919, %v5917
        %v5938 = vpack.c.b16 %v5922, %v5920
        %v5939 = vpack.c.b16 %v5923, %v5921
        %5956 = vmatprep.subr.bf16.mxu0 %v5925
        %5957 = vmatpush1.bf16.msra.mxu0 %v5924
        %5958 = vmatprep.subr.bf16.mxu0 %v5927
        %5959 = vmatpush1.bf16.msra.mxu0 %v5926
        %5960 = vmatprep.subr.bf16.mxu0 %v5929
        %5961 = vmatpush1.bf16.msra.mxu0 %v5928
        %5962 = vmatprep.subr.bf16.mxu0 %v5931
        %5963 = vmatpush1.bf16.msra.mxu0 %v5930
        %5964 = vmatprep.subr.bf16.mxu0 %v5933
        %5965 = vmatpush1.bf16.msra.mxu0 %v5932
        %5966 = vmatprep.subr.bf16.mxu0 %v5935
        %5967 = vmatpush1.bf16.msra.mxu0 %v5934
        %5968 = vmatprep.subr.bf16.mxu0 %v5937
        %5969 = vmatpush1.bf16.msra.mxu0 %v5936
        %5970 = vmatprep.subr.bf16.mxu0 %v5939
        %5971 = vmatpush1.bf16.msra.mxu0 %v5938
        %5972 = vmatprep.subr.bf16.mxu0 0
        %5973 = vmatpush1.bf16.msra.mxu0 0
        %5974 = vmatprep.subr.bf16.mxu0 0
        %5975 = vmatpush1.bf16.msra.mxu0 0
        %5976 = vmatprep.subr.bf16.mxu0 0
        %5977 = vmatpush1.bf16.msra.mxu0 0
        %5978 = vmatprep.subr.bf16.mxu0 0
        %5979 = vmatpush1.bf16.msra.mxu0 0
        %5980 = vmatprep.subr.bf16.mxu0 0
        %5981 = vmatpush1.bf16.msra.mxu0 0
        %5982 = vmatprep.subr.bf16.mxu0 0
        %5983 = vmatpush1.bf16.msra.mxu0 0
        %5984 = vmatprep.subr.bf16.mxu0 0
        %5985 = vmatpush1.bf16.msra.mxu0 0
        %5986 = vmatprep.subr.bf16.mxu0 0
        %5987 = vmatpush1.bf16.msra.mxu0 0
        %5988 = vmatprep.mubr.bf16.mxu0 0
        %5989 = vmatmul.mubr.bf16.gmra.mrb[0].mxu0 %v3819
        %v5990 = vpop.f32.mrb[0].mxu0
        %v5991 = vadd.f32 %v5818, %v5990
        %v5992 = vpop.f32.mrb[0].mxu0
        %v5993 = vadd.f32 %v5820, %v5992
        %v5994 = vpop.f32.mrb[0].mxu0
        %v5995 = vadd.f32 %v5822, %v5994
        %v5996 = vpop.f32.mrb[0].mxu0
        %v5997 = vadd.f32 %v5824, %v5996
        %5998 = vmatprep.mubr.bf16.mxu0 0
        %5999 = vmatmul.mubr.bf16.gmra.mrb[0].mxu0 %v3820
        %v6000 = vpop.f32.mrb[0].mxu0
        %v6001 = vadd.f32 %v5828, %v6000
        %v6002 = vpop.f32.mrb[0].mxu0
        %v6003 = vadd.f32 %v5830, %v6002
        %v6004 = vpop.f32.mrb[0].mxu0
        %v6005 = vadd.f32 %v5832, %v6004
        %v6006 = vpop.f32.mrb[0].mxu0
        %v6007 = vadd.f32 %v5834, %v6006
        %6008 = vmatprep.mubr.bf16.mxu0 0
        %6009 = vmatmul.mubr.bf16.gmra.mrb[0].mxu0 %v3821
        %v6010 = vpop.f32.mrb[0].mxu0
        %v6011 = vadd.f32 %v5838, %v6010
        %v6012 = vpop.f32.mrb[0].mxu0
        %v6013 = vadd.f32 %v5840, %v6012
        %v6014 = vpop.f32.mrb[0].mxu0
        %v6015 = vadd.f32 %v5842, %v6014
        %v6016 = vpop.f32.mrb[0].mxu0
        %v6017 = vadd.f32 %v5844, %v6016
        %6018 = vmatprep.mubr.bf16.mxu0 0
        %6019 = vmatmul.mubr.bf16.gmra.mrb[0].mxu0 %v3822
        %v6020 = vpop.f32.mrb[0].mxu0
        %v6021 = vadd.f32 %v5848, %v6020
        %v6022 = vpop.f32.mrb[0].mxu0
        %v6023 = vadd.f32 %v5850, %v6022
        %v6024 = vpop.f32.mrb[0].mxu0
        %v6025 = vadd.f32 %v5852, %v6024
        %v6026 = vpop.f32.mrb[0].mxu0
        %v6027 = vadd.f32 %v5854, %v6026
        %6028 = vmatprep.mubr.bf16.mxu0 0
        %6029 = vmatmul.mubr.bf16.gmra.mrb[0].mxu0 %v3823
        %v6030 = vpop.f32.mrb[0].mxu0
        %v6031 = vadd.f32 %v5858, %v6030
        %v6032 = vpop.f32.mrb[0].mxu0
        %v6033 = vadd.f32 %v5860, %v6032
        %v6034 = vpop.f32.mrb[0].mxu0
        %v6035 = vadd.f32 %v5862, %v6034
        %v6036 = vpop.f32.mrb[0].mxu0
        %v6037 = vadd.f32 %v5864, %v6036
        %6038 = vmatprep.mubr.bf16.mxu0 0
        %6039 = vmatmul.mubr.bf16.gmra.mrb[0].mxu0 %v3824
        %v6040 = vpop.f32.mrb[0].mxu0
        %v6041 = vadd.f32 %v5868, %v6040
        %v6042 = vpop.f32.mrb[0].mxu0
        %v6043 = vadd.f32 %v5870, %v6042
        %v6044 = vpop.f32.mrb[0].mxu0
        %v6045 = vadd.f32 %v5872, %v6044
        %v6046 = vpop.f32.mrb[0].mxu0
        %v6047 = vadd.f32 %v5874, %v6046
        %6048 = vdwg.mxu0
        %v6049 = vadd.f32 %v595, %v5991
        %v6050 = vadd.f32 %v596, %v5993
        %v6051 = vadd.f32 %v597, %v5995
        %v6052 = vadd.f32 %v598, %v5997
        %v6053 = vadd.f32 %v599, %v6001
        %v6054 = vadd.f32 %v600, %v6003
        %v6055 = vadd.f32 %v601, %v6005
        %v6056 = vadd.f32 %v602, %v6007
        %v6057 = vadd.f32 %v603, %v6011
        %v6058 = vadd.f32 %v604, %v6013
        %v6059 = vadd.f32 %v605, %v6015
        %v6060 = vadd.f32 %v606, %v6017
        %v6061 = vadd.f32 %v607, %v6021
        %v6062 = vadd.f32 %v608, %v6023
        %v6063 = vadd.f32 %v609, %v6025
        %v6064 = vadd.f32 %v610, %v6027
        %v6065 = vadd.f32 %v611, %v6031
        %v6066 = vadd.f32 %v612, %v6033
        %v6067 = vadd.f32 %v613, %v6035
        %v6068 = vadd.f32 %v614, %v6037
        %v6069 = vadd.f32 %v615, %v6041
        %v6070 = vadd.f32 %v616, %v6043
        %v6071 = vadd.f32 %v617, %v6045
        %v6072 = vadd.f32 %v618, %v6047
        %v6073 = vlaneseq
        %v6074 = vshrl.u32 %v6073, 7
        %v6075 = vsub.s32 0, %v6074
        %v6076 = vrot.slane %v1017, %v6075
        %v6077 = vlaneseq
        %v6078 = vshrl.u32 %v6077, 7
        %v6079 = vsub.s32 0, %v6078
        %v6080 = vrot.slane %v1018, %v6079
        %v6081 = vadd.f32 %v6049, %v6076
        %v6082 = vadd.f32 %v6050, %v6080
        %v6083 = vadd.f32 %v6051, %v6076
        %v6084 = vadd.f32 %v6052, %v6080
        %v6085 = vadd.f32 %v6053, %v6076
        %v6086 = vadd.f32 %v6054, %v6080
        %v6087 = vadd.f32 %v6055, %v6076
        %v6088 = vadd.f32 %v6056, %v6080
        %v6089 = vadd.f32 %v6057, %v6076
        %v6090 = vadd.f32 %v6058, %v6080
        %v6091 = vadd.f32 %v6059, %v6076
        %v6092 = vadd.f32 %v6060, %v6080
        %v6093 = vadd.f32 %v6061, %v6076
        %v6094 = vadd.f32 %v6062, %v6080
        %v6095 = vadd.f32 %v6063, %v6076
        %v6096 = vadd.f32 %v6064, %v6080
        %v6097 = vadd.f32 %v6065, %v6076
        %v6098 = vadd.f32 %v6066, %v6080
        %v6099 = vadd.f32 %v6067, %v6076
        %v6100 = vadd.f32 %v6068, %v6080
        %v6101 = vadd.f32 %v6069, %v6076
        %v6102 = vadd.f32 %v6070, %v6080
        %v6103 = vadd.f32 %v6071, %v6076
        %v6104 = vadd.f32 %v6072, %v6080
        %v6105 = vadd.f32 %v6081, %v6082
        %6106 = vadd.xlane.f32.xlu0 %v6105
        %v6107 = vpop.xlane.xlu0 %6106
        %v6108 = vadd.f32 %v6083, %v6084
        %6109 = vadd.xlane.f32.xlu0 %v6108
        %v6110 = vpop.xlane.xlu0 %6109
        %v6111 = vadd.f32 %v6085, %v6086
        %6112 = vadd.xlane.f32.xlu0 %v6111
        %v6113 = vpop.xlane.xlu0 %6112
        %v6114 = vadd.f32 %v6087, %v6088
        %6115 = vadd.xlane.f32.xlu0 %v6114
        %v6116 = vpop.xlane.xlu0 %6115
        %v6117 = vadd.f32 %v6089, %v6090
        %6118 = vadd.xlane.f32.xlu0 %v6117
        %v6119 = vpop.xlane.xlu0 %6118
        %v6120 = vadd.f32 %v6091, %v6092
        %6121 = vadd.xlane.f32.xlu0 %v6120
        %v6122 = vpop.xlane.xlu0 %6121
        %v6123 = vadd.f32 %v6093, %v6094
        %6124 = vadd.xlane.f32.xlu0 %v6123
        %v6125 = vpop.xlane.xlu0 %6124
        %v6126 = vadd.f32 %v6095, %v6096
        %6127 = vadd.xlane.f32.xlu0 %v6126
        %v6128 = vpop.xlane.xlu0 %6127
        %v6129 = vadd.f32 %v6097, %v6098
        %6130 = vadd.xlane.f32.xlu0 %v6129
        %v6131 = vpop.xlane.xlu0 %6130
        %v6132 = vadd.f32 %v6099, %v6100
        %6133 = vadd.xlane.f32.xlu0 %v6132
        %v6134 = vpop.xlane.xlu0 %6133
        %v6135 = vadd.f32 %v6101, %v6102
        %6136 = vadd.xlane.f32.xlu0 %v6135
        %v6137 = vpop.xlane.xlu0 %6136
        %v6138 = vadd.f32 %v6103, %v6104
        %6139 = vadd.xlane.f32.xlu0 %v6138
        %v6140 = vpop.xlane.xlu0 %6139
        %v6141 = vrcp.pop 256.0
        %v6142 = vmul.f32 %v6107, %v6141
        %v6143 = vmul.f32 %v6110, %v6141
        %v6144 = vmul.f32 %v6113, %v6141
        %v6145 = vmul.f32 %v6116, %v6141
        %v6146 = vmul.f32 %v6119, %v6141
        %v6147 = vmul.f32 %v6122, %v6141
        %v6148 = vmul.f32 %v6125, %v6141
        %v6149 = vmul.f32 %v6128, %v6141
        %v6150 = vmul.f32 %v6131, %v6141
        %v6151 = vmul.f32 %v6134, %v6141
        %v6152 = vmul.f32 %v6137, %v6141
        %v6153 = vmul.f32 %v6140, %v6141
        %v6154 = vsub.f32 %v6081, %v6142
        %v6155 = vsub.f32 %v6082, %v6142
        %v6156 = vsub.f32 %v6083, %v6143
        %v6157 = vsub.f32 %v6084, %v6143
        %v6158 = vsub.f32 %v6085, %v6144
        %v6159 = vsub.f32 %v6086, %v6144
        %v6160 = vsub.f32 %v6087, %v6145
        %v6161 = vsub.f32 %v6088, %v6145
        %v6162 = vsub.f32 %v6089, %v6146
        %v6163 = vsub.f32 %v6090, %v6146
        %v6164 = vsub.f32 %v6091, %v6147
        %v6165 = vsub.f32 %v6092, %v6147
        %v6166 = vsub.f32 %v6093, %v6148
        %v6167 = vsub.f32 %v6094, %v6148
        %v6168 = vsub.f32 %v6095, %v6149
        %v6169 = vsub.f32 %v6096, %v6149
        %v6170 = vsub.f32 %v6097, %v6150
        %v6171 = vsub.f32 %v6098, %v6150
        %v6172 = vsub.f32 %v6099, %v6151
        %v6173 = vsub.f32 %v6100, %v6151
        %v6174 = vsub.f32 %v6101, %v6152
        %v6175 = vsub.f32 %v6102, %v6152
        %v6176 = vsub.f32 %v6103, %v6153
        %v6177 = vsub.f32 %v6104, %v6153
        %v6178 = vmul.f32 %v6154, %v6154
        %v6179 = vmul.f32 %v6155, %v6155
        %v6180 = vmul.f32 %v6156, %v6156
        %v6181 = vmul.f32 %v6157, %v6157
        %v6182 = vmul.f32 %v6158, %v6158
        %v6183 = vmul.f32 %v6159, %v6159
        %v6184 = vmul.f32 %v6160, %v6160
        %v6185 = vmul.f32 %v6161, %v6161
        %v6186 = vmul.f32 %v6162, %v6162
        %v6187 = vmul.f32 %v6163, %v6163
        %v6188 = vmul.f32 %v6164, %v6164
        %v6189 = vmul.f32 %v6165, %v6165
        %v6190 = vmul.f32 %v6166, %v6166
        %v6191 = vmul.f32 %v6167, %v6167
        %v6192 = vmul.f32 %v6168, %v6168
        %v6193 = vmul.f32 %v6169, %v6169
        %v6194 = vmul.f32 %v6170, %v6170
        %v6195 = vmul.f32 %v6171, %v6171
        %v6196 = vmul.f32 %v6172, %v6172
        %v6197 = vmul.f32 %v6173, %v6173
        %v6198 = vmul.f32 %v6174, %v6174
        %v6199 = vmul.f32 %v6175, %v6175
        %v6200 = vmul.f32 %v6176, %v6176
        %v6201 = vmul.f32 %v6177, %v6177
        %v6202 = vadd.f32 %v6178, %v6179
        %6203 = vadd.xlane.f32.xlu0 %v6202
        %v6204 = vpop.xlane.xlu0 %6203
        %v6205 = vadd.f32 %v6180, %v6181
        %6206 = vadd.xlane.f32.xlu0 %v6205
        %v6207 = vpop.xlane.xlu0 %6206
        %v6208 = vadd.f32 %v6182, %v6183
        %6209 = vadd.xlane.f32.xlu0 %v6208
        %v6210 = vpop.xlane.xlu0 %6209
        %v6211 = vadd.f32 %v6184, %v6185
        %6212 = vadd.xlane.f32.xlu0 %v6211
        %v6213 = vpop.xlane.xlu0 %6212
        %v6214 = vadd.f32 %v6186, %v6187
        %6215 = vadd.xlane.f32.xlu0 %v6214
        %v6216 = vpop.xlane.xlu0 %6215
        %v6217 = vadd.f32 %v6188, %v6189
        %6218 = vadd.xlane.f32.xlu0 %v6217
        %v6219 = vpop.xlane.xlu0 %6218
        %v6220 = vadd.f32 %v6190, %v6191
        %6221 = vadd.xlane.f32.xlu0 %v6220
        %v6222 = vpop.xlane.xlu0 %6221
        %v6223 = vadd.f32 %v6192, %v6193
        %6224 = vadd.xlane.f32.xlu0 %v6223
        %v6225 = vpop.xlane.xlu0 %6224
        %v6226 = vadd.f32 %v6194, %v6195
        %6227 = vadd.xlane.f32.xlu0 %v6226
        %v6228 = vpop.xlane.xlu0 %6227
        %v6229 = vadd.f32 %v6196, %v6197
        %6230 = vadd.xlane.f32.xlu0 %v6229
        %v6231 = vpop.xlane.xlu0 %6230
        %v6232 = vadd.f32 %v6198, %v6199
        %6233 = vadd.xlane.f32.xlu0 %v6232
        %v6234 = vpop.xlane.xlu0 %6233
        %v6235 = vadd.f32 %v6200, %v6201
        %6236 = vadd.xlane.f32.xlu0 %v6235
        %v6237 = vpop.xlane.xlu0 %6236
        %v6238 = vmul.f32 %v6204, %v6141
        %v6239 = vmul.f32 %v6207, %v6141
        %v6240 = vmul.f32 %v6210, %v6141
        %v6241 = vmul.f32 %v6213, %v6141
        %v6242 = vmul.f32 %v6216, %v6141
        %v6243 = vmul.f32 %v6219, %v6141
        %v6244 = vmul.f32 %v6222, %v6141
        %v6245 = vmul.f32 %v6225, %v6141
        %v6246 = vmul.f32 %v6228, %v6141
        %v6247 = vmul.f32 %v6231, %v6141
        %v6248 = vmul.f32 %v6234, %v6141
        %v6249 = vmul.f32 %v6237, %v6141
        %v6250 = vadd.f32 %v6238, 1e-05
        %v6251 = vadd.f32 %v6239, 1e-05
        %v6252 = vadd.f32 %v6240, 1e-05
        %v6253 = vadd.f32 %v6241, 1e-05
        %v6254 = vadd.f32 %v6242, 1e-05
        %v6255 = vadd.f32 %v6243, 1e-05
        %v6256 = vadd.f32 %v6244, 1e-05
        %v6257 = vadd.f32 %v6245, 1e-05
        %v6258 = vadd.f32 %v6246, 1e-05
        %v6259 = vadd.f32 %v6247, 1e-05
        %v6260 = vadd.f32 %v6248, 1e-05
        %v6261 = vadd.f32 %v6249, 1e-05
        %v6262 = vrsqrt.pop %v6250
        %v6263 = vrsqrt.pop %v6251
        %v6264 = vrsqrt.pop %v6252
        %v6265 = vrsqrt.pop %v6253
        %v6266 = vrsqrt.pop %v6254
        %v6267 = vrsqrt.pop %v6255
        %v6268 = vrsqrt.pop %v6256
        %v6269 = vrsqrt.pop %v6257
        %v6270 = vrsqrt.pop %v6258
        %v6271 = vrsqrt.pop %v6259
        %v6272 = vrsqrt.pop %v6260
        %v6273 = vrsqrt.pop %v6261
        %v6274 = vmul.f32 %v6154, %v6262
        %v6275 = vmul.f32 %v6155, %v6262
        %v6276 = vmul.f32 %v6156, %v6263
        %v6277 = vmul.f32 %v6157, %v6263
        %v6278 = vmul.f32 %v6158, %v6264
        %v6279 = vmul.f32 %v6159, %v6264
        %v6280 = vmul.f32 %v6160, %v6265
        %v6281 = vmul.f32 %v6161, %v6265
        %v6282 = vmul.f32 %v6162, %v6266
        %v6283 = vmul.f32 %v6163, %v6266
        %v6284 = vmul.f32 %v6164, %v6267
        %v6285 = vmul.f32 %v6165, %v6267
        %v6286 = vmul.f32 %v6166, %v6268
        %v6287 = vmul.f32 %v6167, %v6268
        %v6288 = vmul.f32 %v6168, %v6269
        %v6289 = vmul.f32 %v6169, %v6269
        %v6290 = vmul.f32 %v6170, %v6270
        %v6291 = vmul.f32 %v6171, %v6270
        %v6292 = vmul.f32 %v6172, %v6271
        %v6293 = vmul.f32 %v6173, %v6271
        %v6294 = vmul.f32 %v6174, %v6272
        %v6295 = vmul.f32 %v6175, %v6272
        %v6296 = vmul.f32 %v6176, %v6273
        %v6297 = vmul.f32 %v6177, %v6273
        %v6298 = vlaneseq
        %v6299 = vshrl.u32 %v6298, 7
        %v6300 = vsub.s32 1, %v6299
        %v6301 = vrot.slane %v1017, %v6300
        %v6302 = vlaneseq
        %v6303 = vshrl.u32 %v6302, 7
        %v6304 = vsub.s32 1, %v6303
        %v6305 = vrot.slane %v1018, %v6304
        %v6306 = vmul.f32 %v6274, %v6301
        %v6307 = vmul.f32 %v6275, %v6305
        %v6308 = vmul.f32 %v6276, %v6301
        %v6309 = vmul.f32 %v6277, %v6305
        %v6310 = vmul.f32 %v6278, %v6301
        %v6311 = vmul.f32 %v6279, %v6305
        %v6312 = vmul.f32 %v6280, %v6301
        %v6313 = vmul.f32 %v6281, %v6305
        %v6314 = vmul.f32 %v6282, %v6301
        %v6315 = vmul.f32 %v6283, %v6305
        %v6316 = vmul.f32 %v6284, %v6301
        %v6317 = vmul.f32 %v6285, %v6305
        %v6318 = vmul.f32 %v6286, %v6301
        %v6319 = vmul.f32 %v6287, %v6305
        %v6320 = vmul.f32 %v6288, %v6301
        %v6321 = vmul.f32 %v6289, %v6305
        %v6322 = vmul.f32 %v6290, %v6301
        %v6323 = vmul.f32 %v6291, %v6305
        %v6324 = vmul.f32 %v6292, %v6301
        %v6325 = vmul.f32 %v6293, %v6305
        %v6326 = vmul.f32 %v6294, %v6301
        %v6327 = vmul.f32 %v6295, %v6305
        %v6328 = vmul.f32 %v6296, %v6301
        %v6329 = vmul.f32 %v6297, %v6305
        %v6330 = vlaneseq
        %v6331 = vshrl.u32 %v6330, 7
        %v6332 = vsub.s32 2, %v6331
        %v6333 = vrot.slane %v1017, %v6332
        %v6334 = vlaneseq
        %v6335 = vshrl.u32 %v6334, 7
        %v6336 = vsub.s32 2, %v6335
        %v6337 = vrot.slane %v1018, %v6336
        %v6338 = vadd.f32 %v6306, %v6333
        %v6339 = vadd.f32 %v6307, %v6337
        %v6340 = vadd.f32 %v6308, %v6333
        %v6341 = vadd.f32 %v6309, %v6337
        %v6342 = vadd.f32 %v6310, %v6333
        %v6343 = vadd.f32 %v6311, %v6337
        %v6344 = vadd.f32 %v6312, %v6333
        %v6345 = vadd.f32 %v6313, %v6337
        %v6346 = vadd.f32 %v6314, %v6333
        %v6347 = vadd.f32 %v6315, %v6337
        %v6348 = vadd.f32 %v6316, %v6333
        %v6349 = vadd.f32 %v6317, %v6337
        %v6350 = vadd.f32 %v6318, %v6333
        %v6351 = vadd.f32 %v6319, %v6337
        %v6352 = vadd.f32 %v6320, %v6333
        %v6353 = vadd.f32 %v6321, %v6337
        %v6354 = vadd.f32 %v6322, %v6333
        %v6355 = vadd.f32 %v6323, %v6337
        %v6356 = vadd.f32 %v6324, %v6333
        %v6357 = vadd.f32 %v6325, %v6337
        %v6358 = vadd.f32 %v6326, %v6333
        %v6359 = vadd.f32 %v6327, %v6337
        %v6360 = vadd.f32 %v6328, %v6333
        %v6361 = vadd.f32 %v6329, %v6337
        %v6362 = vpack.c.bf16 %v6340, %v6338
        %v6363 = vpack.c.bf16 %v6341, %v6339
        %v6364 = vpack.c.bf16 %v6344, %v6342
        %v6365 = vpack.c.bf16 %v6345, %v6343
        %v6366 = vpack.c.bf16 %v6348, %v6346
        %v6367 = vpack.c.bf16 %v6349, %v6347
        %v6368 = vpack.c.bf16 %v6352, %v6350
        %v6369 = vpack.c.bf16 %v6353, %v6351
        %v6370 = vpack.c.bf16 %v6356, %v6354
        %v6371 = vpack.c.bf16 %v6357, %v6355
        %v6372 = vpack.c.bf16 %v6360, %v6358
        %v6373 = vpack.c.bf16 %v6361, %v6359
        %v6375 = vlaneseq
        %v6376 = vshrl.u32 %v6375, 7
        %v6377 = vsub.s32 0, %v6376
        %v6378 = vrot.slane %v1016, %v6377
        %v6379 = vlaneseq
        %v6380 = vshrl.u32 %v6379, 7
        %v6381 = vsub.s32 1, %v6380
        %v6382 = vrot.slane %v1016, %v6381
        %v6383 = vlaneseq
        %v6384 = vshrl.u32 %v6383, 7
        %v6385 = vsub.s32 2, %v6384
        %v6386 = vrot.slane %v1016, %v6385
        %v6387 = vlaneseq
        %v6388 = vshrl.u32 %v6387, 7
        %v6389 = vsub.s32 3, %v6388
        %v6390 = vrot.slane %v1016, %v6389
        %v6391 = vlaneseq
        %v6392 = vshrl.u32 %v6391, 7
        %v6393 = vsub.s32 4, %v6392
        %v6394 = vrot.slane %v1016, %v6393
        %v6395 = vlaneseq
        %v6396 = vshrl.u32 %v6395, 7
        %v6397 = vsub.s32 5, %v6396
        %v6398 = vrot.slane %v1016, %v6397
        %v6399 = vlaneseq
        %v6400 = vshrl.u32 %v6399, 7
        %v6401 = vsub.s32 6, %v6400
        %v6402 = vrot.slane %v1016, %v6401
        %v6403 = vlaneseq
        %v6404 = vshrl.u32 %v6403, 7
        %v6405 = vsub.s32 7, %v6404
        %v6406 = vrot.slane %v1016, %v6405
        %v6543 = vunpack.c.l.b16 %v759
        %v6544 = vunpack.c.h.b16 %v759
        %v6545 = vunpack.c.l.b16 %v760
        %v6546 = vunpack.c.h.b16 %v760
        %v6547 = vunpack.c.l.b16 %v761
        %v6548 = vunpack.c.h.b16 %v761
        %v6549 = vunpack.c.l.b16 %v762
        %v6550 = vunpack.c.h.b16 %v762
        %v6551 = vunpack.c.l.b16 %v763
        %v6552 = vunpack.c.h.b16 %v763
        %v6553 = vunpack.c.l.b16 %v764
        %v6554 = vunpack.c.h.b16 %v764
        %v6555 = vunpack.c.l.b16 %v765
        %v6556 = vunpack.c.h.b16 %v765
        %v6557 = vunpack.c.l.b16 %v766
        %v6558 = vunpack.c.h.b16 %v766
        %v6559 = vunpack.c.l.b16 %v767
        %v6560 = vunpack.c.h.b16 %v767
        %v6561 = vunpack.c.l.b16 %v768
        %v6562 = vunpack.c.h.b16 %v768
        %v6563 = vunpack.c.l.b16 %v769
        %v6564 = vunpack.c.h.b16 %v769
        %v6565 = vunpack.c.l.b16 %v770
        %v6566 = vunpack.c.h.b16 %v770
        %v6567 = vunpack.c.l.b16 %v771
        %v6568 = vunpack.c.h.b16 %v771
        %v6569 = vunpack.c.l.b16 %v772
        %v6570 = vunpack.c.h.b16 %v772
        %v6571 = vunpack.c.l.b16 %v773
        %v6572 = vunpack.c.h.b16 %v773
        %v6573 = vunpack.c.l.b16 %v774
        %v6574 = vunpack.c.h.b16 %v774
        %v6575 = vunpack.c.l.b16 %v775
        %v6576 = vunpack.c.h.b16 %v775
        %v6577 = vunpack.c.l.b16 %v776
        %v6578 = vunpack.c.h.b16 %v776
        %v6579 = vunpack.c.l.b16 %v777
        %v6580 = vunpack.c.h.b16 %v777
        %v6581 = vunpack.c.l.b16 %v778
        %v6582 = vunpack.c.h.b16 %v778
        %v6583 = vunpack.c.l.b16 %v779
        %v6584 = vunpack.c.h.b16 %v779
        %v6585 = vunpack.c.l.b16 %v780
        %v6586 = vunpack.c.h.b16 %v780
        %v6587 = vunpack.c.l.b16 %v781
        %v6588 = vunpack.c.h.b16 %v781
        %v6589 = vunpack.c.l.b16 %v782
        %v6590 = vunpack.c.h.b16 %v782
        %v6591 = vunpack.c.l.b16 %v783
        %v6592 = vunpack.c.h.b16 %v783
        %v6593 = vunpack.c.l.b16 %v784
        %v6594 = vunpack.c.h.b16 %v784
        %v6595 = vunpack.c.l.b16 %v785
        %v6596 = vunpack.c.h.b16 %v785
        %v6597 = vunpack.c.l.b16 %v786
        %v6598 = vunpack.c.h.b16 %v786
        %v6599 = vunpack.c.l.b16 %v787
        %v6600 = vunpack.c.h.b16 %v787
        %v6601 = vunpack.c.l.b16 %v788
        %v6602 = vunpack.c.h.b16 %v788
        %v6603 = vunpack.c.l.b16 %v789
        %v6604 = vunpack.c.h.b16 %v789
        %v6605 = vunpack.c.l.b16 %v790
        %v6606 = vunpack.c.h.b16 %v790
        %v6607 = vunpack.c.l.b16 %v791
        %v6608 = vunpack.c.h.b16 %v791
        %v6609 = vunpack.c.l.b16 %v792
        %v6610 = vunpack.c.h.b16 %v792
        %v6611 = vunpack.c.l.b16 %v793
        %v6612 = vunpack.c.h.b16 %v793
        %v6613 = vunpack.c.l.b16 %v794
        %v6614 = vunpack.c.h.b16 %v794
        %v6615 = vunpack.c.l.b16 %v795
        %v6616 = vunpack.c.h.b16 %v795
        %v6617 = vunpack.c.l.b16 %v796
        %v6618 = vunpack.c.h.b16 %v796
        %v6619 = vunpack.c.l.b16 %v797
        %v6620 = vunpack.c.h.b16 %v797
        %v6621 = vunpack.c.l.b16 %v798
        %v6622 = vunpack.c.h.b16 %v798
        %v6623 = vunpack.c.l.b16 %v799
        %v6624 = vunpack.c.h.b16 %v799
        %v6625 = vunpack.c.l.b16 %v800
        %v6626 = vunpack.c.h.b16 %v800
        %v6627 = vunpack.c.l.b16 %v801
        %v6628 = vunpack.c.h.b16 %v801
        %v6629 = vunpack.c.l.b16 %v802
        %v6630 = vunpack.c.h.b16 %v802
        %v6631 = vunpack.c.l.b16 %v803
        %v6632 = vunpack.c.h.b16 %v803
        %v6633 = vunpack.c.l.b16 %v804
        %v6634 = vunpack.c.h.b16 %v804
        %v6635 = vunpack.c.l.b16 %v805
        %v6636 = vunpack.c.h.b16 %v805
        %v6637 = vunpack.c.l.b16 %v806
        %v6638 = vunpack.c.h.b16 %v806
        %v6639 = vunpack.c.l.b16 %v807
        %v6640 = vunpack.c.h.b16 %v807
        %v6641 = vunpack.c.l.b16 %v808
        %v6642 = vunpack.c.h.b16 %v808
        %v6643 = vunpack.c.l.b16 %v809
        %v6644 = vunpack.c.h.b16 %v809
        %v6645 = vunpack.c.l.b16 %v810
        %v6646 = vunpack.c.h.b16 %v810
        %v6647 = vunpack.c.l.b16 %v811
        %v6648 = vunpack.c.h.b16 %v811
        %v6649 = vunpack.c.l.b16 %v812
        %v6650 = vunpack.c.h.b16 %v812
        %v6651 = vunpack.c.l.b16 %v813
        %v6652 = vunpack.c.h.b16 %v813
        %v6653 = vunpack.c.l.b16 %v814
        %v6654 = vunpack.c.h.b16 %v814
        %v6655 = vunpack.c.l.b16 %v815
        %v6656 = vunpack.c.h.b16 %v815
        %v6657 = vunpack.c.l.b16 %v816
        %v6658 = vunpack.c.h.b16 %v816
        %v6659 = vunpack.c.l.b16 %v817
        %v6660 = vunpack.c.h.b16 %v817
        %v6661 = vunpack.c.l.b16 %v818
        %v6662 = vunpack.c.h.b16 %v818
        %v6663 = vunpack.c.l.b16 %v819
        %v6664 = vunpack.c.h.b16 %v819
        %v6665 = vunpack.c.l.b16 %v820
        %v6666 = vunpack.c.h.b16 %v820
        %v6667 = vunpack.c.l.b16 %v821
        %v6668 = vunpack.c.h.b16 %v821
        %v6669 = vunpack.c.l.b16 %v822
        %v6670 = vunpack.c.h.b16 %v822
        %v6671 = vunpack.c.l.b16 %v823
        %v6672 = vunpack.c.h.b16 %v823
        %v6673 = vunpack.c.l.b16 %v824
        %v6674 = vunpack.c.h.b16 %v824
        %v6675 = vunpack.c.l.b16 %v825
        %v6676 = vunpack.c.h.b16 %v825
        %v6677 = vunpack.c.l.b16 %v826
        %v6678 = vunpack.c.h.b16 %v826
        %v6679 = vunpack.c.l.b16 %v827
        %v6680 = vunpack.c.h.b16 %v827
        %v6681 = vunpack.c.l.b16 %v828
        %v6682 = vunpack.c.h.b16 %v828
        %v6683 = vunpack.c.l.b16 %v829
        %v6684 = vunpack.c.h.b16 %v829
        %v6685 = vunpack.c.l.b16 %v830
        %v6686 = vunpack.c.h.b16 %v830
        %v6687 = vunpack.c.l.b16 %v831
        %v6688 = vunpack.c.h.b16 %v831
        %v6689 = vunpack.c.l.b16 %v832
        %v6690 = vunpack.c.h.b16 %v832
        %v6691 = vunpack.c.l.b16 %v833
        %v6692 = vunpack.c.h.b16 %v833
        %v6693 = vunpack.c.l.b16 %v834
        %v6694 = vunpack.c.h.b16 %v834
        %v6695 = vunpack.c.l.b16 %v835
        %v6696 = vunpack.c.h.b16 %v835
        %v6697 = vunpack.c.l.b16 %v836
        %v6698 = vunpack.c.h.b16 %v836
        %v6699 = vunpack.c.l.b16 %v837
        %v6700 = vunpack.c.h.b16 %v837
        %v6701 = vunpack.c.l.b16 %v838
        %v6702 = vunpack.c.h.b16 %v838
        %v6703 = vunpack.c.l.b16 %v839
        %v6704 = vunpack.c.h.b16 %v839
        %v6705 = vunpack.c.l.b16 %v840
        %v6706 = vunpack.c.h.b16 %v840
        %v6707 = vunpack.c.l.b16 %v841
        %v6708 = vunpack.c.h.b16 %v841
        %v6709 = vunpack.c.l.b16 %v842
        %v6710 = vunpack.c.h.b16 %v842
        %v6711 = vunpack.c.l.b16 %v843
        %v6712 = vunpack.c.h.b16 %v843
        %v6713 = vunpack.c.l.b16 %v844
        %v6714 = vunpack.c.h.b16 %v844
        %v6715 = vunpack.c.l.b16 %v845
        %v6716 = vunpack.c.h.b16 %v845
        %v6717 = vunpack.c.l.b16 %v846
        %v6718 = vunpack.c.h.b16 %v846
        %v6719 = vunpack.c.l.b16 %v847
        %v6720 = vunpack.c.h.b16 %v847
        %v6721 = vunpack.c.l.b16 %v848
        %v6722 = vunpack.c.h.b16 %v848
        %v6723 = vunpack.c.l.b16 %v849
        %v6724 = vunpack.c.h.b16 %v849
        %v6725 = vunpack.c.l.b16 %v850
        %v6726 = vunpack.c.h.b16 %v850
        %v6727 = vunpack.c.l.b16 %v851
        %v6728 = vunpack.c.h.b16 %v851
        %v6729 = vunpack.c.l.b16 %v852
        %v6730 = vunpack.c.h.b16 %v852
        %v6731 = vunpack.c.l.b16 %v853
        %v6732 = vunpack.c.h.b16 %v853
        %v6733 = vunpack.c.l.b16 %v854
        %v6734 = vunpack.c.h.b16 %v854
        %v6735 = vunpack.c.l.b16 %v855
        %v6736 = vunpack.c.h.b16 %v855
        %v6737 = vunpack.c.l.b16 %v856
        %v6738 = vunpack.c.h.b16 %v856
        %v6739 = vunpack.c.l.b16 %v857
        %v6740 = vunpack.c.h.b16 %v857
        %v6741 = vunpack.c.l.b16 %v858
        %v6742 = vunpack.c.h.b16 %v858
        %v6743 = vunpack.c.l.b16 %v859
        %v6744 = vunpack.c.h.b16 %v859
        %v6745 = vunpack.c.l.b16 %v860
        %v6746 = vunpack.c.h.b16 %v860
        %v6747 = vunpack.c.l.b16 %v861
        %v6748 = vunpack.c.h.b16 %v861
        %v6749 = vunpack.c.l.b16 %v862
        %v6750 = vunpack.c.h.b16 %v862
        %v6751 = vunpack.c.l.b16 %v863
        %v6752 = vunpack.c.h.b16 %v863
        %v6753 = vunpack.c.l.b16 %v864
        %v6754 = vunpack.c.h.b16 %v864
        %v6755 = vunpack.c.l.b16 %v865
        %v6756 = vunpack.c.h.b16 %v865
        %v6757 = vunpack.c.l.b16 %v866
        %v6758 = vunpack.c.h.b16 %v866
        %v6759 = vunpack.c.l.b16 %v867
        %v6760 = vunpack.c.h.b16 %v867
        %v6761 = vunpack.c.l.b16 %v868
        %v6762 = vunpack.c.h.b16 %v868
        %v6763 = vunpack.c.l.b16 %v869
        %v6764 = vunpack.c.h.b16 %v869
        %v6765 = vunpack.c.l.b16 %v870
        %v6766 = vunpack.c.h.b16 %v870
        %v6767 = vunpack.c.l.b16 %v871
        %v6768 = vunpack.c.h.b16 %v871
        %v6769 = vunpack.c.l.b16 %v872
        %v6770 = vunpack.c.h.b16 %v872
        %v6771 = vunpack.c.l.b16 %v873
        %v6772 = vunpack.c.h.b16 %v873
        %v6773 = vunpack.c.l.b16 %v874
        %v6774 = vunpack.c.h.b16 %v874
        %v6775 = vunpack.c.l.b16 %v875
        %v6776 = vunpack.c.h.b16 %v875
        %v6777 = vunpack.c.l.b16 %v876
        %v6778 = vunpack.c.h.b16 %v876
        %v6779 = vunpack.c.l.b16 %v877
        %v6780 = vunpack.c.h.b16 %v877
        %v6781 = vunpack.c.l.b16 %v878
        %v6782 = vunpack.c.h.b16 %v878
        %v6783 = vunpack.c.l.b16 %v879
        %v6784 = vunpack.c.h.b16 %v879
        %v6785 = vunpack.c.l.b16 %v880
        %v6786 = vunpack.c.h.b16 %v880
        %v6787 = vunpack.c.l.b16 %v881
        %v6788 = vunpack.c.h.b16 %v881
        %v6789 = vunpack.c.l.b16 %v882
        %v6790 = vunpack.c.h.b16 %v882
        %v6791 = vunpack.c.l.b16 %v883
        %v6792 = vunpack.c.h.b16 %v883
        %v6793 = vunpack.c.l.b16 %v884
        %v6794 = vunpack.c.h.b16 %v884
        %v6795 = vunpack.c.l.b16 %v885
        %v6796 = vunpack.c.h.b16 %v885
        %v6797 = vunpack.c.l.b16 %v886
        %v6798 = vunpack.c.h.b16 %v886
        %v6799 = vpack.c.b16 %v6551, %v6543
        %v6800 = vpack.c.b16 %v6552, %v6544
        %v6801 = vpack.c.b16 %v6553, %v6545
        %v6802 = vpack.c.b16 %v6554, %v6546
        %v6803 = vpack.c.b16 %v6555, %v6547
        %v6804 = vpack.c.b16 %v6556, %v6548
        %v6805 = vpack.c.b16 %v6557, %v6549
        %v6806 = vpack.c.b16 %v6558, %v6550
        %v6807 = vpack.c.b16 %v6567, %v6559
        %v6808 = vpack.c.b16 %v6568, %v6560
        %v6809 = vpack.c.b16 %v6569, %v6561
        %v6810 = vpack.c.b16 %v6570, %v6562
        %v6811 = vpack.c.b16 %v6571, %v6563
        %v6812 = vpack.c.b16 %v6572, %v6564
        %v6813 = vpack.c.b16 %v6573, %v6565
        %v6814 = vpack.c.b16 %v6574, %v6566
        %v6815 = vpack.c.b16 %v6583, %v6575
        %v6816 = vpack.c.b16 %v6584, %v6576
        %v6817 = vpack.c.b16 %v6585, %v6577
        %v6818 = vpack.c.b16 %v6586, %v6578
        %v6819 = vpack.c.b16 %v6587, %v6579
        %v6820 = vpack.c.b16 %v6588, %v6580
        %v6821 = vpack.c.b16 %v6589, %v6581
        %v6822 = vpack.c.b16 %v6590, %v6582
        %v6823 = vpack.c.b16 %v6599, %v6591
        %v6824 = vpack.c.b16 %v6600, %v6592
        %v6825 = vpack.c.b16 %v6601, %v6593
        %v6826 = vpack.c.b16 %v6602, %v6594
        %v6827 = vpack.c.b16 %v6603, %v6595
        %v6828 = vpack.c.b16 %v6604, %v6596
        %v6829 = vpack.c.b16 %v6605, %v6597
        %v6830 = vpack.c.b16 %v6606, %v6598
        %v6831 = vpack.c.b16 %v6615, %v6607
        %v6832 = vpack.c.b16 %v6616, %v6608
        %v6833 = vpack.c.b16 %v6617, %v6609
        %v6834 = vpack.c.b16 %v6618, %v6610
        %v6835 = vpack.c.b16 %v6619, %v6611
        %v6836 = vpack.c.b16 %v6620, %v6612
        %v6837 = vpack.c.b16 %v6621, %v6613
        %v6838 = vpack.c.b16 %v6622, %v6614
        %v6839 = vpack.c.b16 %v6631, %v6623
        %v6840 = vpack.c.b16 %v6632, %v6624
        %v6841 = vpack.c.b16 %v6633, %v6625
        %v6842 = vpack.c.b16 %v6634, %v6626
        %v6843 = vpack.c.b16 %v6635, %v6627
        %v6844 = vpack.c.b16 %v6636, %v6628
        %v6845 = vpack.c.b16 %v6637, %v6629
        %v6846 = vpack.c.b16 %v6638, %v6630
        %v6847 = vpack.c.b16 %v6647, %v6639
        %v6848 = vpack.c.b16 %v6648, %v6640
        %v6849 = vpack.c.b16 %v6649, %v6641
        %v6850 = vpack.c.b16 %v6650, %v6642
        %v6851 = vpack.c.b16 %v6651, %v6643
        %v6852 = vpack.c.b16 %v6652, %v6644
        %v6853 = vpack.c.b16 %v6653, %v6645
        %v6854 = vpack.c.b16 %v6654, %v6646
        %v6855 = vpack.c.b16 %v6663, %v6655
        %v6856 = vpack.c.b16 %v6664, %v6656
        %v6857 = vpack.c.b16 %v6665, %v6657
        %v6858 = vpack.c.b16 %v6666, %v6658
        %v6859 = vpack.c.b16 %v6667, %v6659
        %v6860 = vpack.c.b16 %v6668, %v6660
        %v6861 = vpack.c.b16 %v6669, %v6661
        %v6862 = vpack.c.b16 %v6670, %v6662
        %v6863 = vpack.c.b16 %v6679, %v6671
        %v6864 = vpack.c.b16 %v6680, %v6672
        %v6865 = vpack.c.b16 %v6681, %v6673
        %v6866 = vpack.c.b16 %v6682, %v6674
        %v6867 = vpack.c.b16 %v6683, %v6675
        %v6868 = vpack.c.b16 %v6684, %v6676
        %v6869 = vpack.c.b16 %v6685, %v6677
        %v6870 = vpack.c.b16 %v6686, %v6678
        %v6871 = vpack.c.b16 %v6695, %v6687
        %v6872 = vpack.c.b16 %v6696, %v6688
        %v6873 = vpack.c.b16 %v6697, %v6689
        %v6874 = vpack.c.b16 %v6698, %v6690
        %v6875 = vpack.c.b16 %v6699, %v6691
        %v6876 = vpack.c.b16 %v6700, %v6692
        %v6877 = vpack.c.b16 %v6701, %v6693
        %v6878 = vpack.c.b16 %v6702, %v6694
        %v6879 = vpack.c.b16 %v6711, %v6703
        %v6880 = vpack.c.b16 %v6712, %v6704
        %v6881 = vpack.c.b16 %v6713, %v6705
        %v6882 = vpack.c.b16 %v6714, %v6706
        %v6883 = vpack.c.b16 %v6715, %v6707
        %v6884 = vpack.c.b16 %v6716, %v6708
        %v6885 = vpack.c.b16 %v6717, %v6709
        %v6886 = vpack.c.b16 %v6718, %v6710
        %v6887 = vpack.c.b16 %v6727, %v6719
        %v6888 = vpack.c.b16 %v6728, %v6720
        %v6889 = vpack.c.b16 %v6729, %v6721
        %v6890 = vpack.c.b16 %v6730, %v6722
        %v6891 = vpack.c.b16 %v6731, %v6723
        %v6892 = vpack.c.b16 %v6732, %v6724
        %v6893 = vpack.c.b16 %v6733, %v6725
        %v6894 = vpack.c.b16 %v6734, %v6726
        %v6895 = vpack.c.b16 %v6743, %v6735
        %v6896 = vpack.c.b16 %v6744, %v6736
        %v6897 = vpack.c.b16 %v6745, %v6737
        %v6898 = vpack.c.b16 %v6746, %v6738
        %v6899 = vpack.c.b16 %v6747, %v6739
        %v6900 = vpack.c.b16 %v6748, %v6740
        %v6901 = vpack.c.b16 %v6749, %v6741
        %v6902 = vpack.c.b16 %v6750, %v6742
        %v6903 = vpack.c.b16 %v6759, %v6751
        %v6904 = vpack.c.b16 %v6760, %v6752
        %v6905 = vpack.c.b16 %v6761, %v6753
        %v6906 = vpack.c.b16 %v6762, %v6754
        %v6907 = vpack.c.b16 %v6763, %v6755
        %v6908 = vpack.c.b16 %v6764, %v6756
        %v6909 = vpack.c.b16 %v6765, %v6757
        %v6910 = vpack.c.b16 %v6766, %v6758
        %v6911 = vpack.c.b16 %v6775, %v6767
        %v6912 = vpack.c.b16 %v6776, %v6768
        %v6913 = vpack.c.b16 %v6777, %v6769
        %v6914 = vpack.c.b16 %v6778, %v6770
        %v6915 = vpack.c.b16 %v6779, %v6771
        %v6916 = vpack.c.b16 %v6780, %v6772
        %v6917 = vpack.c.b16 %v6781, %v6773
        %v6918 = vpack.c.b16 %v6782, %v6774
        %v6919 = vpack.c.b16 %v6791, %v6783
        %v6920 = vpack.c.b16 %v6792, %v6784
        %v6921 = vpack.c.b16 %v6793, %v6785
        %v6922 = vpack.c.b16 %v6794, %v6786
        %v6923 = vpack.c.b16 %v6795, %v6787
        %v6924 = vpack.c.b16 %v6796, %v6788
        %v6925 = vpack.c.b16 %v6797, %v6789
        %v6926 = vpack.c.b16 %v6798, %v6790
        %7055 = vmatprep.subr.bf16.mxu0 %v6800
        %7056 = vmatpush1.bf16.msra.mxu0 %v6799
        %7057 = vmatprep.subr.bf16.mxu0 %v6808
        %7058 = vmatpush1.bf16.msra.mxu0 %v6807
        %7059 = vmatprep.subr.bf16.mxu0 %v6816
        %7060 = vmatpush1.bf16.msra.mxu0 %v6815
        %7061 = vmatprep.subr.bf16.mxu0 %v6824
        %7062 = vmatpush1.bf16.msra.mxu0 %v6823
        %7063 = vmatprep.subr.bf16.mxu0 %v6832
        %7064 = vmatpush1.bf16.msra.mxu0 %v6831
        %7065 = vmatprep.subr.bf16.mxu0 %v6840
        %7066 = vmatpush1.bf16.msra.mxu0 %v6839
        %7067 = vmatprep.subr.bf16.mxu0 %v6848
        %7068 = vmatpush1.bf16.msra.mxu0 %v6847
        %7069 = vmatprep.subr.bf16.mxu0 %v6856
        %7070 = vmatpush1.bf16.msra.mxu0 %v6855
        %7071 = vmatprep.subr.bf16.mxu0 %v6864
        %7072 = vmatpush1.bf16.msra.mxu0 %v6863
        %7073 = vmatprep.subr.bf16.mxu0 %v6872
        %7074 = vmatpush1.bf16.msra.mxu0 %v6871
        %7075 = vmatprep.subr.bf16.mxu0 %v6880
        %7076 = vmatpush1.bf16.msra.mxu0 %v6879
        %7077 = vmatprep.subr.bf16.mxu0 %v6888
        %7078 = vmatpush1.bf16.msra.mxu0 %v6887
        %7079 = vmatprep.subr.bf16.mxu0 %v6896
        %7080 = vmatpush1.bf16.msra.mxu0 %v6895
        %7081 = vmatprep.subr.bf16.mxu0 %v6904
        %7082 = vmatpush1.bf16.msra.mxu0 %v6903
        %7083 = vmatprep.subr.bf16.mxu0 %v6912
        %7084 = vmatpush1.bf16.msra.mxu0 %v6911
        %7085 = vmatprep.subr.bf16.mxu0 %v6920
        %7086 = vmatpush1.bf16.msra.mxu0 %v6919
        %7087 = vmatprep.mubr.bf16.mxu0 %v6363
        %7088 = vmatmul.mubr.bf16.gmra.mrb[0].mxu0 %v6362
        %v7089 = vpop.f32.mrb[0].mxu0
        %v7090 = vadd.f32 %v6378, %v7089
        %v7091 = vpop.f32.mrb[0].mxu0
        %v7092 = vadd.f32 %v6382, %v7091
        %v7093 = vpop.f32.mrb[0].mxu0
        %v7094 = vadd.f32 %v6378, %v7093
        %v7095 = vpop.f32.mrb[0].mxu0
        %v7096 = vadd.f32 %v6382, %v7095
        %7097 = vmatprep.mubr.bf16.mxu0 %v6365
        %7098 = vmatmul.mubr.bf16.gmra.mrb[0].mxu0 %v6364
        %v7099 = vpop.f32.mrb[0].mxu0
        %v7100 = vadd.f32 %v6378, %v7099
        %v7101 = vpop.f32.mrb[0].mxu0
        %v7102 = vadd.f32 %v6382, %v7101
        %v7103 = vpop.f32.mrb[0].mxu0
        %v7104 = vadd.f32 %v6378, %v7103
        %v7105 = vpop.f32.mrb[0].mxu0
        %v7106 = vadd.f32 %v6382, %v7105
        %7107 = vmatprep.mubr.bf16.mxu0 %v6367
        %7108 = vmatmul.mubr.bf16.gmra.mrb[0].mxu0 %v6366
        %v7109 = vpop.f32.mrb[0].mxu0
        %v7110 = vadd.f32 %v6378, %v7109
        %v7111 = vpop.f32.mrb[0].mxu0
        %v7112 = vadd.f32 %v6382, %v7111
        %v7113 = vpop.f32.mrb[0].mxu0
        %v7114 = vadd.f32 %v6378, %v7113
        %v7115 = vpop.f32.mrb[0].mxu0
        %v7116 = vadd.f32 %v6382, %v7115
        %7117 = vmatprep.mubr.bf16.mxu0 %v6369
        %7118 = vmatmul.mubr.bf16.gmra.mrb[0].mxu0 %v6368
        %v7119 = vpop.f32.mrb[0].mxu0
        %v7120 = vadd.f32 %v6378, %v7119
        %v7121 = vpop.f32.mrb[0].mxu0
        %v7122 = vadd.f32 %v6382, %v7121
        %v7123 = vpop.f32.mrb[0].mxu0
        %v7124 = vadd.f32 %v6378, %v7123
        %v7125 = vpop.f32.mrb[0].mxu0
        %v7126 = vadd.f32 %v6382, %v7125
        %7127 = vmatprep.mubr.bf16.mxu0 %v6371
        %7128 = vmatmul.mubr.bf16.gmra.mrb[0].mxu0 %v6370
        %v7129 = vpop.f32.mrb[0].mxu0
        %v7130 = vadd.f32 %v6378, %v7129
        %v7131 = vpop.f32.mrb[0].mxu0
        %v7132 = vadd.f32 %v6382, %v7131
        %v7133 = vpop.f32.mrb[0].mxu0
        %v7134 = vadd.f32 %v6378, %v7133
        %v7135 = vpop.f32.mrb[0].mxu0
        %v7136 = vadd.f32 %v6382, %v7135
        %7137 = vmatprep.mubr.bf16.mxu0 %v6373
        %7138 = vmatmul.mubr.bf16.gmra.mrb[0].mxu0 %v6372
        %v7139 = vpop.f32.mrb[0].mxu0
        %v7140 = vadd.f32 %v6378, %v7139
        %v7141 = vpop.f32.mrb[0].mxu0
        %v7142 = vadd.f32 %v6382, %v7141
        %v7143 = vpop.f32.mrb[0].mxu0
        %v7144 = vadd.f32 %v6378, %v7143
        %v7145 = vpop.f32.mrb[0].mxu0
        %v7146 = vadd.f32 %v6382, %v7145
        %7147 = vdwg.mxu0
        %7148 = vmatprep.subr.bf16.mxu0 %v6802
        %7149 = vmatpush1.bf16.msra.mxu0 %v6801
        %7150 = vmatprep.subr.bf16.mxu0 %v6810
        %7151 = vmatpush1.bf16.msra.mxu0 %v6809
        %7152 = vmatprep.subr.bf16.mxu0 %v6818
        %7153 = vmatpush1.bf16.msra.mxu0 %v6817
        %7154 = vmatprep.subr.bf16.mxu0 %v6826
        %7155 = vmatpush1.bf16.msra.mxu0 %v6825
        %7156 = vmatprep.subr.bf16.mxu0 %v6834
        %7157 = vmatpush1.bf16.msra.mxu0 %v6833
        %7158 = vmatprep.subr.bf16.mxu0 %v6842
        %7159 = vmatpush1.bf16.msra.mxu0 %v6841
        %7160 = vmatprep.subr.bf16.mxu0 %v6850
        %7161 = vmatpush1.bf16.msra.mxu0 %v6849
        %7162 = vmatprep.subr.bf16.mxu0 %v6858
        %7163 = vmatpush1.bf16.msra.mxu0 %v6857
        %7164 = vmatprep.subr.bf16.mxu0 %v6866
        %7165 = vmatpush1.bf16.msra.mxu0 %v6865
        %7166 = vmatprep.subr.bf16.mxu0 %v6874
        %7167 = vmatpush1.bf16.msra.mxu0 %v6873
        %7168 = vmatprep.subr.bf16.mxu0 %v6882
        %7169 = vmatpush1.bf16.msra.mxu0 %v6881
        %7170 = vmatprep.subr.bf16.mxu0 %v6890
        %7171 = vmatpush1.bf16.msra.mxu0 %v6889
        %7172 = vmatprep.subr.bf16.mxu0 %v6898
        %7173 = vmatpush1.bf16.msra.mxu0 %v6897
        %7174 = vmatprep.subr.bf16.mxu0 %v6906
        %7175 = vmatpush1.bf16.msra.mxu0 %v6905
        %7176 = vmatprep.subr.bf16.mxu0 %v6914
        %7177 = vmatpush1.bf16.msra.mxu0 %v6913
        %7178 = vmatprep.subr.bf16.mxu0 %v6922
        %7179 = vmatpush1.bf16.msra.mxu0 %v6921
        %7180 = vmatprep.mubr.bf16.mxu0 %v6363
        %7181 = vmatmul.mubr.bf16.gmra.mrb[0].mxu0 %v6362
        %v7182 = vpop.f32.mrb[0].mxu0
        %v7183 = vadd.f32 %v6386, %v7182
        %v7184 = vpop.f32.mrb[0].mxu0
        %v7185 = vadd.f32 %v6390, %v7184
        %v7186 = vpop.f32.mrb[0].mxu0
        %v7187 = vadd.f32 %v6386, %v7186
        %v7188 = vpop.f32.mrb[0].mxu0
        %v7189 = vadd.f32 %v6390, %v7188
        %7190 = vmatprep.mubr.bf16.mxu0 %v6365
        %7191 = vmatmul.mubr.bf16.gmra.mrb[0].mxu0 %v6364
        %v7192 = vpop.f32.mrb[0].mxu0
        %v7193 = vadd.f32 %v6386, %v7192
        %v7194 = vpop.f32.mrb[0].mxu0
        %v7195 = vadd.f32 %v6390, %v7194
        %v7196 = vpop.f32.mrb[0].mxu0
        %v7197 = vadd.f32 %v6386, %v7196
        %v7198 = vpop.f32.mrb[0].mxu0
        %v7199 = vadd.f32 %v6390, %v7198
        %7200 = vmatprep.mubr.bf16.mxu0 %v6367
        %7201 = vmatmul.mubr.bf16.gmra.mrb[0].mxu0 %v6366
        %v7202 = vpop.f32.mrb[0].mxu0
        %v7203 = vadd.f32 %v6386, %v7202
        %v7204 = vpop.f32.mrb[0].mxu0
        %v7205 = vadd.f32 %v6390, %v7204
        %v7206 = vpop.f32.mrb[0].mxu0
        %v7207 = vadd.f32 %v6386, %v7206
        %v7208 = vpop.f32.mrb[0].mxu0
        %v7209 = vadd.f32 %v6390, %v7208
        %7210 = vmatprep.mubr.bf16.mxu0 %v6369
        %7211 = vmatmul.mubr.bf16.gmra.mrb[0].mxu0 %v6368
        %v7212 = vpop.f32.mrb[0].mxu0
        %v7213 = vadd.f32 %v6386, %v7212
        %v7214 = vpop.f32.mrb[0].mxu0
        %v7215 = vadd.f32 %v6390, %v7214
        %v7216 = vpop.f32.mrb[0].mxu0
        %v7217 = vadd.f32 %v6386, %v7216
        %v7218 = vpop.f32.mrb[0].mxu0
        %v7219 = vadd.f32 %v6390, %v7218
        %7220 = vmatprep.mubr.bf16.mxu0 %v6371
        %7221 = vmatmul.mubr.bf16.gmra.mrb[0].mxu0 %v6370
        %v7222 = vpop.f32.mrb[0].mxu0
        %v7223 = vadd.f32 %v6386, %v7222
        %v7224 = vpop.f32.mrb[0].mxu0
        %v7225 = vadd.f32 %v6390, %v7224
        %v7226 = vpop.f32.mrb[0].mxu0
        %v7227 = vadd.f32 %v6386, %v7226
        %v7228 = vpop.f32.mrb[0].mxu0
        %v7229 = vadd.f32 %v6390, %v7228
        %7230 = vmatprep.mubr.bf16.mxu0 %v6373
        %7231 = vmatmul.mubr.bf16.gmra.mrb[0].mxu0 %v6372
        %v7232 = vpop.f32.mrb[0].mxu0
        %v7233 = vadd.f32 %v6386, %v7232
        %v7234 = vpop.f32.mrb[0].mxu0
        %v7235 = vadd.f32 %v6390, %v7234
        %v7236 = vpop.f32.mrb[0].mxu0
        %v7237 = vadd.f32 %v6386, %v7236
        %v7238 = vpop.f32.mrb[0].mxu0
        %v7239 = vadd.f32 %v6390, %v7238
        %7240 = vdwg.mxu0
        %7241 = vmatprep.subr.bf16.mxu0 %v6804
        %7242 = vmatpush1.bf16.msra.mxu0 %v6803
        %7243 = vmatprep.subr.bf16.mxu0 %v6812
        %7244 = vmatpush1.bf16.msra.mxu0 %v6811
        %7245 = vmatprep.subr.bf16.mxu0 %v6820
        %7246 = vmatpush1.bf16.msra.mxu0 %v6819
        %7247 = vmatprep.subr.bf16.mxu0 %v6828
        %7248 = vmatpush1.bf16.msra.mxu0 %v6827
        %7249 = vmatprep.subr.bf16.mxu0 %v6836
        %7250 = vmatpush1.bf16.msra.mxu0 %v6835
        %7251 = vmatprep.subr.bf16.mxu0 %v6844
        %7252 = vmatpush1.bf16.msra.mxu0 %v6843
        %7253 = vmatprep.subr.bf16.mxu0 %v6852
        %7254 = vmatpush1.bf16.msra.mxu0 %v6851
        %7255 = vmatprep.subr.bf16.mxu0 %v6860
        %7256 = vmatpush1.bf16.msra.mxu0 %v6859
        %7257 = vmatprep.subr.bf16.mxu0 %v6868
        %7258 = vmatpush1.bf16.msra.mxu0 %v6867
        %7259 = vmatprep.subr.bf16.mxu0 %v6876
        %7260 = vmatpush1.bf16.msra.mxu0 %v6875
        %7261 = vmatprep.subr.bf16.mxu0 %v6884
        %7262 = vmatpush1.bf16.msra.mxu0 %v6883
        %7263 = vmatprep.subr.bf16.mxu0 %v6892
        %7264 = vmatpush1.bf16.msra.mxu0 %v6891
        %7265 = vmatprep.subr.bf16.mxu0 %v6900
        %7266 = vmatpush1.bf16.msra.mxu0 %v6899
        %7267 = vmatprep.subr.bf16.mxu0 %v6908
        %7268 = vmatpush1.bf16.msra.mxu0 %v6907
        %7269 = vmatprep.subr.bf16.mxu0 %v6916
        %7270 = vmatpush1.bf16.msra.mxu0 %v6915
        %7271 = vmatprep.subr.bf16.mxu0 %v6924
        %7272 = vmatpush1.bf16.msra.mxu0 %v6923
        %7273 = vmatprep.mubr.bf16.mxu0 %v6363
        %7274 = vmatmul.mubr.bf16.gmra.mrb[0].mxu0 %v6362
        %v7275 = vpop.f32.mrb[0].mxu0
        %v7276 = vadd.f32 %v6394, %v7275
        %v7277 = vpop.f32.mrb[0].mxu0
        %v7278 = vadd.f32 %v6398, %v7277
        %v7279 = vpop.f32.mrb[0].mxu0
        %v7280 = vadd.f32 %v6394, %v7279
        %v7281 = vpop.f32.mrb[0].mxu0
        %v7282 = vadd.f32 %v6398, %v7281
        %7283 = vmatprep.mubr.bf16.mxu0 %v6365
        %7284 = vmatmul.mubr.bf16.gmra.mrb[0].mxu0 %v6364
        %v7285 = vpop.f32.mrb[0].mxu0
        %v7286 = vadd.f32 %v6394, %v7285
        %v7287 = vpop.f32.mrb[0].mxu0
        %v7288 = vadd.f32 %v6398, %v7287
        %v7289 = vpop.f32.mrb[0].mxu0
        %v7290 = vadd.f32 %v6394, %v7289
        %v7291 = vpop.f32.mrb[0].mxu0
        %v7292 = vadd.f32 %v6398, %v7291
        %7293 = vmatprep.mubr.bf16.mxu0 %v6367
        %7294 = vmatmul.mubr.bf16.gmra.mrb[0].mxu0 %v6366
        %v7295 = vpop.f32.mrb[0].mxu0
        %v7296 = vadd.f32 %v6394, %v7295
        %v7297 = vpop.f32.mrb[0].mxu0
        %v7298 = vadd.f32 %v6398, %v7297
        %v7299 = vpop.f32.mrb[0].mxu0
        %v7300 = vadd.f32 %v6394, %v7299
        %v7301 = vpop.f32.mrb[0].mxu0
        %v7302 = vadd.f32 %v6398, %v7301
        %7303 = vmatprep.mubr.bf16.mxu0 %v6369
        %7304 = vmatmul.mubr.bf16.gmra.mrb[0].mxu0 %v6368
        %v7305 = vpop.f32.mrb[0].mxu0
        %v7306 = vadd.f32 %v6394, %v7305
        %v7307 = vpop.f32.mrb[0].mxu0
        %v7308 = vadd.f32 %v6398, %v7307
        %v7309 = vpop.f32.mrb[0].mxu0
        %v7310 = vadd.f32 %v6394, %v7309
        %v7311 = vpop.f32.mrb[0].mxu0
        %v7312 = vadd.f32 %v6398, %v7311
        %7313 = vmatprep.mubr.bf16.mxu0 %v6371
        %7314 = vmatmul.mubr.bf16.gmra.mrb[0].mxu0 %v6370
        %v7315 = vpop.f32.mrb[0].mxu0
        %v7316 = vadd.f32 %v6394, %v7315
        %v7317 = vpop.f32.mrb[0].mxu0
        %v7318 = vadd.f32 %v6398, %v7317
        %v7319 = vpop.f32.mrb[0].mxu0
        %v7320 = vadd.f32 %v6394, %v7319
        %v7321 = vpop.f32.mrb[0].mxu0
        %v7322 = vadd.f32 %v6398, %v7321
        %7323 = vmatprep.mubr.bf16.mxu0 %v6373
        %7324 = vmatmul.mubr.bf16.gmra.mrb[0].mxu0 %v6372
        %v7325 = vpop.f32.mrb[0].mxu0
        %v7326 = vadd.f32 %v6394, %v7325
        %v7327 = vpop.f32.mrb[0].mxu0
        %v7328 = vadd.f32 %v6398, %v7327
        %v7329 = vpop.f32.mrb[0].mxu0
        %v7330 = vadd.f32 %v6394, %v7329
        %v7331 = vpop.f32.mrb[0].mxu0
        %v7332 = vadd.f32 %v6398, %v7331
        %7333 = vdwg.mxu0
        %7334 = vmatprep.subr.bf16.mxu0 %v6806
        %7335 = vmatpush1.bf16.msra.mxu0 %v6805
        %7336 = vmatprep.subr.bf16.mxu0 %v6814
        %7337 = vmatpush1.bf16.msra.mxu0 %v6813
        %7338 = vmatprep.subr.bf16.mxu0 %v6822
        %7339 = vmatpush1.bf16.msra.mxu0 %v6821
        %7340 = vmatprep.subr.bf16.mxu0 %v6830
        %7341 = vmatpush1.bf16.msra.mxu0 %v6829
        %7342 = vmatprep.subr.bf16.mxu0 %v6838
        %7343 = vmatpush1.bf16.msra.mxu0 %v6837
        %7344 = vmatprep.subr.bf16.mxu0 %v6846
        %7345 = vmatpush1.bf16.msra.mxu0 %v6845
        %7346 = vmatprep.subr.bf16.mxu0 %v6854
        %7347 = vmatpush1.bf16.msra.mxu0 %v6853
        %7348 = vmatprep.subr.bf16.mxu0 %v6862
        %7349 = vmatpush1.bf16.msra.mxu0 %v6861
        %7350 = vmatprep.subr.bf16.mxu0 %v6870
        %7351 = vmatpush1.bf16.msra.mxu0 %v6869
        %7352 = vmatprep.subr.bf16.mxu0 %v6878
        %7353 = vmatpush1.bf16.msra.mxu0 %v6877
        %7354 = vmatprep.subr.bf16.mxu0 %v6886
        %7355 = vmatpush1.bf16.msra.mxu0 %v6885
        %7356 = vmatprep.subr.bf16.mxu0 %v6894
        %7357 = vmatpush1.bf16.msra.mxu0 %v6893
        %7358 = vmatprep.subr.bf16.mxu0 %v6902
        %7359 = vmatpush1.bf16.msra.mxu0 %v6901
        %7360 = vmatprep.subr.bf16.mxu0 %v6910
        %7361 = vmatpush1.bf16.msra.mxu0 %v6909
        %7362 = vmatprep.subr.bf16.mxu0 %v6918
        %7363 = vmatpush1.bf16.msra.mxu0 %v6917
        %7364 = vmatprep.subr.bf16.mxu0 %v6926
        %7365 = vmatpush1.bf16.msra.mxu0 %v6925
        %7366 = vmatprep.mubr.bf16.mxu0 %v6363
        %7367 = vmatmul.mubr.bf16.gmra.mrb[0].mxu0 %v6362
        %v7368 = vpop.f32.mrb[0].mxu0
        %v7369 = vadd.f32 %v6402, %v7368
        %v7370 = vpop.f32.mrb[0].mxu0
        %v7371 = vadd.f32 %v6406, %v7370
        %v7372 = vpop.f32.mrb[0].mxu0
        %v7373 = vadd.f32 %v6402, %v7372
        %v7374 = vpop.f32.mrb[0].mxu0
        %v7375 = vadd.f32 %v6406, %v7374
        %7376 = vmatprep.mubr.bf16.mxu0 %v6365
        %7377 = vmatmul.mubr.bf16.gmra.mrb[0].mxu0 %v6364
        %v7378 = vpop.f32.mrb[0].mxu0
        %v7379 = vadd.f32 %v6402, %v7378
        %v7380 = vpop.f32.mrb[0].mxu0
        %v7381 = vadd.f32 %v6406, %v7380
        %v7382 = vpop.f32.mrb[0].mxu0
        %v7383 = vadd.f32 %v6402, %v7382
        %v7384 = vpop.f32.mrb[0].mxu0
        %v7385 = vadd.f32 %v6406, %v7384
        %7386 = vmatprep.mubr.bf16.mxu0 %v6367
        %7387 = vmatmul.mubr.bf16.gmra.mrb[0].mxu0 %v6366
        %v7388 = vpop.f32.mrb[0].mxu0
        %v7389 = vadd.f32 %v6402, %v7388
        %v7390 = vpop.f32.mrb[0].mxu0
        %v7391 = vadd.f32 %v6406, %v7390
        %v7392 = vpop.f32.mrb[0].mxu0
        %v7393 = vadd.f32 %v6402, %v7392
        %v7394 = vpop.f32.mrb[0].mxu0
        %v7395 = vadd.f32 %v6406, %v7394
        %7396 = vmatprep.mubr.bf16.mxu0 %v6369
        %7397 = vmatmul.mubr.bf16.gmra.mrb[0].mxu0 %v6368
        %v7398 = vpop.f32.mrb[0].mxu0
        %v7399 = vadd.f32 %v6402, %v7398
        %v7400 = vpop.f32.mrb[0].mxu0
        %v7401 = vadd.f32 %v6406, %v7400
        %v7402 = vpop.f32.mrb[0].mxu0
        %v7403 = vadd.f32 %v6402, %v7402
        %v7404 = vpop.f32.mrb[0].mxu0
        %v7405 = vadd.f32 %v6406, %v7404
        %7406 = vmatprep.mubr.bf16.mxu0 %v6371
        %7407 = vmatmul.mubr.bf16.gmra.mrb[0].mxu0 %v6370
        %v7408 = vpop.f32.mrb[0].mxu0
        %v7409 = vadd.f32 %v6402, %v7408
        %v7410 = vpop.f32.mrb[0].mxu0
        %v7411 = vadd.f32 %v6406, %v7410
        %v7412 = vpop.f32.mrb[0].mxu0
        %v7413 = vadd.f32 %v6402, %v7412
        %v7414 = vpop.f32.mrb[0].mxu0
        %v7415 = vadd.f32 %v6406, %v7414
        %7416 = vmatprep.mubr.bf16.mxu0 %v6373
        %7417 = vmatmul.mubr.bf16.gmra.mrb[0].mxu0 %v6372
        %v7418 = vpop.f32.mrb[0].mxu0
        %v7419 = vadd.f32 %v6402, %v7418
        %v7420 = vpop.f32.mrb[0].mxu0
        %v7421 = vadd.f32 %v6406, %v7420
        %v7422 = vpop.f32.mrb[0].mxu0
        %v7423 = vadd.f32 %v6402, %v7422
        %v7424 = vpop.f32.mrb[0].mxu0
        %v7425 = vadd.f32 %v6406, %v7424
        %7426 = vdwg.mxu0
        %v7427 = vmul.f32 %v7090, %v7090
        %v7428 = vmul.f32 %v7092, %v7092
        %v7429 = vmul.f32 %v7183, %v7183
        %v7430 = vmul.f32 %v7185, %v7185
        %v7431 = vmul.f32 %v7276, %v7276
        %v7432 = vmul.f32 %v7278, %v7278
        %v7433 = vmul.f32 %v7369, %v7369
        %v7434 = vmul.f32 %v7371, %v7371
        %v7435 = vmul.f32 %v7094, %v7094
        %v7436 = vmul.f32 %v7096, %v7096
        %v7437 = vmul.f32 %v7187, %v7187
        %v7438 = vmul.f32 %v7189, %v7189
        %v7439 = vmul.f32 %v7280, %v7280
        %v7440 = vmul.f32 %v7282, %v7282
        %v7441 = vmul.f32 %v7373, %v7373
        %v7442 = vmul.f32 %v7375, %v7375
        %v7443 = vmul.f32 %v7100, %v7100
        %v7444 = vmul.f32 %v7102, %v7102
        %v7445 = vmul.f32 %v7193, %v7193
        %v7446 = vmul.f32 %v7195, %v7195
        %v7447 = vmul.f32 %v7286, %v7286
        %v7448 = vmul.f32 %v7288, %v7288
        %v7449 = vmul.f32 %v7379, %v7379
        %v7450 = vmul.f32 %v7381, %v7381
        %v7451 = vmul.f32 %v7104, %v7104
        %v7452 = vmul.f32 %v7106, %v7106
        %v7453 = vmul.f32 %v7197, %v7197
        %v7454 = vmul.f32 %v7199, %v7199
        %v7455 = vmul.f32 %v7290, %v7290
        %v7456 = vmul.f32 %v7292, %v7292
        %v7457 = vmul.f32 %v7383, %v7383
        %v7458 = vmul.f32 %v7385, %v7385
        %v7459 = vmul.f32 %v7110, %v7110
        %v7460 = vmul.f32 %v7112, %v7112
        %v7461 = vmul.f32 %v7203, %v7203
        %v7462 = vmul.f32 %v7205, %v7205
        %v7463 = vmul.f32 %v7296, %v7296
        %v7464 = vmul.f32 %v7298, %v7298
        %v7465 = vmul.f32 %v7389, %v7389
        %v7466 = vmul.f32 %v7391, %v7391
        %v7467 = vmul.f32 %v7114, %v7114
        %v7468 = vmul.f32 %v7116, %v7116
        %v7469 = vmul.f32 %v7207, %v7207
        %v7470 = vmul.f32 %v7209, %v7209
        %v7471 = vmul.f32 %v7300, %v7300
        %v7472 = vmul.f32 %v7302, %v7302
        %v7473 = vmul.f32 %v7393, %v7393
        %v7474 = vmul.f32 %v7395, %v7395
        %v7475 = vmul.f32 %v7120, %v7120
        %v7476 = vmul.f32 %v7122, %v7122
        %v7477 = vmul.f32 %v7213, %v7213
        %v7478 = vmul.f32 %v7215, %v7215
        %v7479 = vmul.f32 %v7306, %v7306
        %v7480 = vmul.f32 %v7308, %v7308
        %v7481 = vmul.f32 %v7399, %v7399
        %v7482 = vmul.f32 %v7401, %v7401
        %v7483 = vmul.f32 %v7124, %v7124
        %v7484 = vmul.f32 %v7126, %v7126
        %v7485 = vmul.f32 %v7217, %v7217
        %v7486 = vmul.f32 %v7219, %v7219
        %v7487 = vmul.f32 %v7310, %v7310
        %v7488 = vmul.f32 %v7312, %v7312
        %v7489 = vmul.f32 %v7403, %v7403
        %v7490 = vmul.f32 %v7405, %v7405
        %v7491 = vmul.f32 %v7130, %v7130
        %v7492 = vmul.f32 %v7132, %v7132
        %v7493 = vmul.f32 %v7223, %v7223
        %v7494 = vmul.f32 %v7225, %v7225
        %v7495 = vmul.f32 %v7316, %v7316
        %v7496 = vmul.f32 %v7318, %v7318
        %v7497 = vmul.f32 %v7409, %v7409
        %v7498 = vmul.f32 %v7411, %v7411
        %v7499 = vmul.f32 %v7134, %v7134
        %v7500 = vmul.f32 %v7136, %v7136
        %v7501 = vmul.f32 %v7227, %v7227
        %v7502 = vmul.f32 %v7229, %v7229
        %v7503 = vmul.f32 %v7320, %v7320
        %v7504 = vmul.f32 %v7322, %v7322
        %v7505 = vmul.f32 %v7413, %v7413
        %v7506 = vmul.f32 %v7415, %v7415
        %v7507 = vmul.f32 %v7140, %v7140
        %v7508 = vmul.f32 %v7142, %v7142
        %v7509 = vmul.f32 %v7233, %v7233
        %v7510 = vmul.f32 %v7235, %v7235
        %v7511 = vmul.f32 %v7326, %v7326
        %v7512 = vmul.f32 %v7328, %v7328
        %v7513 = vmul.f32 %v7419, %v7419
        %v7514 = vmul.f32 %v7421, %v7421
        %v7515 = vmul.f32 %v7144, %v7144
        %v7516 = vmul.f32 %v7146, %v7146
        %v7517 = vmul.f32 %v7237, %v7237
        %v7518 = vmul.f32 %v7239, %v7239
        %v7519 = vmul.f32 %v7330, %v7330
        %v7520 = vmul.f32 %v7332, %v7332
        %v7521 = vmul.f32 %v7423, %v7423
        %v7522 = vmul.f32 %v7425, %v7425
        %v7523 = vmul.f32 %v7090, %v7427
        %v7524 = vmul.f32 %v7092, %v7428
        %v7525 = vmul.f32 %v7183, %v7429
        %v7526 = vmul.f32 %v7185, %v7430
        %v7527 = vmul.f32 %v7276, %v7431
        %v7528 = vmul.f32 %v7278, %v7432
        %v7529 = vmul.f32 %v7369, %v7433
        %v7530 = vmul.f32 %v7371, %v7434
        %v7531 = vmul.f32 %v7094, %v7435
        %v7532 = vmul.f32 %v7096, %v7436
        %v7533 = vmul.f32 %v7187, %v7437
        %v7534 = vmul.f32 %v7189, %v7438
        %v7535 = vmul.f32 %v7280, %v7439
        %v7536 = vmul.f32 %v7282, %v7440
        %v7537 = vmul.f32 %v7373, %v7441
        %v7538 = vmul.f32 %v7375, %v7442
        %v7539 = vmul.f32 %v7100, %v7443
        %v7540 = vmul.f32 %v7102, %v7444
        %v7541 = vmul.f32 %v7193, %v7445
        %v7542 = vmul.f32 %v7195, %v7446
        %v7543 = vmul.f32 %v7286, %v7447
        %v7544 = vmul.f32 %v7288, %v7448
        %v7545 = vmul.f32 %v7379, %v7449
        %v7546 = vmul.f32 %v7381, %v7450
        %v7547 = vmul.f32 %v7104, %v7451
        %v7548 = vmul.f32 %v7106, %v7452
        %v7549 = vmul.f32 %v7197, %v7453
        %v7550 = vmul.f32 %v7199, %v7454
        %v7551 = vmul.f32 %v7290, %v7455
        %v7552 = vmul.f32 %v7292, %v7456
        %v7553 = vmul.f32 %v7383, %v7457
        %v7554 = vmul.f32 %v7385, %v7458
        %v7555 = vmul.f32 %v7110, %v7459
        %v7556 = vmul.f32 %v7112, %v7460
        %v7557 = vmul.f32 %v7203, %v7461
        %v7558 = vmul.f32 %v7205, %v7462
        %v7559 = vmul.f32 %v7296, %v7463
        %v7560 = vmul.f32 %v7298, %v7464
        %v7561 = vmul.f32 %v7389, %v7465
        %v7562 = vmul.f32 %v7391, %v7466
        %v7563 = vmul.f32 %v7114, %v7467
        %v7564 = vmul.f32 %v7116, %v7468
        %v7565 = vmul.f32 %v7207, %v7469
        %v7566 = vmul.f32 %v7209, %v7470
        %v7567 = vmul.f32 %v7300, %v7471
        %v7568 = vmul.f32 %v7302, %v7472
        %v7569 = vmul.f32 %v7393, %v7473
        %v7570 = vmul.f32 %v7395, %v7474
        %v7571 = vmul.f32 %v7120, %v7475
        %v7572 = vmul.f32 %v7122, %v7476
        %v7573 = vmul.f32 %v7213, %v7477
        %v7574 = vmul.f32 %v7215, %v7478
        %v7575 = vmul.f32 %v7306, %v7479
        %v7576 = vmul.f32 %v7308, %v7480
        %v7577 = vmul.f32 %v7399, %v7481
        %v7578 = vmul.f32 %v7401, %v7482
        %v7579 = vmul.f32 %v7124, %v7483
        %v7580 = vmul.f32 %v7126, %v7484
        %v7581 = vmul.f32 %v7217, %v7485
        %v7582 = vmul.f32 %v7219, %v7486
        %v7583 = vmul.f32 %v7310, %v7487
        %v7584 = vmul.f32 %v7312, %v7488
        %v7585 = vmul.f32 %v7403, %v7489
        %v7586 = vmul.f32 %v7405, %v7490
        %v7587 = vmul.f32 %v7130, %v7491
        %v7588 = vmul.f32 %v7132, %v7492
        %v7589 = vmul.f32 %v7223, %v7493
        %v7590 = vmul.f32 %v7225, %v7494
        %v7591 = vmul.f32 %v7316, %v7495
        %v7592 = vmul.f32 %v7318, %v7496
        %v7593 = vmul.f32 %v7409, %v7497
        %v7594 = vmul.f32 %v7411, %v7498
        %v7595 = vmul.f32 %v7134, %v7499
        %v7596 = vmul.f32 %v7136, %v7500
        %v7597 = vmul.f32 %v7227, %v7501
        %v7598 = vmul.f32 %v7229, %v7502
        %v7599 = vmul.f32 %v7320, %v7503
        %v7600 = vmul.f32 %v7322, %v7504
        %v7601 = vmul.f32 %v7413, %v7505
        %v7602 = vmul.f32 %v7415, %v7506
        %v7603 = vmul.f32 %v7140, %v7507
        %v7604 = vmul.f32 %v7142, %v7508
        %v7605 = vmul.f32 %v7233, %v7509
        %v7606 = vmul.f32 %v7235, %v7510
        %v7607 = vmul.f32 %v7326, %v7511
        %v7608 = vmul.f32 %v7328, %v7512
        %v7609 = vmul.f32 %v7419, %v7513
        %v7610 = vmul.f32 %v7421, %v7514
        %v7611 = vmul.f32 %v7144, %v7515
        %v7612 = vmul.f32 %v7146, %v7516
        %v7613 = vmul.f32 %v7237, %v7517
        %v7614 = vmul.f32 %v7239, %v7518
        %v7615 = vmul.f32 %v7330, %v7519
        %v7616 = vmul.f32 %v7332, %v7520
        %v7617 = vmul.f32 %v7423, %v7521
        %v7618 = vmul.f32 %v7425, %v7522
        %v7619 = vmul.f32 %v7523, 0.044715
        %v7620 = vmul.f32 %v7524, 0.044715
        %v7621 = vmul.f32 %v7525, 0.044715
        %v7622 = vmul.f32 %v7526, 0.044715
        %v7623 = vmul.f32 %v7527, 0.044715
        %v7624 = vmul.f32 %v7528, 0.044715
        %v7625 = vmul.f32 %v7529, 0.044715
        %v7626 = vmul.f32 %v7530, 0.044715
        %v7627 = vmul.f32 %v7531, 0.044715
        %v7628 = vmul.f32 %v7532, 0.044715
        %v7629 = vmul.f32 %v7533, 0.044715
        %v7630 = vmul.f32 %v7534, 0.044715
        %v7631 = vmul.f32 %v7535, 0.044715
        %v7632 = vmul.f32 %v7536, 0.044715
        %v7633 = vmul.f32 %v7537, 0.044715
        %v7634 = vmul.f32 %v7538, 0.044715
        %v7635 = vmul.f32 %v7539, 0.044715
        %v7636 = vmul.f32 %v7540, 0.044715
        %v7637 = vmul.f32 %v7541, 0.044715
        %v7638 = vmul.f32 %v7542, 0.044715
        %v7639 = vmul.f32 %v7543, 0.044715
        %v7640 = vmul.f32 %v7544, 0.044715
        %v7641 = vmul.f32 %v7545, 0.044715
        %v7642 = vmul.f32 %v7546, 0.044715
        %v7643 = vmul.f32 %v7547, 0.044715
        %v7644 = vmul.f32 %v7548, 0.044715
        %v7645 = vmul.f32 %v7549, 0.044715
        %v7646 = vmul.f32 %v7550, 0.044715
        %v7647 = vmul.f32 %v7551, 0.044715
        %v7648 = vmul.f32 %v7552, 0.044715
        %v7649 = vmul.f32 %v7553, 0.044715
        %v7650 = vmul.f32 %v7554, 0.044715
        %v7651 = vmul.f32 %v7555, 0.044715
        %v7652 = vmul.f32 %v7556, 0.044715
        %v7653 = vmul.f32 %v7557, 0.044715
        %v7654 = vmul.f32 %v7558, 0.044715
        %v7655 = vmul.f32 %v7559, 0.044715
        %v7656 = vmul.f32 %v7560, 0.044715
        %v7657 = vmul.f32 %v7561, 0.044715
        %v7658 = vmul.f32 %v7562, 0.044715
        %v7659 = vmul.f32 %v7563, 0.044715
        %v7660 = vmul.f32 %v7564, 0.044715
        %v7661 = vmul.f32 %v7565, 0.044715
        %v7662 = vmul.f32 %v7566, 0.044715
        %v7663 = vmul.f32 %v7567, 0.044715
        %v7664 = vmul.f32 %v7568, 0.044715
        %v7665 = vmul.f32 %v7569, 0.044715
        %v7666 = vmul.f32 %v7570, 0.044715
        %v7667 = vmul.f32 %v7571, 0.044715
        %v7668 = vmul.f32 %v7572, 0.044715
        %v7669 = vmul.f32 %v7573, 0.044715
        %v7670 = vmul.f32 %v7574, 0.044715
        %v7671 = vmul.f32 %v7575, 0.044715
        %v7672 = vmul.f32 %v7576, 0.044715
        %v7673 = vmul.f32 %v7577, 0.044715
        %v7674 = vmul.f32 %v7578, 0.044715
        %v7675 = vmul.f32 %v7579, 0.044715
        %v7676 = vmul.f32 %v7580, 0.044715
        %v7677 = vmul.f32 %v7581, 0.044715
        %v7678 = vmul.f32 %v7582, 0.044715
        %v7679 = vmul.f32 %v7583, 0.044715
        %v7680 = vmul.f32 %v7584, 0.044715
        %v7681 = vmul.f32 %v7585, 0.044715
        %v7682 = vmul.f32 %v7586, 0.044715
        %v7683 = vmul.f32 %v7587, 0.044715
        %v7684 = vmul.f32 %v7588, 0.044715
        %v7685 = vmul.f32 %v7589, 0.044715
        %v7686 = vmul.f32 %v7590, 0.044715
        %v7687 = vmul.f32 %v7591, 0.044715
        %v7688 = vmul.f32 %v7592, 0.044715
        %v7689 = vmul.f32 %v7593, 0.044715
        %v7690 = vmul.f32 %v7594, 0.044715
        %v7691 = vmul.f32 %v7595, 0.044715
        %v7692 = vmul.f32 %v7596, 0.044715
        %v7693 = vmul.f32 %v7597, 0.044715
        %v7694 = vmul.f32 %v7598, 0.044715
        %v7695 = vmul.f32 %v7599, 0.044715
        %v7696 = vmul.f32 %v7600, 0.044715
        %v7697 = vmul.f32 %v7601, 0.044715
        %v7698 = vmul.f32 %v7602, 0.044715
        %v7699 = vmul.f32 %v7603, 0.044715
        %v7700 = vmul.f32 %v7604, 0.044715
        %v7701 = vmul.f32 %v7605, 0.044715
        %v7702 = vmul.f32 %v7606, 0.044715
        %v7703 = vmul.f32 %v7607, 0.044715
        %v7704 = vmul.f32 %v7608, 0.044715
        %v7705 = vmul.f32 %v7609, 0.044715
        %v7706 = vmul.f32 %v7610, 0.044715
        %v7707 = vmul.f32 %v7611, 0.044715
        %v7708 = vmul.f32 %v7612, 0.044715
        %v7709 = vmul.f32 %v7613, 0.044715
        %v7710 = vmul.f32 %v7614, 0.044715
        %v7711 = vmul.f32 %v7615, 0.044715
        %v7712 = vmul.f32 %v7616, 0.044715
        %v7713 = vmul.f32 %v7617, 0.044715
        %v7714 = vmul.f32 %v7618, 0.044715
        %v7715 = vadd.f32 %v7090, %v7619
        %v7716 = vadd.f32 %v7092, %v7620
        %v7717 = vadd.f32 %v7183, %v7621
        %v7718 = vadd.f32 %v7185, %v7622
        %v7719 = vadd.f32 %v7276, %v7623
        %v7720 = vadd.f32 %v7278, %v7624
        %v7721 = vadd.f32 %v7369, %v7625
        %v7722 = vadd.f32 %v7371, %v7626
        %v7723 = vadd.f32 %v7094, %v7627
        %v7724 = vadd.f32 %v7096, %v7628
        %v7725 = vadd.f32 %v7187, %v7629
        %v7726 = vadd.f32 %v7189, %v7630
        %v7727 = vadd.f32 %v7280, %v7631
        %v7728 = vadd.f32 %v7282, %v7632
        %v7729 = vadd.f32 %v7373, %v7633
        %v7730 = vadd.f32 %v7375, %v7634
        %v7731 = vadd.f32 %v7100, %v7635
        %v7732 = vadd.f32 %v7102, %v7636
        %v7733 = vadd.f32 %v7193, %v7637
        %v7734 = vadd.f32 %v7195, %v7638
        %v7735 = vadd.f32 %v7286, %v7639
        %v7736 = vadd.f32 %v7288, %v7640
        %v7737 = vadd.f32 %v7379, %v7641
        %v7738 = vadd.f32 %v7381, %v7642
        %v7739 = vadd.f32 %v7104, %v7643
        %v7740 = vadd.f32 %v7106, %v7644
        %v7741 = vadd.f32 %v7197, %v7645
        %v7742 = vadd.f32 %v7199, %v7646
        %v7743 = vadd.f32 %v7290, %v7647
        %v7744 = vadd.f32 %v7292, %v7648
        %v7745 = vadd.f32 %v7383, %v7649
        %v7746 = vadd.f32 %v7385, %v7650
        %v7747 = vadd.f32 %v7110, %v7651
        %v7748 = vadd.f32 %v7112, %v7652
        %v7749 = vadd.f32 %v7203, %v7653
        %v7750 = vadd.f32 %v7205, %v7654
        %v7751 = vadd.f32 %v7296, %v7655
        %v7752 = vadd.f32 %v7298, %v7656
        %v7753 = vadd.f32 %v7389, %v7657
        %v7754 = vadd.f32 %v7391, %v7658
        %v7755 = vadd.f32 %v7114, %v7659
        %v7756 = vadd.f32 %v7116, %v7660
        %v7757 = vadd.f32 %v7207, %v7661
        %v7758 = vadd.f32 %v7209, %v7662
        %v7759 = vadd.f32 %v7300, %v7663
        %v7760 = vadd.f32 %v7302, %v7664
        %v7761 = vadd.f32 %v7393, %v7665
        %v7762 = vadd.f32 %v7395, %v7666
        %v7763 = vadd.f32 %v7120, %v7667
        %v7764 = vadd.f32 %v7122, %v7668
        %v7765 = vadd.f32 %v7213, %v7669
        %v7766 = vadd.f32 %v7215, %v7670
        %v7767 = vadd.f32 %v7306, %v7671
        %v7768 = vadd.f32 %v7308, %v7672
        %v7769 = vadd.f32 %v7399, %v7673
        %v7770 = vadd.f32 %v7401, %v7674
        %v7771 = vadd.f32 %v7124, %v7675
        %v7772 = vadd.f32 %v7126, %v7676
        %v7773 = vadd.f32 %v7217, %v7677
        %v7774 = vadd.f32 %v7219, %v7678
        %v7775 = vadd.f32 %v7310, %v7679
        %v7776 = vadd.f32 %v7312, %v7680
        %v7777 = vadd.f32 %v7403, %v7681
        %v7778 = vadd.f32 %v7405, %v7682
        %v7779 = vadd.f32 %v7130, %v7683
        %v7780 = vadd.f32 %v7132, %v7684
        %v7781 = vadd.f32 %v7223, %v7685
        %v7782 = vadd.f32 %v7225, %v7686
        %v7783 = vadd.f32 %v7316, %v7687
        %v7784 = vadd.f32 %v7318, %v7688
        %v7785 = vadd.f32 %v7409, %v7689
        %v7786 = vadd.f32 %v7411, %v7690
        %v7787 = vadd.f32 %v7134, %v7691
        %v7788 = vadd.f32 %v7136, %v7692
        %v7789 = vadd.f32 %v7227, %v7693
        %v7790 = vadd.f32 %v7229, %v7694
        %v7791 = vadd.f32 %v7320, %v7695
        %v7792 = vadd.f32 %v7322, %v7696
        %v7793 = vadd.f32 %v7413, %v7697
        %v7794 = vadd.f32 %v7415, %v7698
        %v7795 = vadd.f32 %v7140, %v7699
        %v7796 = vadd.f32 %v7142, %v7700
        %v7797 = vadd.f32 %v7233, %v7701
        %v7798 = vadd.f32 %v7235, %v7702
        %v7799 = vadd.f32 %v7326, %v7703
        %v7800 = vadd.f32 %v7328, %v7704
        %v7801 = vadd.f32 %v7419, %v7705
        %v7802 = vadd.f32 %v7421, %v7706
        %v7803 = vadd.f32 %v7144, %v7707
        %v7804 = vadd.f32 %v7146, %v7708
        %v7805 = vadd.f32 %v7237, %v7709
        %v7806 = vadd.f32 %v7239, %v7710
        %v7807 = vadd.f32 %v7330, %v7711
        %v7808 = vadd.f32 %v7332, %v7712
        %v7809 = vadd.f32 %v7423, %v7713
        %v7810 = vadd.f32 %v7425, %v7714
        %v7811 = vmul.f32 %v7715, 0.7978846
        %v7812 = vmul.f32 %v7716, 0.7978846
        %v7813 = vmul.f32 %v7717, 0.7978846
        %v7814 = vmul.f32 %v7718, 0.7978846
        %v7815 = vmul.f32 %v7719, 0.7978846
        %v7816 = vmul.f32 %v7720, 0.7978846
        %v7817 = vmul.f32 %v7721, 0.7978846
        %v7818 = vmul.f32 %v7722, 0.7978846
        %v7819 = vmul.f32 %v7723, 0.7978846
        %v7820 = vmul.f32 %v7724, 0.7978846
        %v7821 = vmul.f32 %v7725, 0.7978846
        %v7822 = vmul.f32 %v7726, 0.7978846
        %v7823 = vmul.f32 %v7727, 0.7978846
        %v7824 = vmul.f32 %v7728, 0.7978846
        %v7825 = vmul.f32 %v7729, 0.7978846
        %v7826 = vmul.f32 %v7730, 0.7978846
        %v7827 = vmul.f32 %v7731, 0.7978846
        %v7828 = vmul.f32 %v7732, 0.7978846
        %v7829 = vmul.f32 %v7733, 0.7978846
        %v7830 = vmul.f32 %v7734, 0.7978846
        %v7831 = vmul.f32 %v7735, 0.7978846
        %v7832 = vmul.f32 %v7736, 0.7978846
        %v7833 = vmul.f32 %v7737, 0.7978846
        %v7834 = vmul.f32 %v7738, 0.7978846
        %v7835 = vmul.f32 %v7739, 0.7978846
        %v7836 = vmul.f32 %v7740, 0.7978846
        %v7837 = vmul.f32 %v7741, 0.7978846
        %v7838 = vmul.f32 %v7742, 0.7978846
        %v7839 = vmul.f32 %v7743, 0.7978846
        %v7840 = vmul.f32 %v7744, 0.7978846
        %v7841 = vmul.f32 %v7745, 0.7978846
        %v7842 = vmul.f32 %v7746, 0.7978846
        %v7843 = vmul.f32 %v7747, 0.7978846
        %v7844 = vmul.f32 %v7748, 0.7978846
        %v7845 = vmul.f32 %v7749, 0.7978846
        %v7846 = vmul.f32 %v7750, 0.7978846
        %v7847 = vmul.f32 %v7751, 0.7978846
        %v7848 = vmul.f32 %v7752, 0.7978846
        %v7849 = vmul.f32 %v7753, 0.7978846
        %v7850 = vmul.f32 %v7754, 0.7978846
        %v7851 = vmul.f32 %v7755, 0.7978846
        %v7852 = vmul.f32 %v7756, 0.7978846
        %v7853 = vmul.f32 %v7757, 0.7978846
        %v7854 = vmul.f32 %v7758, 0.7978846
        %v7855 = vmul.f32 %v7759, 0.7978846
        %v7856 = vmul.f32 %v7760, 0.7978846
        %v7857 = vmul.f32 %v7761, 0.7978846
        %v7858 = vmul.f32 %v7762, 0.7978846
        %v7859 = vmul.f32 %v7763, 0.7978846
        %v7860 = vmul.f32 %v7764, 0.7978846
        %v7861 = vmul.f32 %v7765, 0.7978846
        %v7862 = vmul.f32 %v7766, 0.7978846
        %v7863 = vmul.f32 %v7767, 0.7978846
        %v7864 = vmul.f32 %v7768, 0.7978846
        %v7865 = vmul.f32 %v7769, 0.7978846
        %v7866 = vmul.f32 %v7770, 0.7978846
        %v7867 = vmul.f32 %v7771, 0.7978846
        %v7868 = vmul.f32 %v7772, 0.7978846
        %v7869 = vmul.f32 %v7773, 0.7978846
        %v7870 = vmul.f32 %v7774, 0.7978846
        %v7871 = vmul.f32 %v7775, 0.7978846
        %v7872 = vmul.f32 %v7776, 0.7978846
        %v7873 = vmul.f32 %v7777, 0.7978846
        %v7874 = vmul.f32 %v7778, 0.7978846
        %v7875 = vmul.f32 %v7779, 0.7978846
        %v7876 = vmul.f32 %v7780, 0.7978846
        %v7877 = vmul.f32 %v7781, 0.7978846
        %v7878 = vmul.f32 %v7782, 0.7978846
        %v7879 = vmul.f32 %v7783, 0.7978846
        %v7880 = vmul.f32 %v7784, 0.7978846
        %v7881 = vmul.f32 %v7785, 0.7978846
        %v7882 = vmul.f32 %v7786, 0.7978846
        %v7883 = vmul.f32 %v7787, 0.7978846
        %v7884 = vmul.f32 %v7788, 0.7978846
        %v7885 = vmul.f32 %v7789, 0.7978846
        %v7886 = vmul.f32 %v7790, 0.7978846
        %v7887 = vmul.f32 %v7791, 0.7978846
        %v7888 = vmul.f32 %v7792, 0.7978846
        %v7889 = vmul.f32 %v7793, 0.7978846
        %v7890 = vmul.f32 %v7794, 0.7978846
        %v7891 = vmul.f32 %v7795, 0.7978846
        %v7892 = vmul.f32 %v7796, 0.7978846
        %v7893 = vmul.f32 %v7797, 0.7978846
        %v7894 = vmul.f32 %v7798, 0.7978846
        %v7895 = vmul.f32 %v7799, 0.7978846
        %v7896 = vmul.f32 %v7800, 0.7978846
        %v7897 = vmul.f32 %v7801, 0.7978846
        %v7898 = vmul.f32 %v7802, 0.7978846
        %v7899 = vmul.f32 %v7803, 0.7978846
        %v7900 = vmul.f32 %v7804, 0.7978846
        %v7901 = vmul.f32 %v7805, 0.7978846
        %v7902 = vmul.f32 %v7806, 0.7978846
        %v7903 = vmul.f32 %v7807, 0.7978846
        %v7904 = vmul.f32 %v7808, 0.7978846
        %v7905 = vmul.f32 %v7809, 0.7978846
        %v7906 = vmul.f32 %v7810, 0.7978846
        %v7907 = vtanh.pop %v7811
        %v7908 = vtanh.pop %v7812
        %v7909 = vtanh.pop %v7813
        %v7910 = vtanh.pop %v7814
        %v7911 = vtanh.pop %v7815
        %v7912 = vtanh.pop %v7816
        %v7913 = vtanh.pop %v7817
        %v7914 = vtanh.pop %v7818
        %v7915 = vtanh.pop %v7819
        %v7916 = vtanh.pop %v7820
        %v7917 = vtanh.pop %v7821
        %v7918 = vtanh.pop %v7822
        %v7919 = vtanh.pop %v7823
        %v7920 = vtanh.pop %v7824
        %v7921 = vtanh.pop %v7825
        %v7922 = vtanh.pop %v7826
        %v7923 = vtanh.pop %v7827
        %v7924 = vtanh.pop %v7828
        %v7925 = vtanh.pop %v7829
        %v7926 = vtanh.pop %v7830
        %v7927 = vtanh.pop %v7831
        %v7928 = vtanh.pop %v7832
        %v7929 = vtanh.pop %v7833
        %v7930 = vtanh.pop %v7834
        %v7931 = vtanh.pop %v7835
        %v7932 = vtanh.pop %v7836
        %v7933 = vtanh.pop %v7837
        %v7934 = vtanh.pop %v7838
        %v7935 = vtanh.pop %v7839
        %v7936 = vtanh.pop %v7840
        %v7937 = vtanh.pop %v7841
        %v7938 = vtanh.pop %v7842
        %v7939 = vtanh.pop %v7843
        %v7940 = vtanh.pop %v7844
        %v7941 = vtanh.pop %v7845
        %v7942 = vtanh.pop %v7846
        %v7943 = vtanh.pop %v7847
        %v7944 = vtanh.pop %v7848
        %v7945 = vtanh.pop %v7849
        %v7946 = vtanh.pop %v7850
        %v7947 = vtanh.pop %v7851
        %v7948 = vtanh.pop %v7852
        %v7949 = vtanh.pop %v7853
        %v7950 = vtanh.pop %v7854
        %v7951 = vtanh.pop %v7855
        %v7952 = vtanh.pop %v7856
        %v7953 = vtanh.pop %v7857
        %v7954 = vtanh.pop %v7858
        %v7955 = vtanh.pop %v7859
        %v7956 = vtanh.pop %v7860
        %v7957 = vtanh.pop %v7861
        %v7958 = vtanh.pop %v7862
        %v7959 = vtanh.pop %v7863
        %v7960 = vtanh.pop %v7864
        %v7961 = vtanh.pop %v7865
        %v7962 = vtanh.pop %v7866
        %v7963 = vtanh.pop %v7867
        %v7964 = vtanh.pop %v7868
        %v7965 = vtanh.pop %v7869
        %v7966 = vtanh.pop %v7870
        %v7967 = vtanh.pop %v7871
        %v7968 = vtanh.pop %v7872
        %v7969 = vtanh.pop %v7873
        %v7970 = vtanh.pop %v7874
        %v7971 = vtanh.pop %v7875
        %v7972 = vtanh.pop %v7876
        %v7973 = vtanh.pop %v7877
        %v7974 = vtanh.pop %v7878
        %v7975 = vtanh.pop %v7879
        %v7976 = vtanh.pop %v7880
        %v7977 = vtanh.pop %v7881
        %v7978 = vtanh.pop %v7882
        %v7979 = vtanh.pop %v7883
        %v7980 = vtanh.pop %v7884
        %v7981 = vtanh.pop %v7885
        %v7982 = vtanh.pop %v7886
        %v7983 = vtanh.pop %v7887
        %v7984 = vtanh.pop %v7888
        %v7985 = vtanh.pop %v7889
        %v7986 = vtanh.pop %v7890
        %v7987 = vtanh.pop %v7891
        %v7988 = vtanh.pop %v7892
        %v7989 = vtanh.pop %v7893
        %v7990 = vtanh.pop %v7894
        %v7991 = vtanh.pop %v7895
        %v7992 = vtanh.pop %v7896
        %v7993 = vtanh.pop %v7897
        %v7994 = vtanh.pop %v7898
        %v7995 = vtanh.pop %v7899
        %v7996 = vtanh.pop %v7900
        %v7997 = vtanh.pop %v7901
        %v7998 = vtanh.pop %v7902
        %v7999 = vtanh.pop %v7903
        %v8000 = vtanh.pop %v7904
        %v8001 = vtanh.pop %v7905
        %v8002 = vtanh.pop %v7906
        %v8003 = vadd.f32 %v7907, 1.0
        %v8004 = vadd.f32 %v7908, 1.0
        %v8005 = vadd.f32 %v7909, 1.0
        %v8006 = vadd.f32 %v7910, 1.0
        %v8007 = vadd.f32 %v7911, 1.0
        %v8008 = vadd.f32 %v7912, 1.0
        %v8009 = vadd.f32 %v7913, 1.0
        %v8010 = vadd.f32 %v7914, 1.0
        %v8011 = vadd.f32 %v7915, 1.0
        %v8012 = vadd.f32 %v7916, 1.0
        %v8013 = vadd.f32 %v7917, 1.0
        %v8014 = vadd.f32 %v7918, 1.0
        %v8015 = vadd.f32 %v7919, 1.0
        %v8016 = vadd.f32 %v7920, 1.0
        %v8017 = vadd.f32 %v7921, 1.0
        %v8018 = vadd.f32 %v7922, 1.0
        %v8019 = vadd.f32 %v7923, 1.0
        %v8020 = vadd.f32 %v7924, 1.0
        %v8021 = vadd.f32 %v7925, 1.0
        %v8022 = vadd.f32 %v7926, 1.0
        %v8023 = vadd.f32 %v7927, 1.0
        %v8024 = vadd.f32 %v7928, 1.0
        %v8025 = vadd.f32 %v7929, 1.0
        %v8026 = vadd.f32 %v7930, 1.0
        %v8027 = vadd.f32 %v7931, 1.0
        %v8028 = vadd.f32 %v7932, 1.0
        %v8029 = vadd.f32 %v7933, 1.0
        %v8030 = vadd.f32 %v7934, 1.0
        %v8031 = vadd.f32 %v7935, 1.0
        %v8032 = vadd.f32 %v7936, 1.0
        %v8033 = vadd.f32 %v7937, 1.0
        %v8034 = vadd.f32 %v7938, 1.0
        %v8035 = vadd.f32 %v7939, 1.0
        %v8036 = vadd.f32 %v7940, 1.0
        %v8037 = vadd.f32 %v7941, 1.0
        %v8038 = vadd.f32 %v7942, 1.0
        %v8039 = vadd.f32 %v7943, 1.0
        %v8040 = vadd.f32 %v7944, 1.0
        %v8041 = vadd.f32 %v7945, 1.0
        %v8042 = vadd.f32 %v7946, 1.0
        %v8043 = vadd.f32 %v7947, 1.0
        %v8044 = vadd.f32 %v7948, 1.0
        %v8045 = vadd.f32 %v7949, 1.0
        %v8046 = vadd.f32 %v7950, 1.0
        %v8047 = vadd.f32 %v7951, 1.0
        %v8048 = vadd.f32 %v7952, 1.0
        %v8049 = vadd.f32 %v7953, 1.0
        %v8050 = vadd.f32 %v7954, 1.0
        %v8051 = vadd.f32 %v7955, 1.0
        %v8052 = vadd.f32 %v7956, 1.0
        %v8053 = vadd.f32 %v7957, 1.0
        %v8054 = vadd.f32 %v7958, 1.0
        %v8055 = vadd.f32 %v7959, 1.0
        %v8056 = vadd.f32 %v7960, 1.0
        %v8057 = vadd.f32 %v7961, 1.0
        %v8058 = vadd.f32 %v7962, 1.0
        %v8059 = vadd.f32 %v7963, 1.0
        %v8060 = vadd.f32 %v7964, 1.0
        %v8061 = vadd.f32 %v7965, 1.0
        %v8062 = vadd.f32 %v7966, 1.0
        %v8063 = vadd.f32 %v7967, 1.0
        %v8064 = vadd.f32 %v7968, 1.0
        %v8065 = vadd.f32 %v7969, 1.0
        %v8066 = vadd.f32 %v7970, 1.0
        %v8067 = vadd.f32 %v7971, 1.0
        %v8068 = vadd.f32 %v7972, 1.0
        %v8069 = vadd.f32 %v7973, 1.0
        %v8070 = vadd.f32 %v7974, 1.0
        %v8071 = vadd.f32 %v7975, 1.0
        %v8072 = vadd.f32 %v7976, 1.0
        %v8073 = vadd.f32 %v7977, 1.0
        %v8074 = vadd.f32 %v7978, 1.0
        %v8075 = vadd.f32 %v7979, 1.0
        %v8076 = vadd.f32 %v7980, 1.0
        %v8077 = vadd.f32 %v7981, 1.0
        %v8078 = vadd.f32 %v7982, 1.0
        %v8079 = vadd.f32 %v7983, 1.0
        %v8080 = vadd.f32 %v7984, 1.0
        %v8081 = vadd.f32 %v7985, 1.0
        %v8082 = vadd.f32 %v7986, 1.0
        %v8083 = vadd.f32 %v7987, 1.0
        %v8084 = vadd.f32 %v7988, 1.0
        %v8085 = vadd.f32 %v7989, 1.0
        %v8086 = vadd.f32 %v7990, 1.0
        %v8087 = vadd.f32 %v7991, 1.0
        %v8088 = vadd.f32 %v7992, 1.0
        %v8089 = vadd.f32 %v7993, 1.0
        %v8090 = vadd.f32 %v7994, 1.0
        %v8091 = vadd.f32 %v7995, 1.0
        %v8092 = vadd.f32 %v7996, 1.0
        %v8093 = vadd.f32 %v7997, 1.0
        %v8094 = vadd.f32 %v7998, 1.0
        %v8095 = vadd.f32 %v7999, 1.0
        %v8096 = vadd.f32 %v8000, 1.0
        %v8097 = vadd.f32 %v8001, 1.0
        %v8098 = vadd.f32 %v8002, 1.0
        %v8099 = vmul.f32 %v8003, 0.5
        %v8100 = vmul.f32 %v8004, 0.5
        %v8101 = vmul.f32 %v8005, 0.5
        %v8102 = vmul.f32 %v8006, 0.5
        %v8103 = vmul.f32 %v8007, 0.5
        %v8104 = vmul.f32 %v8008, 0.5
        %v8105 = vmul.f32 %v8009, 0.5
        %v8106 = vmul.f32 %v8010, 0.5
        %v8107 = vmul.f32 %v8011, 0.5
        %v8108 = vmul.f32 %v8012, 0.5
        %v8109 = vmul.f32 %v8013, 0.5
        %v8110 = vmul.f32 %v8014, 0.5
        %v8111 = vmul.f32 %v8015, 0.5
        %v8112 = vmul.f32 %v8016, 0.5
        %v8113 = vmul.f32 %v8017, 0.5
        %v8114 = vmul.f32 %v8018, 0.5
        %v8115 = vmul.f32 %v8019, 0.5
        %v8116 = vmul.f32 %v8020, 0.5
        %v8117 = vmul.f32 %v8021, 0.5
        %v8118 = vmul.f32 %v8022, 0.5
        %v8119 = vmul.f32 %v8023, 0.5
        %v8120 = vmul.f32 %v8024, 0.5
        %v8121 = vmul.f32 %v8025, 0.5
        %v8122 = vmul.f32 %v8026, 0.5
        %v8123 = vmul.f32 %v8027, 0.5
        %v8124 = vmul.f32 %v8028, 0.5
        %v8125 = vmul.f32 %v8029, 0.5
        %v8126 = vmul.f32 %v8030, 0.5
        %v8127 = vmul.f32 %v8031, 0.5
        %v8128 = vmul.f32 %v8032, 0.5
        %v8129 = vmul.f32 %v8033, 0.5
        %v8130 = vmul.f32 %v8034, 0.5
        %v8131 = vmul.f32 %v8035, 0.5
        %v8132 = vmul.f32 %v8036, 0.5
        %v8133 = vmul.f32 %v8037, 0.5
        %v8134 = vmul.f32 %v8038, 0.5
        %v8135 = vmul.f32 %v8039, 0.5
        %v8136 = vmul.f32 %v8040, 0.5
        %v8137 = vmul.f32 %v8041, 0.5
        %v8138 = vmul.f32 %v8042, 0.5
        %v8139 = vmul.f32 %v8043, 0.5
        %v8140 = vmul.f32 %v8044, 0.5
        %v8141 = vmul.f32 %v8045, 0.5
        %v8142 = vmul.f32 %v8046, 0.5
        %v8143 = vmul.f32 %v8047, 0.5
        %v8144 = vmul.f32 %v8048, 0.5
        %v8145 = vmul.f32 %v8049, 0.5
        %v8146 = vmul.f32 %v8050, 0.5
        %v8147 = vmul.f32 %v8051, 0.5
        %v8148 = vmul.f32 %v8052, 0.5
        %v8149 = vmul.f32 %v8053, 0.5
        %v8150 = vmul.f32 %v8054, 0.5
        %v8151 = vmul.f32 %v8055, 0.5
        %v8152 = vmul.f32 %v8056, 0.5
        %v8153 = vmul.f32 %v8057, 0.5
        %v8154 = vmul.f32 %v8058, 0.5
        %v8155 = vmul.f32 %v8059, 0.5
        %v8156 = vmul.f32 %v8060, 0.5
        %v8157 = vmul.f32 %v8061, 0.5
        %v8158 = vmul.f32 %v8062, 0.5
        %v8159 = vmul.f32 %v8063, 0.5
        %v8160 = vmul.f32 %v8064, 0.5
        %v8161 = vmul.f32 %v8065, 0.5
        %v8162 = vmul.f32 %v8066, 0.5
        %v8163 = vmul.f32 %v8067, 0.5
        %v8164 = vmul.f32 %v8068, 0.5
        %v8165 = vmul.f32 %v8069, 0.5
        %v8166 = vmul.f32 %v8070, 0.5
        %v8167 = vmul.f32 %v8071, 0.5
        %v8168 = vmul.f32 %v8072, 0.5
        %v8169 = vmul.f32 %v8073, 0.5
        %v8170 = vmul.f32 %v8074, 0.5
        %v8171 = vmul.f32 %v8075, 0.5
        %v8172 = vmul.f32 %v8076, 0.5
        %v8173 = vmul.f32 %v8077, 0.5
        %v8174 = vmul.f32 %v8078, 0.5
        %v8175 = vmul.f32 %v8079, 0.5
        %v8176 = vmul.f32 %v8080, 0.5
        %v8177 = vmul.f32 %v8081, 0.5
        %v8178 = vmul.f32 %v8082, 0.5
        %v8179 = vmul.f32 %v8083, 0.5
        %v8180 = vmul.f32 %v8084, 0.5
        %v8181 = vmul.f32 %v8085, 0.5
        %v8182 = vmul.f32 %v8086, 0.5
        %v8183 = vmul.f32 %v8087, 0.5
        %v8184 = vmul.f32 %v8088, 0.5
        %v8185 = vmul.f32 %v8089, 0.5
        %v8186 = vmul.f32 %v8090, 0.5
        %v8187 = vmul.f32 %v8091, 0.5
        %v8188 = vmul.f32 %v8092, 0.5
        %v8189 = vmul.f32 %v8093, 0.5
        %v8190 = vmul.f32 %v8094, 0.5
        %v8191 = vmul.f32 %v8095, 0.5
        %v8192 = vmul.f32 %v8096, 0.5
        %v8193 = vmul.f32 %v8097, 0.5
        %v8194 = vmul.f32 %v8098, 0.5
        %v8195 = vmul.f32 %v7090, %v8099
        %v8196 = vmul.f32 %v7092, %v8100
        %v8197 = vmul.f32 %v7183, %v8101
        %v8198 = vmul.f32 %v7185, %v8102
        %v8199 = vmul.f32 %v7276, %v8103
        %v8200 = vmul.f32 %v7278, %v8104
        %v8201 = vmul.f32 %v7369, %v8105
        %v8202 = vmul.f32 %v7371, %v8106
        %v8203 = vmul.f32 %v7094, %v8107
        %v8204 = vmul.f32 %v7096, %v8108
        %v8205 = vmul.f32 %v7187, %v8109
        %v8206 = vmul.f32 %v7189, %v8110
        %v8207 = vmul.f32 %v7280, %v8111
        %v8208 = vmul.f32 %v7282, %v8112
        %v8209 = vmul.f32 %v7373, %v8113
        %v8210 = vmul.f32 %v7375, %v8114
        %v8211 = vmul.f32 %v7100, %v8115
        %v8212 = vmul.f32 %v7102, %v8116
        %v8213 = vmul.f32 %v7193, %v8117
        %v8214 = vmul.f32 %v7195, %v8118
        %v8215 = vmul.f32 %v7286, %v8119
        %v8216 = vmul.f32 %v7288, %v8120
        %v8217 = vmul.f32 %v7379, %v8121
        %v8218 = vmul.f32 %v7381, %v8122
        %v8219 = vmul.f32 %v7104, %v8123
        %v8220 = vmul.f32 %v7106, %v8124
        %v8221 = vmul.f32 %v7197, %v8125
        %v8222 = vmul.f32 %v7199, %v8126
        %v8223 = vmul.f32 %v7290, %v8127
        %v8224 = vmul.f32 %v7292, %v8128
        %v8225 = vmul.f32 %v7383, %v8129
        %v8226 = vmul.f32 %v7385, %v8130
        %v8227 = vmul.f32 %v7110, %v8131
        %v8228 = vmul.f32 %v7112, %v8132
        %v8229 = vmul.f32 %v7203, %v8133
        %v8230 = vmul.f32 %v7205, %v8134
        %v8231 = vmul.f32 %v7296, %v8135
        %v8232 = vmul.f32 %v7298, %v8136
        %v8233 = vmul.f32 %v7389, %v8137
        %v8234 = vmul.f32 %v7391, %v8138
        %v8235 = vmul.f32 %v7114, %v8139
        %v8236 = vmul.f32 %v7116, %v8140
        %v8237 = vmul.f32 %v7207, %v8141
        %v8238 = vmul.f32 %v7209, %v8142
        %v8239 = vmul.f32 %v7300, %v8143
        %v8240 = vmul.f32 %v7302, %v8144
        %v8241 = vmul.f32 %v7393, %v8145
        %v8242 = vmul.f32 %v7395, %v8146
        %v8243 = vmul.f32 %v7120, %v8147
        %v8244 = vmul.f32 %v7122, %v8148
        %v8245 = vmul.f32 %v7213, %v8149
        %v8246 = vmul.f32 %v7215, %v8150
        %v8247 = vmul.f32 %v7306, %v8151
        %v8248 = vmul.f32 %v7308, %v8152
        %v8249 = vmul.f32 %v7399, %v8153
        %v8250 = vmul.f32 %v7401, %v8154
        %v8251 = vmul.f32 %v7124, %v8155
        %v8252 = vmul.f32 %v7126, %v8156
        %v8253 = vmul.f32 %v7217, %v8157
        %v8254 = vmul.f32 %v7219, %v8158
        %v8255 = vmul.f32 %v7310, %v8159
        %v8256 = vmul.f32 %v7312, %v8160
        %v8257 = vmul.f32 %v7403, %v8161
        %v8258 = vmul.f32 %v7405, %v8162
        %v8259 = vmul.f32 %v7130, %v8163
        %v8260 = vmul.f32 %v7132, %v8164
        %v8261 = vmul.f32 %v7223, %v8165
        %v8262 = vmul.f32 %v7225, %v8166
        %v8263 = vmul.f32 %v7316, %v8167
        %v8264 = vmul.f32 %v7318, %v8168
        %v8265 = vmul.f32 %v7409, %v8169
        %v8266 = vmul.f32 %v7411, %v8170
        %v8267 = vmul.f32 %v7134, %v8171
        %v8268 = vmul.f32 %v7136, %v8172
        %v8269 = vmul.f32 %v7227, %v8173
        %v8270 = vmul.f32 %v7229, %v8174
        %v8271 = vmul.f32 %v7320, %v8175
        %v8272 = vmul.f32 %v7322, %v8176
        %v8273 = vmul.f32 %v7413, %v8177
        %v8274 = vmul.f32 %v7415, %v8178
        %v8275 = vmul.f32 %v7140, %v8179
        %v8276 = vmul.f32 %v7142, %v8180
        %v8277 = vmul.f32 %v7233, %v8181
        %v8278 = vmul.f32 %v7235, %v8182
        %v8279 = vmul.f32 %v7326, %v8183
        %v8280 = vmul.f32 %v7328, %v8184
        %v8281 = vmul.f32 %v7419, %v8185
        %v8282 = vmul.f32 %v7421, %v8186
        %v8283 = vmul.f32 %v7144, %v8187
        %v8284 = vmul.f32 %v7146, %v8188
        %v8285 = vmul.f32 %v7237, %v8189
        %v8286 = vmul.f32 %v7239, %v8190
        %v8287 = vmul.f32 %v7330, %v8191
        %v8288 = vmul.f32 %v7332, %v8192
        %v8289 = vmul.f32 %v7423, %v8193
        %v8290 = vmul.f32 %v7425, %v8194
        %v8291 = vpack.c.bf16 %v8203, %v8195
        %v8292 = vpack.c.bf16 %v8204, %v8196
        %v8293 = vpack.c.bf16 %v8205, %v8197
        %v8294 = vpack.c.bf16 %v8206, %v8198
        %v8295 = vpack.c.bf16 %v8207, %v8199
        %v8296 = vpack.c.bf16 %v8208, %v8200
        %v8297 = vpack.c.bf16 %v8209, %v8201
        %v8298 = vpack.c.bf16 %v8210, %v8202
        %v8299 = vpack.c.bf16 %v8219, %v8211
        %v8300 = vpack.c.bf16 %v8220, %v8212
        %v8301 = vpack.c.bf16 %v8221, %v8213
        %v8302 = vpack.c.bf16 %v8222, %v8214
        %v8303 = vpack.c.bf16 %v8223, %v8215
        %v8304 = vpack.c.bf16 %v8224, %v8216
        %v8305 = vpack.c.bf16 %v8225, %v8217
        %v8306 = vpack.c.bf16 %v8226, %v8218
        %v8307 = vpack.c.bf16 %v8235, %v8227
        %v8308 = vpack.c.bf16 %v8236, %v8228
        %v8309 = vpack.c.bf16 %v8237, %v8229
        %v8310 = vpack.c.bf16 %v8238, %v8230
        %v8311 = vpack.c.bf16 %v8239, %v8231
        %v8312 = vpack.c.bf16 %v8240, %v8232
        %v8313 = vpack.c.bf16 %v8241, %v8233
        %v8314 = vpack.c.bf16 %v8242, %v8234
        %v8315 = vpack.c.bf16 %v8251, %v8243
        %v8316 = vpack.c.bf16 %v8252, %v8244
        %v8317 = vpack.c.bf16 %v8253, %v8245
        %v8318 = vpack.c.bf16 %v8254, %v8246
        %v8319 = vpack.c.bf16 %v8255, %v8247
        %v8320 = vpack.c.bf16 %v8256, %v8248
        %v8321 = vpack.c.bf16 %v8257, %v8249
        %v8322 = vpack.c.bf16 %v8258, %v8250
        %v8323 = vpack.c.bf16 %v8267, %v8259
        %v8324 = vpack.c.bf16 %v8268, %v8260
        %v8325 = vpack.c.bf16 %v8269, %v8261
        %v8326 = vpack.c.bf16 %v8270, %v8262
        %v8327 = vpack.c.bf16 %v8271, %v8263
        %v8328 = vpack.c.bf16 %v8272, %v8264
        %v8329 = vpack.c.bf16 %v8273, %v8265
        %v8330 = vpack.c.bf16 %v8274, %v8266
        %v8331 = vpack.c.bf16 %v8283, %v8275
        %v8332 = vpack.c.bf16 %v8284, %v8276
        %v8333 = vpack.c.bf16 %v8285, %v8277
        %v8334 = vpack.c.bf16 %v8286, %v8278
        %v8335 = vpack.c.bf16 %v8287, %v8279
        %v8336 = vpack.c.bf16 %v8288, %v8280
        %v8337 = vpack.c.bf16 %v8289, %v8281
        %v8338 = vpack.c.bf16 %v8290, %v8282
        %v8339 = vlaneseq
        %v8340 = vshrl.u32 %v8339, 7
        %v8341 = vsub.s32 3, %v8340
        %v8342 = vrot.slane %v1017, %v8341
        %v8343 = vlaneseq
        %v8344 = vshrl.u32 %v8343, 7
        %v8345 = vsub.s32 3, %v8344
        %v8346 = vrot.slane %v1018, %v8345
        %v8475 = vunpack.c.l.b16 %v887
        %v8476 = vunpack.c.h.b16 %v887
        %v8477 = vunpack.c.l.b16 %v888
        %v8478 = vunpack.c.h.b16 %v888
        %v8479 = vunpack.c.l.b16 %v889
        %v8480 = vunpack.c.h.b16 %v889
        %v8481 = vunpack.c.l.b16 %v890
        %v8482 = vunpack.c.h.b16 %v890
        %v8483 = vunpack.c.l.b16 %v891
        %v8484 = vunpack.c.h.b16 %v891
        %v8485 = vunpack.c.l.b16 %v892
        %v8486 = vunpack.c.h.b16 %v892
        %v8487 = vunpack.c.l.b16 %v893
        %v8488 = vunpack.c.h.b16 %v893
        %v8489 = vunpack.c.l.b16 %v894
        %v8490 = vunpack.c.h.b16 %v894
        %v8491 = vunpack.c.l.b16 %v895
        %v8492 = vunpack.c.h.b16 %v895
        %v8493 = vunpack.c.l.b16 %v896
        %v8494 = vunpack.c.h.b16 %v896
        %v8495 = vunpack.c.l.b16 %v897
        %v8496 = vunpack.c.h.b16 %v897
        %v8497 = vunpack.c.l.b16 %v898
        %v8498 = vunpack.c.h.b16 %v898
        %v8499 = vunpack.c.l.b16 %v899
        %v8500 = vunpack.c.h.b16 %v899
        %v8501 = vunpack.c.l.b16 %v900
        %v8502 = vunpack.c.h.b16 %v900
        %v8503 = vunpack.c.l.b16 %v901
        %v8504 = vunpack.c.h.b16 %v901
        %v8505 = vunpack.c.l.b16 %v902
        %v8506 = vunpack.c.h.b16 %v902
        %v8507 = vunpack.c.l.b16 %v903
        %v8508 = vunpack.c.h.b16 %v903
        %v8509 = vunpack.c.l.b16 %v904
        %v8510 = vunpack.c.h.b16 %v904
        %v8511 = vunpack.c.l.b16 %v905
        %v8512 = vunpack.c.h.b16 %v905
        %v8513 = vunpack.c.l.b16 %v906
        %v8514 = vunpack.c.h.b16 %v906
        %v8515 = vunpack.c.l.b16 %v907
        %v8516 = vunpack.c.h.b16 %v907
        %v8517 = vunpack.c.l.b16 %v908
        %v8518 = vunpack.c.h.b16 %v908
        %v8519 = vunpack.c.l.b16 %v909
        %v8520 = vunpack.c.h.b16 %v909
        %v8521 = vunpack.c.l.b16 %v910
        %v8522 = vunpack.c.h.b16 %v910
        %v8523 = vunpack.c.l.b16 %v911
        %v8524 = vunpack.c.h.b16 %v911
        %v8525 = vunpack.c.l.b16 %v912
        %v8526 = vunpack.c.h.b16 %v912
        %v8527 = vunpack.c.l.b16 %v913
        %v8528 = vunpack.c.h.b16 %v913
        %v8529 = vunpack.c.l.b16 %v914
        %v8530 = vunpack.c.h.b16 %v914
        %v8531 = vunpack.c.l.b16 %v915
        %v8532 = vunpack.c.h.b16 %v915
        %v8533 = vunpack.c.l.b16 %v916
        %v8534 = vunpack.c.h.b16 %v916
        %v8535 = vunpack.c.l.b16 %v917
        %v8536 = vunpack.c.h.b16 %v917
        %v8537 = vunpack.c.l.b16 %v918
        %v8538 = vunpack.c.h.b16 %v918
        %v8539 = vunpack.c.l.b16 %v919
        %v8540 = vunpack.c.h.b16 %v919
        %v8541 = vunpack.c.l.b16 %v920
        %v8542 = vunpack.c.h.b16 %v920
        %v8543 = vunpack.c.l.b16 %v921
        %v8544 = vunpack.c.h.b16 %v921
        %v8545 = vunpack.c.l.b16 %v922
        %v8546 = vunpack.c.h.b16 %v922
        %v8547 = vunpack.c.l.b16 %v923
        %v8548 = vunpack.c.h.b16 %v923
        %v8549 = vunpack.c.l.b16 %v924
        %v8550 = vunpack.c.h.b16 %v924
        %v8551 = vunpack.c.l.b16 %v925
        %v8552 = vunpack.c.h.b16 %v925
        %v8553 = vunpack.c.l.b16 %v926
        %v8554 = vunpack.c.h.b16 %v926
        %v8555 = vunpack.c.l.b16 %v927
        %v8556 = vunpack.c.h.b16 %v927
        %v8557 = vunpack.c.l.b16 %v928
        %v8558 = vunpack.c.h.b16 %v928
        %v8559 = vunpack.c.l.b16 %v929
        %v8560 = vunpack.c.h.b16 %v929
        %v8561 = vunpack.c.l.b16 %v930
        %v8562 = vunpack.c.h.b16 %v930
        %v8563 = vunpack.c.l.b16 %v931
        %v8564 = vunpack.c.h.b16 %v931
        %v8565 = vunpack.c.l.b16 %v932
        %v8566 = vunpack.c.h.b16 %v932
        %v8567 = vunpack.c.l.b16 %v933
        %v8568 = vunpack.c.h.b16 %v933
        %v8569 = vunpack.c.l.b16 %v934
        %v8570 = vunpack.c.h.b16 %v934
        %v8571 = vunpack.c.l.b16 %v935
        %v8572 = vunpack.c.h.b16 %v935
        %v8573 = vunpack.c.l.b16 %v936
        %v8574 = vunpack.c.h.b16 %v936
        %v8575 = vunpack.c.l.b16 %v937
        %v8576 = vunpack.c.h.b16 %v937
        %v8577 = vunpack.c.l.b16 %v938
        %v8578 = vunpack.c.h.b16 %v938
        %v8579 = vunpack.c.l.b16 %v939
        %v8580 = vunpack.c.h.b16 %v939
        %v8581 = vunpack.c.l.b16 %v940
        %v8582 = vunpack.c.h.b16 %v940
        %v8583 = vunpack.c.l.b16 %v941
        %v8584 = vunpack.c.h.b16 %v941
        %v8585 = vunpack.c.l.b16 %v942
        %v8586 = vunpack.c.h.b16 %v942
        %v8587 = vunpack.c.l.b16 %v943
        %v8588 = vunpack.c.h.b16 %v943
        %v8589 = vunpack.c.l.b16 %v944
        %v8590 = vunpack.c.h.b16 %v944
        %v8591 = vunpack.c.l.b16 %v945
        %v8592 = vunpack.c.h.b16 %v945
        %v8593 = vunpack.c.l.b16 %v946
        %v8594 = vunpack.c.h.b16 %v946
        %v8595 = vunpack.c.l.b16 %v947
        %v8596 = vunpack.c.h.b16 %v947
        %v8597 = vunpack.c.l.b16 %v948
        %v8598 = vunpack.c.h.b16 %v948
        %v8599 = vunpack.c.l.b16 %v949
        %v8600 = vunpack.c.h.b16 %v949
        %v8601 = vunpack.c.l.b16 %v950
        %v8602 = vunpack.c.h.b16 %v950
        %v8603 = vunpack.c.l.b16 %v951
        %v8604 = vunpack.c.h.b16 %v951
        %v8605 = vunpack.c.l.b16 %v952
        %v8606 = vunpack.c.h.b16 %v952
        %v8607 = vunpack.c.l.b16 %v953
        %v8608 = vunpack.c.h.b16 %v953
        %v8609 = vunpack.c.l.b16 %v954
        %v8610 = vunpack.c.h.b16 %v954
        %v8611 = vunpack.c.l.b16 %v955
        %v8612 = vunpack.c.h.b16 %v955
        %v8613 = vunpack.c.l.b16 %v956
        %v8614 = vunpack.c.h.b16 %v956
        %v8615 = vunpack.c.l.b16 %v957
        %v8616 = vunpack.c.h.b16 %v957
        %v8617 = vunpack.c.l.b16 %v958
        %v8618 = vunpack.c.h.b16 %v958
        %v8619 = vunpack.c.l.b16 %v959
        %v8620 = vunpack.c.h.b16 %v959
        %v8621 = vunpack.c.l.b16 %v960
        %v8622 = vunpack.c.h.b16 %v960
        %v8623 = vunpack.c.l.b16 %v961
        %v8624 = vunpack.c.h.b16 %v961
        %v8625 = vunpack.c.l.b16 %v962
        %v8626 = vunpack.c.h.b16 %v962
        %v8627 = vunpack.c.l.b16 %v963
        %v8628 = vunpack.c.h.b16 %v963
        %v8629 = vunpack.c.l.b16 %v964
        %v8630 = vunpack.c.h.b16 %v964
        %v8631 = vunpack.c.l.b16 %v965
        %v8632 = vunpack.c.h.b16 %v965
        %v8633 = vunpack.c.l.b16 %v966
        %v8634 = vunpack.c.h.b16 %v966
        %v8635 = vunpack.c.l.b16 %v967
        %v8636 = vunpack.c.h.b16 %v967
        %v8637 = vunpack.c.l.b16 %v968
        %v8638 = vunpack.c.h.b16 %v968
        %v8639 = vunpack.c.l.b16 %v969
        %v8640 = vunpack.c.h.b16 %v969
        %v8641 = vunpack.c.l.b16 %v970
        %v8642 = vunpack.c.h.b16 %v970
        %v8643 = vunpack.c.l.b16 %v971
        %v8644 = vunpack.c.h.b16 %v971
        %v8645 = vunpack.c.l.b16 %v972
        %v8646 = vunpack.c.h.b16 %v972
        %v8647 = vunpack.c.l.b16 %v973
        %v8648 = vunpack.c.h.b16 %v973
        %v8649 = vunpack.c.l.b16 %v974
        %v8650 = vunpack.c.h.b16 %v974
        %v8651 = vunpack.c.l.b16 %v975
        %v8652 = vunpack.c.h.b16 %v975
        %v8653 = vunpack.c.l.b16 %v976
        %v8654 = vunpack.c.h.b16 %v976
        %v8655 = vunpack.c.l.b16 %v977
        %v8656 = vunpack.c.h.b16 %v977
        %v8657 = vunpack.c.l.b16 %v978
        %v8658 = vunpack.c.h.b16 %v978
        %v8659 = vunpack.c.l.b16 %v979
        %v8660 = vunpack.c.h.b16 %v979
        %v8661 = vunpack.c.l.b16 %v980
        %v8662 = vunpack.c.h.b16 %v980
        %v8663 = vunpack.c.l.b16 %v981
        %v8664 = vunpack.c.h.b16 %v981
        %v8665 = vunpack.c.l.b16 %v982
        %v8666 = vunpack.c.h.b16 %v982
        %v8667 = vunpack.c.l.b16 %v983
        %v8668 = vunpack.c.h.b16 %v983
        %v8669 = vunpack.c.l.b16 %v984
        %v8670 = vunpack.c.h.b16 %v984
        %v8671 = vunpack.c.l.b16 %v985
        %v8672 = vunpack.c.h.b16 %v985
        %v8673 = vunpack.c.l.b16 %v986
        %v8674 = vunpack.c.h.b16 %v986
        %v8675 = vunpack.c.l.b16 %v987
        %v8676 = vunpack.c.h.b16 %v987
        %v8677 = vunpack.c.l.b16 %v988
        %v8678 = vunpack.c.h.b16 %v988
        %v8679 = vunpack.c.l.b16 %v989
        %v8680 = vunpack.c.h.b16 %v989
        %v8681 = vunpack.c.l.b16 %v990
        %v8682 = vunpack.c.h.b16 %v990
        %v8683 = vunpack.c.l.b16 %v991
        %v8684 = vunpack.c.h.b16 %v991
        %v8685 = vunpack.c.l.b16 %v992
        %v8686 = vunpack.c.h.b16 %v992
        %v8687 = vunpack.c.l.b16 %v993
        %v8688 = vunpack.c.h.b16 %v993
        %v8689 = vunpack.c.l.b16 %v994
        %v8690 = vunpack.c.h.b16 %v994
        %v8691 = vunpack.c.l.b16 %v995
        %v8692 = vunpack.c.h.b16 %v995
        %v8693 = vunpack.c.l.b16 %v996
        %v8694 = vunpack.c.h.b16 %v996
        %v8695 = vunpack.c.l.b16 %v997
        %v8696 = vunpack.c.h.b16 %v997
        %v8697 = vunpack.c.l.b16 %v998
        %v8698 = vunpack.c.h.b16 %v998
        %v8699 = vunpack.c.l.b16 %v999
        %v8700 = vunpack.c.h.b16 %v999
        %v8701 = vunpack.c.l.b16 %v1000
        %v8702 = vunpack.c.h.b16 %v1000
        %v8703 = vunpack.c.l.b16 %v1001
        %v8704 = vunpack.c.h.b16 %v1001
        %v8705 = vunpack.c.l.b16 %v1002
        %v8706 = vunpack.c.h.b16 %v1002
        %v8707 = vunpack.c.l.b16 %v1003
        %v8708 = vunpack.c.h.b16 %v1003
        %v8709 = vunpack.c.l.b16 %v1004
        %v8710 = vunpack.c.h.b16 %v1004
        %v8711 = vunpack.c.l.b16 %v1005
        %v8712 = vunpack.c.h.b16 %v1005
        %v8713 = vunpack.c.l.b16 %v1006
        %v8714 = vunpack.c.h.b16 %v1006
        %v8715 = vunpack.c.l.b16 %v1007
        %v8716 = vunpack.c.h.b16 %v1007
        %v8717 = vunpack.c.l.b16 %v1008
        %v8718 = vunpack.c.h.b16 %v1008
        %v8719 = vunpack.c.l.b16 %v1009
        %v8720 = vunpack.c.h.b16 %v1009
        %v8721 = vunpack.c.l.b16 %v1010
        %v8722 = vunpack.c.h.b16 %v1010
        %v8723 = vunpack.c.l.b16 %v1011
        %v8724 = vunpack.c.h.b16 %v1011
        %v8725 = vunpack.c.l.b16 %v1012
        %v8726 = vunpack.c.h.b16 %v1012
        %v8727 = vunpack.c.l.b16 %v1013
        %v8728 = vunpack.c.h.b16 %v1013
        %v8729 = vunpack.c.l.b16 %v1014
        %v8730 = vunpack.c.h.b16 %v1014
        %v8731 = vpack.c.b16 %v8477, %v8475
        %v8732 = vpack.c.b16 %v8478, %v8476
        %v8733 = vpack.c.b16 %v8481, %v8479
        %v8734 = vpack.c.b16 %v8482, %v8480
        %v8735 = vpack.c.b16 %v8485, %v8483
        %v8736 = vpack.c.b16 %v8486, %v8484
        %v8737 = vpack.c.b16 %v8489, %v8487
        %v8738 = vpack.c.b16 %v8490, %v8488
        %v8739 = vpack.c.b16 %v8493, %v8491
        %v8740 = vpack.c.b16 %v8494, %v8492
        %v8741 = vpack.c.b16 %v8497, %v8495
        %v8742 = vpack.c.b16 %v8498, %v8496
        %v8743 = vpack.c.b16 %v8501, %v8499
        %v8744 = vpack.c.b16 %v8502, %v8500
        %v8745 = vpack.c.b16 %v8505, %v8503
        %v8746 = vpack.c.b16 %v8506, %v8504
        %v8747 = vpack.c.b16 %v8509, %v8507
        %v8748 = vpack.c.b16 %v8510, %v8508
        %v8749 = vpack.c.b16 %v8513, %v8511
        %v8750 = vpack.c.b16 %v8514, %v8512
        %v8751 = vpack.c.b16 %v8517, %v8515
        %v8752 = vpack.c.b16 %v8518, %v8516
        %v8753 = vpack.c.b16 %v8521, %v8519
        %v8754 = vpack.c.b16 %v8522, %v8520
        %v8755 = vpack.c.b16 %v8525, %v8523
        %v8756 = vpack.c.b16 %v8526, %v8524
        %v8757 = vpack.c.b16 %v8529, %v8527
        %v8758 = vpack.c.b16 %v8530, %v8528
        %v8759 = vpack.c.b16 %v8533, %v8531
        %v8760 = vpack.c.b16 %v8534, %v8532
        %v8761 = vpack.c.b16 %v8537, %v8535
        %v8762 = vpack.c.b16 %v8538, %v8536
        %v8763 = vpack.c.b16 %v8541, %v8539
        %v8764 = vpack.c.b16 %v8542, %v8540
        %v8765 = vpack.c.b16 %v8545, %v8543
        %v8766 = vpack.c.b16 %v8546, %v8544
        %v8767 = vpack.c.b16 %v8549, %v8547
        %v8768 = vpack.c.b16 %v8550, %v8548
        %v8769 = vpack.c.b16 %v8553, %v8551
        %v8770 = vpack.c.b16 %v8554, %v8552
        %v8771 = vpack.c.b16 %v8557, %v8555
        %v8772 = vpack.c.b16 %v8558, %v8556
        %v8773 = vpack.c.b16 %v8561, %v8559
        %v8774 = vpack.c.b16 %v8562, %v8560
        %v8775 = vpack.c.b16 %v8565, %v8563
        %v8776 = vpack.c.b16 %v8566, %v8564
        %v8777 = vpack.c.b16 %v8569, %v8567
        %v8778 = vpack.c.b16 %v8570, %v8568
        %v8779 = vpack.c.b16 %v8573, %v8571
        %v8780 = vpack.c.b16 %v8574, %v8572
        %v8781 = vpack.c.b16 %v8577, %v8575
        %v8782 = vpack.c.b16 %v8578, %v8576
        %v8783 = vpack.c.b16 %v8581, %v8579
        %v8784 = vpack.c.b16 %v8582, %v8580
        %v8785 = vpack.c.b16 %v8585, %v8583
        %v8786 = vpack.c.b16 %v8586, %v8584
        %v8787 = vpack.c.b16 %v8589, %v8587
        %v8788 = vpack.c.b16 %v8590, %v8588
        %v8789 = vpack.c.b16 %v8593, %v8591
        %v8790 = vpack.c.b16 %v8594, %v8592
        %v8791 = vpack.c.b16 %v8597, %v8595
        %v8792 = vpack.c.b16 %v8598, %v8596
        %v8793 = vpack.c.b16 %v8601, %v8599
        %v8794 = vpack.c.b16 %v8602, %v8600
        %v8795 = vpack.c.b16 %v8605, %v8603
        %v8796 = vpack.c.b16 %v8606, %v8604
        %v8797 = vpack.c.b16 %v8609, %v8607
        %v8798 = vpack.c.b16 %v8610, %v8608
        %v8799 = vpack.c.b16 %v8613, %v8611
        %v8800 = vpack.c.b16 %v8614, %v8612
        %v8801 = vpack.c.b16 %v8617, %v8615
        %v8802 = vpack.c.b16 %v8618, %v8616
        %v8803 = vpack.c.b16 %v8621, %v8619
        %v8804 = vpack.c.b16 %v8622, %v8620
        %v8805 = vpack.c.b16 %v8625, %v8623
        %v8806 = vpack.c.b16 %v8626, %v8624
        %v8807 = vpack.c.b16 %v8629, %v8627
        %v8808 = vpack.c.b16 %v8630, %v8628
        %v8809 = vpack.c.b16 %v8633, %v8631
        %v8810 = vpack.c.b16 %v8634, %v8632
        %v8811 = vpack.c.b16 %v8637, %v8635
        %v8812 = vpack.c.b16 %v8638, %v8636
        %v8813 = vpack.c.b16 %v8641, %v8639
        %v8814 = vpack.c.b16 %v8642, %v8640
        %v8815 = vpack.c.b16 %v8645, %v8643
        %v8816 = vpack.c.b16 %v8646, %v8644
        %v8817 = vpack.c.b16 %v8649, %v8647
        %v8818 = vpack.c.b16 %v8650, %v8648
        %v8819 = vpack.c.b16 %v8653, %v8651
        %v8820 = vpack.c.b16 %v8654, %v8652
        %v8821 = vpack.c.b16 %v8657, %v8655
        %v8822 = vpack.c.b16 %v8658, %v8656
        %v8823 = vpack.c.b16 %v8661, %v8659
        %v8824 = vpack.c.b16 %v8662, %v8660
        %v8825 = vpack.c.b16 %v8665, %v8663
        %v8826 = vpack.c.b16 %v8666, %v8664
        %v8827 = vpack.c.b16 %v8669, %v8667
        %v8828 = vpack.c.b16 %v8670, %v8668
        %v8829 = vpack.c.b16 %v8673, %v8671
        %v8830 = vpack.c.b16 %v8674, %v8672
        %v8831 = vpack.c.b16 %v8677, %v8675
        %v8832 = vpack.c.b16 %v8678, %v8676
        %v8833 = vpack.c.b16 %v8681, %v8679
        %v8834 = vpack.c.b16 %v8682, %v8680
        %v8835 = vpack.c.b16 %v8685, %v8683
        %v8836 = vpack.c.b16 %v8686, %v8684
        %v8837 = vpack.c.b16 %v8689, %v8687
        %v8838 = vpack.c.b16 %v8690, %v8688
        %v8839 = vpack.c.b16 %v8693, %v8691
        %v8840 = vpack.c.b16 %v8694, %v8692
        %v8841 = vpack.c.b16 %v8697, %v8695
        %v8842 = vpack.c.b16 %v8698, %v8696
        %v8843 = vpack.c.b16 %v8701, %v8699
        %v8844 = vpack.c.b16 %v8702, %v8700
        %v8845 = vpack.c.b16 %v8705, %v8703
        %v8846 = vpack.c.b16 %v8706, %v8704
        %v8847 = vpack.c.b16 %v8709, %v8707
        %v8848 = vpack.c.b16 %v8710, %v8708
        %v8849 = vpack.c.b16 %v8713, %v8711
        %v8850 = vpack.c.b16 %v8714, %v8712
        %v8851 = vpack.c.b16 %v8717, %v8715
        %v8852 = vpack.c.b16 %v8718, %v8716
        %v8853 = vpack.c.b16 %v8721, %v8719
        %v8854 = vpack.c.b16 %v8722, %v8720
        %v8855 = vpack.c.b16 %v8725, %v8723
        %v8856 = vpack.c.b16 %v8726, %v8724
        %v8857 = vpack.c.b16 %v8729, %v8727
        %v8858 = vpack.c.b16 %v8730, %v8728
        %8987 = vmatprep.subr.bf16.mxu0 %v8732
        %8988 = vmatpush1.bf16.msra.mxu0 %v8731
        %8989 = vmatprep.subr.bf16.mxu0 %v8734
        %8990 = vmatpush1.bf16.msra.mxu0 %v8733
        %8991 = vmatprep.subr.bf16.mxu0 %v8736
        %8992 = vmatpush1.bf16.msra.mxu0 %v8735
        %8993 = vmatprep.subr.bf16.mxu0 %v8738
        %8994 = vmatpush1.bf16.msra.mxu0 %v8737
        %8995 = vmatprep.subr.bf16.mxu0 %v8740
        %8996 = vmatpush1.bf16.msra.mxu0 %v8739
        %8997 = vmatprep.subr.bf16.mxu0 %v8742
        %8998 = vmatpush1.bf16.msra.mxu0 %v8741
        %8999 = vmatprep.subr.bf16.mxu0 %v8744
        %9000 = vmatpush1.bf16.msra.mxu0 %v8743
        %9001 = vmatprep.subr.bf16.mxu0 %v8746
        %9002 = vmatpush1.bf16.msra.mxu0 %v8745
        %9003 = vmatprep.subr.bf16.mxu0 %v8748
        %9004 = vmatpush1.bf16.msra.mxu0 %v8747
        %9005 = vmatprep.subr.bf16.mxu0 %v8750
        %9006 = vmatpush1.bf16.msra.mxu0 %v8749
        %9007 = vmatprep.subr.bf16.mxu0 %v8752
        %9008 = vmatpush1.bf16.msra.mxu0 %v8751
        %9009 = vmatprep.subr.bf16.mxu0 %v8754
        %9010 = vmatpush1.bf16.msra.mxu0 %v8753
        %9011 = vmatprep.subr.bf16.mxu0 %v8756
        %9012 = vmatpush1.bf16.msra.mxu0 %v8755
        %9013 = vmatprep.subr.bf16.mxu0 %v8758
        %9014 = vmatpush1.bf16.msra.mxu0 %v8757
        %9015 = vmatprep.subr.bf16.mxu0 %v8760
        %9016 = vmatpush1.bf16.msra.mxu0 %v8759
        %9017 = vmatprep.subr.bf16.mxu0 %v8762
        %9018 = vmatpush1.bf16.msra.mxu0 %v8761
        %9019 = vmatprep.mubr.bf16.mxu0 %v8292
        %9020 = vmatmul.mubr.bf16.gmra.mrb[0].mxu0 %v8291
        %v9021 = vpop.f32.mrb[0].mxu0
        %v9022 = vadd.f32 %v8342, %v9021
        %v9023 = vpop.f32.mrb[0].mxu0
        %v9024 = vadd.f32 %v8346, %v9023
        %v9025 = vpop.f32.mrb[0].mxu0
        %v9026 = vadd.f32 %v8342, %v9025
        %v9027 = vpop.f32.mrb[0].mxu0
        %v9028 = vadd.f32 %v8346, %v9027
        %9029 = vmatprep.mubr.bf16.mxu0 %v8300
        %9030 = vmatmul.mubr.bf16.gmra.mrb[0].mxu0 %v8299
        %v9031 = vpop.f32.mrb[0].mxu0
        %v9032 = vadd.f32 %v8342, %v9031
        %v9033 = vpop.f32.mrb[0].mxu0
        %v9034 = vadd.f32 %v8346, %v9033
        %v9035 = vpop.f32.mrb[0].mxu0
        %v9036 = vadd.f32 %v8342, %v9035
        %v9037 = vpop.f32.mrb[0].mxu0
        %v9038 = vadd.f32 %v8346, %v9037
        %9039 = vmatprep.mubr.bf16.mxu0 %v8308
        %9040 = vmatmul.mubr.bf16.gmra.mrb[0].mxu0 %v8307
        %v9041 = vpop.f32.mrb[0].mxu0
        %v9042 = vadd.f32 %v8342, %v9041
        %v9043 = vpop.f32.mrb[0].mxu0
        %v9044 = vadd.f32 %v8346, %v9043
        %v9045 = vpop.f32.mrb[0].mxu0
        %v9046 = vadd.f32 %v8342, %v9045
        %v9047 = vpop.f32.mrb[0].mxu0
        %v9048 = vadd.f32 %v8346, %v9047
        %9049 = vmatprep.mubr.bf16.mxu0 %v8316
        %9050 = vmatmul.mubr.bf16.gmra.mrb[0].mxu0 %v8315
        %v9051 = vpop.f32.mrb[0].mxu0
        %v9052 = vadd.f32 %v8342, %v9051
        %v9053 = vpop.f32.mrb[0].mxu0
        %v9054 = vadd.f32 %v8346, %v9053
        %v9055 = vpop.f32.mrb[0].mxu0
        %v9056 = vadd.f32 %v8342, %v9055
        %v9057 = vpop.f32.mrb[0].mxu0
        %v9058 = vadd.f32 %v8346, %v9057
        %9059 = vmatprep.mubr.bf16.mxu0 %v8324
        %9060 = vmatmul.mubr.bf16.gmra.mrb[0].mxu0 %v8323
        %v9061 = vpop.f32.mrb[0].mxu0
        %v9062 = vadd.f32 %v8342, %v9061
        %v9063 = vpop.f32.mrb[0].mxu0
        %v9064 = vadd.f32 %v8346, %v9063
        %v9065 = vpop.f32.mrb[0].mxu0
        %v9066 = vadd.f32 %v8342, %v9065
        %v9067 = vpop.f32.mrb[0].mxu0
        %v9068 = vadd.f32 %v8346, %v9067
        %9069 = vmatprep.mubr.bf16.mxu0 %v8332
        %9070 = vmatmul.mubr.bf16.gmra.mrb[0].mxu0 %v8331
        %v9071 = vpop.f32.mrb[0].mxu0
        %v9072 = vadd.f32 %v8342, %v9071
        %v9073 = vpop.f32.mrb[0].mxu0
        %v9074 = vadd.f32 %v8346, %v9073
        %v9075 = vpop.f32.mrb[0].mxu0
        %v9076 = vadd.f32 %v8342, %v9075
        %v9077 = vpop.f32.mrb[0].mxu0
        %v9078 = vadd.f32 %v8346, %v9077
        %9079 = vdwg.mxu0
        %9080 = vmatprep.subr.bf16.mxu0 %v8764
        %9081 = vmatpush1.bf16.msra.mxu0 %v8763
        %9082 = vmatprep.subr.bf16.mxu0 %v8766
        %9083 = vmatpush1.bf16.msra.mxu0 %v8765
        %9084 = vmatprep.subr.bf16.mxu0 %v8768
        %9085 = vmatpush1.bf16.msra.mxu0 %v8767
        %9086 = vmatprep.subr.bf16.mxu0 %v8770
        %9087 = vmatpush1.bf16.msra.mxu0 %v8769
        %9088 = vmatprep.subr.bf16.mxu0 %v8772
        %9089 = vmatpush1.bf16.msra.mxu0 %v8771
        %9090 = vmatprep.subr.bf16.mxu0 %v8774
        %9091 = vmatpush1.bf16.msra.mxu0 %v8773
        %9092 = vmatprep.subr.bf16.mxu0 %v8776
        %9093 = vmatpush1.bf16.msra.mxu0 %v8775
        %9094 = vmatprep.subr.bf16.mxu0 %v8778
        %9095 = vmatpush1.bf16.msra.mxu0 %v8777
        %9096 = vmatprep.subr.bf16.mxu0 %v8780
        %9097 = vmatpush1.bf16.msra.mxu0 %v8779
        %9098 = vmatprep.subr.bf16.mxu0 %v8782
        %9099 = vmatpush1.bf16.msra.mxu0 %v8781
        %9100 = vmatprep.subr.bf16.mxu0 %v8784
        %9101 = vmatpush1.bf16.msra.mxu0 %v8783
        %9102 = vmatprep.subr.bf16.mxu0 %v8786
        %9103 = vmatpush1.bf16.msra.mxu0 %v8785
        %9104 = vmatprep.subr.bf16.mxu0 %v8788
        %9105 = vmatpush1.bf16.msra.mxu0 %v8787
        %9106 = vmatprep.subr.bf16.mxu0 %v8790
        %9107 = vmatpush1.bf16.msra.mxu0 %v8789
        %9108 = vmatprep.subr.bf16.mxu0 %v8792
        %9109 = vmatpush1.bf16.msra.mxu0 %v8791
        %9110 = vmatprep.subr.bf16.mxu0 %v8794
        %9111 = vmatpush1.bf16.msra.mxu0 %v8793
        %9112 = vmatprep.mubr.bf16.mxu0 %v8294
        %9113 = vmatmul.mubr.bf16.gmra.mrb[0].mxu0 %v8293
        %v9114 = vpop.f32.mrb[0].mxu0
        %v9115 = vadd.f32 %v9022, %v9114
        %v9116 = vpop.f32.mrb[0].mxu0
        %v9117 = vadd.f32 %v9024, %v9116
        %v9118 = vpop.f32.mrb[0].mxu0
        %v9119 = vadd.f32 %v9026, %v9118
        %v9120 = vpop.f32.mrb[0].mxu0
        %v9121 = vadd.f32 %v9028, %v9120
        %9122 = vmatprep.mubr.bf16.mxu0 %v8302
        %9123 = vmatmul.mubr.bf16.gmra.mrb[0].mxu0 %v8301
        %v9124 = vpop.f32.mrb[0].mxu0
        %v9125 = vadd.f32 %v9032, %v9124
        %v9126 = vpop.f32.mrb[0].mxu0
        %v9127 = vadd.f32 %v9034, %v9126
        %v9128 = vpop.f32.mrb[0].mxu0
        %v9129 = vadd.f32 %v9036, %v9128
        %v9130 = vpop.f32.mrb[0].mxu0
        %v9131 = vadd.f32 %v9038, %v9130
        %9132 = vmatprep.mubr.bf16.mxu0 %v8310
        %9133 = vmatmul.mubr.bf16.gmra.mrb[0].mxu0 %v8309
        %v9134 = vpop.f32.mrb[0].mxu0
        %v9135 = vadd.f32 %v9042, %v9134
        %v9136 = vpop.f32.mrb[0].mxu0
        %v9137 = vadd.f32 %v9044, %v9136
        %v9138 = vpop.f32.mrb[0].mxu0
        %v9139 = vadd.f32 %v9046, %v9138
        %v9140 = vpop.f32.mrb[0].mxu0
        %v9141 = vadd.f32 %v9048, %v9140
        %9142 = vmatprep.mubr.bf16.mxu0 %v8318
        %9143 = vmatmul.mubr.bf16.gmra.mrb[0].mxu0 %v8317
        %v9144 = vpop.f32.mrb[0].mxu0
        %v9145 = vadd.f32 %v9052, %v9144
        %v9146 = vpop.f32.mrb[0].mxu0
        %v9147 = vadd.f32 %v9054, %v9146
        %v9148 = vpop.f32.mrb[0].mxu0
        %v9149 = vadd.f32 %v9056, %v9148
        %v9150 = vpop.f32.mrb[0].mxu0
        %v9151 = vadd.f32 %v9058, %v9150
        %9152 = vmatprep.mubr.bf16.mxu0 %v8326
        %9153 = vmatmul.mubr.bf16.gmra.mrb[0].mxu0 %v8325
        %v9154 = vpop.f32.mrb[0].mxu0
        %v9155 = vadd.f32 %v9062, %v9154
        %v9156 = vpop.f32.mrb[0].mxu0
        %v9157 = vadd.f32 %v9064, %v9156
        %v9158 = vpop.f32.mrb[0].mxu0
        %v9159 = vadd.f32 %v9066, %v9158
        %v9160 = vpop.f32.mrb[0].mxu0
        %v9161 = vadd.f32 %v9068, %v9160
        %9162 = vmatprep.mubr.bf16.mxu0 %v8334
        %9163 = vmatmul.mubr.bf16.gmra.mrb[0].mxu0 %v8333
        %v9164 = vpop.f32.mrb[0].mxu0
        %v9165 = vadd.f32 %v9072, %v9164
        %v9166 = vpop.f32.mrb[0].mxu0
        %v9167 = vadd.f32 %v9074, %v9166
        %v9168 = vpop.f32.mrb[0].mxu0
        %v9169 = vadd.f32 %v9076, %v9168
        %v9170 = vpop.f32.mrb[0].mxu0
        %v9171 = vadd.f32 %v9078, %v9170
        %9172 = vdwg.mxu0
        %9173 = vmatprep.subr.bf16.mxu0 %v8796
        %9174 = vmatpush1.bf16.msra.mxu0 %v8795
        %9175 = vmatprep.subr.bf16.mxu0 %v8798
        %9176 = vmatpush1.bf16.msra.mxu0 %v8797
        %9177 = vmatprep.subr.bf16.mxu0 %v8800
        %9178 = vmatpush1.bf16.msra.mxu0 %v8799
        %9179 = vmatprep.subr.bf16.mxu0 %v8802
        %9180 = vmatpush1.bf16.msra.mxu0 %v8801
        %9181 = vmatprep.subr.bf16.mxu0 %v8804
        %9182 = vmatpush1.bf16.msra.mxu0 %v8803
        %9183 = vmatprep.subr.bf16.mxu0 %v8806
        %9184 = vmatpush1.bf16.msra.mxu0 %v8805
        %9185 = vmatprep.subr.bf16.mxu0 %v8808
        %9186 = vmatpush1.bf16.msra.mxu0 %v8807
        %9187 = vmatprep.subr.bf16.mxu0 %v8810
        %9188 = vmatpush1.bf16.msra.mxu0 %v8809
        %9189 = vmatprep.subr.bf16.mxu0 %v8812
        %9190 = vmatpush1.bf16.msra.mxu0 %v8811
        %9191 = vmatprep.subr.bf16.mxu0 %v8814
        %9192 = vmatpush1.bf16.msra.mxu0 %v8813
        %9193 = vmatprep.subr.bf16.mxu0 %v8816
        %9194 = vmatpush1.bf16.msra.mxu0 %v8815
        %9195 = vmatprep.subr.bf16.mxu0 %v8818
        %9196 = vmatpush1.bf16.msra.mxu0 %v8817
        %9197 = vmatprep.subr.bf16.mxu0 %v8820
        %9198 = vmatpush1.bf16.msra.mxu0 %v8819
        %9199 = vmatprep.subr.bf16.mxu0 %v8822
        %9200 = vmatpush1.bf16.msra.mxu0 %v8821
        %9201 = vmatprep.subr.bf16.mxu0 %v8824
        %9202 = vmatpush1.bf16.msra.mxu0 %v8823
        %9203 = vmatprep.subr.bf16.mxu0 %v8826
        %9204 = vmatpush1.bf16.msra.mxu0 %v8825
        %9205 = vmatprep.mubr.bf16.mxu0 %v8296
        %9206 = vmatmul.mubr.bf16.gmra.mrb[0].mxu0 %v8295
        %v9207 = vpop.f32.mrb[0].mxu0
        %v9208 = vadd.f32 %v9115, %v9207
        %v9209 = vpop.f32.mrb[0].mxu0
        %v9210 = vadd.f32 %v9117, %v9209
        %v9211 = vpop.f32.mrb[0].mxu0
        %v9212 = vadd.f32 %v9119, %v9211
        %v9213 = vpop.f32.mrb[0].mxu0
        %v9214 = vadd.f32 %v9121, %v9213
        %9215 = vmatprep.mubr.bf16.mxu0 %v8304
        %9216 = vmatmul.mubr.bf16.gmra.mrb[0].mxu0 %v8303
        %v9217 = vpop.f32.mrb[0].mxu0
        %v9218 = vadd.f32 %v9125, %v9217
        %v9219 = vpop.f32.mrb[0].mxu0
        %v9220 = vadd.f32 %v9127, %v9219
        %v9221 = vpop.f32.mrb[0].mxu0
        %v9222 = vadd.f32 %v9129, %v9221
        %v9223 = vpop.f32.mrb[0].mxu0
        %v9224 = vadd.f32 %v9131, %v9223
        %9225 = vmatprep.mubr.bf16.mxu0 %v8312
        %9226 = vmatmul.mubr.bf16.gmra.mrb[0].mxu0 %v8311
        %v9227 = vpop.f32.mrb[0].mxu0
        %v9228 = vadd.f32 %v9135, %v9227
        %v9229 = vpop.f32.mrb[0].mxu0
        %v9230 = vadd.f32 %v9137, %v9229
        %v9231 = vpop.f32.mrb[0].mxu0
        %v9232 = vadd.f32 %v9139, %v9231
        %v9233 = vpop.f32.mrb[0].mxu0
        %v9234 = vadd.f32 %v9141, %v9233
        %9235 = vmatprep.mubr.bf16.mxu0 %v8320
        %9236 = vmatmul.mubr.bf16.gmra.mrb[0].mxu0 %v8319
        %v9237 = vpop.f32.mrb[0].mxu0
        %v9238 = vadd.f32 %v9145, %v9237
        %v9239 = vpop.f32.mrb[0].mxu0
        %v9240 = vadd.f32 %v9147, %v9239
        %v9241 = vpop.f32.mrb[0].mxu0
        %v9242 = vadd.f32 %v9149, %v9241
        %v9243 = vpop.f32.mrb[0].mxu0
        %v9244 = vadd.f32 %v9151, %v9243
        %9245 = vmatprep.mubr.bf16.mxu0 %v8328
        %9246 = vmatmul.mubr.bf16.gmra.mrb[0].mxu0 %v8327
        %v9247 = vpop.f32.mrb[0].mxu0
        %v9248 = vadd.f32 %v9155, %v9247
        %v9249 = vpop.f32.mrb[0].mxu0
        %v9250 = vadd.f32 %v9157, %v9249
        %v9251 = vpop.f32.mrb[0].mxu0
        %v9252 = vadd.f32 %v9159, %v9251
        %v9253 = vpop.f32.mrb[0].mxu0
        %v9254 = vadd.f32 %v9161, %v9253
        %9255 = vmatprep.mubr.bf16.mxu0 %v8336
        %9256 = vmatmul.mubr.bf16.gmra.mrb[0].mxu0 %v8335
        %v9257 = vpop.f32.mrb[0].mxu0
        %v9258 = vadd.f32 %v9165, %v9257
        %v9259 = vpop.f32.mrb[0].mxu0
        %v9260 = vadd.f32 %v9167, %v9259
        %v9261 = vpop.f32.mrb[0].mxu0
        %v9262 = vadd.f32 %v9169, %v9261
        %v9263 = vpop.f32.mrb[0].mxu0
        %v9264 = vadd.f32 %v9171, %v9263
        %9265 = vdwg.mxu0
        %9266 = vmatprep.subr.bf16.mxu0 %v8828
        %9267 = vmatpush1.bf16.msra.mxu0 %v8827
        %9268 = vmatprep.subr.bf16.mxu0 %v8830
        %9269 = vmatpush1.bf16.msra.mxu0 %v8829
        %9270 = vmatprep.subr.bf16.mxu0 %v8832
        %9271 = vmatpush1.bf16.msra.mxu0 %v8831
        %9272 = vmatprep.subr.bf16.mxu0 %v8834
        %9273 = vmatpush1.bf16.msra.mxu0 %v8833
        %9274 = vmatprep.subr.bf16.mxu0 %v8836
        %9275 = vmatpush1.bf16.msra.mxu0 %v8835
        %9276 = vmatprep.subr.bf16.mxu0 %v8838
        %9277 = vmatpush1.bf16.msra.mxu0 %v8837
        %9278 = vmatprep.subr.bf16.mxu0 %v8840
        %9279 = vmatpush1.bf16.msra.mxu0 %v8839
        %9280 = vmatprep.subr.bf16.mxu0 %v8842
        %9281 = vmatpush1.bf16.msra.mxu0 %v8841
        %9282 = vmatprep.subr.bf16.mxu0 %v8844
        %9283 = vmatpush1.bf16.msra.mxu0 %v8843
        %9284 = vmatprep.subr.bf16.mxu0 %v8846
        %9285 = vmatpush1.bf16.msra.mxu0 %v8845
        %9286 = vmatprep.subr.bf16.mxu0 %v8848
        %9287 = vmatpush1.bf16.msra.mxu0 %v8847
        %9288 = vmatprep.subr.bf16.mxu0 %v8850
        %9289 = vmatpush1.bf16.msra.mxu0 %v8849
        %9290 = vmatprep.subr.bf16.mxu0 %v8852
        %9291 = vmatpush1.bf16.msra.mxu0 %v8851
        %9292 = vmatprep.subr.bf16.mxu0 %v8854
        %9293 = vmatpush1.bf16.msra.mxu0 %v8853
        %9294 = vmatprep.subr.bf16.mxu0 %v8856
        %9295 = vmatpush1.bf16.msra.mxu0 %v8855
        %9296 = vmatprep.subr.bf16.mxu0 %v8858
        %9297 = vmatpush1.bf16.msra.mxu0 %v8857
        %9298 = vmatprep.mubr.bf16.mxu0 %v8298
        %9299 = vmatmul.mubr.bf16.gmra.mrb[0].mxu0 %v8297
        %v9300 = vpop.f32.mrb[0].mxu0
        %v9301 = vadd.f32 %v9208, %v9300
        %v9302 = vpop.f32.mrb[0].mxu0
        %v9303 = vadd.f32 %v9210, %v9302
        %v9304 = vpop.f32.mrb[0].mxu0
        %v9305 = vadd.f32 %v9212, %v9304
        %v9306 = vpop.f32.mrb[0].mxu0
        %v9307 = vadd.f32 %v9214, %v9306
        %9308 = vmatprep.mubr.bf16.mxu0 %v8306
        %9309 = vmatmul.mubr.bf16.gmra.mrb[0].mxu0 %v8305
        %v9310 = vpop.f32.mrb[0].mxu0
        %v9311 = vadd.f32 %v9218, %v9310
        %v9312 = vpop.f32.mrb[0].mxu0
        %v9313 = vadd.f32 %v9220, %v9312
        %v9314 = vpop.f32.mrb[0].mxu0
        %v9315 = vadd.f32 %v9222, %v9314
        %v9316 = vpop.f32.mrb[0].mxu0
        %v9317 = vadd.f32 %v9224, %v9316
        %9318 = vmatprep.mubr.bf16.mxu0 %v8314
        %9319 = vmatmul.mubr.bf16.gmra.mrb[0].mxu0 %v8313
        %v9320 = vpop.f32.mrb[0].mxu0
        %v9321 = vadd.f32 %v9228, %v9320
        %v9322 = vpop.f32.mrb[0].mxu0
        %v9323 = vadd.f32 %v9230, %v9322
        %v9324 = vpop.f32.mrb[0].mxu0
        %v9325 = vadd.f32 %v9232, %v9324
        %v9326 = vpop.f32.mrb[0].mxu0
        %v9327 = vadd.f32 %v9234, %v9326
        %9328 = vmatprep.mubr.bf16.mxu0 %v8322
        %9329 = vmatmul.mubr.bf16.gmra.mrb[0].mxu0 %v8321
        %v9330 = vpop.f32.mrb[0].mxu0
        %v9331 = vadd.f32 %v9238, %v9330
        %v9332 = vpop.f32.mrb[0].mxu0
        %v9333 = vadd.f32 %v9240, %v9332
        %v9334 = vpop.f32.mrb[0].mxu0
        %v9335 = vadd.f32 %v9242, %v9334
        %v9336 = vpop.f32.mrb[0].mxu0
        %v9337 = vadd.f32 %v9244, %v9336
        %9338 = vmatprep.mubr.bf16.mxu0 %v8330
        %9339 = vmatmul.mubr.bf16.gmra.mrb[0].mxu0 %v8329
        %v9340 = vpop.f32.mrb[0].mxu0
        %v9341 = vadd.f32 %v9248, %v9340
        %v9342 = vpop.f32.mrb[0].mxu0
        %v9343 = vadd.f32 %v9250, %v9342
        %v9344 = vpop.f32.mrb[0].mxu0
        %v9345 = vadd.f32 %v9252, %v9344
        %v9346 = vpop.f32.mrb[0].mxu0
        %v9347 = vadd.f32 %v9254, %v9346
        %9348 = vmatprep.mubr.bf16.mxu0 %v8338
        %9349 = vmatmul.mubr.bf16.gmra.mrb[0].mxu0 %v8337
        %v9350 = vpop.f32.mrb[0].mxu0
        %v9351 = vadd.f32 %v9258, %v9350
        %v9352 = vpop.f32.mrb[0].mxu0
        %v9353 = vadd.f32 %v9260, %v9352
        %v9354 = vpop.f32.mrb[0].mxu0
        %v9355 = vadd.f32 %v9262, %v9354
        %v9356 = vpop.f32.mrb[0].mxu0
        %v9357 = vadd.f32 %v9264, %v9356
        %9358 = vdwg.mxu0
        %v9359 = vadd.f32 %v6338, %v9301
        %v9360 = vadd.f32 %v6339, %v9303
        %v9361 = vadd.f32 %v6340, %v9305
        %v9362 = vadd.f32 %v6341, %v9307
        %v9363 = vadd.f32 %v6342, %v9311
        %v9364 = vadd.f32 %v6343, %v9313
        %v9365 = vadd.f32 %v6344, %v9315
        %v9366 = vadd.f32 %v6345, %v9317
        %v9367 = vadd.f32 %v6346, %v9321
        %v9368 = vadd.f32 %v6347, %v9323
        %v9369 = vadd.f32 %v6348, %v9325
        %v9370 = vadd.f32 %v6349, %v9327
        %v9371 = vadd.f32 %v6350, %v9331
        %v9372 = vadd.f32 %v6351, %v9333
        %v9373 = vadd.f32 %v6352, %v9335
        %v9374 = vadd.f32 %v6353, %v9337
        %v9375 = vadd.f32 %v6354, %v9341
        %v9376 = vadd.f32 %v6355, %v9343
        %v9377 = vadd.f32 %v6356, %v9345
        %v9378 = vadd.f32 %v6357, %v9347
        %v9379 = vadd.f32 %v6358, %v9351
        %v9380 = vadd.f32 %v6359, %v9353
        %v9381 = vadd.f32 %v6360, %v9355
        %v9382 = vadd.f32 %v6361, %v9357
        %v9383 = vadd.f32 %v9359, %v9360
        %9384 = vadd.xlane.f32.xlu0 %v9383
        %v9385 = vpop.xlane.xlu0 %9384
        %v9386 = vadd.f32 %v9361, %v9362
        %9387 = vadd.xlane.f32.xlu0 %v9386
        %v9388 = vpop.xlane.xlu0 %9387
        %v9389 = vadd.f32 %v9363, %v9364
        %9390 = vadd.xlane.f32.xlu0 %v9389
        %v9391 = vpop.xlane.xlu0 %9390
        %v9392 = vadd.f32 %v9365, %v9366
        %9393 = vadd.xlane.f32.xlu0 %v9392
        %v9394 = vpop.xlane.xlu0 %9393
        %v9395 = vadd.f32 %v9367, %v9368
        %9396 = vadd.xlane.f32.xlu0 %v9395
        %v9397 = vpop.xlane.xlu0 %9396
        %v9398 = vadd.f32 %v9369, %v9370
        %9399 = vadd.xlane.f32.xlu0 %v9398
        %v9400 = vpop.xlane.xlu0 %9399
        %v9401 = vadd.f32 %v9371, %v9372
        %9402 = vadd.xlane.f32.xlu0 %v9401
        %v9403 = vpop.xlane.xlu0 %9402
        %v9404 = vadd.f32 %v9373, %v9374
        %9405 = vadd.xlane.f32.xlu0 %v9404
        %v9406 = vpop.xlane.xlu0 %9405
        %v9407 = vadd.f32 %v9375, %v9376
        %9408 = vadd.xlane.f32.xlu0 %v9407
        %v9409 = vpop.xlane.xlu0 %9408
        %v9410 = vadd.f32 %v9377, %v9378
        %9411 = vadd.xlane.f32.xlu0 %v9410
        %v9412 = vpop.xlane.xlu0 %9411
        %v9413 = vadd.f32 %v9379, %v9380
        %9414 = vadd.xlane.f32.xlu0 %v9413
        %v9415 = vpop.xlane.xlu0 %9414
        %v9416 = vadd.f32 %v9381, %v9382
        %9417 = vadd.xlane.f32.xlu0 %v9416
        %v9418 = vpop.xlane.xlu0 %9417
        %v9419 = vmul.f32 %v9385, %v6141
        %v9420 = vmul.f32 %v9388, %v6141
        %v9421 = vmul.f32 %v9391, %v6141
        %v9422 = vmul.f32 %v9394, %v6141
        %v9423 = vmul.f32 %v9397, %v6141
        %v9424 = vmul.f32 %v9400, %v6141
        %v9425 = vmul.f32 %v9403, %v6141
        %v9426 = vmul.f32 %v9406, %v6141
        %v9427 = vmul.f32 %v9409, %v6141
        %v9428 = vmul.f32 %v9412, %v6141
        %v9429 = vmul.f32 %v9415, %v6141
        %v9430 = vmul.f32 %v9418, %v6141
        %v9431 = vsub.f32 %v9359, %v9419
        %v9432 = vsub.f32 %v9360, %v9419
        %v9433 = vsub.f32 %v9361, %v9420
        %v9434 = vsub.f32 %v9362, %v9420
        %v9435 = vsub.f32 %v9363, %v9421
        %v9436 = vsub.f32 %v9364, %v9421
        %v9437 = vsub.f32 %v9365, %v9422
        %v9438 = vsub.f32 %v9366, %v9422
        %v9439 = vsub.f32 %v9367, %v9423
        %v9440 = vsub.f32 %v9368, %v9423
        %v9441 = vsub.f32 %v9369, %v9424
        %v9442 = vsub.f32 %v9370, %v9424
        %v9443 = vsub.f32 %v9371, %v9425
        %v9444 = vsub.f32 %v9372, %v9425
        %v9445 = vsub.f32 %v9373, %v9426
        %v9446 = vsub.f32 %v9374, %v9426
        %v9447 = vsub.f32 %v9375, %v9427
        %v9448 = vsub.f32 %v9376, %v9427
        %v9449 = vsub.f32 %v9377, %v9428
        %v9450 = vsub.f32 %v9378, %v9428
        %v9451 = vsub.f32 %v9379, %v9429
        %v9452 = vsub.f32 %v9380, %v9429
        %v9453 = vsub.f32 %v9381, %v9430
        %v9454 = vsub.f32 %v9382, %v9430
        %v9455 = vmul.f32 %v9431, %v9431
        %v9456 = vmul.f32 %v9432, %v9432
        %v9457 = vmul.f32 %v9433, %v9433
        %v9458 = vmul.f32 %v9434, %v9434
        %v9459 = vmul.f32 %v9435, %v9435
        %v9460 = vmul.f32 %v9436, %v9436
        %v9461 = vmul.f32 %v9437, %v9437
        %v9462 = vmul.f32 %v9438, %v9438
        %v9463 = vmul.f32 %v9439, %v9439
        %v9464 = vmul.f32 %v9440, %v9440
        %v9465 = vmul.f32 %v9441, %v9441
        %v9466 = vmul.f32 %v9442, %v9442
        %v9467 = vmul.f32 %v9443, %v9443
        %v9468 = vmul.f32 %v9444, %v9444
        %v9469 = vmul.f32 %v9445, %v9445
        %v9470 = vmul.f32 %v9446, %v9446
        %v9471 = vmul.f32 %v9447, %v9447
        %v9472 = vmul.f32 %v9448, %v9448
        %v9473 = vmul.f32 %v9449, %v9449
        %v9474 = vmul.f32 %v9450, %v9450
        %v9475 = vmul.f32 %v9451, %v9451
        %v9476 = vmul.f32 %v9452, %v9452
        %v9477 = vmul.f32 %v9453, %v9453
        %v9478 = vmul.f32 %v9454, %v9454
        %v9479 = vadd.f32 %v9455, %v9456
        %9480 = vadd.xlane.f32.xlu0 %v9479
        %v9481 = vpop.xlane.xlu0 %9480
        %v9482 = vadd.f32 %v9457, %v9458
        %9483 = vadd.xlane.f32.xlu0 %v9482
        %v9484 = vpop.xlane.xlu0 %9483
        %v9485 = vadd.f32 %v9459, %v9460
        %9486 = vadd.xlane.f32.xlu0 %v9485
        %v9487 = vpop.xlane.xlu0 %9486
        %v9488 = vadd.f32 %v9461, %v9462
        %9489 = vadd.xlane.f32.xlu0 %v9488
        %v9490 = vpop.xlane.xlu0 %9489
        %v9491 = vadd.f32 %v9463, %v9464
        %9492 = vadd.xlane.f32.xlu0 %v9491
        %v9493 = vpop.xlane.xlu0 %9492
        %v9494 = vadd.f32 %v9465, %v9466
        %9495 = vadd.xlane.f32.xlu0 %v9494
        %v9496 = vpop.xlane.xlu0 %9495
        %v9497 = vadd.f32 %v9467, %v9468
        %9498 = vadd.xlane.f32.xlu0 %v9497
        %v9499 = vpop.xlane.xlu0 %9498
        %v9500 = vadd.f32 %v9469, %v9470
        %9501 = vadd.xlane.f32.xlu0 %v9500
        %v9502 = vpop.xlane.xlu0 %9501
        %v9503 = vadd.f32 %v9471, %v9472
        %9504 = vadd.xlane.f32.xlu0 %v9503
        %v9505 = vpop.xlane.xlu0 %9504
        %v9506 = vadd.f32 %v9473, %v9474
        %9507 = vadd.xlane.f32.xlu0 %v9506
        %v9508 = vpop.xlane.xlu0 %9507
        %v9509 = vadd.f32 %v9475, %v9476
        %9510 = vadd.xlane.f32.xlu0 %v9509
        %v9511 = vpop.xlane.xlu0 %9510
        %v9512 = vadd.f32 %v9477, %v9478
        %9513 = vadd.xlane.f32.xlu0 %v9512
        %v9514 = vpop.xlane.xlu0 %9513
        %v9515 = vmul.f32 %v9481, %v6141
        %v9516 = vmul.f32 %v9484, %v6141
        %v9517 = vmul.f32 %v9487, %v6141
        %v9518 = vmul.f32 %v9490, %v6141
        %v9519 = vmul.f32 %v9493, %v6141
        %v9520 = vmul.f32 %v9496, %v6141
        %v9521 = vmul.f32 %v9499, %v6141
        %v9522 = vmul.f32 %v9502, %v6141
        %v9523 = vmul.f32 %v9505, %v6141
        %v9524 = vmul.f32 %v9508, %v6141
        %v9525 = vmul.f32 %v9511, %v6141
        %v9526 = vmul.f32 %v9514, %v6141
        %v9527 = vadd.f32 %v9515, 1e-05
        %v9528 = vadd.f32 %v9516, 1e-05
        %v9529 = vadd.f32 %v9517, 1e-05
        %v9530 = vadd.f32 %v9518, 1e-05
        %v9531 = vadd.f32 %v9519, 1e-05
        %v9532 = vadd.f32 %v9520, 1e-05
        %v9533 = vadd.f32 %v9521, 1e-05
        %v9534 = vadd.f32 %v9522, 1e-05
        %v9535 = vadd.f32 %v9523, 1e-05
        %v9536 = vadd.f32 %v9524, 1e-05
        %v9537 = vadd.f32 %v9525, 1e-05
        %v9538 = vadd.f32 %v9526, 1e-05
        %v9539 = vrsqrt.pop %v9527
        %v9540 = vrsqrt.pop %v9528
        %v9541 = vrsqrt.pop %v9529
        %v9542 = vrsqrt.pop %v9530
        %v9543 = vrsqrt.pop %v9531
        %v9544 = vrsqrt.pop %v9532
        %v9545 = vrsqrt.pop %v9533
        %v9546 = vrsqrt.pop %v9534
        %v9547 = vrsqrt.pop %v9535
        %v9548 = vrsqrt.pop %v9536
        %v9549 = vrsqrt.pop %v9537
        %v9550 = vrsqrt.pop %v9538
        %v9551 = vmul.f32 %v9431, %v9539
        %v9552 = vmul.f32 %v9432, %v9539
        %v9553 = vmul.f32 %v9433, %v9540
        %v9554 = vmul.f32 %v9434, %v9540
        %v9555 = vmul.f32 %v9435, %v9541
        %v9556 = vmul.f32 %v9436, %v9541
        %v9557 = vmul.f32 %v9437, %v9542
        %v9558 = vmul.f32 %v9438, %v9542
        %v9559 = vmul.f32 %v9439, %v9543
        %v9560 = vmul.f32 %v9440, %v9543
        %v9561 = vmul.f32 %v9441, %v9544
        %v9562 = vmul.f32 %v9442, %v9544
        %v9563 = vmul.f32 %v9443, %v9545
        %v9564 = vmul.f32 %v9444, %v9545
        %v9565 = vmul.f32 %v9445, %v9546
        %v9566 = vmul.f32 %v9446, %v9546
        %v9567 = vmul.f32 %v9447, %v9547
        %v9568 = vmul.f32 %v9448, %v9547
        %v9569 = vmul.f32 %v9449, %v9548
        %v9570 = vmul.f32 %v9450, %v9548
        %v9571 = vmul.f32 %v9451, %v9549
        %v9572 = vmul.f32 %v9452, %v9549
        %v9573 = vmul.f32 %v9453, %v9550
        %v9574 = vmul.f32 %v9454, %v9550
        %v9575 = vlaneseq
        %v9576 = vshrl.u32 %v9575, 7
        %v9577 = vsub.s32 4, %v9576
        %v9578 = vrot.slane %v1017, %v9577
        %v9579 = vlaneseq
        %v9580 = vshrl.u32 %v9579, 7
        %v9581 = vsub.s32 4, %v9580
        %v9582 = vrot.slane %v1018, %v9581
        %v9583 = vmul.f32 %v9551, %v9578
        %v9584 = vmul.f32 %v9552, %v9582
        %v9585 = vmul.f32 %v9553, %v9578
        %v9586 = vmul.f32 %v9554, %v9582
        %v9587 = vmul.f32 %v9555, %v9578
        %v9588 = vmul.f32 %v9556, %v9582
        %v9589 = vmul.f32 %v9557, %v9578
        %v9590 = vmul.f32 %v9558, %v9582
        %v9591 = vmul.f32 %v9559, %v9578
        %v9592 = vmul.f32 %v9560, %v9582
        %v9593 = vmul.f32 %v9561, %v9578
        %v9594 = vmul.f32 %v9562, %v9582
        %v9595 = vmul.f32 %v9563, %v9578
        %v9596 = vmul.f32 %v9564, %v9582
        %v9597 = vmul.f32 %v9565, %v9578
        %v9598 = vmul.f32 %v9566, %v9582
        %v9599 = vmul.f32 %v9567, %v9578
        %v9600 = vmul.f32 %v9568, %v9582
        %v9601 = vmul.f32 %v9569, %v9578
        %v9602 = vmul.f32 %v9570, %v9582
        %v9603 = vmul.f32 %v9571, %v9578
        %v9604 = vmul.f32 %v9572, %v9582
        %v9605 = vmul.f32 %v9573, %v9578
        %v9606 = vmul.f32 %v9574, %v9582
        %v9607 = vlaneseq
        %v9608 = vshrl.u32 %v9607, 7
        %v9609 = vsub.s32 5, %v9608
        %v9610 = vrot.slane %v1017, %v9609
        %v9611 = vlaneseq
        %v9612 = vshrl.u32 %v9611, 7
        %v9613 = vsub.s32 5, %v9612
        %v9614 = vrot.slane %v1018, %v9613
        %v9615 = vadd.f32 %v9583, %v9610
        %v9616 = vadd.f32 %v9584, %v9614
        %v9617 = vadd.f32 %v9585, %v9610
        %v9618 = vadd.f32 %v9586, %v9614
        %v9619 = vadd.f32 %v9587, %v9610
        %v9620 = vadd.f32 %v9588, %v9614
        %v9621 = vadd.f32 %v9589, %v9610
        %v9622 = vadd.f32 %v9590, %v9614
        %v9623 = vadd.f32 %v9591, %v9610
        %v9624 = vadd.f32 %v9592, %v9614
        %v9625 = vadd.f32 %v9593, %v9610
        %v9626 = vadd.f32 %v9594, %v9614
        %v9627 = vadd.f32 %v9595, %v9610
        %v9628 = vadd.f32 %v9596, %v9614
        %v9629 = vadd.f32 %v9597, %v9610
        %v9630 = vadd.f32 %v9598, %v9614
        %v9631 = vadd.f32 %v9599, %v9610
        %v9632 = vadd.f32 %v9600, %v9614
        %v9633 = vadd.f32 %v9601, %v9610
        %v9634 = vadd.f32 %v9602, %v9614
        %v9635 = vadd.f32 %v9603, %v9610
        %v9636 = vadd.f32 %v9604, %v9614
        %v9637 = vadd.f32 %v9605, %v9610
        %v9638 = vadd.f32 %v9606, %v9614
        %9639 = vst [vmem:[#allocation2] sm:$0xff] %v9615
        %9640 = vst [vmem:[#allocation2 + $0x8] sm:$0xff] %v9616
        %9641 = vst [vmem:[#allocation2 + $0x10] sm:$0xff] %v9617
        %9642 = vst [vmem:[#allocation2 + $0x18] sm:$0xff] %v9618
        %9643 = vst [vmem:[#allocation2 + $0x20] sm:$0xff] %v9619
        %9644 = vst [vmem:[#allocation2 + $0x28] sm:$0xff] %v9620
        %9645 = vst [vmem:[#allocation2 + $0x30] sm:$0xff] %v9621
        %9646 = vst [vmem:[#allocation2 + $0x38] sm:$0xff] %v9622
        %9647 = vst [vmem:[#allocation2 + $0x40] sm:$0xff] %v9623
        %9648 = vst [vmem:[#allocation2 + $0x48] sm:$0xff] %v9624
        %9649 = vst [vmem:[#allocation2 + $0x50] sm:$0xff] %v9625
        %9650 = vst [vmem:[#allocation2 + $0x58] sm:$0xff] %v9626
        %9651 = vst [vmem:[#allocation2 + $0x60] sm:$0xff] %v9627
        %9652 = vst [vmem:[#allocation2 + $0x68] sm:$0xff] %v9628
        %9653 = vst [vmem:[#allocation2 + $0x70] sm:$0xff] %v9629
        %9654 = vst [vmem:[#allocation2 + $0x78] sm:$0xff] %v9630
        %9655 = vst [vmem:[#allocation2 + $0x80] sm:$0xff] %v9631
        %9656 = vst [vmem:[#allocation2 + $0x88] sm:$0xff] %v9632
        %9657 = vst [vmem:[#allocation2 + $0x90] sm:$0xff] %v9633
        %9658 = vst [vmem:[#allocation2 + $0x98] sm:$0xff] %v9634
        %9659 = vst [vmem:[#allocation2 + $0xa0] sm:$0xff] %v9635
        %9660 = vst [vmem:[#allocation2 + $0xa8] sm:$0xff] %v9636
        %9661 = vst [vmem:[#allocation2 + $0xb0] sm:$0xff] %v9637
        %9662 = vst [vmem:[#allocation2 + $0xb8] sm:$0xff] %v9638
        %p9663 = scmp.eq.s32.totalorder %s31, 1
        // Predicated region
        $region99: #{codebert_triplet_forward.1} parent=51 // pred_check
          %p9664 = pneg %p9663
        $region100: #{codebert_triplet_forward.1} parent=51 // pred_check_branch
          %9666 = sbr.rel (%p9664) target = $region102
        $region101: #{codebert_triplet_forward.1} parent=51 // pred_region
          %v9691 = vrot.slane %v9617, 7
          %vm9692 = vcmask 1041409
          %v9693 = vsel %vm9692, %v9691, %v9615
          %v9694 = vrot.slane %v9618, 7
          %v9695 = vsel %vm9692, %v9694, %v9616
          %v9696 = vrot.slane %v9621, 7
          %v9697 = vsel %vm9692, %v9696, %v9619
          %v9698 = vrot.slane %v9622, 7
          %v9699 = vsel %vm9692, %v9698, %v9620
          %v9700 = vrot.slane %v9625, 7
          %v9701 = vsel %vm9692, %v9700, %v9623
          %v9702 = vrot.slane %v9626, 7
          %v9703 = vsel %vm9692, %v9702, %v9624
          %v9704 = vrot.slane %v9629, 7
          %v9705 = vsel %vm9692, %v9704, %v9627
          %v9706 = vrot.slane %v9630, 7
          %v9707 = vsel %vm9692, %v9706, %v9628
          %v9708 = vrot.slane %v9633, 7
          %v9709 = vsel %vm9692, %v9708, %v9631
          %v9710 = vrot.slane %v9634, 7
          %v9711 = vsel %vm9692, %v9710, %v9632
          %v9712 = vrot.slane %v9637, 7
          %v9713 = vsel %vm9692, %v9712, %v9635
          %v9714 = vrot.slane %v9638, 7
          %v9715 = vsel %vm9692, %v9714, %v9636
          %vm9728 = vcmask 1041408
          %v9729 = vsel %vm9728, %v9693, 0.0
          %v9730 = vrot.slane %v9729, 4
          %v9731 = vadd.f32 %v9729, %v9730
          %v9732 = vrot.slane %v9731, 2
          %v9733 = vadd.f32 %v9731, %v9732
          %v9734 = vrot.slane %v9733, 1
          %v9735 = vadd.f32 %v9733, %v9734
          %v9736 = vsel %vm9728, %v9695, 0.0
          %v9737 = vrot.slane %v9736, 4
          %v9738 = vadd.f32 %v9736, %v9737
          %v9739 = vrot.slane %v9738, 2
          %v9740 = vadd.f32 %v9738, %v9739
          %v9741 = vrot.slane %v9740, 1
          %v9742 = vadd.f32 %v9740, %v9741
          %v9743 = vsel %vm9728, %v9697, 0.0
          %v9744 = vrot.slane %v9743, 4
          %v9745 = vadd.f32 %v9743, %v9744
          %v9746 = vrot.slane %v9745, 2
          %v9747 = vadd.f32 %v9745, %v9746
          %v9748 = vrot.slane %v9747, 1
          %v9749 = vadd.f32 %v9747, %v9748
          %v9750 = vsel %vm9728, %v9699, 0.0
          %v9751 = vrot.slane %v9750, 4
          %v9752 = vadd.f32 %v9750, %v9751
          %v9753 = vrot.slane %v9752, 2
          %v9754 = vadd.f32 %v9752, %v9753
          %v9755 = vrot.slane %v9754, 1
          %v9756 = vadd.f32 %v9754, %v9755
          %v9757 = vsel %vm9728, %v9701, 0.0
          %v9758 = vrot.slane %v9757, 4
          %v9759 = vadd.f32 %v9757, %v9758
          %v9760 = vrot.slane %v9759, 2
          %v9761 = vadd.f32 %v9759, %v9760
          %v9762 = vrot.slane %v9761, 1
          %v9763 = vadd.f32 %v9761, %v9762
          %v9764 = vsel %vm9728, %v9703, 0.0
          %v9765 = vrot.slane %v9764, 4
          %v9766 = vadd.f32 %v9764, %v9765
          %v9767 = vrot.slane %v9766, 2
          %v9768 = vadd.f32 %v9766, %v9767
          %v9769 = vrot.slane %v9768, 1
          %v9770 = vadd.f32 %v9768, %v9769
          %v9771 = vsel %vm9728, %v9705, 0.0
          %v9772 = vrot.slane %v9771, 4
          %v9773 = vadd.f32 %v9771, %v9772
          %v9774 = vrot.slane %v9773, 2
          %v9775 = vadd.f32 %v9773, %v9774
          %v9776 = vrot.slane %v9775, 1
          %v9777 = vadd.f32 %v9775, %v9776
          %v9778 = vsel %vm9728, %v9707, 0.0
          %v9779 = vrot.slane %v9778, 4
          %v9780 = vadd.f32 %v9778, %v9779
          %v9781 = vrot.slane %v9780, 2
          %v9782 = vadd.f32 %v9780, %v9781
          %v9783 = vrot.slane %v9782, 1
          %v9784 = vadd.f32 %v9782, %v9783
          %v9785 = vsel %vm9728, %v9709, 0.0
          %v9786 = vrot.slane %v9785, 4
          %v9787 = vadd.f32 %v9785, %v9786
          %v9788 = vrot.slane %v9787, 2
          %v9789 = vadd.f32 %v9787, %v9788
          %v9790 = vrot.slane %v9789, 1
          %v9791 = vadd.f32 %v9789, %v9790
          %v9792 = vsel %vm9728, %v9711, 0.0
          %v9793 = vrot.slane %v9792, 4
          %v9794 = vadd.f32 %v9792, %v9793
          %v9795 = vrot.slane %v9794, 2
          %v9796 = vadd.f32 %v9794, %v9795
          %v9797 = vrot.slane %v9796, 1
          %v9798 = vadd.f32 %v9796, %v9797
          %v9799 = vsel %vm9728, %v9713, 0.0
          %v9800 = vrot.slane %v9799, 4
          %v9801 = vadd.f32 %v9799, %v9800
          %v9802 = vrot.slane %v9801, 2
          %v9803 = vadd.f32 %v9801, %v9802
          %v9804 = vrot.slane %v9803, 1
          %v9805 = vadd.f32 %v9803, %v9804
          %v9806 = vsel %vm9728, %v9715, 0.0
          %v9807 = vrot.slane %v9806, 4
          %v9808 = vadd.f32 %v9806, %v9807
          %v9809 = vrot.slane %v9808, 2
          %v9810 = vadd.f32 %v9808, %v9809
          %v9811 = vrot.slane %v9810, 1
          %v9812 = vadd.f32 %v9810, %v9811
          %v9813 = vrcp.pop 2.0
          %v9814 = vmul.f32 %v9735, %v9813
          %v9815 = vmul.f32 %v9742, %v9813
          %v9816 = vmul.f32 %v9749, %v9813
          %v9817 = vmul.f32 %v9756, %v9813
          %v9818 = vmul.f32 %v9763, %v9813
          %v9819 = vmul.f32 %v9770, %v9813
          %v9820 = vmul.f32 %v9777, %v9813
          %v9821 = vmul.f32 %v9784, %v9813
          %v9822 = vmul.f32 %v9791, %v9813
          %v9823 = vmul.f32 %v9798, %v9813
          %v9824 = vmul.f32 %v9805, %v9813
          %v9825 = vmul.f32 %v9812, %v9813
          %v9826 = vmul.f32 %v9814, %v9814
          %v9827 = vmul.f32 %v9815, %v9815
          %v9828 = vmul.f32 %v9816, %v9816
          %v9829 = vmul.f32 %v9817, %v9817
          %v9830 = vmul.f32 %v9818, %v9818
          %v9831 = vmul.f32 %v9819, %v9819
          %v9832 = vmul.f32 %v9820, %v9820
          %v9833 = vmul.f32 %v9821, %v9821
          %v9834 = vmul.f32 %v9822, %v9822
          %v9835 = vmul.f32 %v9823, %v9823
          %v9836 = vmul.f32 %v9824, %v9824
          %v9837 = vmul.f32 %v9825, %v9825
          %v9850 = vrot.slane %v9828, 7
          %v9851 = vsel %vm9692, %v9850, %v9826
          %v9852 = vrot.slane %v9830, 6
          %vm9853 = vcmask 1042434
          %v9854 = vsel %vm9853, %v9852, %v9851
          %v9855 = vrot.slane %v9832, 5
          %vm9856 = vcmask 1043459
          %v9857 = vsel %vm9856, %v9855, %v9854
          %v9858 = vrot.slane %v9834, 4
          %vm9859 = vcmask 1044484
          %v9860 = vsel %vm9859, %v9858, %v9857
          %v9861 = vrot.slane %v9836, 3
          %vm9862 = vcmask 1045509
          %v9863 = vsel %vm9862, %v9861, %v9860
          %v9864 = vrot.slane %v9829, 7
          %v9865 = vsel %vm9692, %v9864, %v9827
          %v9866 = vrot.slane %v9831, 6
          %v9867 = vsel %vm9853, %v9866, %v9865
          %v9868 = vrot.slane %v9833, 5
          %v9869 = vsel %vm9856, %v9868, %v9867
          %v9870 = vrot.slane %v9835, 4
          %v9871 = vsel %vm9859, %v9870, %v9869
          %v9872 = vrot.slane %v9837, 3
          %v9873 = vsel %vm9862, %v9872, %v9871
          %vm9876 = vcmask 1045504
          %v9877 = vsel %vm9876, %v9863, 0.0
          %v9878 = vsel %vm9876, %v9873, 0.0
          %v9879 = vadd.f32 %v9877, %v9878
          %9880 = vadd.xlane.f32.xlu0 %v9879
          %v9881 = vpop.xlane.xlu0 %9880
          %v9882 = vrsqrt.pop %v9881
          %v9883 = vmul.f32 %v9881, %v9882
          %vm9884 = vcmp.eq.f32.partialorder %v9881, inf
          %v9885 = vsel %vm9884, %v9881, %v9883
          %vm9886 = vcmp.eq.f32.partialorder %v9881, 0.0
          %v9887 = vand.u32 %v9881, 2147483648
          %v9888 = vsel %vm9886, %v9887, %v9885
          %v9889 = vmax.f32 %v9888, 1e-12
          %v9891 = vrot.slane %v9889, 1
          %v9892 = vrot.slane %v9889, 2
          %v9893 = vrot.slane %v9889, 3
          %v9894 = vrot.slane %v9889, 4
          %v9895 = vrot.slane %v9889, 5
          %v9902 = vrcp.pop %v9889
          %v9903 = vmul.f32 %v9814, %v9902
          %v9904 = vmul.f32 %v9815, %v9902
          %v9905 = vrcp.pop %v9891
          %v9906 = vmul.f32 %v9816, %v9905
          %v9907 = vmul.f32 %v9817, %v9905
          %v9908 = vrcp.pop %v9892
          %v9909 = vmul.f32 %v9818, %v9908
          %v9910 = vmul.f32 %v9819, %v9908
          %v9911 = vrcp.pop %v9893
          %v9912 = vmul.f32 %v9820, %v9911
          %v9913 = vmul.f32 %v9821, %v9911
          %v9914 = vrcp.pop %v9894
          %v9915 = vmul.f32 %v9822, %v9914
          %v9916 = vmul.f32 %v9823, %v9914
          %v9917 = vrcp.pop %v9895
          %v9918 = vmul.f32 %v9824, %v9917
          %v9919 = vmul.f32 %v9825, %v9917
          %v9932 = vrot.slane %v9906, 7
          %v9933 = vsel %vm9692, %v9932, %v9903
          %v9934 = vrot.slane %v9909, 6
          %v9935 = vsel %vm9853, %v9934, %v9933
          %v9936 = vrot.slane %v9912, 5
          %v9937 = vsel %vm9856, %v9936, %v9935
          %v9938 = vrot.slane %v9915, 4
          %v9939 = vsel %vm9859, %v9938, %v9937
          %v9940 = vrot.slane %v9918, 3
          %v9941 = vsel %vm9862, %v9940, %v9939
          %v9942 = vrot.slane %v9907, 7
          %v9943 = vsel %vm9692, %v9942, %v9904
          %v9944 = vrot.slane %v9910, 6
          %v9945 = vsel %vm9853, %v9944, %v9943
          %v9946 = vrot.slane %v9913, 5
          %v9947 = vsel %vm9856, %v9946, %v9945
          %v9948 = vrot.slane %v9916, 4
          %v9949 = vsel %vm9859, %v9948, %v9947
          %v9950 = vrot.slane %v9919, 3
          %v9951 = vsel %vm9862, %v9950, %v9949
          %9954 = vst [vmem:[%s492] sm:$0x3f] %v9941
          %9955 = vst [vmem:[%s492 + $0x8] sm:$0x3f] %v9951
        $region102: #{codebert_triplet_forward.1} parent=51 // pred_fallthru
          _
        %p9956 = scmp.lt.s32.totalorder %s30, 0
        %s9957 = scalar_select %p9956, %s30, 0
        %s9958 = smul.addr %s9957, 2
        %s9959 = smul.addr %s9958, 8
        %s9960 = scalar_lea.vmem %s9, %s9959
        // Predicated region
        $region103: #{codebert_triplet_forward.1} parent=51 // pred_check
          %p9961 = pneg %p264
        $region104: #{codebert_triplet_forward.1} parent=51 // pred_check_branch
          %9963 = sbr.rel (%p9961) target = $region106
        $region105: #{codebert_triplet_forward.1} parent=51 // pred_region
          _
        $region106: #{codebert_triplet_forward.1} parent=51 // pred_fallthru
          _
        // Predicated region
        $region107: #{codebert_triplet_forward.1} parent=51 // pred_check
          %p9964 = pneg %p264
        $region108: #{codebert_triplet_forward.1} parent=51 // pred_check_branch
          %9966 = sbr.rel (%p9964) target = $region110
        $region109: #{codebert_triplet_forward.1} parent=51 // pred_region
          %p9967 = scmp.lt.s32.totalorder %s30, 0
          %s9968 = scalar_select %p9967, %s30, 0
          %s9969 = smul.addr %s9968, 2
          %s9970 = smul.addr %s9969, 8
          %s9971 = scalar_lea.vmem %s9, %s9970
        $region110: #{codebert_triplet_forward.1} parent=51 // pred_fallthru
          _
      $region52: #{codebert_triplet_forward.1} parent=5 // pred_fallthru
        _
      %p9972 = scmp.le.s32.totalorder 2, %s21
      // Predicated region
      $region111: #{codebert_triplet_forward.1} parent=5 // pred_check
        %p9973 = pneg %p9972
      $region112: #{codebert_triplet_forward.1} parent=5 // pred_check_branch
        %9975 = sbr.rel (%p9973) target = $region114
      $region113: #{codebert_triplet_forward.1} parent=5 // pred_region
        %s9976 = ssub.s32 %s21, 2
      $region114: #{codebert_triplet_forward.1} parent=5 // pred_fallthru
        _
    $region6: #{codebert_triplet_forward.1} parent=1 // loop_footer
      %s25 = sadd.s32 1, %s21
    $region7: #{codebert_triplet_forward.1} parent=1 // loop_footer_branch
      %20 = sbr.rel target = $region3
    $region8: #{codebert_triplet_forward.1} parent=1 // loop_exit
      _
    %9977 = vsyncpa [#allocation5], 1
    %s9978 = scalar_lea.sflag [#allocation5], 1
    %9979 = vsyncpa %s9978, 1
    %9980 = vsyncpa [#allocation7], 1
    %s9981 = scalar_lea.sflag [#allocation7], 1
    %9982 = vsyncpa %s9981, 1
  %9983 = vsyncmov [#allocation3]
  %s9984 = vpop.sfrf %9983
  %p9985 = scmp.eq.s32.totalorder %s9984, 0
  %p9986 = pneg %p9985
  %9988 = shalt.err (%p9986)

</llo_original>
